<compile_context>
chip_gen: v7x
topology: tpu7x:2x2x1
jax: 0.10.0
libtpu: 0.0.40
codegen_flags: <defaults>
</compile_context>

<pallas_src>
import functools
import math

import jax
import jax.numpy as jnp
from jax import lax
from jax.experimental import pallas as pl
from jax.experimental.pallas import tpu as pltpu


# ----------------------------------------------------------------------------
# Fused kernel: grid = (batch blocks, layers).  One grid step == one encoder
# layer applied to `block_b` batch elements; fc_input / DNN head are gated.
# ----------------------------------------------------------------------------
def _fused_transformer_dnn_kernel(
    x_ref,                         # (Bt, S, F)   f32
    w_in_ref, b_in_ref,            # (F, D) bf16, (1, D) f32
    wqkv_ref, bqkv_ref,            # (1, D, 3D) bf16, (1, 1, 3D) f32
    wo_ref, bo_ref,                # (1, D, D) bf16,  (1, 1, D)  f32
    ln1g_ref, ln1b_ref,            # (1, 1, D) f32 x2
    w1_ref, b1_ref,                # (1, D, FF) bf16, (1, 1, FF) f32
    w2_ref, b2_ref,                # (1, FF, D) bf16, (1, 1, D)  f32
    ln2g_ref, ln2b_ref,            # (1, 1, D) f32 x2
    wf1_ref, bf1_ref,              # (D, 128) bf16, (1, 128) f32
    wf2_ref, bf2_ref,              # (128, 64) bf16, (1, 64) f32
    wf3_ref, bf3_ref,              # (64, O) bf16,   (1, O) f32
    out_ref,                       # (Bt, 1, O) f32
    h_ref,                         # VMEM scratch (Bt*S, D) f32, carried over l
    *, num_heads, d_model, eps, seq_len, block_b):
    l = pl.program_id(1)
    num_layers = pl.num_programs(1)

    S, Bt = seq_len, block_b
    Mb = Bt * S
    D = d_model
    H = num_heads
    Dh = D // H
    scale = 1.0 / math.sqrt(Dh)
    f32, bf16 = jnp.float32, jnp.bfloat16

    def mm(a, w):
        # bf16 MXU operands, f32 accumulation.
        return jnp.dot(a.astype(bf16), w, preferred_element_type=f32)

    def add_layernorm(x, res, g, b):
        y = x + res
        mean = jnp.mean(y, axis=-1, keepdims=True)
        c = y - mean
        var = jnp.mean(c * c, axis=-1, keepdims=True)      # biased var (PyTorch)
        return c * lax.rsqrt(var + eps) * g + b

    # ---- fc_input: only on the first layer step of each batch block ----
    @pl.when(l == 0)
    def _():
        xf = x_ref[...].reshape(Mb, x_ref.shape[2])
        h_ref[...] = mm(xf, w_in_ref[...]) + b_in_ref[...]

    # ---- one transformer encoder layer (post-norm, ReLU FFN, eval mode) ----
    h = h_ref[...]                                         # (Mb, D) f32
    qkv = mm(h, wqkv_ref[0]) + bqkv_ref[0]                 # (Mb, 3D) f32
    q = qkv[:, :D] * scale                                 # fold 1/sqrt(Dh) into Q
    k = qkv[:, D:2 * D]
    v = qkv[:, 2 * D:]

    heads = []
    for hd in range(H):
        lo = hd * Dh
        qh = q[:, lo:lo + Dh].reshape(Bt, S, Dh).astype(bf16)
        kh = k[:, lo:lo + Dh].reshape(Bt, S, Dh).astype(bf16)
        vh = v[:, lo:lo + Dh].reshape(Bt, S, Dh).astype(bf16)
        sc = jnp.einsum('bqd,bkd->bqk', qh, kh,
                        preferred_element_type=f32)        # (Bt, S, S) f32
        sc = sc - jnp.max(sc, axis=-1, keepdims=True)
        p = jnp.exp(sc)
        p = p * pl.reciprocal(jnp.sum(p, axis=-1, keepdims=True), approx=True)
        ctx_h = jnp.einsum('bqk,bkd->bqd', p.astype(bf16), vh,
                           preferred_element_type=f32)     # (Bt, S, Dh) f32
        heads.append(ctx_h.reshape(Mb, Dh))
    ctx = jnp.concatenate(heads, axis=-1)                  # (Mb, D) lane-dense

    attn = mm(ctx, wo_ref[0]) + bo_ref[0]
    h1 = add_layernorm(h, attn, ln1g_ref[0], ln1b_ref[0])

    ff = jnp.maximum(mm(h1, w1_ref[0]) + b1_ref[0], 0.0)
    ff = mm(ff, w2_ref[0]) + b2_ref[0]
    h_new = add_layernorm(h1, ff, ln2g_ref[0], ln2b_ref[0])
    h_ref[...] = h_new

    # ---- last token -> fused DNN head (only on the last layer step) ----
    @pl.when(l == num_layers - 1)
    def _():
        last = h_new.reshape(Bt, S, D)[:, S - 1, :]        # (Bt, D)
        y = jnp.maximum(mm(last, wf1_ref[...]) + bf1_ref[...], 0.0)
        y = jnp.maximum(mm(y, wf2_ref[...]) + bf2_ref[...], 0.0)
        y = mm(y, wf3_ref[...]) + bf3_ref[...]             # (Bt, O)
        out_ref[...] = y[:, None, :]


# ----------------------------------------------------------------------------
# Wrapper: one pallas_call for the whole model, grid over (batch blocks, layers).
# ----------------------------------------------------------------------------
def _choose_block_b(batch, seq, max_rows=512):
    """Largest divisor of `batch` keeping block_b*seq <= max_rows (fatten M)."""
    bt = 1
    for cand in range(1, batch + 1):
        if batch % cand == 0 and cand * seq <= max_rows:
            bt = cand
    return bt


def transformer_dnn_forward(params, x, block_b=None):
    if x.ndim == 2:
        # fc_input commutes with unsqueeze(1); add the seq dim up front.
        x = x[:, None, :]
    B, S, F = x.shape
    cfg = params["config"]
    D, H, L, O = cfg["d_model"], cfg["num_heads"], cfg["num_layers"], cfg["output_size"]

    if block_b is None:
        block_b = _choose_block_b(B, S)
    assert B % block_b == 0, (B, block_b)

    stk = params["layers_stacked"]
    inputs = (
        x,
        params["w_in"], params["b_in"],
        stk["wqkv"], stk["bqkv"],
        stk["wo"], stk["bo"],
        stk["ln1g"], stk["ln1b"],
        stk["w1"], stk["b1"],
        stk["w2"], stk["b2"],
        stk["ln2g"], stk["ln2b"],
        params["wf1"], params["bf1"],
        params["wf2"], params["bf2"],
        params["wf3"], params["bf3"],
    )

    def resident(a):
        # Constant block index over the whole grid -> fetched once, stays in VMEM.
        return pl.BlockSpec(a.shape, lambda b, l, _nd=a.ndim: (0,) * _nd)

    def per_layer(a):
        # Stream one layer slice per grid step along the 'arbitrary' layer axis;
        # Pallas double-buffers the next layer's DMA behind current compute.
        return pl.BlockSpec((1,) + a.shape[1:],
                            lambda b, l, _nd=a.ndim: (l,) + (0,) * (_nd - 1))

    in_specs = [pl.BlockSpec((block_b, S, F), lambda b, l: (b, 0, 0))]
    in_specs += [resident(a) for a in inputs[1:3]]        # w_in, b_in
    in_specs += [per_layer(a) for a in inputs[3:15]]      # encoder layer params
    in_specs += [resident(a) for a in inputs[15:]]        # DNN head params

    out = pl.pallas_call(
        functools.partial(_fused_transformer_dnn_kernel,
                          num_heads=H, d_model=D, eps=1e-5,
                          seq_len=S, block_b=block_b),
        out_shape=jax.ShapeDtypeStruct((B, 1, O), jnp.float32),
        grid=(B // block_b, L),
        in_specs=in_specs,
        out_specs=pl.BlockSpec((block_b, 1, O), lambda b, l: (b, 0, 0)),
        scratch_shapes=[pltpu.VMEM((block_b * S, D), jnp.float32)],
        compiler_params=pltpu.CompilerParams(
            dimension_semantics=("parallel", "arbitrary"),  # batch across TCs
            vmem_limit_bytes=24 * 1024 * 1024),
    )(*inputs)
    return out[:, 0, :]                                     # (B, O)


# ----------------------------------------------------------------------------
# Parameter init: weights pre-transposed (in_features, out_features) and bf16;
# biases / LayerNorm params stay f32.
# ----------------------------------------------------------------------------
def _linear_init(key, in_f, out_f):
    kw, kb = jax.random.split(key)
    bound = 1.0 / math.sqrt(in_f)
    w = jax.random.uniform(kw, (in_f, out_f), jnp.float32, -bound, bound)
    b = jax.random.uniform(kb, (1, out_f), jnp.float32, -bound, bound)
    return w.astype(jnp.bfloat16), b


def init_params(key, input_size, output_size, d_model=128, num_heads=8,
                num_layers=4, dim_ff=2048):
    keys = jax.random.split(key, 4 + num_layers)
    w_in, b_in = _linear_init(keys[0], input_size, d_model)
    wf1, bf1 = _linear_init(keys[1], d_model, 128)
    wf2, bf2 = _linear_init(keys[2], 128, 64)
    wf3, bf3 = _linear_init(keys[3], 64, output_size)

    wqkv, bqkv, wo, bo = [], [], [], []
    w1, b1, w2, b2 = [], [], [], []
    ln1g, ln1b, ln2g, ln2b = [], [], [], []
    for l in range(num_layers):
        lk = jax.random.split(keys[4 + l], 4)
        a_w, a_b = _linear_init(lk[0], d_model, 3 * d_model)   # in_proj (q|k|v)
        o_w, o_b = _linear_init(lk[1], d_model, d_model)       # out_proj
        f1w, f1b = _linear_init(lk[2], d_model, dim_ff)
        f2w, f2b = _linear_init(lk[3], dim_ff, d_model)
        wqkv.append(a_w); bqkv.append(a_b); wo.append(o_w); bo.append(o_b)
        w1.append(f1w); b1.append(f1b); w2.append(f2w); b2.append(f2b)
        ln1g.append(jnp.ones((1, d_model), jnp.float32))
        ln1b.append(jnp.zeros((1, d_model), jnp.float32))
        ln2g.append(jnp.ones((1, d_model), jnp.float32))
        ln2b.append(jnp.zeros((1, d_model), jnp.float32))

    stack = lambda xs: jnp.stack(xs, axis=0)
    return dict(
        w_in=w_in, b_in=b_in,
        wf1=wf1, bf1=bf1, wf2=wf2, bf2=bf2, wf3=wf3, bf3=bf3,
        layers_stacked=dict(
            wqkv=stack(wqkv), bqkv=stack(bqkv), wo=stack(wo), bo=stack(bo),
            w1=stack(w1), b1=stack(b1), w2=stack(w2), b2=stack(b2),
            ln1g=stack(ln1g), ln1b=stack(ln1b),
            ln2g=stack(ln2g), ln2b=stack(ln2b)),
        config=dict(d_model=d_model, num_heads=num_heads,
                    num_layers=num_layers, output_size=output_size,
                    dim_ff=dim_ff),
    )


# ----------------------------------------------------------------------------
if __name__ == "__main__":
    B, S = 2, 8
    input_size, output_size = 16, 10
    d_model, num_heads, num_layers = 128, 8, 4

    key = jax.random.PRNGKey(0)
    k_params, k_x = jax.random.split(key)

    params = init_params(k_params, input_size, output_size,
                         d_model=d_model, num_heads=num_heads,
                         num_layers=num_layers, dim_ff=2048)
    x = jax.random.normal(k_x, (B, S, input_size), jnp.float32)

    out = transformer_dnn_forward(params, x)
    out = jax.block_until_ready(out)

    assert out.shape == (B, output_size), out.shape
    assert bool(jnp.all(jnp.isfinite(out)))
    print("KERNEL_OK")
</pallas_src>

<mosaic_0001>
module attributes {stable_mosaic.version = 11 : i64} {
  func.func @_fused_transformer_dnn_kernel(%arg0: i32, %arg1: i32, %arg2: memref<2x8x16xf32, #tpu.memory_space<vmem>>, %arg3: memref<16x128xbf16, #tpu.memory_space<vmem>>, %arg4: memref<1x128xf32, #tpu.memory_space<vmem>>, %arg5: memref<1x128x384xbf16, #tpu.memory_space<vmem>>, %arg6: memref<1x1x384xf32, #tpu.memory_space<vmem>>, %arg7: memref<1x128x128xbf16, #tpu.memory_space<vmem>>, %arg8: memref<1x1x128xf32, #tpu.memory_space<vmem>>, %arg9: memref<1x1x128xf32, #tpu.memory_space<vmem>>, %arg10: memref<1x1x128xf32, #tpu.memory_space<vmem>>, %arg11: memref<1x128x2048xbf16, #tpu.memory_space<vmem>>, %arg12: memref<1x1x2048xf32, #tpu.memory_space<vmem>>, %arg13: memref<1x2048x128xbf16, #tpu.memory_space<vmem>>, %arg14: memref<1x1x128xf32, #tpu.memory_space<vmem>>, %arg15: memref<1x1x128xf32, #tpu.memory_space<vmem>>, %arg16: memref<1x1x128xf32, #tpu.memory_space<vmem>>, %arg17: memref<128x128xbf16, #tpu.memory_space<vmem>>, %arg18: memref<1x128xf32, #tpu.memory_space<vmem>>, %arg19: memref<128x64xbf16, #tpu.memory_space<vmem>>, %arg20: memref<1x64xf32, #tpu.memory_space<vmem>>, %arg21: memref<64x10xbf16, #tpu.memory_space<vmem>>, %arg22: memref<1x10xf32, #tpu.memory_space<vmem>>, %arg23: memref<2x1x10xf32, #tpu.memory_space<vmem>>, %arg24: memref<16x128xf32, #tpu.memory_space<vmem>>) attributes {dimension_semantics = [#tpu.dimension_semantics<parallel>, #tpu.dimension_semantics<arbitrary>], iteration_bounds = array<i64: 1, 4>, scalar_prefetch = 0 : i64, scratch_operands = 1 : i64, tpu.core_type = #tpu.core_type<tc>, window_params = [{transform_indices = @transform_0, window_bounds = array<i64: 2, 8, 16>}, {pipeline_mode = #tpu.pipeline_mode<synchronous>, transform_indices = @transform_1, window_bounds = array<i64: 16, 128>}, {pipeline_mode = #tpu.pipeline_mode<synchronous>, transform_indices = @transform_2, window_bounds = array<i64: 1, 128>}, {transform_indices = @transform_3, window_bounds = array<i64: 1, 128, 384>}, {transform_indices = @transform_4, window_bounds = array<i64: 1, 1, 384>}, {transform_indices = @transform_5, window_bounds = array<i64: 1, 128, 128>}, {transform_indices = @transform_6, window_bounds = array<i64: 1, 1, 128>}, {transform_indices = @transform_7, window_bounds = array<i64: 1, 1, 128>}, {transform_indices = @transform_8, window_bounds = array<i64: 1, 1, 128>}, {transform_indices = @transform_9, window_bounds = array<i64: 1, 128, 2048>}, {transform_indices = @transform_10, window_bounds = array<i64: 1, 1, 2048>}, {transform_indices = @transform_11, window_bounds = array<i64: 1, 2048, 128>}, {transform_indices = @transform_12, window_bounds = array<i64: 1, 1, 128>}, {transform_indices = @transform_13, window_bounds = array<i64: 1, 1, 128>}, {transform_indices = @transform_14, window_bounds = array<i64: 1, 1, 128>}, {pipeline_mode = #tpu.pipeline_mode<synchronous>, transform_indices = @transform_15, window_bounds = array<i64: 128, 128>}, {pipeline_mode = #tpu.pipeline_mode<synchronous>, transform_indices = @transform_16, window_bounds = array<i64: 1, 128>}, {pipeline_mode = #tpu.pipeline_mode<synchronous>, transform_indices = @transform_17, window_bounds = array<i64: 128, 64>}, {pipeline_mode = #tpu.pipeline_mode<synchronous>, transform_indices = @transform_18, window_bounds = array<i64: 1, 64>}, {pipeline_mode = #tpu.pipeline_mode<synchronous>, transform_indices = @transform_19, window_bounds = array<i64: 64, 10>}, {pipeline_mode = #tpu.pipeline_mode<synchronous>, transform_indices = @transform_20, window_bounds = array<i64: 1, 10>}, {transform_indices = @transform_21, window_bounds = array<i64: 2, 1, 10>}]} {
    %c0_i32 = arith.constant 0 : i32
    %0 = arith.cmpi eq, %arg1, %c0_i32 : i32
    %1 = arith.extui %0 : i1 to i32
    %c0_i32_0 = arith.constant 0 : i32
    %2 = arith.cmpi ne, %1, %c0_i32_0 : i32
    scf.if %2 {
      %c0_88 = arith.constant 0 : index
      %c0_89 = arith.constant 0 : index
      %c0_90 = arith.constant 0 : index
      %282 = vector.load %arg2[%c0_88, %c0_89, %c0_90] : memref<2x8x16xf32, #tpu.memory_space<vmem>>, vector<2x8x16xf32>
      %283 = vector.shape_cast %282 : vector<2x8x16xf32> to vector<16x16xf32>
      %c0_91 = arith.constant 0 : index
      %c0_92 = arith.constant 0 : index
      %284 = vector.load %arg3[%c0_91, %c0_92] : memref<16x128xbf16, #tpu.memory_space<vmem>>, vector<16x128xbf16>
      %285 = arith.truncf %283 : vector<16x16xf32> to vector<16x16xbf16>
      %cst_93 = arith.constant dense<0.000000e+00> : vector<16x128xf32>
      %286 = tpu.matmul %285, %284, %cst_93 {dimension_numbers = #tpu.dot_dimension_numbers<[1], [0], [0], [1], [0, 0, 1, 1], [], []>} : vector<16x16xbf16>, vector<16x128xbf16>, vector<16x128xf32> -> vector<16x128xf32>
      %c0_94 = arith.constant 0 : index
      %c0_95 = arith.constant 0 : index
      %287 = vector.load %arg4[%c0_94, %c0_95] : memref<1x128xf32, #tpu.memory_space<vmem>>, vector<1x128xf32>
      %288 = vector.broadcast %287 : vector<1x128xf32> to vector<16x128xf32>
      %289 = arith.addf %286, %288 : vector<16x128xf32>
      %c0_96 = arith.constant 0 : index
      %c0_97 = arith.constant 0 : index
      %290 = vector.load %arg24[%c0_96, %c0_97] : memref<16x128xf32, #tpu.memory_space<vmem>>, vector<16x128xf32>
      tpu.vector_store %arg24[%c0_96, %c0_97], %289 {strides = array<i32>} : memref<16x128xf32, #tpu.memory_space<vmem>>, vector<16x128xf32>,
    } else {
    }
    %c0 = arith.constant 0 : index
    %c0_1 = arith.constant 0 : index
    %3 = vector.load %arg24[%c0, %c0_1] : memref<16x128xf32, #tpu.memory_space<vmem>>, vector<16x128xf32>
    %c0_2 = arith.constant 0 : index
    %c0_3 = arith.constant 0 : index
    %c0_4 = arith.constant 0 : index
    %4 = vector.load %arg5[%c0_2, %c0_3, %c0_4] : memref<1x128x384xbf16, #tpu.memory_space<vmem>>, vector<1x128x384xbf16>
    %5 = vector.shape_cast %4 : vector<1x128x384xbf16> to vector<128x384xbf16>
    %6 = arith.truncf %3 : vector<16x128xf32> to vector<16x128xbf16>
    %cst = arith.constant dense<0.000000e+00> : vector<16x384xf32>
    %7 = tpu.matmul %6, %5, %cst {dimension_numbers = #tpu.dot_dimension_numbers<[1], [0], [0], [1], [0, 0, 1, 1], [], []>} : vector<16x128xbf16>, vector<128x384xbf16>, vector<16x384xf32> -> vector<16x384xf32>
    %c0_5 = arith.constant 0 : index
    %c0_6 = arith.constant 0 : index
    %c0_7 = arith.constant 0 : index
    %8 = vector.load %arg6[%c0_5, %c0_6, %c0_7] : memref<1x1x384xf32, #tpu.memory_space<vmem>>, vector<1x1x384xf32>
    %9 = vector.shape_cast %8 : vector<1x1x384xf32> to vector<1x384xf32>
    %10 = vector.broadcast %9 : vector<1x384xf32> to vector<16x384xf32>
    %11 = arith.addf %7, %10 : vector<16x384xf32>
    %12 = vector.extract_strided_slice %11 {offsets = [0, 0], sizes = [16, 128], strides = [1, 1]} : vector<16x384xf32> to vector<16x128xf32>
    %cst_8 = arith.constant 2.500000e-01 : f32
    %13 = vector.broadcast %cst_8 : f32 to vector<16x128xf32>
    %14 = arith.mulf %12, %13 : vector<16x128xf32>
    %15 = vector.extract_strided_slice %11 {offsets = [0, 128], sizes = [16, 128], strides = [1, 1]} : vector<16x384xf32> to vector<16x128xf32>
    %16 = vector.extract_strided_slice %11 {offsets = [0, 256], sizes = [16, 128], strides = [1, 1]} : vector<16x384xf32> to vector<16x128xf32>
    %17 = vector.extract_strided_slice %14 {offsets = [0, 0], sizes = [16, 16], strides = [1, 1]} : vector<16x128xf32> to vector<16x16xf32>
    %18 = vector.shape_cast %17 : vector<16x16xf32> to vector<2x8x16xf32>
    %19 = arith.truncf %18 : vector<2x8x16xf32> to vector<2x8x16xbf16>
    %20 = vector.extract_strided_slice %15 {offsets = [0, 0], sizes = [16, 16], strides = [1, 1]} : vector<16x128xf32> to vector<16x16xf32>
    %21 = vector.shape_cast %20 : vector<16x16xf32> to vector<2x8x16xf32>
    %22 = arith.truncf %21 : vector<2x8x16xf32> to vector<2x8x16xbf16>
    %23 = vector.extract_strided_slice %16 {offsets = [0, 0], sizes = [16, 16], strides = [1, 1]} : vector<16x128xf32> to vector<16x16xf32>
    %24 = vector.shape_cast %23 : vector<16x16xf32> to vector<2x8x16xf32>
    %25 = arith.truncf %24 : vector<2x8x16xf32> to vector<2x8x16xbf16>
    "tpu.trace_start"() <{level = 10 : i32, message = "bqd,bkd->bqk"}> : () -> ()
    %cst_9 = arith.constant dense<0.000000e+00> : vector<2x8x8xf32>
    %26 = tpu.matmul %19, %22, %cst_9 {dimension_numbers = #tpu.dot_dimension_numbers<[2], [2], [1], [1], [0, 0, 0, 1, 1, 1], [0], [0]>} : vector<2x8x16xbf16>, vector<2x8x16xbf16>, vector<2x8x8xf32> -> vector<2x8x8xf32>
    "tpu.trace_stop"() : () -> ()
    %cst_10 = arith.constant dense<0xFF800000> : vector<2x8xf32>
    %27 = vector.multi_reduction <maximumf>, %26, %cst_10 [2] : vector<2x8x8xf32> to vector<2x8xf32>
    %28 = vector.shape_cast %27 : vector<2x8xf32> to vector<2x8x1xf32>
    %29 = vector.broadcast %28 : vector<2x8x1xf32> to vector<2x8x8xf32>
    %30 = arith.subf %26, %29 : vector<2x8x8xf32>
    %31 = math.exp %30 : vector<2x8x8xf32>
    %cst_11 = arith.constant dense<0.000000e+00> : vector<2x8xf32>
    %32 = vector.multi_reduction <add>, %31, %cst_11 [2] : vector<2x8x8xf32> to vector<2x8xf32>
    %33 = vector.shape_cast %32 : vector<2x8xf32> to vector<2x8x1xf32>
    %34 = tpu.reciprocal %33 {approx = true} : vector<2x8x1xf32> -> vector<2x8x1xf32>
    %35 = vector.broadcast %34 : vector<2x8x1xf32> to vector<2x8x8xf32>
    %36 = arith.mulf %31, %35 : vector<2x8x8xf32>
    %37 = arith.truncf %36 : vector<2x8x8xf32> to vector<2x8x8xbf16>
    "tpu.trace_start"() <{level = 10 : i32, message = "bqk,bkd->bqd"}> : () -> ()
    %cst_12 = arith.constant dense<0.000000e+00> : vector<2x8x16xf32>
    %38 = tpu.matmul %37, %25, %cst_12 {dimension_numbers = #tpu.dot_dimension_numbers<[2], [1], [1], [2], [0, 0, 0, 1, 1, 2], [0], [0]>} : vector<2x8x8xbf16>, vector<2x8x16xbf16>, vector<2x8x16xf32> -> vector<2x8x16xf32>
    "tpu.trace_stop"() : () -> ()
    %39 = vector.shape_cast %38 : vector<2x8x16xf32> to vector<16x16xf32>
    %40 = vector.extract_strided_slice %14 {offsets = [0, 16], sizes = [16, 16], strides = [1, 1]} : vector<16x128xf32> to vector<16x16xf32>
    %41 = vector.shape_cast %40 : vector<16x16xf32> to vector<2x8x16xf32>
    %42 = arith.truncf %41 : vector<2x8x16xf32> to vector<2x8x16xbf16>
    %43 = vector.extract_strided_slice %15 {offsets = [0, 16], sizes = [16, 16], strides = [1, 1]} : vector<16x128xf32> to vector<16x16xf32>
    %44 = vector.shape_cast %43 : vector<16x16xf32> to vector<2x8x16xf32>
    %45 = arith.truncf %44 : vector<2x8x16xf32> to vector<2x8x16xbf16>
    %46 = vector.extract_strided_slice %16 {offsets = [0, 16], sizes = [16, 16], strides = [1, 1]} : vector<16x128xf32> to vector<16x16xf32>
    %47 = vector.shape_cast %46 : vector<16x16xf32> to vector<2x8x16xf32>
    %48 = arith.truncf %47 : vector<2x8x16xf32> to vector<2x8x16xbf16>
    "tpu.trace_start"() <{level = 10 : i32, message = "bqd,bkd->bqk"}> : () -> ()
    %cst_13 = arith.constant dense<0.000000e+00> : vector<2x8x8xf32>
    %49 = tpu.matmul %42, %45, %cst_13 {dimension_numbers = #tpu.dot_dimension_numbers<[2], [2], [1], [1], [0, 0, 0, 1, 1, 1], [0], [0]>} : vector<2x8x16xbf16>, vector<2x8x16xbf16>, vector<2x8x8xf32> -> vector<2x8x8xf32>
    "tpu.trace_stop"() : () -> ()
    %cst_14 = arith.constant dense<0xFF800000> : vector<2x8xf32>
    %50 = vector.multi_reduction <maximumf>, %49, %cst_14 [2] : vector<2x8x8xf32> to vector<2x8xf32>
    %51 = vector.shape_cast %50 : vector<2x8xf32> to vector<2x8x1xf32>
    %52 = vector.broadcast %51 : vector<2x8x1xf32> to vector<2x8x8xf32>
    %53 = arith.subf %49, %52 : vector<2x8x8xf32>
    %54 = math.exp %53 : vector<2x8x8xf32>
    %cst_15 = arith.constant dense<0.000000e+00> : vector<2x8xf32>
    %55 = vector.multi_reduction <add>, %54, %cst_15 [2] : vector<2x8x8xf32> to vector<2x8xf32>
    %56 = vector.shape_cast %55 : vector<2x8xf32> to vector<2x8x1xf32>
    %57 = tpu.reciprocal %56 {approx = true} : vector<2x8x1xf32> -> vector<2x8x1xf32>
    %58 = vector.broadcast %57 : vector<2x8x1xf32> to vector<2x8x8xf32>
    %59 = arith.mulf %54, %58 : vector<2x8x8xf32>
    %60 = arith.truncf %59 : vector<2x8x8xf32> to vector<2x8x8xbf16>
    "tpu.trace_start"() <{level = 10 : i32, message = "bqk,bkd->bqd"}> : () -> ()
    %cst_16 = arith.constant dense<0.000000e+00> : vector<2x8x16xf32>
    %61 = tpu.matmul %60, %48, %cst_16 {dimension_numbers = #tpu.dot_dimension_numbers<[2], [1], [1], [2], [0, 0, 0, 1, 1, 2], [0], [0]>} : vector<2x8x8xbf16>, vector<2x8x16xbf16>, vector<2x8x16xf32> -> vector<2x8x16xf32>
    "tpu.trace_stop"() : () -> ()
    %62 = vector.shape_cast %61 : vector<2x8x16xf32> to vector<16x16xf32>
    %63 = vector.extract_strided_slice %14 {offsets = [0, 32], sizes = [16, 16], strides = [1, 1]} : vector<16x128xf32> to vector<16x16xf32>
    %64 = vector.shape_cast %63 : vector<16x16xf32> to vector<2x8x16xf32>
    %65 = arith.truncf %64 : vector<2x8x16xf32> to vector<2x8x16xbf16>
    %66 = vector.extract_strided_slice %15 {offsets = [0, 32], sizes = [16, 16], strides = [1, 1]} : vector<16x128xf32> to vector<16x16xf32>
    %67 = vector.shape_cast %66 : vector<16x16xf32> to vector<2x8x16xf32>
    %68 = arith.truncf %67 : vector<2x8x16xf32> to vector<2x8x16xbf16>
    %69 = vector.extract_strided_slice %16 {offsets = [0, 32], sizes = [16, 16], strides = [1, 1]} : vector<16x128xf32> to vector<16x16xf32>
    %70 = vector.shape_cast %69 : vector<16x16xf32> to vector<2x8x16xf32>
    %71 = arith.truncf %70 : vector<2x8x16xf32> to vector<2x8x16xbf16>
    "tpu.trace_start"() <{level = 10 : i32, message = "bqd,bkd->bqk"}> : () -> ()
    %cst_17 = arith.constant dense<0.000000e+00> : vector<2x8x8xf32>
    %72 = tpu.matmul %65, %68, %cst_17 {dimension_numbers = #tpu.dot_dimension_numbers<[2], [2], [1], [1], [0, 0, 0, 1, 1, 1], [0], [0]>} : vector<2x8x16xbf16>, vector<2x8x16xbf16>, vector<2x8x8xf32> -> vector<2x8x8xf32>
    "tpu.trace_stop"() : () -> ()
    %cst_18 = arith.constant dense<0xFF800000> : vector<2x8xf32>
    %73 = vector.multi_reduction <maximumf>, %72, %cst_18 [2] : vector<2x8x8xf32> to vector<2x8xf32>
    %74 = vector.shape_cast %73 : vector<2x8xf32> to vector<2x8x1xf32>
    %75 = vector.broadcast %74 : vector<2x8x1xf32> to vector<2x8x8xf32>
    %76 = arith.subf %72, %75 : vector<2x8x8xf32>
    %77 = math.exp %76 : vector<2x8x8xf32>
    %cst_19 = arith.constant dense<0.000000e+00> : vector<2x8xf32>
    %78 = vector.multi_reduction <add>, %77, %cst_19 [2] : vector<2x8x8xf32> to vector<2x8xf32>
    %79 = vector.shape_cast %78 : vector<2x8xf32> to vector<2x8x1xf32>
    %80 = tpu.reciprocal %79 {approx = true} : vector<2x8x1xf32> -> vector<2x8x1xf32>
    %81 = vector.broadcast %80 : vector<2x8x1xf32> to vector<2x8x8xf32>
    %82 = arith.mulf %77, %81 : vector<2x8x8xf32>
    %83 = arith.truncf %82 : vector<2x8x8xf32> to vector<2x8x8xbf16>
    "tpu.trace_start"() <{level = 10 : i32, message = "bqk,bkd->bqd"}> : () -> ()
    %cst_20 = arith.constant dense<0.000000e+00> : vector<2x8x16xf32>
    %84 = tpu.matmul %83, %71, %cst_20 {dimension_numbers = #tpu.dot_dimension_numbers<[2], [1], [1], [2], [0, 0, 0, 1, 1, 2], [0], [0]>} : vector<2x8x8xbf16>, vector<2x8x16xbf16>, vector<2x8x16xf32> -> vector<2x8x16xf32>
    "tpu.trace_stop"() : () -> ()
    %85 = vector.shape_cast %84 : vector<2x8x16xf32> to vector<16x16xf32>
    %86 = vector.extract_strided_slice %14 {offsets = [0, 48], sizes = [16, 16], strides = [1, 1]} : vector<16x128xf32> to vector<16x16xf32>
    %87 = vector.shape_cast %86 : vector<16x16xf32> to vector<2x8x16xf32>
    %88 = arith.truncf %87 : vector<2x8x16xf32> to vector<2x8x16xbf16>
    %89 = vector.extract_strided_slice %15 {offsets = [0, 48], sizes = [16, 16], strides = [1, 1]} : vector<16x128xf32> to vector<16x16xf32>
    %90 = vector.shape_cast %89 : vector<16x16xf32> to vector<2x8x16xf32>
    %91 = arith.truncf %90 : vector<2x8x16xf32> to vector<2x8x16xbf16>
    %92 = vector.extract_strided_slice %16 {offsets = [0, 48], sizes = [16, 16], strides = [1, 1]} : vector<16x128xf32> to vector<16x16xf32>
    %93 = vector.shape_cast %92 : vector<16x16xf32> to vector<2x8x16xf32>
    %94 = arith.truncf %93 : vector<2x8x16xf32> to vector<2x8x16xbf16>
    "tpu.trace_start"() <{level = 10 : i32, message = "bqd,bkd->bqk"}> : () -> ()
    %cst_21 = arith.constant dense<0.000000e+00> : vector<2x8x8xf32>
    %95 = tpu.matmul %88, %91, %cst_21 {dimension_numbers = #tpu.dot_dimension_numbers<[2], [2], [1], [1], [0, 0, 0, 1, 1, 1], [0], [0]>} : vector<2x8x16xbf16>, vector<2x8x16xbf16>, vector<2x8x8xf32> -> vector<2x8x8xf32>
    "tpu.trace_stop"() : () -> ()
    %cst_22 = arith.constant dense<0xFF800000> : vector<2x8xf32>
    %96 = vector.multi_reduction <maximumf>, %95, %cst_22 [2] : vector<2x8x8xf32> to vector<2x8xf32>
    %97 = vector.shape_cast %96 : vector<2x8xf32> to vector<2x8x1xf32>
    %98 = vector.broadcast %97 : vector<2x8x1xf32> to vector<2x8x8xf32>
    %99 = arith.subf %95, %98 : vector<2x8x8xf32>
    %100 = math.exp %99 : vector<2x8x8xf32>
    %cst_23 = arith.constant dense<0.000000e+00> : vector<2x8xf32>
    %101 = vector.multi_reduction <add>, %100, %cst_23 [2] : vector<2x8x8xf32> to vector<2x8xf32>
    %102 = vector.shape_cast %101 : vector<2x8xf32> to vector<2x8x1xf32>
    %103 = tpu.reciprocal %102 {approx = true} : vector<2x8x1xf32> -> vector<2x8x1xf32>
    %104 = vector.broadcast %103 : vector<2x8x1xf32> to vector<2x8x8xf32>
    %105 = arith.mulf %100, %104 : vector<2x8x8xf32>
    %106 = arith.truncf %105 : vector<2x8x8xf32> to vector<2x8x8xbf16>
    "tpu.trace_start"() <{level = 10 : i32, message = "bqk,bkd->bqd"}> : () -> ()
    %cst_24 = arith.constant dense<0.000000e+00> : vector<2x8x16xf32>
    %107 = tpu.matmul %106, %94, %cst_24 {dimension_numbers = #tpu.dot_dimension_numbers<[2], [1], [1], [2], [0, 0, 0, 1, 1, 2], [0], [0]>} : vector<2x8x8xbf16>, vector<2x8x16xbf16>, vector<2x8x16xf32> -> vector<2x8x16xf32>
    "tpu.trace_stop"() : () -> ()
    %108 = vector.shape_cast %107 : vector<2x8x16xf32> to vector<16x16xf32>
    %109 = vector.extract_strided_slice %14 {offsets = [0, 64], sizes = [16, 16], strides = [1, 1]} : vector<16x128xf32> to vector<16x16xf32>
    %110 = vector.shape_cast %109 : vector<16x16xf32> to vector<2x8x16xf32>
    %111 = arith.truncf %110 : vector<2x8x16xf32> to vector<2x8x16xbf16>
    %112 = vector.extract_strided_slice %15 {offsets = [0, 64], sizes = [16, 16], strides = [1, 1]} : vector<16x128xf32> to vector<16x16xf32>
    %113 = vector.shape_cast %112 : vector<16x16xf32> to vector<2x8x16xf32>
    %114 = arith.truncf %113 : vector<2x8x16xf32> to vector<2x8x16xbf16>
    %115 = vector.extract_strided_slice %16 {offsets = [0, 64], sizes = [16, 16], strides = [1, 1]} : vector<16x128xf32> to vector<16x16xf32>
    %116 = vector.shape_cast %115 : vector<16x16xf32> to vector<2x8x16xf32>
    %117 = arith.truncf %116 : vector<2x8x16xf32> to vector<2x8x16xbf16>
    "tpu.trace_start"() <{level = 10 : i32, message = "bqd,bkd->bqk"}> : () -> ()
    %cst_25 = arith.constant dense<0.000000e+00> : vector<2x8x8xf32>
    %118 = tpu.matmul %111, %114, %cst_25 {dimension_numbers = #tpu.dot_dimension_numbers<[2], [2], [1], [1], [0, 0, 0, 1, 1, 1], [0], [0]>} : vector<2x8x16xbf16>, vector<2x8x16xbf16>, vector<2x8x8xf32> -> vector<2x8x8xf32>
    "tpu.trace_stop"() : () -> ()
    %cst_26 = arith.constant dense<0xFF800000> : vector<2x8xf32>
    %119 = vector.multi_reduction <maximumf>, %118, %cst_26 [2] : vector<2x8x8xf32> to vector<2x8xf32>
    %120 = vector.shape_cast %119 : vector<2x8xf32> to vector<2x8x1xf32>
    %121 = vector.broadcast %120 : vector<2x8x1xf32> to vector<2x8x8xf32>
    %122 = arith.subf %118, %121 : vector<2x8x8xf32>
    %123 = math.exp %122 : vector<2x8x8xf32>
    %cst_27 = arith.constant dense<0.000000e+00> : vector<2x8xf32>
    %124 = vector.multi_reduction <add>, %123, %cst_27 [2] : vector<2x8x8xf32> to vector<2x8xf32>
    %125 = vector.shape_cast %124 : vector<2x8xf32> to vector<2x8x1xf32>
    %126 = tpu.reciprocal %125 {approx = true} : vector<2x8x1xf32> -> vector<2x8x1xf32>
    %127 = vector.broadcast %126 : vector<2x8x1xf32> to vector<2x8x8xf32>
    %128 = arith.mulf %123, %127 : vector<2x8x8xf32>
    %129 = arith.truncf %128 : vector<2x8x8xf32> to vector<2x8x8xbf16>
    "tpu.trace_start"() <{level = 10 : i32, message = "bqk,bkd->bqd"}> : () -> ()
    %cst_28 = arith.constant dense<0.000000e+00> : vector<2x8x16xf32>
    %130 = tpu.matmul %129, %117, %cst_28 {dimension_numbers = #tpu.dot_dimension_numbers<[2], [1], [1], [2], [0, 0, 0, 1, 1, 2], [0], [0]>} : vector<2x8x8xbf16>, vector<2x8x16xbf16>, vector<2x8x16xf32> -> vector<2x8x16xf32>
    "tpu.trace_stop"() : () -> ()
    %131 = vector.shape_cast %130 : vector<2x8x16xf32> to vector<16x16xf32>
    %132 = vector.extract_strided_slice %14 {offsets = [0, 80], sizes = [16, 16], strides = [1, 1]} : vector<16x128xf32> to vector<16x16xf32>
    %133 = vector.shape_cast %132 : vector<16x16xf32> to vector<2x8x16xf32>
    %134 = arith.truncf %133 : vector<2x8x16xf32> to vector<2x8x16xbf16>
    %135 = vector.extract_strided_slice %15 {offsets = [0, 80], sizes = [16, 16], strides = [1, 1]} : vector<16x128xf32> to vector<16x16xf32>
    %136 = vector.shape_cast %135 : vector<16x16xf32> to vector<2x8x16xf32>
    %137 = arith.truncf %136 : vector<2x8x16xf32> to vector<2x8x16xbf16>
    %138 = vector.extract_strided_slice %16 {offsets = [0, 80], sizes = [16, 16], strides = [1, 1]} : vector<16x128xf32> to vector<16x16xf32>
    %139 = vector.shape_cast %138 : vector<16x16xf32> to vector<2x8x16xf32>
    %140 = arith.truncf %139 : vector<2x8x16xf32> to vector<2x8x16xbf16>
    "tpu.trace_start"() <{level = 10 : i32, message = "bqd,bkd->bqk"}> : () -> ()
    %cst_29 = arith.constant dense<0.000000e+00> : vector<2x8x8xf32>
    %141 = tpu.matmul %134, %137, %cst_29 {dimension_numbers = #tpu.dot_dimension_numbers<[2], [2], [1], [1], [0, 0, 0, 1, 1, 1], [0], [0]>} : vector<2x8x16xbf16>, vector<2x8x16xbf16>, vector<2x8x8xf32> -> vector<2x8x8xf32>
    "tpu.trace_stop"() : () -> ()
    %cst_30 = arith.constant dense<0xFF800000> : vector<2x8xf32>
    %142 = vector.multi_reduction <maximumf>, %141, %cst_30 [2] : vector<2x8x8xf32> to vector<2x8xf32>
    %143 = vector.shape_cast %142 : vector<2x8xf32> to vector<2x8x1xf32>
    %144 = vector.broadcast %143 : vector<2x8x1xf32> to vector<2x8x8xf32>
    %145 = arith.subf %141, %144 : vector<2x8x8xf32>
    %146 = math.exp %145 : vector<2x8x8xf32>
    %cst_31 = arith.constant dense<0.000000e+00> : vector<2x8xf32>
    %147 = vector.multi_reduction <add>, %146, %cst_31 [2] : vector<2x8x8xf32> to vector<2x8xf32>
    %148 = vector.shape_cast %147 : vector<2x8xf32> to vector<2x8x1xf32>
    %149 = tpu.reciprocal %148 {approx = true} : vector<2x8x1xf32> -> vector<2x8x1xf32>
    %150 = vector.broadcast %149 : vector<2x8x1xf32> to vector<2x8x8xf32>
    %151 = arith.mulf %146, %150 : vector<2x8x8xf32>
    %152 = arith.truncf %151 : vector<2x8x8xf32> to vector<2x8x8xbf16>
    "tpu.trace_start"() <{level = 10 : i32, message = "bqk,bkd->bqd"}> : () -> ()
    %cst_32 = arith.constant dense<0.000000e+00> : vector<2x8x16xf32>
    %153 = tpu.matmul %152, %140, %cst_32 {dimension_numbers = #tpu.dot_dimension_numbers<[2], [1], [1], [2], [0, 0, 0, 1, 1, 2], [0], [0]>} : vector<2x8x8xbf16>, vector<2x8x16xbf16>, vector<2x8x16xf32> -> vector<2x8x16xf32>
    "tpu.trace_stop"() : () -> ()
    %154 = vector.shape_cast %153 : vector<2x8x16xf32> to vector<16x16xf32>
    %155 = vector.extract_strided_slice %14 {offsets = [0, 96], sizes = [16, 16], strides = [1, 1]} : vector<16x128xf32> to vector<16x16xf32>
    %156 = vector.shape_cast %155 : vector<16x16xf32> to vector<2x8x16xf32>
    %157 = arith.truncf %156 : vector<2x8x16xf32> to vector<2x8x16xbf16>
    %158 = vector.extract_strided_slice %15 {offsets = [0, 96], sizes = [16, 16], strides = [1, 1]} : vector<16x128xf32> to vector<16x16xf32>
    %159 = vector.shape_cast %158 : vector<16x16xf32> to vector<2x8x16xf32>
    %160 = arith.truncf %159 : vector<2x8x16xf32> to vector<2x8x16xbf16>
    %161 = vector.extract_strided_slice %16 {offsets = [0, 96], sizes = [16, 16], strides = [1, 1]} : vector<16x128xf32> to vector<16x16xf32>
    %162 = vector.shape_cast %161 : vector<16x16xf32> to vector<2x8x16xf32>
    %163 = arith.truncf %162 : vector<2x8x16xf32> to vector<2x8x16xbf16>
    "tpu.trace_start"() <{level = 10 : i32, message = "bqd,bkd->bqk"}> : () -> ()
    %cst_33 = arith.constant dense<0.000000e+00> : vector<2x8x8xf32>
    %164 = tpu.matmul %157, %160, %cst_33 {dimension_numbers = #tpu.dot_dimension_numbers<[2], [2], [1], [1], [0, 0, 0, 1, 1, 1], [0], [0]>} : vector<2x8x16xbf16>, vector<2x8x16xbf16>, vector<2x8x8xf32> -> vector<2x8x8xf32>
    "tpu.trace_stop"() : () -> ()
    %cst_34 = arith.constant dense<0xFF800000> : vector<2x8xf32>
    %165 = vector.multi_reduction <maximumf>, %164, %cst_34 [2] : vector<2x8x8xf32> to vector<2x8xf32>
    %166 = vector.shape_cast %165 : vector<2x8xf32> to vector<2x8x1xf32>
    %167 = vector.broadcast %166 : vector<2x8x1xf32> to vector<2x8x8xf32>
    %168 = arith.subf %164, %167 : vector<2x8x8xf32>
    %169 = math.exp %168 : vector<2x8x8xf32>
    %cst_35 = arith.constant dense<0.000000e+00> : vector<2x8xf32>
    %170 = vector.multi_reduction <add>, %169, %cst_35 [2] : vector<2x8x8xf32> to vector<2x8xf32>
    %171 = vector.shape_cast %170 : vector<2x8xf32> to vector<2x8x1xf32>
    %172 = tpu.reciprocal %171 {approx = true} : vector<2x8x1xf32> -> vector<2x8x1xf32>
    %173 = vector.broadcast %172 : vector<2x8x1xf32> to vector<2x8x8xf32>
    %174 = arith.mulf %169, %173 : vector<2x8x8xf32>
    %175 = arith.truncf %174 : vector<2x8x8xf32> to vector<2x8x8xbf16>
    "tpu.trace_start"() <{level = 10 : i32, message = "bqk,bkd->bqd"}> : () -> ()
    %cst_36 = arith.constant dense<0.000000e+00> : vector<2x8x16xf32>
    %176 = tpu.matmul %175, %163, %cst_36 {dimension_numbers = #tpu.dot_dimension_numbers<[2], [1], [1], [2], [0, 0, 0, 1, 1, 2], [0], [0]>} : vector<2x8x8xbf16>, vector<2x8x16xbf16>, vector<2x8x16xf32> -> vector<2x8x16xf32>
    "tpu.trace_stop"() : () -> ()
    %177 = vector.shape_cast %176 : vector<2x8x16xf32> to vector<16x16xf32>
    %178 = vector.extract_strided_slice %14 {offsets = [0, 112], sizes = [16, 16], strides = [1, 1]} : vector<16x128xf32> to vector<16x16xf32>
    %179 = vector.shape_cast %178 : vector<16x16xf32> to vector<2x8x16xf32>
    %180 = arith.truncf %179 : vector<2x8x16xf32> to vector<2x8x16xbf16>
    %181 = vector.extract_strided_slice %15 {offsets = [0, 112], sizes = [16, 16], strides = [1, 1]} : vector<16x128xf32> to vector<16x16xf32>
    %182 = vector.shape_cast %181 : vector<16x16xf32> to vector<2x8x16xf32>
    %183 = arith.truncf %182 : vector<2x8x16xf32> to vector<2x8x16xbf16>
    %184 = vector.extract_strided_slice %16 {offsets = [0, 112], sizes = [16, 16], strides = [1, 1]} : vector<16x128xf32> to vector<16x16xf32>
    %185 = vector.shape_cast %184 : vector<16x16xf32> to vector<2x8x16xf32>
    %186 = arith.truncf %185 : vector<2x8x16xf32> to vector<2x8x16xbf16>
    "tpu.trace_start"() <{level = 10 : i32, message = "bqd,bkd->bqk"}> : () -> ()
    %cst_37 = arith.constant dense<0.000000e+00> : vector<2x8x8xf32>
    %187 = tpu.matmul %180, %183, %cst_37 {dimension_numbers = #tpu.dot_dimension_numbers<[2], [2], [1], [1], [0, 0, 0, 1, 1, 1], [0], [0]>} : vector<2x8x16xbf16>, vector<2x8x16xbf16>, vector<2x8x8xf32> -> vector<2x8x8xf32>
    "tpu.trace_stop"() : () -> ()
    %cst_38 = arith.constant dense<0xFF800000> : vector<2x8xf32>
    %188 = vector.multi_reduction <maximumf>, %187, %cst_38 [2] : vector<2x8x8xf32> to vector<2x8xf32>
    %189 = vector.shape_cast %188 : vector<2x8xf32> to vector<2x8x1xf32>
    %190 = vector.broadcast %189 : vector<2x8x1xf32> to vector<2x8x8xf32>
    %191 = arith.subf %187, %190 : vector<2x8x8xf32>
    %192 = math.exp %191 : vector<2x8x8xf32>
    %cst_39 = arith.constant dense<0.000000e+00> : vector<2x8xf32>
    %193 = vector.multi_reduction <add>, %192, %cst_39 [2] : vector<2x8x8xf32> to vector<2x8xf32>
    %194 = vector.shape_cast %193 : vector<2x8xf32> to vector<2x8x1xf32>
    %195 = tpu.reciprocal %194 {approx = true} : vector<2x8x1xf32> -> vector<2x8x1xf32>
    %196 = vector.broadcast %195 : vector<2x8x1xf32> to vector<2x8x8xf32>
    %197 = arith.mulf %192, %196 : vector<2x8x8xf32>
    %198 = arith.truncf %197 : vector<2x8x8xf32> to vector<2x8x8xbf16>
    "tpu.trace_start"() <{level = 10 : i32, message = "bqk,bkd->bqd"}> : () -> ()
    %cst_40 = arith.constant dense<0.000000e+00> : vector<2x8x16xf32>
    %199 = tpu.matmul %198, %186, %cst_40 {dimension_numbers = #tpu.dot_dimension_numbers<[2], [1], [1], [2], [0, 0, 0, 1, 1, 2], [0], [0]>} : vector<2x8x8xbf16>, vector<2x8x16xbf16>, vector<2x8x16xf32> -> vector<2x8x16xf32>
    "tpu.trace_stop"() : () -> ()
    %200 = vector.shape_cast %199 : vector<2x8x16xf32> to vector<16x16xf32>
    %201 = tpu.concatenate %39, %62, %85, %108, %131, %154, %177, %200 in 1 : vector<16x16xf32>, vector<16x16xf32>, vector<16x16xf32>, vector<16x16xf32>, vector<16x16xf32>, vector<16x16xf32>, vector<16x16xf32>, vector<16x16xf32> -> vector<16x128xf32>
    %c0_41 = arith.constant 0 : index
    %c0_42 = arith.constant 0 : index
    %c0_43 = arith.constant 0 : index
    %202 = vector.load %arg7[%c0_41, %c0_42, %c0_43] : memref<1x128x128xbf16, #tpu.memory_space<vmem>>, vector<1x128x128xbf16>
    %203 = vector.shape_cast %202 : vector<1x128x128xbf16> to vector<128x128xbf16>
    %204 = arith.truncf %201 : vector<16x128xf32> to vector<16x128xbf16>
    %cst_44 = arith.constant dense<0.000000e+00> : vector<16x128xf32>
    %205 = tpu.matmul %204, %203, %cst_44 {dimension_numbers = #tpu.dot_dimension_numbers<[1], [0], [0], [1], [0, 0, 1, 1], [], []>} : vector<16x128xbf16>, vector<128x128xbf16>, vector<16x128xf32> -> vector<16x128xf32>
    %c0_45 = arith.constant 0 : index
    %c0_46 = arith.constant 0 : index
    %c0_47 = arith.constant 0 : index
    %206 = vector.load %arg8[%c0_45, %c0_46, %c0_47] : memref<1x1x128xf32, #tpu.memory_space<vmem>>, vector<1x1x128xf32>
    %207 = vector.shape_cast %206 : vector<1x1x128xf32> to vector<1x128xf32>
    %208 = vector.broadcast %207 : vector<1x128xf32> to vector<16x128xf32>
    %209 = arith.addf %205, %208 : vector<16x128xf32>
    %c0_48 = arith.constant 0 : index
    %c0_49 = arith.constant 0 : index
    %c0_50 = arith.constant 0 : index
    %210 = vector.load %arg9[%c0_48, %c0_49, %c0_50] : memref<1x1x128xf32, #tpu.memory_space<vmem>>, vector<1x1x128xf32>
    %211 = vector.shape_cast %210 : vector<1x1x128xf32> to vector<1x128xf32>
    %c0_51 = arith.constant 0 : index
    %c0_52 = arith.constant 0 : index
    %c0_53 = arith.constant 0 : index
    %212 = vector.load %arg10[%c0_51, %c0_52, %c0_53] : memref<1x1x128xf32, #tpu.memory_space<vmem>>, vector<1x1x128xf32>
    %213 = vector.shape_cast %212 : vector<1x1x128xf32> to vector<1x128xf32>
    %214 = arith.addf %3, %209 : vector<16x128xf32>
    %cst_54 = arith.constant dense<0.000000e+00> : vector<16xf32>
    %215 = vector.multi_reduction <add>, %214, %cst_54 [1] : vector<16x128xf32> to vector<16xf32>
    %216 = vector.shape_cast %215 : vector<16xf32> to vector<16x1xf32>
    %cst_55 = arith.constant 1.280000e+02 : f32
    %217 = vector.broadcast %cst_55 : f32 to vector<16x1xf32>
    %218 = arith.divf %216, %217 : vector<16x1xf32>
    %219 = vector.broadcast %218 : vector<16x1xf32> to vector<16x128xf32>
    %220 = arith.subf %214, %219 : vector<16x128xf32>
    %221 = arith.mulf %220, %220 : vector<16x128xf32>
    %cst_56 = arith.constant dense<0.000000e+00> : vector<16xf32>
    %222 = vector.multi_reduction <add>, %221, %cst_56 [1] : vector<16x128xf32> to vector<16xf32>
    %223 = vector.shape_cast %222 : vector<16xf32> to vector<16x1xf32>
    %cst_57 = arith.constant 1.280000e+02 : f32
    %224 = vector.broadcast %cst_57 : f32 to vector<16x1xf32>
    %225 = arith.divf %223, %224 : vector<16x1xf32>
    %cst_58 = arith.constant 9.99999974E-6 : f32
    %226 = vector.broadcast %cst_58 : f32 to vector<16x1xf32>
    %227 = arith.addf %225, %226 : vector<16x1xf32>
    %228 = math.rsqrt %227 : vector<16x1xf32>
    %229 = vector.broadcast %228 : vector<16x1xf32> to vector<16x128xf32>
    %230 = arith.mulf %220, %229 : vector<16x128xf32>
    %231 = vector.broadcast %211 : vector<1x128xf32> to vector<16x128xf32>
    %232 = arith.mulf %230, %231 : vector<16x128xf32>
    %233 = vector.broadcast %213 : vector<1x128xf32> to vector<16x128xf32>
    %234 = arith.addf %232, %233 : vector<16x128xf32>
    %c0_59 = arith.constant 0 : index
    %c0_60 = arith.constant 0 : index
    %c0_61 = arith.constant 0 : index
    %235 = vector.load %arg11[%c0_59, %c0_60, %c0_61] : memref<1x128x2048xbf16, #tpu.memory_space<vmem>>, vector<1x128x2048xbf16>
    %236 = vector.shape_cast %235 : vector<1x128x2048xbf16> to vector<128x2048xbf16>
    %237 = arith.truncf %234 : vector<16x128xf32> to vector<16x128xbf16>
    %cst_62 = arith.constant dense<0.000000e+00> : vector<16x2048xf32>
    %238 = tpu.matmul %237, %236, %cst_62 {dimension_numbers = #tpu.dot_dimension_numbers<[1], [0], [0], [1], [0, 0, 1, 1], [], []>} : vector<16x128xbf16>, vector<128x2048xbf16>, vector<16x2048xf32> -> vector<16x2048xf32>
    %c0_63 = arith.constant 0 : index
    %c0_64 = arith.constant 0 : index
    %c0_65 = arith.constant 0 : index
    %239 = vector.load %arg12[%c0_63, %c0_64, %c0_65] : memref<1x1x2048xf32, #tpu.memory_space<vmem>>, vector<1x1x2048xf32>
    %240 = vector.shape_cast %239 : vector<1x1x2048xf32> to vector<1x2048xf32>
    %241 = vector.broadcast %240 : vector<1x2048xf32> to vector<16x2048xf32>
    %242 = arith.addf %238, %241 : vector<16x2048xf32>
    %cst_66 = arith.constant 0.000000e+00 : f32
    %243 = vector.broadcast %cst_66 : f32 to vector<16x2048xf32>
    %244 = arith.maximumf %242, %243 : vector<16x2048xf32>
    %c0_67 = arith.constant 0 : index
    %c0_68 = arith.constant 0 : index
    %c0_69 = arith.constant 0 : index
    %245 = vector.load %arg13[%c0_67, %c0_68, %c0_69] : memref<1x2048x128xbf16, #tpu.memory_space<vmem>>, vector<1x2048x128xbf16>
    %246 = vector.shape_cast %245 : vector<1x2048x128xbf16> to vector<2048x128xbf16>
    %247 = arith.truncf %244 : vector<16x2048xf32> to vector<16x2048xbf16>
    %cst_70 = arith.constant dense<0.000000e+00> : vector<16x128xf32>
    %248 = tpu.matmul %247, %246, %cst_70 {dimension_numbers = #tpu.dot_dimension_numbers<[1], [0], [0], [1], [0, 0, 1, 1], [], []>} : vector<16x2048xbf16>, vector<2048x128xbf16>, vector<16x128xf32> -> vector<16x128xf32>
    %c0_71 = arith.constant 0 : index
    %c0_72 = arith.constant 0 : index
    %c0_73 = arith.constant 0 : index
    %249 = vector.load %arg14[%c0_71, %c0_72, %c0_73] : memref<1x1x128xf32, #tpu.memory_space<vmem>>, vector<1x1x128xf32>
    %250 = vector.shape_cast %249 : vector<1x1x128xf32> to vector<1x128xf32>
    %251 = vector.broadcast %250 : vector<1x128xf32> to vector<16x128xf32>
    %252 = arith.addf %248, %251 : vector<16x128xf32>
    %c0_74 = arith.constant 0 : index
    %c0_75 = arith.constant 0 : index
    %c0_76 = arith.constant 0 : index
    %253 = vector.load %arg15[%c0_74, %c0_75, %c0_76] : memref<1x1x128xf32, #tpu.memory_space<vmem>>, vector<1x1x128xf32>
    %254 = vector.shape_cast %253 : vector<1x1x128xf32> to vector<1x128xf32>
    %c0_77 = arith.constant 0 : index
    %c0_78 = arith.constant 0 : index
    %c0_79 = arith.constant 0 : index
    %255 = vector.load %arg16[%c0_77, %c0_78, %c0_79] : memref<1x1x128xf32, #tpu.memory_space<vmem>>, vector<1x1x128xf32>
    %256 = vector.shape_cast %255 : vector<1x1x128xf32> to vector<1x128xf32>
    %257 = arith.addf %234, %252 : vector<16x128xf32>
    %cst_80 = arith.constant dense<0.000000e+00> : vector<16xf32>
    %258 = vector.multi_reduction <add>, %257, %cst_80 [1] : vector<16x128xf32> to vector<16xf32>
    %259 = vector.shape_cast %258 : vector<16xf32> to vector<16x1xf32>
    %cst_81 = arith.constant 1.280000e+02 : f32
    %260 = vector.broadcast %cst_81 : f32 to vector<16x1xf32>
    %261 = arith.divf %259, %260 : vector<16x1xf32>
    %262 = vector.broadcast %261 : vector<16x1xf32> to vector<16x128xf32>
    %263 = arith.subf %257, %262 : vector<16x128xf32>
    %264 = arith.mulf %263, %263 : vector<16x128xf32>
    %cst_82 = arith.constant dense<0.000000e+00> : vector<16xf32>
    %265 = vector.multi_reduction <add>, %264, %cst_82 [1] : vector<16x128xf32> to vector<16xf32>
    %266 = vector.shape_cast %265 : vector<16xf32> to vector<16x1xf32>
    %cst_83 = arith.constant 1.280000e+02 : f32
    %267 = vector.broadcast %cst_83 : f32 to vector<16x1xf32>
    %268 = arith.divf %266, %267 : vector<16x1xf32>
    %cst_84 = arith.constant 9.99999974E-6 : f32
    %269 = vector.broadcast %cst_84 : f32 to vector<16x1xf32>
    %270 = arith.addf %268, %269 : vector<16x1xf32>
    %271 = math.rsqrt %270 : vector<16x1xf32>
    %272 = vector.broadcast %271 : vector<16x1xf32> to vector<16x128xf32>
    %273 = arith.mulf %263, %272 : vector<16x128xf32>
    %274 = vector.broadcast %254 : vector<1x128xf32> to vector<16x128xf32>
    %275 = arith.mulf %273, %274 : vector<16x128xf32>
    %276 = vector.broadcast %256 : vector<1x128xf32> to vector<16x128xf32>
    %277 = arith.addf %275, %276 : vector<16x128xf32>
    %c0_85 = arith.constant 0 : index
    %c0_86 = arith.constant 0 : index
    %278 = vector.load %arg24[%c0_85, %c0_86] : memref<16x128xf32, #tpu.memory_space<vmem>>, vector<16x128xf32>
    tpu.vector_store %arg24[%c0_85, %c0_86], %277 {strides = array<i32>} : memref<16x128xf32, #tpu.memory_space<vmem>>, vector<16x128xf32>,
    %c3_i32 = arith.constant 3 : i32
    %279 = arith.cmpi eq, %arg1, %c3_i32 : i32
    %280 = arith.extui %279 : i1 to i32
    %c0_i32_87 = arith.constant 0 : i32
    %281 = arith.cmpi ne, %280, %c0_i32_87 : i32
    scf.if %281 {
      %282 = vector.shape_cast %277 : vector<16x128xf32> to vector<2x8x128xf32>
      %283 = vector.extract_strided_slice %282 {offsets = [0, 7, 0], sizes = [2, 1, 128], strides = [1, 1, 1]} : vector<2x8x128xf32> to vector<2x1x128xf32>
      %284 = vector.shape_cast %283 : vector<2x1x128xf32> to vector<2x128xf32>
      %c0_88 = arith.constant 0 : index
      %c0_89 = arith.constant 0 : index
      %285 = vector.load %arg17[%c0_88, %c0_89] : memref<128x128xbf16, #tpu.memory_space<vmem>>, vector<128x128xbf16>
      %286 = arith.truncf %284 : vector<2x128xf32> to vector<2x128xbf16>
      %cst_90 = arith.constant dense<0.000000e+00> : vector<2x128xf32>
      %287 = tpu.matmul %286, %285, %cst_90 {dimension_numbers = #tpu.dot_dimension_numbers<[1], [0], [0], [1], [0, 0, 1, 1], [], []>} : vector<2x128xbf16>, vector<128x128xbf16>, vector<2x128xf32> -> vector<2x128xf32>
      %c0_91 = arith.constant 0 : index
      %c0_92 = arith.constant 0 : index
      %288 = vector.load %arg18[%c0_91, %c0_92] : memref<1x128xf32, #tpu.memory_space<vmem>>, vector<1x128xf32>
      %289 = vector.broadcast %288 : vector<1x128xf32> to vector<2x128xf32>
      %290 = arith.addf %287, %289 : vector<2x128xf32>
      %cst_93 = arith.constant 0.000000e+00 : f32
      %291 = vector.broadcast %cst_93 : f32 to vector<2x128xf32>
      %292 = arith.maximumf %290, %291 : vector<2x128xf32>
      %c0_94 = arith.constant 0 : index
      %c0_95 = arith.constant 0 : index
      %293 = vector.load %arg19[%c0_94, %c0_95] : memref<128x64xbf16, #tpu.memory_space<vmem>>, vector<128x64xbf16>
      %294 = arith.truncf %292 : vector<2x128xf32> to vector<2x128xbf16>
      %cst_96 = arith.constant dense<0.000000e+00> : vector<2x64xf32>
      %295 = tpu.matmul %294, %293, %cst_96 {dimension_numbers = #tpu.dot_dimension_numbers<[1], [0], [0], [1], [0, 0, 1, 1], [], []>} : vector<2x128xbf16>, vector<128x64xbf16>, vector<2x64xf32> -> vector<2x64xf32>
      %c0_97 = arith.constant 0 : index
      %c0_98 = arith.constant 0 : index
      %296 = vector.load %arg20[%c0_97, %c0_98] : memref<1x64xf32, #tpu.memory_space<vmem>>, vector<1x64xf32>
      %297 = vector.broadcast %296 : vector<1x64xf32> to vector<2x64xf32>
      %298 = arith.addf %295, %297 : vector<2x64xf32>
      %cst_99 = arith.constant 0.000000e+00 : f32
      %299 = vector.broadcast %cst_99 : f32 to vector<2x64xf32>
      %300 = arith.maximumf %298, %299 : vector<2x64xf32>
      %c0_100 = arith.constant 0 : index
      %c0_101 = arith.constant 0 : index
      %301 = vector.load %arg21[%c0_100, %c0_101] : memref<64x10xbf16, #tpu.memory_space<vmem>>, vector<64x10xbf16>
      %302 = arith.truncf %300 : vector<2x64xf32> to vector<2x64xbf16>
      %cst_102 = arith.constant dense<0.000000e+00> : vector<2x10xf32>
      %303 = tpu.matmul %302, %301, %cst_102 {dimension_numbers = #tpu.dot_dimension_numbers<[1], [0], [0], [1], [0, 0, 1, 1], [], []>} : vector<2x64xbf16>, vector<64x10xbf16>, vector<2x10xf32> -> vector<2x10xf32>
      %c0_103 = arith.constant 0 : index
      %c0_104 = arith.constant 0 : index
      %304 = vector.load %arg22[%c0_103, %c0_104] : memref<1x10xf32, #tpu.memory_space<vmem>>, vector<1x10xf32>
      %305 = vector.broadcast %304 : vector<1x10xf32> to vector<2x10xf32>
      %306 = arith.addf %303, %305 : vector<2x10xf32>
      %307 = vector.shape_cast %306 : vector<2x10xf32> to vector<2x1x10xf32>
      %c0_105 = arith.constant 0 : index
      %c0_106 = arith.constant 0 : index
      %c0_107 = arith.constant 0 : index
      %308 = vector.load %arg23[%c0_105, %c0_106, %c0_107] : memref<2x1x10xf32, #tpu.memory_space<vmem>>, vector<2x1x10xf32>
      tpu.vector_store %arg23[%c0_105, %c0_106, %c0_107], %307 {strides = array<i32>} : memref<2x1x10xf32, #tpu.memory_space<vmem>>, vector<2x1x10xf32>,
    } else {
    }
    return
  }
  func.func @transform_0(%arg0: i32, %arg1: i32) -> (i32, i32, i32) {
    %c0_i32 = arith.constant 0 : i32
    %c0_i32_0 = arith.constant 0 : i32
    %c0_i32_1 = arith.constant 0 : i32
    return %arg0, %c0_i32, %c0_i32_0 : i32, i32, i32
  }
  func.func @transform_1(%arg0: i32, %arg1: i32) -> (i32, i32) {
    %c0_i32 = arith.constant 0 : i32
    %c0_i32_0 = arith.constant 0 : i32
    %c0_i32_1 = arith.constant 0 : i32
    return %c0_i32, %c0_i32_0 : i32, i32
  }
  func.func @transform_2(%arg0: i32, %arg1: i32) -> (i32, i32) {
    %c0_i32 = arith.constant 0 : i32
    %c0_i32_0 = arith.constant 0 : i32
    %c0_i32_1 = arith.constant 0 : i32
    return %c0_i32, %c0_i32_0 : i32, i32
  }
  func.func @transform_3(%arg0: i32, %arg1: i32) -> (i32, i32, i32) {
    %c0_i32 = arith.constant 0 : i32
    %c0_i32_0 = arith.constant 0 : i32
    %c0_i32_1 = arith.constant 0 : i32
    return %arg1, %c0_i32, %c0_i32_0 : i32, i32, i32
  }
  func.func @transform_4(%arg0: i32, %arg1: i32) -> (i32, i32, i32) {
    %c0_i32 = arith.constant 0 : i32
    %c0_i32_0 = arith.constant 0 : i32
    %c0_i32_1 = arith.constant 0 : i32
    return %arg1, %c0_i32, %c0_i32_0 : i32, i32, i32
  }
  func.func @transform_5(%arg0: i32, %arg1: i32) -> (i32, i32, i32) {
    %c0_i32 = arith.constant 0 : i32
    %c0_i32_0 = arith.constant 0 : i32
    %c0_i32_1 = arith.constant 0 : i32
    return %arg1, %c0_i32, %c0_i32_0 : i32, i32, i32
  }
  func.func @transform_6(%arg0: i32, %arg1: i32) -> (i32, i32, i32) {
    %c0_i32 = arith.constant 0 : i32
    %c0_i32_0 = arith.constant 0 : i32
    %c0_i32_1 = arith.constant 0 : i32
    return %arg1, %c0_i32, %c0_i32_0 : i32, i32, i32
  }
  func.func @transform_7(%arg0: i32, %arg1: i32) -> (i32, i32, i32) {
    %c0_i32 = arith.constant 0 : i32
    %c0_i32_0 = arith.constant 0 : i32
    %c0_i32_1 = arith.constant 0 : i32
    return %arg1, %c0_i32, %c0_i32_0 : i32, i32, i32
  }
  func.func @transform_8(%arg0: i32, %arg1: i32) -> (i32, i32, i32) {
    %c0_i32 = arith.constant 0 : i32
    %c0_i32_0 = arith.constant 0 : i32
    %c0_i32_1 = arith.constant 0 : i32
    return %arg1, %c0_i32, %c0_i32_0 : i32, i32, i32
  }
  func.func @transform_9(%arg0: i32, %arg1: i32) -> (i32, i32, i32) {
    %c0_i32 = arith.constant 0 : i32
    %c0_i32_0 = arith.constant 0 : i32
    %c0_i32_1 = arith.constant 0 : i32
    return %arg1, %c0_i32, %c0_i32_0 : i32, i32, i32
  }
  func.func @transform_10(%arg0: i32, %arg1: i32) -> (i32, i32, i32) {
    %c0_i32 = arith.constant 0 : i32
    %c0_i32_0 = arith.constant 0 : i32
    %c0_i32_1 = arith.constant 0 : i32
    return %arg1, %c0_i32, %c0_i32_0 : i32, i32, i32
  }
  func.func @transform_11(%arg0: i32, %arg1: i32) -> (i32, i32, i32) {
    %c0_i32 = arith.constant 0 : i32
    %c0_i32_0 = arith.constant 0 : i32
    %c0_i32_1 = arith.constant 0 : i32
    return %arg1, %c0_i32, %c0_i32_0 : i32, i32, i32
  }
  func.func @transform_12(%arg0: i32, %arg1: i32) -> (i32, i32, i32) {
    %c0_i32 = arith.constant 0 : i32
    %c0_i32_0 = arith.constant 0 : i32
    %c0_i32_1 = arith.constant 0 : i32
    return %arg1, %c0_i32, %c0_i32_0 : i32, i32, i32
  }
  func.func @transform_13(%arg0: i32, %arg1: i32) -> (i32, i32, i32) {
    %c0_i32 = arith.constant 0 : i32
    %c0_i32_0 = arith.constant 0 : i32
    %c0_i32_1 = arith.constant 0 : i32
    return %arg1, %c0_i32, %c0_i32_0 : i32, i32, i32
  }
  func.func @transform_14(%arg0: i32, %arg1: i32) -> (i32, i32, i32) {
    %c0_i32 = arith.constant 0 : i32
    %c0_i32_0 = arith.constant 0 : i32
    %c0_i32_1 = arith.constant 0 : i32
    return %arg1, %c0_i32, %c0_i32_0 : i32, i32, i32
  }
  func.func @transform_15(%arg0: i32, %arg1: i32) -> (i32, i32) {
    %c0_i32 = arith.constant 0 : i32
    %c0_i32_0 = arith.constant 0 : i32
    %c0_i32_1 = arith.constant 0 : i32
    return %c0_i32, %c0_i32_0 : i32, i32
  }
  func.func @transform_16(%arg0: i32, %arg1: i32) -> (i32, i32) {
    %c0_i32 = arith.constant 0 : i32
    %c0_i32_0 = arith.constant 0 : i32
    %c0_i32_1 = arith.constant 0 : i32
    return %c0_i32, %c0_i32_0 : i32, i32
  }
  func.func @transform_17(%arg0: i32, %arg1: i32) -> (i32, i32) {
    %c0_i32 = arith.constant 0 : i32
    %c0_i32_0 = arith.constant 0 : i32
    %c0_i32_1 = arith.constant 0 : i32
    return %c0_i32, %c0_i32_0 : i32, i32
  }
  func.func @transform_18(%arg0: i32, %arg1: i32) -> (i32, i32) {
    %c0_i32 = arith.constant 0 : i32
    %c0_i32_0 = arith.constant 0 : i32
    %c0_i32_1 = arith.constant 0 : i32
    return %c0_i32, %c0_i32_0 : i32, i32
  }
  func.func @transform_19(%arg0: i32, %arg1: i32) -> (i32, i32) {
    %c0_i32 = arith.constant 0 : i32
    %c0_i32_0 = arith.constant 0 : i32
    %c0_i32_1 = arith.constant 0 : i32
    return %c0_i32, %c0_i32_0 : i32, i32
  }
  func.func @transform_20(%arg0: i32, %arg1: i32) -> (i32, i32) {
    %c0_i32 = arith.constant 0 : i32
    %c0_i32_0 = arith.constant 0 : i32
    %c0_i32_1 = arith.constant 0 : i32
    return %c0_i32, %c0_i32_0 : i32, i32
  }
  func.func @transform_21(%arg0: i32, %arg1: i32) -> (i32, i32, i32) {
    %c0_i32 = arith.constant 0 : i32
    %c0_i32_0 = arith.constant 0 : i32
    %c0_i32_1 = arith.constant 0 : i32
    return %arg0, %c0_i32, %c0_i32_0 : i32, i32, i32
  }
}

</mosaic_0001>

<llo_original>
// kernel: tpu_custom_call.1
$region0: #{tpu_custom_call.1}
  #allocation0 [shape = 'u32[]', space=smem, size = 0x4, offset = 0x4, fixed_abs, tag = 'smem constant byte address 0x4 - core index']
  #allocation1 [shape = 'u32[144,128]{1,0:T(1,128)}', space=vmem, size = 0x12000, scoped, tag = 'internal scratch']
  #allocation2 [shape = 'f32[16,128]{1,0:T(8,128)}', space=vmem, size = 0x2000, scoped, tag = 'scratch operand']
  %s0 = inlined_call_operand.hbm [shape: f32[2,8,16], index: 0, kind: input, shape index: {}]
  %s1 = inlined_call_operand.hbm [shape: bf16[16,128], index: 1, kind: input, shape index: {}]
  %s2 = inlined_call_operand.hbm [shape: f32[1,128], index: 2, kind: input, shape index: {}]
  %s3 = inlined_call_operand.hbm [shape: bf16[4,128,384], index: 3, kind: input, shape index: {}]
  %s4 = inlined_call_operand.hbm [shape: f32[4,1,384], index: 4, kind: input, shape index: {}]
  %s5 = inlined_call_operand.hbm [shape: bf16[4,128,128], index: 5, kind: input, shape index: {}]
  %s6 = inlined_call_operand.hbm [shape: f32[4,1,128], index: 6, kind: input, shape index: {}]
  %s7 = inlined_call_operand.hbm [shape: f32[4,1,128], index: 7, kind: input, shape index: {}]
  %s8 = inlined_call_operand.hbm [shape: f32[4,1,128], index: 8, kind: input, shape index: {}]
  %s9 = inlined_call_operand.hbm [shape: bf16[4,128,2048], index: 9, kind: input, shape index: {}]
  %s10 = inlined_call_operand.hbm [shape: f32[4,1,2048], index: 10, kind: input, shape index: {}]
  %s11 = inlined_call_operand.hbm [shape: bf16[4,2048,128], index: 11, kind: input, shape index: {}]
  %s12 = inlined_call_operand.hbm [shape: f32[4,1,128], index: 12, kind: input, shape index: {}]
  %s13 = inlined_call_operand.hbm [shape: f32[4,1,128], index: 13, kind: input, shape index: {}]
  %s14 = inlined_call_operand.hbm [shape: f32[4,1,128], index: 14, kind: input, shape index: {}]
  %s15 = inlined_call_operand.hbm [shape: bf16[128,128], index: 15, kind: input, shape index: {}]
  %s16 = inlined_call_operand.hbm [shape: f32[1,128], index: 16, kind: input, shape index: {}]
  %s17 = inlined_call_operand.vmem [shape: bf16[128,64], index: 17, kind: input, shape index: {}]
  %s18 = inlined_call_operand.hbm [shape: f32[1,64], index: 18, kind: input, shape index: {}]
  %s19 = inlined_call_operand.vmem [shape: bf16[64,10], index: 19, kind: input, shape index: {}]
  %s20 = inlined_call_operand.hbm [shape: f32[1,10], index: 20, kind: input, shape index: {}]
  %s21 = inlined_call_operand.hbm [shape: f32[2,1,10], index: 21, kind: output, shape index: {}]
  %s22 = sld [smem:[#allocation0]]
  $region201: #{tpu_custom_call.1} parent=0
    _
  %s24 = ssub.s32 1, %s22
  %s25 = scalar_select 0, %s24, %s22
  $region1: #{tpu_custom_call.1} parent=0
    #allocation3 [shape = 'u8[8192]{0}', space=vmem, size = 0x2000, scoped, tag = 'input window, operand 0, single buffered']
    #allocation4 [shape = 's32[2]{0}', space=sflag, size = 0x8, scoped, tag = 'scoped memory for tpu_custom_call.1']
    #allocation5 [shape = 's32[2]{0}', space=sflag, size = 0x8, scoped, tag = 'scoped memory for tpu_custom_call.1']
    #allocation6 [shape = 'u8[4096]{0}', space=vmem, size = 0x1000, scoped, tag = 'input window, operand 1, single buffered']
    #allocation7 [shape = 's32[1]{0}', space=sflag, size = 0x4, scoped, tag = 'scoped memory for tpu_custom_call.1']
    #allocation8 [shape = 'u8[512]{0}', space=vmem, size = 0x400, scoped, tag = 'input window, operand 2, single buffered']
    #allocation9 [shape = 'u8[196608]{0}', space=vmem, size = 0x30000, scoped, tag = 'input window, operand 3']
    #allocation10 [shape = 's32[2]{0}', space=sflag, size = 0x8, scoped, tag = 'scoped memory for tpu_custom_call.1']
    #allocation11 [shape = 'u8[3072]{0}', space=vmem, size = 0xc00, scoped, tag = 'input window, operand 4']
    #allocation12 [shape = 'u8[65536]{0}', space=vmem, size = 0x10000, scoped, tag = 'input window, operand 5']
    #allocation13 [shape = 's32[2]{0}', space=sflag, size = 0x8, scoped, tag = 'scoped memory for tpu_custom_call.1']
    #allocation14 [shape = 'u8[1024]{0}', space=vmem, size = 0x400, scoped, tag = 'input window, operand 6']
    #allocation15 [shape = 'u8[1024]{0}', space=vmem, size = 0x400, scoped, tag = 'input window, operand 7']
    #allocation16 [shape = 's32[2]{0}', space=sflag, size = 0x8, scoped, tag = 'scoped memory for tpu_custom_call.1']
    #allocation17 [shape = 'u8[1024]{0}', space=vmem, size = 0x400, scoped, tag = 'input window, operand 8']
    #allocation18 [shape = 'u8[1048576]{0}', space=vmem, size = 0x100000, scoped, tag = 'input window, operand 9']
    #allocation19 [shape = 's32[2]{0}', space=sflag, size = 0x8, scoped, tag = 'scoped memory for tpu_custom_call.1']
    #allocation20 [shape = 'u8[16384]{0}', space=vmem, size = 0x4000, scoped, tag = 'input window, operand 10']
    #allocation21 [shape = 'u8[1048576]{0}', space=vmem, size = 0x100000, scoped, tag = 'input window, operand 11']
    #allocation22 [shape = 's32[2]{0}', space=sflag, size = 0x8, scoped, tag = 'scoped memory for tpu_custom_call.1']
    #allocation23 [shape = 'u8[1024]{0}', space=vmem, size = 0x400, scoped, tag = 'input window, operand 12']
    #allocation24 [shape = 'u8[1024]{0}', space=vmem, size = 0x400, scoped, tag = 'input window, operand 13']
    #allocation25 [shape = 's32[2]{0}', space=sflag, size = 0x8, scoped, tag = 'scoped memory for tpu_custom_call.1']
    #allocation26 [shape = 'u8[1024]{0}', space=vmem, size = 0x400, scoped, tag = 'input window, operand 14']
    #allocation27 [shape = 'u8[32768]{0}', space=vmem, size = 0x8000, scoped, tag = 'input window, operand 15, single buffered']
    #allocation28 [shape = 's32[1]{0}', space=sflag, size = 0x4, scoped, tag = 'scoped memory for tpu_custom_call.1']
    #allocation29 [shape = 'u8[512]{0}', space=vmem, size = 0x400, scoped, tag = 'input window, operand 16, single buffered']
    #allocation30 [shape = 'u8[512]{0}', space=vmem, size = 0x400, scoped, tag = 'input window, operand 18, single buffered']
    #allocation31 [shape = 's32[1]{0}', space=sflag, size = 0x4, scoped, tag = 'scoped memory for tpu_custom_call.1']
    #allocation32 [shape = 'u8[512]{0}', space=vmem, size = 0x400, scoped, tag = 'input window, operand 20, single buffered']
    #allocation33 [shape = 'u8[1024]{0}', space=vmem, size = 0x400, scoped, tag = 'output window, operand 0, single buffered']
    %26 = vsyncpa [#allocation4], 0
    %27 = vsyncpa [#allocation7], 0
    %28 = vsyncpa [#allocation10], 0
    %s29 = scalar_lea.sflag [#allocation10], 1
    %30 = vsyncpa %s29, 0
    %31 = vsyncpa [#allocation13], 0
    %s32 = scalar_lea.sflag [#allocation13], 1
    %33 = vsyncpa %s32, 0
    %34 = vsyncpa [#allocation16], 0
    %s35 = scalar_lea.sflag [#allocation16], 1
    %36 = vsyncpa %s35, 0
    %37 = vsyncpa [#allocation19], 0
    %s38 = scalar_lea.sflag [#allocation19], 1
    %39 = vsyncpa %s38, 0
    %40 = vsyncpa [#allocation22], 0
    %s41 = scalar_lea.sflag [#allocation22], 1
    %42 = vsyncpa %s41, 0
    %43 = vsyncpa [#allocation25], 0
    %s44 = scalar_lea.sflag [#allocation25], 1
    %45 = vsyncpa %s44, 0
    %46 = vsyncpa [#allocation28], 0
    %47 = vsyncpa [#allocation31], 0
    %48 = vsyncpa [#allocation5], 0
    loop: start=0, step=1, limit=6
    $region2: #{tpu_custom_call.1} parent=1 // loop_pre_header
      _
    $region3: #{tpu_custom_call.1} parent=1 // loop_header
      %s50 = sphi 0, %s54
      %p51 = scmp.ge.s32.totalorder %s50, 6
      %s57 = sphi 0, %s69
      %s58 = sphi 0, %s65
      %s59 = sphi 0, %s57
      %s60 = sphi 0, %s58
      %s61 = sphi 0, %s59
      %s62 = sphi 0, %s60
      %s72 = sphi 0, %s74
      %s75 = sphi 0, %s72
      %s76 = sphi 0, %s75
      %s92 = sphi 0, %s76
      %s96 = sphi 0, %s96
      %s98 = sphi 0, %s96
      %s99 = sphi 0, %s98
      %s113 = sphi 0, %s99
      %s117 = sphi 0, %s117
      %s119 = sphi 0, %s117
      %s120 = sphi 0, %s119
      %s134 = sphi 0, %s120
      %s140 = sphi 0, %s142
      %s143 = sphi 0, %s140
      %s144 = sphi 0, %s143
      %s160 = sphi 0, %s144
      %s166 = sphi 0, %s168
      %s169 = sphi 0, %s166
      %s170 = sphi 0, %s169
      %s186 = sphi 0, %s170
      %s192 = sphi 0, %s194
      %s195 = sphi 0, %s192
      %s196 = sphi 0, %s195
      %s212 = sphi 0, %s196
      %s218 = sphi 0, %s220
      %s221 = sphi 0, %s218
      %s222 = sphi 0, %s221
      %s238 = sphi 0, %s222
      %s244 = sphi 0, %s246
      %s247 = sphi 0, %s244
      %s248 = sphi 0, %s247
      %s264 = sphi 0, %s248
      %s270 = sphi 0, %s272
      %s273 = sphi 0, %s270
      %s274 = sphi 0, %s273
      %s290 = sphi 0, %s274
      %s296 = sphi 0, %s298
      %s299 = sphi 0, %s296
      %s300 = sphi 0, %s299
      %s316 = sphi 0, %s300
      %s322 = sphi 0, %s324
      %s325 = sphi 0, %s322
      %s326 = sphi 0, %s325
      %s342 = sphi 0, %s326
      %s348 = sphi 0, %s350
      %s351 = sphi 0, %s348
      %s352 = sphi 0, %s351
      %s368 = sphi 0, %s352
      %s374 = sphi 0, %s376
      %s377 = sphi 0, %s374
      %s378 = sphi 0, %s377
      %s394 = sphi 0, %s378
      %s400 = sphi 0, %s402
      %s403 = sphi 0, %s400
      %s404 = sphi 0, %s403
      %s420 = sphi 0, %s404
      %s426 = sphi 0, %s428
      %s429 = sphi 0, %s426
      %s430 = sphi 0, %s429
      %s446 = sphi 0, %s430
      %s450 = sphi 0, %s450
      %s452 = sphi 0, %s450
      %s453 = sphi 0, %s452
      %s467 = sphi 0, %s453
      %s471 = sphi 0, %s471
      %s473 = sphi 0, %s471
      %s474 = sphi 0, %s473
      %s488 = sphi 0, %s474
      %s492 = sphi 0, %s492
      %s494 = sphi 0, %s492
      %s495 = sphi 0, %s494
      %s509 = sphi 0, %s495
      %s513 = sphi 0, %s513
      %s515 = sphi 0, %s513
      %s516 = sphi 0, %s515
      %s530 = sphi 0, %s516
      %s534 = sphi 0, %s534
      %s536 = sphi 0, %s534
      %s537 = sphi 0, %s536
      %s551 = sphi 0, %s537
      %s555 = sphi 0, %s555
      %s557 = sphi 0, %s555
      %s558 = sphi 0, %s557
      %s572 = sphi 0, %s558
      %s578 = sphi 0, %s580
      %s581 = sphi 0, %s578
      %s582 = sphi 0, %s581
      %s598 = sphi 0, %s582
    $region4: #{tpu_custom_call.1} parent=1 // loop_header_branch
      %53 = sbr.rel (%p51) target = $region8
    $region5: #{tpu_custom_call.1} parent=1 // loop_body
      %s55 = ssub.s32 %s50, 1
      %s56 = ssub.s32 %s50, 2
      %s63 = sadd.s32 1, %s58
      %p64 = scmp.ge.s32.totalorder %s63, 4
      %s65 = scalar_select %p64, 0, %s63
      %s66 = sadd.s32 1, %s57
      %s67 = scalar_select %p64, %s66, %s57
      %p68 = scmp.ge.s32.totalorder %s67, 1
      %s69 = scalar_select %p68, 0, %s67
      %s70 = ssub.s32 %s57, %s69
      %p71 = scmp.eq.s32.totalorder %s70, 0
      %s73 = sadd.s32 %s72, 1
      %s74 = scalar_select %p71, %s72, %s73
      %p77 = pneg %p71
      %p78 = scmp.eq.s32.totalorder %s50, 3
      %p79 = por %p77, %p78
      %p80 = scmp.ne.s32.totalorder %s72, %s75
      %p81 = scmp.eq.s32.totalorder %s50, 0
      %p82 = por %p80, %p81
      %p83 = scmp.ne.s32.totalorder %s72, %s75
      %p84 = scmp.eq.s32.totalorder %s55, 3
      %p85 = por %p83, %p84
      %p86 = scmp.ne.s32.totalorder %s75, %s76
      %p87 = scmp.eq.s32.totalorder %s55, 0
      %p88 = por %p86, %p87
      %p89 = scmp.ne.s32.totalorder %s75, %s76
      %p90 = scmp.eq.s32.totalorder %s56, 3
      %p91 = por %p89, %p90
      %p93 = scmp.ne.s32.totalorder %s76, %s92
      %p94 = scmp.eq.s32.totalorder %s56, 0
      %p95 = por %p93, %p94
      %s97 = sadd.s32 %s96, 1
      %p100 = scmp.eq.s32.totalorder %s50, 3
      %p101 = scmp.ne.s32.totalorder %s96, %s98
      %p102 = scmp.eq.s32.totalorder %s50, 0
      %p103 = por %p101, %p102
      %p104 = scmp.ne.s32.totalorder %s96, %s98
      %p105 = scmp.eq.s32.totalorder %s55, 3
      %p106 = por %p104, %p105
      %p107 = scmp.ne.s32.totalorder %s98, %s99
      %p108 = scmp.eq.s32.totalorder %s55, 0
      %p109 = por %p107, %p108
      %p110 = scmp.ne.s32.totalorder %s98, %s99
      %p111 = scmp.eq.s32.totalorder %s56, 3
      %p112 = por %p110, %p111
      %p114 = scmp.ne.s32.totalorder %s99, %s113
      %p115 = scmp.eq.s32.totalorder %s56, 0
      %p116 = por %p114, %p115
      %s118 = sadd.s32 %s117, 1
      %p121 = scmp.eq.s32.totalorder %s50, 3
      %p122 = scmp.ne.s32.totalorder %s117, %s119
      %p123 = scmp.eq.s32.totalorder %s50, 0
      %p124 = por %p122, %p123
      %p125 = scmp.ne.s32.totalorder %s117, %s119
      %p126 = scmp.eq.s32.totalorder %s55, 3
      %p127 = por %p125, %p126
      %p128 = scmp.ne.s32.totalorder %s119, %s120
      %p129 = scmp.eq.s32.totalorder %s55, 0
      %p130 = por %p128, %p129
      %p131 = scmp.ne.s32.totalorder %s119, %s120
      %p132 = scmp.eq.s32.totalorder %s56, 3
      %p133 = por %p131, %p132
      %p135 = scmp.ne.s32.totalorder %s120, %s134
      %p136 = scmp.eq.s32.totalorder %s56, 0
      %p137 = por %p135, %p136
      %s138 = ssub.s32 %s58, %s65
      %p139 = scmp.eq.s32.totalorder %s138, 0
      %s141 = sadd.s32 %s140, 1
      %s142 = scalar_select %p139, %s140, %s141
      %p145 = pneg %p139
      %p146 = scmp.eq.s32.totalorder %s50, 3
      %p147 = por %p145, %p146
      %p148 = scmp.ne.s32.totalorder %s140, %s143
      %p149 = scmp.eq.s32.totalorder %s50, 0
      %p150 = por %p148, %p149
      %p151 = scmp.ne.s32.totalorder %s140, %s143
      %p152 = scmp.eq.s32.totalorder %s55, 3
      %p153 = por %p151, %p152
      %p154 = scmp.ne.s32.totalorder %s143, %s144
      %p155 = scmp.eq.s32.totalorder %s55, 0
      %p156 = por %p154, %p155
      %p157 = scmp.ne.s32.totalorder %s143, %s144
      %p158 = scmp.eq.s32.totalorder %s56, 3
      %p159 = por %p157, %p158
      %p161 = scmp.ne.s32.totalorder %s144, %s160
      %p162 = scmp.eq.s32.totalorder %s56, 0
      %p163 = por %p161, %p162
      %s164 = ssub.s32 %s58, %s65
      %p165 = scmp.eq.s32.totalorder %s164, 0
      %s167 = sadd.s32 %s166, 1
      %s168 = scalar_select %p165, %s166, %s167
      %p171 = pneg %p165
      %p172 = scmp.eq.s32.totalorder %s50, 3
      %p173 = por %p171, %p172
      %p174 = scmp.ne.s32.totalorder %s166, %s169
      %p175 = scmp.eq.s32.totalorder %s50, 0
      %p176 = por %p174, %p175
      %p177 = scmp.ne.s32.totalorder %s166, %s169
      %p178 = scmp.eq.s32.totalorder %s55, 3
      %p179 = por %p177, %p178
      %p180 = scmp.ne.s32.totalorder %s169, %s170
      %p181 = scmp.eq.s32.totalorder %s55, 0
      %p182 = por %p180, %p181
      %p183 = scmp.ne.s32.totalorder %s169, %s170
      %p184 = scmp.eq.s32.totalorder %s56, 3
      %p185 = por %p183, %p184
      %p187 = scmp.ne.s32.totalorder %s170, %s186
      %p188 = scmp.eq.s32.totalorder %s56, 0
      %p189 = por %p187, %p188
      %s190 = ssub.s32 %s58, %s65
      %p191 = scmp.eq.s32.totalorder %s190, 0
      %s193 = sadd.s32 %s192, 1
      %s194 = scalar_select %p191, %s192, %s193
      %p197 = pneg %p191
      %p198 = scmp.eq.s32.totalorder %s50, 3
      %p199 = por %p197, %p198
      %p200 = scmp.ne.s32.totalorder %s192, %s195
      %p201 = scmp.eq.s32.totalorder %s50, 0
      %p202 = por %p200, %p201
      %p203 = scmp.ne.s32.totalorder %s192, %s195
      %p204 = scmp.eq.s32.totalorder %s55, 3
      %p205 = por %p203, %p204
      %p206 = scmp.ne.s32.totalorder %s195, %s196
      %p207 = scmp.eq.s32.totalorder %s55, 0
      %p208 = por %p206, %p207
      %p209 = scmp.ne.s32.totalorder %s195, %s196
      %p210 = scmp.eq.s32.totalorder %s56, 3
      %p211 = por %p209, %p210
      %p213 = scmp.ne.s32.totalorder %s196, %s212
      %p214 = scmp.eq.s32.totalorder %s56, 0
      %p215 = por %p213, %p214
      %s216 = ssub.s32 %s58, %s65
      %p217 = scmp.eq.s32.totalorder %s216, 0
      %s219 = sadd.s32 %s218, 1
      %s220 = scalar_select %p217, %s218, %s219
      %p223 = pneg %p217
      %p224 = scmp.eq.s32.totalorder %s50, 3
      %p225 = por %p223, %p224
      %p226 = scmp.ne.s32.totalorder %s218, %s221
      %p227 = scmp.eq.s32.totalorder %s50, 0
      %p228 = por %p226, %p227
      %p229 = scmp.ne.s32.totalorder %s218, %s221
      %p230 = scmp.eq.s32.totalorder %s55, 3
      %p231 = por %p229, %p230
      %p232 = scmp.ne.s32.totalorder %s221, %s222
      %p233 = scmp.eq.s32.totalorder %s55, 0
      %p234 = por %p232, %p233
      %p235 = scmp.ne.s32.totalorder %s221, %s222
      %p236 = scmp.eq.s32.totalorder %s56, 3
      %p237 = por %p235, %p236
      %p239 = scmp.ne.s32.totalorder %s222, %s238
      %p240 = scmp.eq.s32.totalorder %s56, 0
      %p241 = por %p239, %p240
      %s242 = ssub.s32 %s58, %s65
      %p243 = scmp.eq.s32.totalorder %s242, 0
      %s245 = sadd.s32 %s244, 1
      %s246 = scalar_select %p243, %s244, %s245
      %p249 = pneg %p243
      %p250 = scmp.eq.s32.totalorder %s50, 3
      %p251 = por %p249, %p250
      %p252 = scmp.ne.s32.totalorder %s244, %s247
      %p253 = scmp.eq.s32.totalorder %s50, 0
      %p254 = por %p252, %p253
      %p255 = scmp.ne.s32.totalorder %s244, %s247
      %p256 = scmp.eq.s32.totalorder %s55, 3
      %p257 = por %p255, %p256
      %p258 = scmp.ne.s32.totalorder %s247, %s248
      %p259 = scmp.eq.s32.totalorder %s55, 0
      %p260 = por %p258, %p259
      %p261 = scmp.ne.s32.totalorder %s247, %s248
      %p262 = scmp.eq.s32.totalorder %s56, 3
      %p263 = por %p261, %p262
      %p265 = scmp.ne.s32.totalorder %s248, %s264
      %p266 = scmp.eq.s32.totalorder %s56, 0
      %p267 = por %p265, %p266
      %s268 = ssub.s32 %s58, %s65
      %p269 = scmp.eq.s32.totalorder %s268, 0
      %s271 = sadd.s32 %s270, 1
      %s272 = scalar_select %p269, %s270, %s271
      %p275 = pneg %p269
      %p276 = scmp.eq.s32.totalorder %s50, 3
      %p277 = por %p275, %p276
      %p278 = scmp.ne.s32.totalorder %s270, %s273
      %p279 = scmp.eq.s32.totalorder %s50, 0
      %p280 = por %p278, %p279
      %p281 = scmp.ne.s32.totalorder %s270, %s273
      %p282 = scmp.eq.s32.totalorder %s55, 3
      %p283 = por %p281, %p282
      %p284 = scmp.ne.s32.totalorder %s273, %s274
      %p285 = scmp.eq.s32.totalorder %s55, 0
      %p286 = por %p284, %p285
      %p287 = scmp.ne.s32.totalorder %s273, %s274
      %p288 = scmp.eq.s32.totalorder %s56, 3
      %p289 = por %p287, %p288
      %p291 = scmp.ne.s32.totalorder %s274, %s290
      %p292 = scmp.eq.s32.totalorder %s56, 0
      %p293 = por %p291, %p292
      %s294 = ssub.s32 %s58, %s65
      %p295 = scmp.eq.s32.totalorder %s294, 0
      %s297 = sadd.s32 %s296, 1
      %s298 = scalar_select %p295, %s296, %s297
      %p301 = pneg %p295
      %p302 = scmp.eq.s32.totalorder %s50, 3
      %p303 = por %p301, %p302
      %p304 = scmp.ne.s32.totalorder %s296, %s299
      %p305 = scmp.eq.s32.totalorder %s50, 0
      %p306 = por %p304, %p305
      %p307 = scmp.ne.s32.totalorder %s296, %s299
      %p308 = scmp.eq.s32.totalorder %s55, 3
      %p309 = por %p307, %p308
      %p310 = scmp.ne.s32.totalorder %s299, %s300
      %p311 = scmp.eq.s32.totalorder %s55, 0
      %p312 = por %p310, %p311
      %p313 = scmp.ne.s32.totalorder %s299, %s300
      %p314 = scmp.eq.s32.totalorder %s56, 3
      %p315 = por %p313, %p314
      %p317 = scmp.ne.s32.totalorder %s300, %s316
      %p318 = scmp.eq.s32.totalorder %s56, 0
      %p319 = por %p317, %p318
      %s320 = ssub.s32 %s58, %s65
      %p321 = scmp.eq.s32.totalorder %s320, 0
      %s323 = sadd.s32 %s322, 1
      %s324 = scalar_select %p321, %s322, %s323
      %p327 = pneg %p321
      %p328 = scmp.eq.s32.totalorder %s50, 3
      %p329 = por %p327, %p328
      %p330 = scmp.ne.s32.totalorder %s322, %s325
      %p331 = scmp.eq.s32.totalorder %s50, 0
      %p332 = por %p330, %p331
      %p333 = scmp.ne.s32.totalorder %s322, %s325
      %p334 = scmp.eq.s32.totalorder %s55, 3
      %p335 = por %p333, %p334
      %p336 = scmp.ne.s32.totalorder %s325, %s326
      %p337 = scmp.eq.s32.totalorder %s55, 0
      %p338 = por %p336, %p337
      %p339 = scmp.ne.s32.totalorder %s325, %s326
      %p340 = scmp.eq.s32.totalorder %s56, 3
      %p341 = por %p339, %p340
      %p343 = scmp.ne.s32.totalorder %s326, %s342
      %p344 = scmp.eq.s32.totalorder %s56, 0
      %p345 = por %p343, %p344
      %s346 = ssub.s32 %s58, %s65
      %p347 = scmp.eq.s32.totalorder %s346, 0
      %s349 = sadd.s32 %s348, 1
      %s350 = scalar_select %p347, %s348, %s349
      %p353 = pneg %p347
      %p354 = scmp.eq.s32.totalorder %s50, 3
      %p355 = por %p353, %p354
      %p356 = scmp.ne.s32.totalorder %s348, %s351
      %p357 = scmp.eq.s32.totalorder %s50, 0
      %p358 = por %p356, %p357
      %p359 = scmp.ne.s32.totalorder %s348, %s351
      %p360 = scmp.eq.s32.totalorder %s55, 3
      %p361 = por %p359, %p360
      %p362 = scmp.ne.s32.totalorder %s351, %s352
      %p363 = scmp.eq.s32.totalorder %s55, 0
      %p364 = por %p362, %p363
      %p365 = scmp.ne.s32.totalorder %s351, %s352
      %p366 = scmp.eq.s32.totalorder %s56, 3
      %p367 = por %p365, %p366
      %p369 = scmp.ne.s32.totalorder %s352, %s368
      %p370 = scmp.eq.s32.totalorder %s56, 0
      %p371 = por %p369, %p370
      %s372 = ssub.s32 %s58, %s65
      %p373 = scmp.eq.s32.totalorder %s372, 0
      %s375 = sadd.s32 %s374, 1
      %s376 = scalar_select %p373, %s374, %s375
      %p379 = pneg %p373
      %p380 = scmp.eq.s32.totalorder %s50, 3
      %p381 = por %p379, %p380
      %p382 = scmp.ne.s32.totalorder %s374, %s377
      %p383 = scmp.eq.s32.totalorder %s50, 0
      %p384 = por %p382, %p383
      %p385 = scmp.ne.s32.totalorder %s374, %s377
      %p386 = scmp.eq.s32.totalorder %s55, 3
      %p387 = por %p385, %p386
      %p388 = scmp.ne.s32.totalorder %s377, %s378
      %p389 = scmp.eq.s32.totalorder %s55, 0
      %p390 = por %p388, %p389
      %p391 = scmp.ne.s32.totalorder %s377, %s378
      %p392 = scmp.eq.s32.totalorder %s56, 3
      %p393 = por %p391, %p392
      %p395 = scmp.ne.s32.totalorder %s378, %s394
      %p396 = scmp.eq.s32.totalorder %s56, 0
      %p397 = por %p395, %p396
      %s398 = ssub.s32 %s58, %s65
      %p399 = scmp.eq.s32.totalorder %s398, 0
      %s401 = sadd.s32 %s400, 1
      %s402 = scalar_select %p399, %s400, %s401
      %p405 = pneg %p399
      %p406 = scmp.eq.s32.totalorder %s50, 3
      %p407 = por %p405, %p406
      %p408 = scmp.ne.s32.totalorder %s400, %s403
      %p409 = scmp.eq.s32.totalorder %s50, 0
      %p410 = por %p408, %p409
      %p411 = scmp.ne.s32.totalorder %s400, %s403
      %p412 = scmp.eq.s32.totalorder %s55, 3
      %p413 = por %p411, %p412
      %p414 = scmp.ne.s32.totalorder %s403, %s404
      %p415 = scmp.eq.s32.totalorder %s55, 0
      %p416 = por %p414, %p415
      %p417 = scmp.ne.s32.totalorder %s403, %s404
      %p418 = scmp.eq.s32.totalorder %s56, 3
      %p419 = por %p417, %p418
      %p421 = scmp.ne.s32.totalorder %s404, %s420
      %p422 = scmp.eq.s32.totalorder %s56, 0
      %p423 = por %p421, %p422
      %s424 = ssub.s32 %s58, %s65
      %p425 = scmp.eq.s32.totalorder %s424, 0
      %s427 = sadd.s32 %s426, 1
      %s428 = scalar_select %p425, %s426, %s427
      %p431 = pneg %p425
      %p432 = scmp.eq.s32.totalorder %s50, 3
      %p433 = por %p431, %p432
      %p434 = scmp.ne.s32.totalorder %s426, %s429
      %p435 = scmp.eq.s32.totalorder %s50, 0
      %p436 = por %p434, %p435
      %p437 = scmp.ne.s32.totalorder %s426, %s429
      %p438 = scmp.eq.s32.totalorder %s55, 3
      %p439 = por %p437, %p438
      %p440 = scmp.ne.s32.totalorder %s429, %s430
      %p441 = scmp.eq.s32.totalorder %s55, 0
      %p442 = por %p440, %p441
      %p443 = scmp.ne.s32.totalorder %s429, %s430
      %p444 = scmp.eq.s32.totalorder %s56, 3
      %p445 = por %p443, %p444
      %p447 = scmp.ne.s32.totalorder %s430, %s446
      %p448 = scmp.eq.s32.totalorder %s56, 0
      %p449 = por %p447, %p448
      %s451 = sadd.s32 %s450, 1
      %p454 = scmp.eq.s32.totalorder %s50, 3
      %p455 = scmp.ne.s32.totalorder %s450, %s452
      %p456 = scmp.eq.s32.totalorder %s50, 0
      %p457 = por %p455, %p456
      %p458 = scmp.ne.s32.totalorder %s450, %s452
      %p459 = scmp.eq.s32.totalorder %s55, 3
      %p460 = por %p458, %p459
      %p461 = scmp.ne.s32.totalorder %s452, %s453
      %p462 = scmp.eq.s32.totalorder %s55, 0
      %p463 = por %p461, %p462
      %p464 = scmp.ne.s32.totalorder %s452, %s453
      %p465 = scmp.eq.s32.totalorder %s56, 3
      %p466 = por %p464, %p465
      %p468 = scmp.ne.s32.totalorder %s453, %s467
      %p469 = scmp.eq.s32.totalorder %s56, 0
      %p470 = por %p468, %p469
      %s472 = sadd.s32 %s471, 1
      %p475 = scmp.eq.s32.totalorder %s50, 3
      %p476 = scmp.ne.s32.totalorder %s471, %s473
      %p477 = scmp.eq.s32.totalorder %s50, 0
      %p478 = por %p476, %p477
      %p479 = scmp.ne.s32.totalorder %s471, %s473
      %p480 = scmp.eq.s32.totalorder %s55, 3
      %p481 = por %p479, %p480
      %p482 = scmp.ne.s32.totalorder %s473, %s474
      %p483 = scmp.eq.s32.totalorder %s55, 0
      %p484 = por %p482, %p483
      %p485 = scmp.ne.s32.totalorder %s473, %s474
      %p486 = scmp.eq.s32.totalorder %s56, 3
      %p487 = por %p485, %p486
      %p489 = scmp.ne.s32.totalorder %s474, %s488
      %p490 = scmp.eq.s32.totalorder %s56, 0
      %p491 = por %p489, %p490
      %s493 = sadd.s32 %s492, 1
      %p496 = scmp.eq.s32.totalorder %s50, 3
      %p497 = scmp.ne.s32.totalorder %s492, %s494
      %p498 = scmp.eq.s32.totalorder %s50, 0
      %p499 = por %p497, %p498
      %p500 = scmp.ne.s32.totalorder %s492, %s494
      %p501 = scmp.eq.s32.totalorder %s55, 3
      %p502 = por %p500, %p501
      %p503 = scmp.ne.s32.totalorder %s494, %s495
      %p504 = scmp.eq.s32.totalorder %s55, 0
      %p505 = por %p503, %p504
      %p506 = scmp.ne.s32.totalorder %s494, %s495
      %p507 = scmp.eq.s32.totalorder %s56, 3
      %p508 = por %p506, %p507
      %p510 = scmp.ne.s32.totalorder %s495, %s509
      %p511 = scmp.eq.s32.totalorder %s56, 0
      %p512 = por %p510, %p511
      %s514 = sadd.s32 %s513, 1
      %p517 = scmp.eq.s32.totalorder %s50, 3
      %p518 = scmp.ne.s32.totalorder %s513, %s515
      %p519 = scmp.eq.s32.totalorder %s50, 0
      %p520 = por %p518, %p519
      %p521 = scmp.ne.s32.totalorder %s513, %s515
      %p522 = scmp.eq.s32.totalorder %s55, 3
      %p523 = por %p521, %p522
      %p524 = scmp.ne.s32.totalorder %s515, %s516
      %p525 = scmp.eq.s32.totalorder %s55, 0
      %p526 = por %p524, %p525
      %p527 = scmp.ne.s32.totalorder %s515, %s516
      %p528 = scmp.eq.s32.totalorder %s56, 3
      %p529 = por %p527, %p528
      %p531 = scmp.ne.s32.totalorder %s516, %s530
      %p532 = scmp.eq.s32.totalorder %s56, 0
      %p533 = por %p531, %p532
      %s535 = sadd.s32 %s534, 1
      %p538 = scmp.eq.s32.totalorder %s50, 3
      %p539 = scmp.ne.s32.totalorder %s534, %s536
      %p540 = scmp.eq.s32.totalorder %s50, 0
      %p541 = por %p539, %p540
      %p542 = scmp.ne.s32.totalorder %s534, %s536
      %p543 = scmp.eq.s32.totalorder %s55, 3
      %p544 = por %p542, %p543
      %p545 = scmp.ne.s32.totalorder %s536, %s537
      %p546 = scmp.eq.s32.totalorder %s55, 0
      %p547 = por %p545, %p546
      %p548 = scmp.ne.s32.totalorder %s536, %s537
      %p549 = scmp.eq.s32.totalorder %s56, 3
      %p550 = por %p548, %p549
      %p552 = scmp.ne.s32.totalorder %s537, %s551
      %p553 = scmp.eq.s32.totalorder %s56, 0
      %p554 = por %p552, %p553
      %s556 = sadd.s32 %s555, 1
      %p559 = scmp.eq.s32.totalorder %s50, 3
      %p560 = scmp.ne.s32.totalorder %s555, %s557
      %p561 = scmp.eq.s32.totalorder %s50, 0
      %p562 = por %p560, %p561
      %p563 = scmp.ne.s32.totalorder %s555, %s557
      %p564 = scmp.eq.s32.totalorder %s55, 3
      %p565 = por %p563, %p564
      %p566 = scmp.ne.s32.totalorder %s557, %s558
      %p567 = scmp.eq.s32.totalorder %s55, 0
      %p568 = por %p566, %p567
      %p569 = scmp.ne.s32.totalorder %s557, %s558
      %p570 = scmp.eq.s32.totalorder %s56, 3
      %p571 = por %p569, %p570
      %p573 = scmp.ne.s32.totalorder %s558, %s572
      %p574 = scmp.eq.s32.totalorder %s56, 0
      %p575 = por %p573, %p574
      %s576 = ssub.s32 %s57, %s69
      %p577 = scmp.eq.s32.totalorder %s576, 0
      %s579 = sadd.s32 %s578, 1
      %s580 = scalar_select %p577, %s578, %s579
      %p583 = pneg %p577
      %p584 = scmp.eq.s32.totalorder %s50, 3
      %p585 = por %p583, %p584
      %p586 = scmp.ne.s32.totalorder %s578, %s581
      %p587 = scmp.eq.s32.totalorder %s50, 0
      %p588 = por %p586, %p587
      %p589 = scmp.ne.s32.totalorder %s578, %s581
      %p590 = scmp.eq.s32.totalorder %s55, 3
      %p591 = por %p589, %p590
      %p592 = scmp.ne.s32.totalorder %s581, %s582
      %p593 = scmp.eq.s32.totalorder %s55, 0
      %p594 = por %p592, %p593
      %p595 = scmp.ne.s32.totalorder %s581, %s582
      %p596 = scmp.eq.s32.totalorder %s56, 3
      %p597 = por %p595, %p596
      %p599 = scmp.ne.s32.totalorder %s582, %s598
      %p600 = scmp.eq.s32.totalorder %s56, 0
      %p601 = por %p599, %p600
      %p602 = scmp.le.s32.totalorder 1, %s50
      %p603 = scmp.lt.s32.totalorder %s50, 5
      %p604 = pnand %p602, %p603
      %p605 = pneg %p604
      // Predicated region
      $region9: #{tpu_custom_call.1} parent=5 // pred_check
        _
      $region10: #{tpu_custom_call.1} parent=5 // pred_check_branch
        %607 = sbr.rel (%p604) target = $region12
      $region11: #{tpu_custom_call.1} parent=5 // pred_region
        %s608 = ssub.s32 %s50, 1
        // Predicated region
        $region13: #{tpu_custom_call.1} parent=11 // pred_check
          %p609 = pneg %p88
        $region14: #{tpu_custom_call.1} parent=11 // pred_check_branch
          %611 = sbr.rel (%p609) target = $region16
        $region15: #{tpu_custom_call.1} parent=11 // pred_region
          %s612 = smul.u32 2, %s59
          %s614 = ssub.s32 256, 256
          %615 = vsyncadd [#allocation4], %s614
          %s616 = smul.addr %s612, 128
          %s617 = scalar_lea.hbm %s0, %s616
          %s618 = sshll.u32 [#allocation3], 4
          %s619 = int_to_ptr.vmem [resolvable:$true] %s618
          %624 = dma.hbm_to_vmem [thread:$0]  %s617, 256, %s619, [#allocation4], 128, 128, 8
        $region16: #{tpu_custom_call.1} parent=11 // pred_fallthru
          _
        // Predicated region
        $region17: #{tpu_custom_call.1} parent=11 // pred_check
          %p625 = pneg %p109
        $region18: #{tpu_custom_call.1} parent=11 // pred_check_branch
          %627 = sbr.rel (%p625) target = $region20
        $region19: #{tpu_custom_call.1} parent=11 // pred_region
          %s629 = ssub.s32 128, 128
          %630 = vsyncadd [#allocation7], %s629
          %s631 = sshll.u32 [#allocation6], 4
          %s632 = int_to_ptr.vmem [resolvable:$true] %s631
          %637 = dma.hbm_to_vmem [thread:$0]  %s1, 128, %s632, [#allocation7], 64, 64, 4
        $region20: #{tpu_custom_call.1} parent=11 // pred_fallthru
          _
        // Predicated region
        $region21: #{tpu_custom_call.1} parent=11 // pred_check
          %p638 = pneg %p130
        $region22: #{tpu_custom_call.1} parent=11 // pred_check_branch
          %640 = sbr.rel (%p638) target = $region24
        $region23: #{tpu_custom_call.1} parent=11 // pred_region
          %s642 = ssub.s32 16, 16
          %643 = vsyncadd [#allocation7], %s642
          %s645 = sshll.u32 [#allocation8], 4
          %s646 = int_to_ptr.vmem [resolvable:$true] %s645
          %648 = dma.hbm_to_vmem [thread:$0]  %s2, 16, %s646, [#allocation7]
        $region24: #{tpu_custom_call.1} parent=11 // pred_fallthru
          _
        // Predicated region
        $region25: #{tpu_custom_call.1} parent=11 // pred_check
          %p649 = pneg %p463
        $region26: #{tpu_custom_call.1} parent=11 // pred_check_branch
          %651 = sbr.rel (%p649) target = $region28
        $region27: #{tpu_custom_call.1} parent=11 // pred_region
          %s653 = ssub.s32 1024, 1024
          %654 = vsyncadd [#allocation28], %s653
          %s655 = sshll.u32 [#allocation27], 4
          %s656 = int_to_ptr.vmem [resolvable:$true] %s655
          %661 = dma.hbm_to_vmem [thread:$0]  %s15, 1024, %s656, [#allocation28], 64, 64, 4
        $region28: #{tpu_custom_call.1} parent=11 // pred_fallthru
          _
        // Predicated region
        $region29: #{tpu_custom_call.1} parent=11 // pred_check
          %p662 = pneg %p484
        $region30: #{tpu_custom_call.1} parent=11 // pred_check_branch
          %664 = sbr.rel (%p662) target = $region32
        $region31: #{tpu_custom_call.1} parent=11 // pred_region
          %s666 = ssub.s32 16, 16
          %667 = vsyncadd [#allocation28], %s666
          %s669 = sshll.u32 [#allocation29], 4
          %s670 = int_to_ptr.vmem [resolvable:$true] %s669
          %672 = dma.hbm_to_vmem [thread:$0]  %s16, 16, %s670, [#allocation28]
        $region32: #{tpu_custom_call.1} parent=11 // pred_fallthru
          _
        // Predicated region
        $region33: #{tpu_custom_call.1} parent=11 // pred_check
          %p673 = pneg %p505
        $region34: #{tpu_custom_call.1} parent=11 // pred_check_branch
          %675 = sbr.rel (%p673) target = $region36
        $region35: #{tpu_custom_call.1} parent=11 // pred_region
          _
        $region36: #{tpu_custom_call.1} parent=11 // pred_fallthru
          _
        // Predicated region
        $region37: #{tpu_custom_call.1} parent=11 // pred_check
          %p676 = pneg %p526
        $region38: #{tpu_custom_call.1} parent=11 // pred_check_branch
          %678 = sbr.rel (%p676) target = $region40
        $region39: #{tpu_custom_call.1} parent=11 // pred_region
          %s680 = ssub.s32 16, 16
          %681 = vsyncadd [#allocation31], %s680
          %s683 = sshll.u32 [#allocation30], 4
          %s684 = int_to_ptr.vmem [resolvable:$true] %s683
          %686 = dma.hbm_to_vmem [thread:$0]  %s18, 16, %s684, [#allocation31]
        $region40: #{tpu_custom_call.1} parent=11 // pred_fallthru
          _
        // Predicated region
        $region41: #{tpu_custom_call.1} parent=11 // pred_check
          %p687 = pneg %p547
        $region42: #{tpu_custom_call.1} parent=11 // pred_check_branch
          %689 = sbr.rel (%p687) target = $region44
        $region43: #{tpu_custom_call.1} parent=11 // pred_region
          _
        $region44: #{tpu_custom_call.1} parent=11 // pred_fallthru
          _
        // Predicated region
        $region45: #{tpu_custom_call.1} parent=11 // pred_check
          %p690 = pneg %p568
        $region46: #{tpu_custom_call.1} parent=11 // pred_check_branch
          %692 = sbr.rel (%p690) target = $region48
        $region47: #{tpu_custom_call.1} parent=11 // pred_region
          %s694 = ssub.s32 16, 16
          %695 = vsyncadd [#allocation31], %s694
          %s697 = sshll.u32 [#allocation32], 4
          %s698 = int_to_ptr.vmem [resolvable:$true] %s697
          %700 = dma.hbm_to_vmem [thread:$0]  %s20, 16, %s698, [#allocation31]
        $region48: #{tpu_custom_call.1} parent=11 // pred_fallthru
          _
      $region12: #{tpu_custom_call.1} parent=5 // pred_fallthru
        _
      %p701 = scmp.lt.s32.totalorder %s50, 4
      // Predicated region
      $region49: #{tpu_custom_call.1} parent=5 // pred_check
        %p702 = pneg %p701
      $region50: #{tpu_custom_call.1} parent=5 // pred_check_branch
        %704 = sbr.rel (%p702) target = $region52
      $region51: #{tpu_custom_call.1} parent=5 // pred_region
        // Predicated region
        $region53: #{tpu_custom_call.1} parent=51 // pred_check
          %p705 = pneg %p150
        $region54: #{tpu_custom_call.1} parent=51 // pred_check_branch
          %707 = sbr.rel (%p705) target = $region56
        $region55: #{tpu_custom_call.1} parent=51 // pred_region
          %s708 = sand.u32 %s50, 1
          %s709 = scalar_lea.sflag [#allocation10], %s708
          %s710 = sand.u32 %s140, 1
          %s711 = smul.addr %s710, 192
          %s712 = scalar_lea.vmem [#allocation9], %s711
          %s714 = ssub.s32 3072, 3072
          %715 = vsyncadd %s709, %s714
          %s716 = smul.addr %s58, 48
          %s717 = smul.addr %s716, 64
          %s718 = scalar_lea.hbm %s3, %s717
          %s719 = sshll.u32 %s712, 4
          %s720 = int_to_ptr.vmem [resolvable:$true] %s719
          %725 = dma.hbm_to_vmem [thread:$0]  %s718, 3072, %s720, %s709, 192, 192, 12
        $region56: #{tpu_custom_call.1} parent=51 // pred_fallthru
          _
        // Predicated region
        $region57: #{tpu_custom_call.1} parent=51 // pred_check
          %p726 = pneg %p176
        $region58: #{tpu_custom_call.1} parent=51 // pred_check_branch
          %728 = sbr.rel (%p726) target = $region60
        $region59: #{tpu_custom_call.1} parent=51 // pred_region
          %s729 = sand.u32 %s50, 1
          %s730 = scalar_lea.sflag [#allocation10], %s729
          %s731 = sand.u32 %s166, 1
          %s732 = smul.addr %s731, 3
          %s733 = scalar_lea.vmem [#allocation11], %s732
          %s735 = ssub.s32 48, 48
          %736 = vsyncadd %s730, %s735
          %s737 = smul.addr %s58, 3
          %s738 = smul.addr %s737, 16
          %s739 = scalar_lea.hbm %s4, %s738
          %s741 = sshll.u32 %s733, 4
          %s742 = int_to_ptr.vmem [resolvable:$true] %s741
          %744 = dma.hbm_to_vmem [thread:$0]  %s739, 48, %s742, %s730
        $region60: #{tpu_custom_call.1} parent=51 // pred_fallthru
          _
        // Predicated region
        $region61: #{tpu_custom_call.1} parent=51 // pred_check
          %p745 = pneg %p202
        $region62: #{tpu_custom_call.1} parent=51 // pred_check_branch
          %747 = sbr.rel (%p745) target = $region64
        $region63: #{tpu_custom_call.1} parent=51 // pred_region
          %s748 = sand.u32 %s50, 1
          %s749 = scalar_lea.sflag [#allocation13], %s748
          %s750 = sand.u32 %s192, 1
          %s751 = smul.addr %s750, 64
          %s752 = scalar_lea.vmem [#allocation12], %s751
          %s754 = ssub.s32 1024, 1024
          %755 = vsyncadd %s749, %s754
          %s756 = smul.addr %s58, 16
          %s757 = smul.addr %s756, 64
          %s758 = scalar_lea.hbm %s5, %s757
          %s759 = sshll.u32 %s752, 4
          %s760 = int_to_ptr.vmem [resolvable:$true] %s759
          %765 = dma.hbm_to_vmem [thread:$0]  %s758, 1024, %s760, %s749, 64, 64, 4
        $region64: #{tpu_custom_call.1} parent=51 // pred_fallthru
          _
        // Predicated region
        $region65: #{tpu_custom_call.1} parent=51 // pred_check
          %p766 = pneg %p228
        $region66: #{tpu_custom_call.1} parent=51 // pred_check_branch
          %768 = sbr.rel (%p766) target = $region68
        $region67: #{tpu_custom_call.1} parent=51 // pred_region
          %s769 = sand.u32 %s50, 1
          %s770 = scalar_lea.sflag [#allocation13], %s769
          %s771 = sand.u32 %s218, 1
          %s772 = scalar_lea.vmem [#allocation14], %s771
          %s774 = ssub.s32 16, 16
          %775 = vsyncadd %s770, %s774
          %s776 = smul.addr %s58, 16
          %s777 = scalar_lea.hbm %s6, %s776
          %s779 = sshll.u32 %s772, 4
          %s780 = int_to_ptr.vmem [resolvable:$true] %s779
          %782 = dma.hbm_to_vmem [thread:$0]  %s777, 16, %s780, %s770
        $region68: #{tpu_custom_call.1} parent=51 // pred_fallthru
          _
        // Predicated region
        $region69: #{tpu_custom_call.1} parent=51 // pred_check
          %p783 = pneg %p254
        $region70: #{tpu_custom_call.1} parent=51 // pred_check_branch
          %785 = sbr.rel (%p783) target = $region72
        $region71: #{tpu_custom_call.1} parent=51 // pred_region
          %s786 = sand.u32 %s50, 1
          %s787 = scalar_lea.sflag [#allocation16], %s786
          %s788 = sand.u32 %s244, 1
          %s789 = scalar_lea.vmem [#allocation15], %s788
          %s791 = ssub.s32 16, 16
          %792 = vsyncadd %s787, %s791
          %s793 = smul.addr %s58, 16
          %s794 = scalar_lea.hbm %s7, %s793
          %s796 = sshll.u32 %s789, 4
          %s797 = int_to_ptr.vmem [resolvable:$true] %s796
          %799 = dma.hbm_to_vmem [thread:$0]  %s794, 16, %s797, %s787
        $region72: #{tpu_custom_call.1} parent=51 // pred_fallthru
          _
        // Predicated region
        $region73: #{tpu_custom_call.1} parent=51 // pred_check
          %p800 = pneg %p280
        $region74: #{tpu_custom_call.1} parent=51 // pred_check_branch
          %802 = sbr.rel (%p800) target = $region76
        $region75: #{tpu_custom_call.1} parent=51 // pred_region
          %s803 = sand.u32 %s50, 1
          %s804 = scalar_lea.sflag [#allocation16], %s803
          %s805 = sand.u32 %s270, 1
          %s806 = scalar_lea.vmem [#allocation17], %s805
          %s808 = ssub.s32 16, 16
          %809 = vsyncadd %s804, %s808
          %s810 = smul.addr %s58, 16
          %s811 = scalar_lea.hbm %s8, %s810
          %s813 = sshll.u32 %s806, 4
          %s814 = int_to_ptr.vmem [resolvable:$true] %s813
          %816 = dma.hbm_to_vmem [thread:$0]  %s811, 16, %s814, %s804
        $region76: #{tpu_custom_call.1} parent=51 // pred_fallthru
          _
        // Predicated region
        $region77: #{tpu_custom_call.1} parent=51 // pred_check
          %p817 = pneg %p306
        $region78: #{tpu_custom_call.1} parent=51 // pred_check_branch
          %819 = sbr.rel (%p817) target = $region80
        $region79: #{tpu_custom_call.1} parent=51 // pred_region
          %s820 = sand.u32 %s50, 1
          %s821 = scalar_lea.sflag [#allocation19], %s820
          %s822 = sand.u32 %s296, 1
          %s823 = smul.addr %s822, 1024
          %s824 = scalar_lea.vmem [#allocation18], %s823
          %s826 = ssub.s32 16384, 16384
          %827 = vsyncadd %s821, %s826
          %s828 = smul.addr %s58, 256
          %s829 = smul.addr %s828, 64
          %s830 = scalar_lea.hbm %s9, %s829
          %s831 = sshll.u32 %s824, 4
          %s832 = int_to_ptr.vmem [resolvable:$true] %s831
          %837 = dma.hbm_to_vmem [thread:$0]  %s830, 16384, %s832, %s821, 1024, 1024, 64
        $region80: #{tpu_custom_call.1} parent=51 // pred_fallthru
          _
        // Predicated region
        $region81: #{tpu_custom_call.1} parent=51 // pred_check
          %p838 = pneg %p332
        $region82: #{tpu_custom_call.1} parent=51 // pred_check_branch
          %840 = sbr.rel (%p838) target = $region84
        $region83: #{tpu_custom_call.1} parent=51 // pred_region
          %s841 = sand.u32 %s50, 1
          %s842 = scalar_lea.sflag [#allocation19], %s841
          %s843 = sand.u32 %s322, 1
          %s844 = smul.addr %s843, 16
          %s845 = scalar_lea.vmem [#allocation20], %s844
          %s847 = ssub.s32 256, 256
          %848 = vsyncadd %s842, %s847
          %s849 = smul.addr %s58, 16
          %s850 = smul.addr %s849, 16
          %s851 = scalar_lea.hbm %s10, %s850
          %s853 = sshll.u32 %s845, 4
          %s854 = int_to_ptr.vmem [resolvable:$true] %s853
          %856 = dma.hbm_to_vmem [thread:$0]  %s851, 256, %s854, %s842
        $region84: #{tpu_custom_call.1} parent=51 // pred_fallthru
          _
        // Predicated region
        $region85: #{tpu_custom_call.1} parent=51 // pred_check
          %p857 = pneg %p358
        $region86: #{tpu_custom_call.1} parent=51 // pred_check_branch
          %859 = sbr.rel (%p857) target = $region88
        $region87: #{tpu_custom_call.1} parent=51 // pred_region
          %s860 = sand.u32 %s50, 1
          %s861 = scalar_lea.sflag [#allocation22], %s860
          %s862 = sand.u32 %s348, 1
          %s863 = smul.addr %s862, 1024
          %s864 = scalar_lea.vmem [#allocation21], %s863
          %s866 = ssub.s32 16384, 16384
          %867 = vsyncadd %s861, %s866
          %s868 = smul.addr %s58, 256
          %s869 = smul.addr %s868, 64
          %s870 = scalar_lea.hbm %s11, %s869
          %s871 = sshll.u32 %s864, 4
          %s872 = int_to_ptr.vmem [resolvable:$true] %s871
          %877 = dma.hbm_to_vmem [thread:$0]  %s870, 16384, %s872, %s861, 64, 64, 4
        $region88: #{tpu_custom_call.1} parent=51 // pred_fallthru
          _
        // Predicated region
        $region89: #{tpu_custom_call.1} parent=51 // pred_check
          %p878 = pneg %p384
        $region90: #{tpu_custom_call.1} parent=51 // pred_check_branch
          %880 = sbr.rel (%p878) target = $region92
        $region91: #{tpu_custom_call.1} parent=51 // pred_region
          %s881 = sand.u32 %s50, 1
          %s882 = scalar_lea.sflag [#allocation22], %s881
          %s883 = sand.u32 %s374, 1
          %s884 = scalar_lea.vmem [#allocation23], %s883
          %s886 = ssub.s32 16, 16
          %887 = vsyncadd %s882, %s886
          %s888 = smul.addr %s58, 16
          %s889 = scalar_lea.hbm %s12, %s888
          %s891 = sshll.u32 %s884, 4
          %s892 = int_to_ptr.vmem [resolvable:$true] %s891
          %894 = dma.hbm_to_vmem [thread:$0]  %s889, 16, %s892, %s882
        $region92: #{tpu_custom_call.1} parent=51 // pred_fallthru
          _
        // Predicated region
        $region93: #{tpu_custom_call.1} parent=51 // pred_check
          %p895 = pneg %p410
        $region94: #{tpu_custom_call.1} parent=51 // pred_check_branch
          %897 = sbr.rel (%p895) target = $region96
        $region95: #{tpu_custom_call.1} parent=51 // pred_region
          %s898 = sand.u32 %s50, 1
          %s899 = scalar_lea.sflag [#allocation25], %s898
          %s900 = sand.u32 %s400, 1
          %s901 = scalar_lea.vmem [#allocation24], %s900
          %s903 = ssub.s32 16, 16
          %904 = vsyncadd %s899, %s903
          %s905 = smul.addr %s58, 16
          %s906 = scalar_lea.hbm %s13, %s905
          %s908 = sshll.u32 %s901, 4
          %s909 = int_to_ptr.vmem [resolvable:$true] %s908
          %911 = dma.hbm_to_vmem [thread:$0]  %s906, 16, %s909, %s899
        $region96: #{tpu_custom_call.1} parent=51 // pred_fallthru
          _
        // Predicated region
        $region97: #{tpu_custom_call.1} parent=51 // pred_check
          %p912 = pneg %p436
        $region98: #{tpu_custom_call.1} parent=51 // pred_check_branch
          %914 = sbr.rel (%p912) target = $region100
        $region99: #{tpu_custom_call.1} parent=51 // pred_region
          %s915 = sand.u32 %s50, 1
          %s916 = scalar_lea.sflag [#allocation25], %s915
          %s917 = sand.u32 %s426, 1
          %s918 = scalar_lea.vmem [#allocation26], %s917
          %s920 = ssub.s32 16, 16
          %921 = vsyncadd %s916, %s920
          %s922 = smul.addr %s58, 16
          %s923 = scalar_lea.hbm %s14, %s922
          %s925 = sshll.u32 %s918, 4
          %s926 = int_to_ptr.vmem [resolvable:$true] %s925
          %928 = dma.hbm_to_vmem [thread:$0]  %s923, 16, %s926, %s916
        $region100: #{tpu_custom_call.1} parent=51 // pred_fallthru
          _
      $region52: #{tpu_custom_call.1} parent=5 // pred_fallthru
        _
      %p929 = scmp.le.s32.totalorder 1, %s50
      %p930 = scmp.lt.s32.totalorder %s50, 5
      %p931 = pnand %p929, %p930
      %p932 = pneg %p931
      // Predicated region
      $region101: #{tpu_custom_call.1} parent=5 // pred_check
        _
      $region102: #{tpu_custom_call.1} parent=5 // pred_check_branch
        %934 = sbr.rel (%p931) target = $region104
      $region103: #{tpu_custom_call.1} parent=5 // pred_region
        %s935 = ssub.s32 %s50, 1
        // Predicated region
        $region105: #{tpu_custom_call.1} parent=103 // pred_check
          %p936 = pneg %p88
        $region106: #{tpu_custom_call.1} parent=103 // pred_check_branch
          %938 = sbr.rel (%p936) target = $region108
        $region107: #{tpu_custom_call.1} parent=103 // pred_region
          %939 = dma.done [#allocation4], 256
        $region108: #{tpu_custom_call.1} parent=103 // pred_fallthru
          _
        // Predicated region
        $region109: #{tpu_custom_call.1} parent=103 // pred_check
          %p940 = pneg %p109
        $region110: #{tpu_custom_call.1} parent=103 // pred_check_branch
          %942 = sbr.rel (%p940) target = $region112
        $region111: #{tpu_custom_call.1} parent=103 // pred_region
          %943 = dma.done [#allocation7], 128
        $region112: #{tpu_custom_call.1} parent=103 // pred_fallthru
          _
        // Predicated region
        $region113: #{tpu_custom_call.1} parent=103 // pred_check
          %p944 = pneg %p130
        $region114: #{tpu_custom_call.1} parent=103 // pred_check_branch
          %946 = sbr.rel (%p944) target = $region116
        $region115: #{tpu_custom_call.1} parent=103 // pred_region
          %947 = dma.done [#allocation7], 16
        $region116: #{tpu_custom_call.1} parent=103 // pred_fallthru
          _
        %s948 = sand.u32 %s55, 1
        %s949 = scalar_lea.sflag [#allocation10], %s948
        %s950 = sand.u32 %s143, 1
        %s951 = smul.addr %s950, 192
        %s952 = scalar_lea.vmem [#allocation9], %s951
        // Predicated region
        $region117: #{tpu_custom_call.1} parent=103 // pred_check
          %p953 = pneg %p156
        $region118: #{tpu_custom_call.1} parent=103 // pred_check_branch
          %955 = sbr.rel (%p953) target = $region120
        $region119: #{tpu_custom_call.1} parent=103 // pred_region
          %956 = dma.done %s949, 3072
        $region120: #{tpu_custom_call.1} parent=103 // pred_fallthru
          _
        %s957 = sand.u32 %s55, 1
        %s958 = scalar_lea.sflag [#allocation10], %s957
        %s959 = sand.u32 %s169, 1
        %s960 = smul.addr %s959, 3
        %s961 = scalar_lea.vmem [#allocation11], %s960
        // Predicated region
        $region121: #{tpu_custom_call.1} parent=103 // pred_check
          %p962 = pneg %p182
        $region122: #{tpu_custom_call.1} parent=103 // pred_check_branch
          %964 = sbr.rel (%p962) target = $region124
        $region123: #{tpu_custom_call.1} parent=103 // pred_region
          %965 = dma.done %s958, 48
        $region124: #{tpu_custom_call.1} parent=103 // pred_fallthru
          _
        %s966 = sand.u32 %s55, 1
        %s967 = scalar_lea.sflag [#allocation13], %s966
        %s968 = sand.u32 %s195, 1
        %s969 = smul.addr %s968, 64
        %s970 = scalar_lea.vmem [#allocation12], %s969
        // Predicated region
        $region125: #{tpu_custom_call.1} parent=103 // pred_check
          %p971 = pneg %p208
        $region126: #{tpu_custom_call.1} parent=103 // pred_check_branch
          %973 = sbr.rel (%p971) target = $region128
        $region127: #{tpu_custom_call.1} parent=103 // pred_region
          %974 = dma.done %s967, 1024
        $region128: #{tpu_custom_call.1} parent=103 // pred_fallthru
          _
        %s975 = sand.u32 %s55, 1
        %s976 = scalar_lea.sflag [#allocation13], %s975
        %s977 = sand.u32 %s221, 1
        %s978 = scalar_lea.vmem [#allocation14], %s977
        // Predicated region
        $region129: #{tpu_custom_call.1} parent=103 // pred_check
          %p979 = pneg %p234
        $region130: #{tpu_custom_call.1} parent=103 // pred_check_branch
          %981 = sbr.rel (%p979) target = $region132
        $region131: #{tpu_custom_call.1} parent=103 // pred_region
          %982 = dma.done %s976, 16
        $region132: #{tpu_custom_call.1} parent=103 // pred_fallthru
          _
        %s983 = sand.u32 %s55, 1
        %s984 = scalar_lea.sflag [#allocation16], %s983
        %s985 = sand.u32 %s247, 1
        %s986 = scalar_lea.vmem [#allocation15], %s985
        // Predicated region
        $region133: #{tpu_custom_call.1} parent=103 // pred_check
          %p987 = pneg %p260
        $region134: #{tpu_custom_call.1} parent=103 // pred_check_branch
          %989 = sbr.rel (%p987) target = $region136
        $region135: #{tpu_custom_call.1} parent=103 // pred_region
          %990 = dma.done %s984, 16
        $region136: #{tpu_custom_call.1} parent=103 // pred_fallthru
          _
        %s991 = sand.u32 %s55, 1
        %s992 = scalar_lea.sflag [#allocation16], %s991
        %s993 = sand.u32 %s273, 1
        %s994 = scalar_lea.vmem [#allocation17], %s993
        // Predicated region
        $region137: #{tpu_custom_call.1} parent=103 // pred_check
          %p995 = pneg %p286
        $region138: #{tpu_custom_call.1} parent=103 // pred_check_branch
          %997 = sbr.rel (%p995) target = $region140
        $region139: #{tpu_custom_call.1} parent=103 // pred_region
          %998 = dma.done %s992, 16
        $region140: #{tpu_custom_call.1} parent=103 // pred_fallthru
          _
        %s999 = sand.u32 %s55, 1
        %s1000 = scalar_lea.sflag [#allocation19], %s999
        %s1001 = sand.u32 %s299, 1
        %s1002 = smul.addr %s1001, 1024
        %s1003 = scalar_lea.vmem [#allocation18], %s1002
        // Predicated region
        $region141: #{tpu_custom_call.1} parent=103 // pred_check
          %p1004 = pneg %p312
        $region142: #{tpu_custom_call.1} parent=103 // pred_check_branch
          %1006 = sbr.rel (%p1004) target = $region144
        $region143: #{tpu_custom_call.1} parent=103 // pred_region
          %1007 = dma.done %s1000, 16384
        $region144: #{tpu_custom_call.1} parent=103 // pred_fallthru
          _
        %s1008 = sand.u32 %s55, 1
        %s1009 = scalar_lea.sflag [#allocation19], %s1008
        %s1010 = sand.u32 %s325, 1
        %s1011 = smul.addr %s1010, 16
        %s1012 = scalar_lea.vmem [#allocation20], %s1011
        // Predicated region
        $region145: #{tpu_custom_call.1} parent=103 // pred_check
          %p1013 = pneg %p338
        $region146: #{tpu_custom_call.1} parent=103 // pred_check_branch
          %1015 = sbr.rel (%p1013) target = $region148
        $region147: #{tpu_custom_call.1} parent=103 // pred_region
          %1016 = dma.done %s1009, 256
        $region148: #{tpu_custom_call.1} parent=103 // pred_fallthru
          _
        %s1017 = sand.u32 %s55, 1
        %s1018 = scalar_lea.sflag [#allocation22], %s1017
        %s1019 = sand.u32 %s351, 1
        %s1020 = smul.addr %s1019, 1024
        %s1021 = scalar_lea.vmem [#allocation21], %s1020
        // Predicated region
        $region149: #{tpu_custom_call.1} parent=103 // pred_check
          %p1022 = pneg %p364
        $region150: #{tpu_custom_call.1} parent=103 // pred_check_branch
          %1024 = sbr.rel (%p1022) target = $region152
        $region151: #{tpu_custom_call.1} parent=103 // pred_region
          %1025 = dma.done %s1018, 16384
        $region152: #{tpu_custom_call.1} parent=103 // pred_fallthru
          _
        %s1026 = sand.u32 %s55, 1
        %s1027 = scalar_lea.sflag [#allocation22], %s1026
        %s1028 = sand.u32 %s377, 1
        %s1029 = scalar_lea.vmem [#allocation23], %s1028
        // Predicated region
        $region153: #{tpu_custom_call.1} parent=103 // pred_check
          %p1030 = pneg %p390
        $region154: #{tpu_custom_call.1} parent=103 // pred_check_branch
          %1032 = sbr.rel (%p1030) target = $region156
        $region155: #{tpu_custom_call.1} parent=103 // pred_region
          %1033 = dma.done %s1027, 16
        $region156: #{tpu_custom_call.1} parent=103 // pred_fallthru
          _
        %s1034 = sand.u32 %s55, 1
        %s1035 = scalar_lea.sflag [#allocation25], %s1034
        %s1036 = sand.u32 %s403, 1
        %s1037 = scalar_lea.vmem [#allocation24], %s1036
        // Predicated region
        $region157: #{tpu_custom_call.1} parent=103 // pred_check
          %p1038 = pneg %p416
        $region158: #{tpu_custom_call.1} parent=103 // pred_check_branch
          %1040 = sbr.rel (%p1038) target = $region160
        $region159: #{tpu_custom_call.1} parent=103 // pred_region
          %1041 = dma.done %s1035, 16
        $region160: #{tpu_custom_call.1} parent=103 // pred_fallthru
          _
        %s1042 = sand.u32 %s55, 1
        %s1043 = scalar_lea.sflag [#allocation25], %s1042
        %s1044 = sand.u32 %s429, 1
        %s1045 = scalar_lea.vmem [#allocation26], %s1044
        // Predicated region
        $region161: #{tpu_custom_call.1} parent=103 // pred_check
          %p1046 = pneg %p442
        $region162: #{tpu_custom_call.1} parent=103 // pred_check_branch
          %1048 = sbr.rel (%p1046) target = $region164
        $region163: #{tpu_custom_call.1} parent=103 // pred_region
          %1049 = dma.done %s1043, 16
        $region164: #{tpu_custom_call.1} parent=103 // pred_fallthru
          _
        // Predicated region
        $region165: #{tpu_custom_call.1} parent=103 // pred_check
          %p1050 = pneg %p463
        $region166: #{tpu_custom_call.1} parent=103 // pred_check_branch
          %1052 = sbr.rel (%p1050) target = $region168
        $region167: #{tpu_custom_call.1} parent=103 // pred_region
          %1053 = dma.done [#allocation28], 1024
        $region168: #{tpu_custom_call.1} parent=103 // pred_fallthru
          _
        // Predicated region
        $region169: #{tpu_custom_call.1} parent=103 // pred_check
          %p1054 = pneg %p484
        $region170: #{tpu_custom_call.1} parent=103 // pred_check_branch
          %1056 = sbr.rel (%p1054) target = $region172
        $region171: #{tpu_custom_call.1} parent=103 // pred_region
          %1057 = dma.done [#allocation28], 16
        $region172: #{tpu_custom_call.1} parent=103 // pred_fallthru
          _
        // Predicated region
        $region173: #{tpu_custom_call.1} parent=103 // pred_check
          %p1058 = pneg %p526
        $region174: #{tpu_custom_call.1} parent=103 // pred_check_branch
          %1060 = sbr.rel (%p1058) target = $region176
        $region175: #{tpu_custom_call.1} parent=103 // pred_region
          %1061 = dma.done [#allocation31], 16
        $region176: #{tpu_custom_call.1} parent=103 // pred_fallthru
          _
        // Predicated region
        $region177: #{tpu_custom_call.1} parent=103 // pred_check
          %p1062 = pneg %p568
        $region178: #{tpu_custom_call.1} parent=103 // pred_check_branch
          %1064 = sbr.rel (%p1062) target = $region180
        $region179: #{tpu_custom_call.1} parent=103 // pred_region
          %1065 = dma.done [#allocation31], 16
        $region180: #{tpu_custom_call.1} parent=103 // pred_fallthru
          _
        %p1066 = pneg %p88
        %p1067 = pneg %p85
        %p1068 = pneg %p109
        %p1069 = pneg %p106
        %p1070 = pneg %p130
        %p1071 = pneg %p127
        %s1072 = sand.u32 %s55, 1
        %s1073 = scalar_lea.sflag [#allocation10], %s1072
        %s1074 = sand.u32 %s143, 1
        %s1075 = smul.addr %s1074, 192
        %s1076 = scalar_lea.vmem [#allocation9], %s1075
        %p1077 = pneg %p156
        %p1078 = pneg %p153
        %s1079 = sand.u32 %s55, 1
        %s1080 = scalar_lea.sflag [#allocation10], %s1079
        %s1081 = sand.u32 %s169, 1
        %s1082 = smul.addr %s1081, 3
        %s1083 = scalar_lea.vmem [#allocation11], %s1082
        %p1084 = pneg %p182
        %p1085 = pneg %p179
        %s1086 = sand.u32 %s55, 1
        %s1087 = scalar_lea.sflag [#allocation13], %s1086
        %s1088 = sand.u32 %s195, 1
        %s1089 = smul.addr %s1088, 64
        %s1090 = scalar_lea.vmem [#allocation12], %s1089
        %p1091 = pneg %p208
        %p1092 = pneg %p205
        %s1093 = sand.u32 %s55, 1
        %s1094 = scalar_lea.sflag [#allocation13], %s1093
        %s1095 = sand.u32 %s221, 1
        %s1096 = scalar_lea.vmem [#allocation14], %s1095
        %p1097 = pneg %p234
        %p1098 = pneg %p231
        %s1099 = sand.u32 %s55, 1
        %s1100 = scalar_lea.sflag [#allocation16], %s1099
        %s1101 = sand.u32 %s247, 1
        %s1102 = scalar_lea.vmem [#allocation15], %s1101
        %p1103 = pneg %p260
        %p1104 = pneg %p257
        %s1105 = sand.u32 %s55, 1
        %s1106 = scalar_lea.sflag [#allocation16], %s1105
        %s1107 = sand.u32 %s273, 1
        %s1108 = scalar_lea.vmem [#allocation17], %s1107
        %p1109 = pneg %p286
        %p1110 = pneg %p283
        %s1111 = sand.u32 %s55, 1
        %s1112 = scalar_lea.sflag [#allocation19], %s1111
        %s1113 = sand.u32 %s299, 1
        %s1114 = smul.addr %s1113, 1024
        %s1115 = scalar_lea.vmem [#allocation18], %s1114
        %p1116 = pneg %p312
        %p1117 = pneg %p309
        %s1118 = sand.u32 %s55, 1
        %s1119 = scalar_lea.sflag [#allocation19], %s1118
        %s1120 = sand.u32 %s325, 1
        %s1121 = smul.addr %s1120, 16
        %s1122 = scalar_lea.vmem [#allocation20], %s1121
        %p1123 = pneg %p338
        %p1124 = pneg %p335
        %s1125 = sand.u32 %s55, 1
        %s1126 = scalar_lea.sflag [#allocation22], %s1125
        %s1127 = sand.u32 %s351, 1
        %s1128 = smul.addr %s1127, 1024
        %s1129 = scalar_lea.vmem [#allocation21], %s1128
        %p1130 = pneg %p364
        %p1131 = pneg %p361
        %s1132 = sand.u32 %s55, 1
        %s1133 = scalar_lea.sflag [#allocation22], %s1132
        %s1134 = sand.u32 %s377, 1
        %s1135 = scalar_lea.vmem [#allocation23], %s1134
        %p1136 = pneg %p390
        %p1137 = pneg %p387
        %s1138 = sand.u32 %s55, 1
        %s1139 = scalar_lea.sflag [#allocation25], %s1138
        %s1140 = sand.u32 %s403, 1
        %s1141 = scalar_lea.vmem [#allocation24], %s1140
        %p1142 = pneg %p416
        %p1143 = pneg %p413
        %s1144 = sand.u32 %s55, 1
        %s1145 = scalar_lea.sflag [#allocation25], %s1144
        %s1146 = sand.u32 %s429, 1
        %s1147 = scalar_lea.vmem [#allocation26], %s1146
        %p1148 = pneg %p442
        %p1149 = pneg %p439
        %p1150 = pneg %p463
        %p1151 = pneg %p460
        %p1152 = pneg %p484
        %p1153 = pneg %p481
        %p1154 = pneg %p505
        %p1155 = pneg %p502
        %p1156 = pneg %p526
        %p1157 = pneg %p523
        %p1158 = pneg %p547
        %p1159 = pneg %p544
        %p1160 = pneg %p568
        %p1161 = pneg %p565
        %p1162 = pneg %p594
        %p1163 = pneg %p591
        %s1164 = smul.u32 2, %s59
        %s1165 = smul.u32 2, %s59
        %p1167 = scmp.eq.s32.totalorder %s60, 0
        // Predicated region
        $region181: #{tpu_custom_call.1} parent=103 // pred_check
          %p1168 = pneg %p1167
        $region182: #{tpu_custom_call.1} parent=103 // pred_check_branch
          %1170 = sbr.rel (%p1168) target = $region184
        $region183: #{tpu_custom_call.1} parent=103 // pred_region
          %v1171 = vld [vmem:[#allocation3] sm:$0xff]
          %v1172 = vld [vmem:[#allocation3 + $0x8] sm:$0xff]
          %v1173 = vld [vmem:[#allocation6] sm:$0xf]
          %v1174 = vld [vmem:[#allocation6 + $0x4] sm:$0xf]
          %v1175 = vpack.c.bf16 %v1172, %v1171
          %v1176 = vld [vmem:[#allocation8] sm:$0x1]
          %v1178 = vlaneseq
          %v1179 = vshrl.u32 %v1178, 7
          %v1180 = vsub.s32 0, %v1179
          %v1181 = vrot.slane %v1176, %v1180
          %v1185 = vunpack.c.l.b16 %v1173
          %v1186 = vunpack.c.l.b16 %v1174
          %v1187 = vpack.c.b16 %v1186, %v1185
          %vm1189 = vcmask 130048
          %v1191 = vsel %vm1189, %v1175, 0
          %1193 = vmatprep.subr.bf16.mxu0 0
          %1194 = vmatpush1.bf16.msra.mxu0 %v1187
          %1195 = vmatprep.subr.bf16.mxu0 0
          %1196 = vmatpush1.bf16.msra.mxu0 0
          %1197 = vmatprep.subr.bf16.mxu0 0
          %1198 = vmatpush1.bf16.msra.mxu0 0
          %1199 = vmatprep.subr.bf16.mxu0 0
          %1200 = vmatpush1.bf16.msra.mxu0 0
          %1201 = vmatprep.subr.bf16.mxu0 0
          %1202 = vmatpush1.bf16.msra.mxu0 0
          %1203 = vmatprep.subr.bf16.mxu0 0
          %1204 = vmatpush1.bf16.msra.mxu0 0
          %1205 = vmatprep.subr.bf16.mxu0 0
          %1206 = vmatpush1.bf16.msra.mxu0 0
          %1207 = vmatprep.subr.bf16.mxu0 0
          %1208 = vmatpush1.bf16.msra.mxu0 0
          %1209 = vmatprep.subr.bf16.mxu0 0
          %1210 = vmatpush1.bf16.msra.mxu0 0
          %1211 = vmatprep.subr.bf16.mxu0 0
          %1212 = vmatpush1.bf16.msra.mxu0 0
          %1213 = vmatprep.subr.bf16.mxu0 0
          %1214 = vmatpush1.bf16.msra.mxu0 0
          %1215 = vmatprep.subr.bf16.mxu0 0
          %1216 = vmatpush1.bf16.msra.mxu0 0
          %1217 = vmatprep.subr.bf16.mxu0 0
          %1218 = vmatpush1.bf16.msra.mxu0 0
          %1219 = vmatprep.subr.bf16.mxu0 0
          %1220 = vmatpush1.bf16.msra.mxu0 0
          %1221 = vmatprep.subr.bf16.mxu0 0
          %1222 = vmatpush1.bf16.msra.mxu0 0
          %1223 = vmatprep.subr.bf16.mxu0 0
          %1224 = vmatpush1.bf16.msra.mxu0 0
          %1225 = vmatprep.mubr.bf16.mxu0 0
          %1226 = vmatmul.mubr.bf16.gmra.mrb[0].mxu0 %v1191
          %v1227 = vpop.f32.mrb[0].mxu0
          %v1228 = vadd.f32 %v1181, %v1227
          %v1229 = vpop.f32.mrb[0].mxu0
          %v1230 = vpop.f32.mrb[0].mxu0
          %v1231 = vadd.f32 %v1181, %v1230
          %v1232 = vpop.f32.mrb[0].mxu0
          %1233 = vdwg.mxu0
          %1234 = vst [vmem:[#allocation2] sm:$0xff] %v1228
          %1235 = vst [vmem:[#allocation2 + $0x8] sm:$0xff] %v1231
        $region184: #{tpu_custom_call.1} parent=103 // pred_fallthru
          _
        %v1236 = vld [vmem:[#allocation2] sm:$0xff]
        %v1237 = vld [vmem:[#allocation2 + $0x8] sm:$0xff]
        %v1238 = vld [vmem:[%s952] sm:$0xff]
        %v1239 = vld [vmem:[%s952 + $0x8] sm:$0xf]
        %v1240 = vld [vmem:[%s952 + $0xc] sm:$0xff]
        %v1241 = vld [vmem:[%s952 + $0x14] sm:$0xf]
        %v1242 = vld [vmem:[%s952 + $0x18] sm:$0xff]
        %v1243 = vld [vmem:[%s952 + $0x20] sm:$0xf]
        %v1244 = vld [vmem:[%s952 + $0x24] sm:$0xff]
        %v1245 = vld [vmem:[%s952 + $0x2c] sm:$0xf]
        %v1246 = vld [vmem:[%s952 + $0x30] sm:$0xff]
        %v1247 = vld [vmem:[%s952 + $0x38] sm:$0xf]
        %v1248 = vld [vmem:[%s952 + $0x3c] sm:$0xff]
        %v1249 = vld [vmem:[%s952 + $0x44] sm:$0xf]
        %v1250 = vld [vmem:[%s952 + $0x48] sm:$0xff]
        %v1251 = vld [vmem:[%s952 + $0x50] sm:$0xf]
        %v1252 = vld [vmem:[%s952 + $0x54] sm:$0xff]
        %v1253 = vld [vmem:[%s952 + $0x5c] sm:$0xf]
        %v1254 = vld [vmem:[%s952 + $0x60] sm:$0xff]
        %v1255 = vld [vmem:[%s952 + $0x68] sm:$0xf]
        %v1256 = vld [vmem:[%s952 + $0x6c] sm:$0xff]
        %v1257 = vld [vmem:[%s952 + $0x74] sm:$0xf]
        %v1258 = vld [vmem:[%s952 + $0x78] sm:$0xff]
        %v1259 = vld [vmem:[%s952 + $0x80] sm:$0xf]
        %v1260 = vld [vmem:[%s952 + $0x84] sm:$0xff]
        %v1261 = vld [vmem:[%s952 + $0x8c] sm:$0xf]
        %v1262 = vld [vmem:[%s952 + $0x90] sm:$0xff]
        %v1263 = vld [vmem:[%s952 + $0x98] sm:$0xf]
        %v1264 = vld [vmem:[%s952 + $0x9c] sm:$0xff]
        %v1265 = vld [vmem:[%s952 + $0xa4] sm:$0xf]
        %v1266 = vld [vmem:[%s952 + $0xa8] sm:$0xff]
        %v1267 = vld [vmem:[%s952 + $0xb0] sm:$0xf]
        %v1268 = vld [vmem:[%s952 + $0xb4] sm:$0xff]
        %v1269 = vld [vmem:[%s952 + $0xbc] sm:$0xf]
        %v1270 = vpack.c.bf16 %v1237, %v1236
        %v1271 = vld [vmem:[%s961] sm:$0x7]
        %v1273 = vlaneseq
        %v1274 = vshrl.u32 %v1273, 7
        %v1275 = vsub.s32 0, %v1274
        %v1276 = vrot.slane %v1271, %v1275
        %v1277 = vlaneseq
        %v1278 = vshrl.u32 %v1277, 7
        %v1279 = vsub.s32 1, %v1278
        %v1280 = vrot.slane %v1271, %v1279
        %v1281 = vlaneseq
        %v1282 = vshrl.u32 %v1281, 7
        %v1283 = vsub.s32 2, %v1282
        %v1284 = vrot.slane %v1271, %v1283
        %v1320 = vunpack.c.l.b16 %v1238
        %v1321 = vunpack.c.h.b16 %v1238
        %v1322 = vunpack.c.l.b16 %v1239
        %v1323 = vunpack.c.l.b16 %v1240
        %v1324 = vunpack.c.h.b16 %v1240
        %v1325 = vunpack.c.l.b16 %v1241
        %v1326 = vunpack.c.l.b16 %v1242
        %v1327 = vunpack.c.h.b16 %v1242
        %v1328 = vunpack.c.l.b16 %v1243
        %v1329 = vunpack.c.l.b16 %v1244
        %v1330 = vunpack.c.h.b16 %v1244
        %v1331 = vunpack.c.l.b16 %v1245
        %v1332 = vunpack.c.l.b16 %v1246
        %v1333 = vunpack.c.h.b16 %v1246
        %v1334 = vunpack.c.l.b16 %v1247
        %v1335 = vunpack.c.l.b16 %v1248
        %v1336 = vunpack.c.h.b16 %v1248
        %v1337 = vunpack.c.l.b16 %v1249
        %v1338 = vunpack.c.l.b16 %v1250
        %v1339 = vunpack.c.h.b16 %v1250
        %v1340 = vunpack.c.l.b16 %v1251
        %v1341 = vunpack.c.l.b16 %v1252
        %v1342 = vunpack.c.h.b16 %v1252
        %v1343 = vunpack.c.l.b16 %v1253
        %v1344 = vunpack.c.l.b16 %v1254
        %v1345 = vunpack.c.h.b16 %v1254
        %v1346 = vunpack.c.l.b16 %v1255
        %v1347 = vunpack.c.l.b16 %v1256
        %v1348 = vunpack.c.h.b16 %v1256
        %v1349 = vunpack.c.l.b16 %v1257
        %v1350 = vunpack.c.l.b16 %v1258
        %v1351 = vunpack.c.h.b16 %v1258
        %v1352 = vunpack.c.l.b16 %v1259
        %v1353 = vunpack.c.l.b16 %v1260
        %v1354 = vunpack.c.h.b16 %v1260
        %v1355 = vunpack.c.l.b16 %v1261
        %v1356 = vunpack.c.l.b16 %v1262
        %v1357 = vunpack.c.h.b16 %v1262
        %v1358 = vunpack.c.l.b16 %v1263
        %v1359 = vunpack.c.l.b16 %v1264
        %v1360 = vunpack.c.h.b16 %v1264
        %v1361 = vunpack.c.l.b16 %v1265
        %v1362 = vunpack.c.l.b16 %v1266
        %v1363 = vunpack.c.h.b16 %v1266
        %v1364 = vunpack.c.l.b16 %v1267
        %v1365 = vunpack.c.l.b16 %v1268
        %v1366 = vunpack.c.h.b16 %v1268
        %v1367 = vunpack.c.l.b16 %v1269
        %v1368 = vpack.c.b16 %v1323, %v1320
        %v1369 = vpack.c.b16 %v1324, %v1321
        %v1370 = vpack.c.b16 %v1325, %v1322
        %v1371 = vpack.c.b16 %v1329, %v1326
        %v1372 = vpack.c.b16 %v1330, %v1327
        %v1373 = vpack.c.b16 %v1331, %v1328
        %v1374 = vpack.c.b16 %v1335, %v1332
        %v1375 = vpack.c.b16 %v1336, %v1333
        %v1376 = vpack.c.b16 %v1337, %v1334
        %v1377 = vpack.c.b16 %v1341, %v1338
        %v1378 = vpack.c.b16 %v1342, %v1339
        %v1379 = vpack.c.b16 %v1343, %v1340
        %v1380 = vpack.c.b16 %v1347, %v1344
        %v1381 = vpack.c.b16 %v1348, %v1345
        %v1382 = vpack.c.b16 %v1349, %v1346
        %v1383 = vpack.c.b16 %v1353, %v1350
        %v1384 = vpack.c.b16 %v1354, %v1351
        %v1385 = vpack.c.b16 %v1355, %v1352
        %v1386 = vpack.c.b16 %v1359, %v1356
        %v1387 = vpack.c.b16 %v1360, %v1357
        %v1388 = vpack.c.b16 %v1361, %v1358
        %v1389 = vpack.c.b16 %v1365, %v1362
        %v1390 = vpack.c.b16 %v1366, %v1363
        %v1391 = vpack.c.b16 %v1367, %v1364
        %1416 = vmatprep.subr.bf16.mxu0 %v1369
        %1417 = vmatpush1.bf16.msra.mxu0 %v1368
        %1418 = vmatprep.subr.bf16.mxu0 %v1372
        %1419 = vmatpush1.bf16.msra.mxu0 %v1371
        %1420 = vmatprep.subr.bf16.mxu0 %v1375
        %1421 = vmatpush1.bf16.msra.mxu0 %v1374
        %1422 = vmatprep.subr.bf16.mxu0 %v1378
        %1423 = vmatpush1.bf16.msra.mxu0 %v1377
        %1424 = vmatprep.subr.bf16.mxu0 %v1381
        %1425 = vmatpush1.bf16.msra.mxu0 %v1380
        %1426 = vmatprep.subr.bf16.mxu0 %v1384
        %1427 = vmatpush1.bf16.msra.mxu0 %v1383
        %1428 = vmatprep.subr.bf16.mxu0 %v1387
        %1429 = vmatpush1.bf16.msra.mxu0 %v1386
        %1430 = vmatprep.subr.bf16.mxu0 %v1390
        %1431 = vmatpush1.bf16.msra.mxu0 %v1389
        %1432 = vmatprep.subr.bf16.mxu0 0
        %1433 = vmatpush1.bf16.msra.mxu0 0
        %1434 = vmatprep.subr.bf16.mxu0 0
        %1435 = vmatpush1.bf16.msra.mxu0 0
        %1436 = vmatprep.subr.bf16.mxu0 0
        %1437 = vmatpush1.bf16.msra.mxu0 0
        %1438 = vmatprep.subr.bf16.mxu0 0
        %1439 = vmatpush1.bf16.msra.mxu0 0
        %1440 = vmatprep.subr.bf16.mxu0 0
        %1441 = vmatpush1.bf16.msra.mxu0 0
        %1442 = vmatprep.subr.bf16.mxu0 0
        %1443 = vmatpush1.bf16.msra.mxu0 0
        %1444 = vmatprep.subr.bf16.mxu0 0
        %1445 = vmatpush1.bf16.msra.mxu0 0
        %1446 = vmatprep.subr.bf16.mxu0 0
        %1447 = vmatpush1.bf16.msra.mxu0 0
        %1448 = vmatprep.mubr.bf16.mxu0 0
        %1449 = vmatmul.mubr.bf16.gmra.mrb[0].mxu0 %v1270
        %v1450 = vpop.f32.mrb[0].mxu0
        %v1451 = vadd.f32 %v1276, %v1450
        %v1452 = vpop.f32.mrb[0].mxu0
        %v1453 = vadd.f32 %v1280, %v1452
        %v1454 = vpop.f32.mrb[0].mxu0
        %v1455 = vadd.f32 %v1276, %v1454
        %v1456 = vpop.f32.mrb[0].mxu0
        %v1457 = vadd.f32 %v1280, %v1456
        %1458 = vdwg.mxu0
        %1459 = vmatprep.subr.bf16.mxu0 0
        %1460 = vmatpush1.bf16.msra.mxu0 %v1370
        %1461 = vmatprep.subr.bf16.mxu0 0
        %1462 = vmatpush1.bf16.msra.mxu0 %v1373
        %1463 = vmatprep.subr.bf16.mxu0 0
        %1464 = vmatpush1.bf16.msra.mxu0 %v1376
        %1465 = vmatprep.subr.bf16.mxu0 0
        %1466 = vmatpush1.bf16.msra.mxu0 %v1379
        %1467 = vmatprep.subr.bf16.mxu0 0
        %1468 = vmatpush1.bf16.msra.mxu0 %v1382
        %1469 = vmatprep.subr.bf16.mxu0 0
        %1470 = vmatpush1.bf16.msra.mxu0 %v1385
        %1471 = vmatprep.subr.bf16.mxu0 0
        %1472 = vmatpush1.bf16.msra.mxu0 %v1388
        %1473 = vmatprep.subr.bf16.mxu0 0
        %1474 = vmatpush1.bf16.msra.mxu0 %v1391
        %1475 = vmatprep.subr.bf16.mxu0 0
        %1476 = vmatpush1.bf16.msra.mxu0 0
        %1477 = vmatprep.subr.bf16.mxu0 0
        %1478 = vmatpush1.bf16.msra.mxu0 0
        %1479 = vmatprep.subr.bf16.mxu0 0
        %1480 = vmatpush1.bf16.msra.mxu0 0
        %1481 = vmatprep.subr.bf16.mxu0 0
        %1482 = vmatpush1.bf16.msra.mxu0 0
        %1483 = vmatprep.subr.bf16.mxu0 0
        %1484 = vmatpush1.bf16.msra.mxu0 0
        %1485 = vmatprep.subr.bf16.mxu0 0
        %1486 = vmatpush1.bf16.msra.mxu0 0
        %1487 = vmatprep.subr.bf16.mxu0 0
        %1488 = vmatpush1.bf16.msra.mxu0 0
        %1489 = vmatprep.subr.bf16.mxu0 0
        %1490 = vmatpush1.bf16.msra.mxu0 0
        %1491 = vmatprep.mubr.bf16.mxu0 0
        %1492 = vmatmul.mubr.bf16.gmra.mrb[0].mxu0 %v1270
        %v1493 = vpop.f32.mrb[0].mxu0
        %v1494 = vadd.f32 %v1284, %v1493
        %v1495 = vpop.f32.mrb[0].mxu0
        %v1496 = vpop.f32.mrb[0].mxu0
        %v1497 = vadd.f32 %v1284, %v1496
        %v1498 = vpop.f32.mrb[0].mxu0
        %1499 = vdwg.mxu0
        %v1500 = vmul.f32 %v1451, 0.25
        %v1501 = vmul.f32 %v1455, 0.25
        %v1502 = vpack.c.bf16 %v1500, %v1500
        %v1503 = vpack.c.bf16 %v1501, %v1501
        %v1504 = vpack.c.bf16 %v1453, %v1453
        %v1505 = vpack.c.bf16 %v1457, %v1457
        %v1506 = vpack.c.bf16 %v1494, %v1494
        %v1507 = vpack.c.bf16 %v1497, %v1497
        %vm1508 = vcmask 130048
        %v1510 = vsel %vm1508, %v1502, 0
        %v1513 = vsel %vm1508, %v1504, 0
        %1515 = vmatprep.subr.bf16.mxu0 0
        %1516 = vmatpush1.bf16.xpose.msra.mxu0 %v1513
        %1517 = vmatprep.subr.bf16.mxu0 0
        %1518 = vmatpush1.bf16.xpose.msra.mxu0 0
        %1519 = vmatprep.subr.bf16.mxu0 0
        %1520 = vmatpush1.bf16.xpose.msra.mxu0 0
        %1521 = vmatprep.subr.bf16.mxu0 0
        %1522 = vmatpush1.bf16.xpose.msra.mxu0 0
        %1523 = vmatprep.subr.bf16.mxu0 0
        %1524 = vmatpush1.bf16.xpose.msra.mxu0 0
        %1525 = vmatprep.subr.bf16.mxu0 0
        %1526 = vmatpush1.bf16.xpose.msra.mxu0 0
        %1527 = vmatprep.subr.bf16.mxu0 0
        %1528 = vmatpush1.bf16.xpose.msra.mxu0 0
        %1529 = vmatprep.subr.bf16.mxu0 0
        %1530 = vmatpush1.bf16.xpose.msra.mxu0 0
        %1531 = vmatprep.subr.bf16.mxu0 0
        %1532 = vmatpush1.bf16.xpose.msra.mxu0 0
        %1533 = vmatprep.subr.bf16.mxu0 0
        %1534 = vmatpush1.bf16.xpose.msra.mxu0 0
        %1535 = vmatprep.subr.bf16.mxu0 0
        %1536 = vmatpush1.bf16.xpose.msra.mxu0 0
        %1537 = vmatprep.subr.bf16.mxu0 0
        %1538 = vmatpush1.bf16.xpose.msra.mxu0 0
        %1539 = vmatprep.subr.bf16.mxu0 0
        %1540 = vmatpush1.bf16.xpose.msra.mxu0 0
        %1541 = vmatprep.subr.bf16.mxu0 0
        %1542 = vmatpush1.bf16.xpose.msra.mxu0 0
        %1543 = vmatprep.subr.bf16.mxu0 0
        %1544 = vmatpush1.bf16.xpose.msra.mxu0 0
        %1545 = vmatprep.subr.bf16.mxu0 0
        %1546 = vmatpush1.bf16.xpose.msra.mxu0 0
        %1547 = vmatprep.mubr.bf16.mxu0 0
        %1548 = vmatmul.mubr.bf16.gmra.mrb[0].mxu0 %v1510
        %v1549 = vpop.f32.mrb[0].mxu0
        %v1550 = vadd.f32 0.0, %v1549
        %v1551 = vpop.f32.mrb[0].mxu0
        %v1552 = vpop.f32.mrb[0].mxu0
        %v1553 = vpop.f32.mrb[0].mxu0
        %1554 = vdwg.mxu0
        %v1556 = vsel %vm1508, %v1503, 0
        %v1559 = vsel %vm1508, %v1505, 0
        %1561 = vmatprep.subr.bf16.mxu0 0
        %1562 = vmatpush1.bf16.xpose.msra.mxu0 %v1559
        %1563 = vmatprep.subr.bf16.mxu0 0
        %1564 = vmatpush1.bf16.xpose.msra.mxu0 0
        %1565 = vmatprep.subr.bf16.mxu0 0
        %1566 = vmatpush1.bf16.xpose.msra.mxu0 0
        %1567 = vmatprep.subr.bf16.mxu0 0
        %1568 = vmatpush1.bf16.xpose.msra.mxu0 0
        %1569 = vmatprep.subr.bf16.mxu0 0
        %1570 = vmatpush1.bf16.xpose.msra.mxu0 0
        %1571 = vmatprep.subr.bf16.mxu0 0
        %1572 = vmatpush1.bf16.xpose.msra.mxu0 0
        %1573 = vmatprep.subr.bf16.mxu0 0
        %1574 = vmatpush1.bf16.xpose.msra.mxu0 0
        %1575 = vmatprep.subr.bf16.mxu0 0
        %1576 = vmatpush1.bf16.xpose.msra.mxu0 0
        %1577 = vmatprep.subr.bf16.mxu0 0
        %1578 = vmatpush1.bf16.xpose.msra.mxu0 0
        %1579 = vmatprep.subr.bf16.mxu0 0
        %1580 = vmatpush1.bf16.xpose.msra.mxu0 0
        %1581 = vmatprep.subr.bf16.mxu0 0
        %1582 = vmatpush1.bf16.xpose.msra.mxu0 0
        %1583 = vmatprep.subr.bf16.mxu0 0
        %1584 = vmatpush1.bf16.xpose.msra.mxu0 0
        %1585 = vmatprep.subr.bf16.mxu0 0
        %1586 = vmatpush1.bf16.xpose.msra.mxu0 0
        %1587 = vmatprep.subr.bf16.mxu0 0
        %1588 = vmatpush1.bf16.xpose.msra.mxu0 0
        %1589 = vmatprep.subr.bf16.mxu0 0
        %1590 = vmatpush1.bf16.xpose.msra.mxu0 0
        %1591 = vmatprep.subr.bf16.mxu0 0
        %1592 = vmatpush1.bf16.xpose.msra.mxu0 0
        %1593 = vmatprep.mubr.bf16.mxu0 0
        %1594 = vmatmul.mubr.bf16.gmra.mrb[0].mxu0 %v1556
        %v1595 = vpop.f32.mrb[0].mxu0
        %v1596 = vadd.f32 0.0, %v1595
        %v1597 = vpop.f32.mrb[0].mxu0
        %v1598 = vpop.f32.mrb[0].mxu0
        %v1599 = vpop.f32.mrb[0].mxu0
        %1600 = vdwg.mxu0
        %vm1601 = vcmask 64512
        %v1602 = vsel %vm1601, %v1550, -inf
        %1603 = vmax.xlane.f32.xlu0 %v1602
        %v1604 = vpop.xlane.xlu0 %1603
        %v1605 = vsel %vm1601, %v1596, -inf
        %1606 = vmax.xlane.f32.xlu0 %v1605
        %v1607 = vpop.xlane.xlu0 %1606
        %v1608 = vsub.f32 %v1550, %v1604
        %v1609 = vsub.f32 %v1596, %v1607
        %v1610 = vmul.f32 %v1608, 1.442695
        %v1611 = vpow.pop %v1610
        %v1612 = vmul.f32 %v1609, 1.442695
        %v1613 = vpow.pop %v1612
        %v1614 = vsel %vm1601, %v1611, 0.0
        %1615 = vadd.xlane.f32.xlu0 %v1614
        %v1616 = vpop.xlane.xlu0 %1615
        %v1617 = vsel %vm1601, %v1613, 0.0
        %1618 = vadd.xlane.f32.xlu0 %v1617
        %v1619 = vpop.xlane.xlu0 %1618
        %v1620 = vrcp.pop %v1616
        %v1621 = vrcp.pop %v1619
        %v1622 = vmul.f32 %v1611, %v1620
        %v1623 = vmul.f32 %v1613, %v1621
        %v1624 = vpack.c.bf16 %v1622, %v1622
        %v1625 = vpack.c.bf16 %v1623, %v1623
        %v1627 = vsel %vm1601, %v1624, 0
        %vm1629 = vcmask 1043456
        %v1631 = vsel %vm1629, %v1506, 0
        %1633 = vmatprep.subr.bf16.mxu0 0
        %1634 = vmatpush1.bf16.msra.mxu0 %v1631
        %1635 = vmatprep.subr.bf16.mxu0 0
        %1636 = vmatpush1.bf16.msra.mxu0 0
        %1637 = vmatprep.subr.bf16.mxu0 0
        %1638 = vmatpush1.bf16.msra.mxu0 0
        %1639 = vmatprep.subr.bf16.mxu0 0
        %1640 = vmatpush1.bf16.msra.mxu0 0
        %1641 = vmatprep.subr.bf16.mxu0 0
        %1642 = vmatpush1.bf16.msra.mxu0 0
        %1643 = vmatprep.subr.bf16.mxu0 0
        %1644 = vmatpush1.bf16.msra.mxu0 0
        %1645 = vmatprep.subr.bf16.mxu0 0
        %1646 = vmatpush1.bf16.msra.mxu0 0
        %1647 = vmatprep.subr.bf16.mxu0 0
        %1648 = vmatpush1.bf16.msra.mxu0 0
        %1649 = vmatprep.subr.bf16.mxu0 0
        %1650 = vmatpush1.bf16.msra.mxu0 0
        %1651 = vmatprep.subr.bf16.mxu0 0
        %1652 = vmatpush1.bf16.msra.mxu0 0
        %1653 = vmatprep.subr.bf16.mxu0 0
        %1654 = vmatpush1.bf16.msra.mxu0 0
        %1655 = vmatprep.subr.bf16.mxu0 0
        %1656 = vmatpush1.bf16.msra.mxu0 0
        %1657 = vmatprep.subr.bf16.mxu0 0
        %1658 = vmatpush1.bf16.msra.mxu0 0
        %1659 = vmatprep.subr.bf16.mxu0 0
        %1660 = vmatpush1.bf16.msra.mxu0 0
        %1661 = vmatprep.subr.bf16.mxu0 0
        %1662 = vmatpush1.bf16.msra.mxu0 0
        %1663 = vmatprep.subr.bf16.mxu0 0
        %1664 = vmatpush1.bf16.msra.mxu0 0
        %1665 = vmatprep.mubr.bf16.mxu0 0
        %1666 = vmatmul.mubr.bf16.gmra.mrb[0].mxu0 %v1627
        %v1667 = vpop.f32.mrb[0].mxu0
        %v1668 = vadd.f32 0.0, %v1667
        %v1669 = vpop.f32.mrb[0].mxu0
        %v1670 = vpop.f32.mrb[0].mxu0
        %v1671 = vpop.f32.mrb[0].mxu0
        %1672 = vdwg.mxu0
        %v1674 = vsel %vm1601, %v1625, 0
        %v1677 = vsel %vm1629, %v1507, 0
        %1679 = vmatprep.subr.bf16.mxu0 0
        %1680 = vmatpush1.bf16.msra.mxu0 %v1677
        %1681 = vmatprep.subr.bf16.mxu0 0
        %1682 = vmatpush1.bf16.msra.mxu0 0
        %1683 = vmatprep.subr.bf16.mxu0 0
        %1684 = vmatpush1.bf16.msra.mxu0 0
        %1685 = vmatprep.subr.bf16.mxu0 0
        %1686 = vmatpush1.bf16.msra.mxu0 0
        %1687 = vmatprep.subr.bf16.mxu0 0
        %1688 = vmatpush1.bf16.msra.mxu0 0
        %1689 = vmatprep.subr.bf16.mxu0 0
        %1690 = vmatpush1.bf16.msra.mxu0 0
        %1691 = vmatprep.subr.bf16.mxu0 0
        %1692 = vmatpush1.bf16.msra.mxu0 0
        %1693 = vmatprep.subr.bf16.mxu0 0
        %1694 = vmatpush1.bf16.msra.mxu0 0
        %1695 = vmatprep.subr.bf16.mxu0 0
        %1696 = vmatpush1.bf16.msra.mxu0 0
        %1697 = vmatprep.subr.bf16.mxu0 0
        %1698 = vmatpush1.bf16.msra.mxu0 0
        %1699 = vmatprep.subr.bf16.mxu0 0
        %1700 = vmatpush1.bf16.msra.mxu0 0
        %1701 = vmatprep.subr.bf16.mxu0 0
        %1702 = vmatpush1.bf16.msra.mxu0 0
        %1703 = vmatprep.subr.bf16.mxu0 0
        %1704 = vmatpush1.bf16.msra.mxu0 0
        %1705 = vmatprep.subr.bf16.mxu0 0
        %1706 = vmatpush1.bf16.msra.mxu0 0
        %1707 = vmatprep.subr.bf16.mxu0 0
        %1708 = vmatpush1.bf16.msra.mxu0 0
        %1709 = vmatprep.subr.bf16.mxu0 0
        %1710 = vmatpush1.bf16.msra.mxu0 0
        %1711 = vmatprep.mubr.bf16.mxu0 0
        %1712 = vmatmul.mubr.bf16.gmra.mrb[0].mxu0 %v1674
        %v1713 = vpop.f32.mrb[0].mxu0
        %v1714 = vadd.f32 0.0, %v1713
        %v1715 = vpop.f32.mrb[0].mxu0
        %v1716 = vpop.f32.mrb[0].mxu0
        %v1717 = vpop.f32.mrb[0].mxu0
        %1718 = vdwg.mxu0
        %1720 = vrot.lane.b32.xlu0 %v1502, 112
        %v1721 = vpop.permute.xlu0 %1720
        %1723 = vrot.lane.b32.xlu0 %v1504, 112
        %v1724 = vpop.permute.xlu0 %1723
        %v1726 = vsel %vm1508, %v1721, 0
        %v1729 = vsel %vm1508, %v1724, 0
        %1731 = vmatprep.subr.bf16.mxu0 0
        %1732 = vmatpush1.bf16.xpose.msra.mxu0 %v1729
        %1733 = vmatprep.subr.bf16.mxu0 0
        %1734 = vmatpush1.bf16.xpose.msra.mxu0 0
        %1735 = vmatprep.subr.bf16.mxu0 0
        %1736 = vmatpush1.bf16.xpose.msra.mxu0 0
        %1737 = vmatprep.subr.bf16.mxu0 0
        %1738 = vmatpush1.bf16.xpose.msra.mxu0 0
        %1739 = vmatprep.subr.bf16.mxu0 0
        %1740 = vmatpush1.bf16.xpose.msra.mxu0 0
        %1741 = vmatprep.subr.bf16.mxu0 0
        %1742 = vmatpush1.bf16.xpose.msra.mxu0 0
        %1743 = vmatprep.subr.bf16.mxu0 0
        %1744 = vmatpush1.bf16.xpose.msra.mxu0 0
        %1745 = vmatprep.subr.bf16.mxu0 0
        %1746 = vmatpush1.bf16.xpose.msra.mxu0 0
        %1747 = vmatprep.subr.bf16.mxu0 0
        %1748 = vmatpush1.bf16.xpose.msra.mxu0 0
        %1749 = vmatprep.subr.bf16.mxu0 0
        %1750 = vmatpush1.bf16.xpose.msra.mxu0 0
        %1751 = vmatprep.subr.bf16.mxu0 0
        %1752 = vmatpush1.bf16.xpose.msra.mxu0 0
        %1753 = vmatprep.subr.bf16.mxu0 0
        %1754 = vmatpush1.bf16.xpose.msra.mxu0 0
        %1755 = vmatprep.subr.bf16.mxu0 0
        %1756 = vmatpush1.bf16.xpose.msra.mxu0 0
        %1757 = vmatprep.subr.bf16.mxu0 0
        %1758 = vmatpush1.bf16.xpose.msra.mxu0 0
        %1759 = vmatprep.subr.bf16.mxu0 0
        %1760 = vmatpush1.bf16.xpose.msra.mxu0 0
        %1761 = vmatprep.subr.bf16.mxu0 0
        %1762 = vmatpush1.bf16.xpose.msra.mxu0 0
        %1763 = vmatprep.mubr.bf16.mxu0 0
        %1764 = vmatmul.mubr.bf16.gmra.mrb[0].mxu0 %v1726
        %v1765 = vpop.f32.mrb[0].mxu0
        %v1766 = vadd.f32 0.0, %v1765
        %v1767 = vpop.f32.mrb[0].mxu0
        %v1768 = vpop.f32.mrb[0].mxu0
        %v1769 = vpop.f32.mrb[0].mxu0
        %1770 = vdwg.mxu0
        %1772 = vrot.lane.b32.xlu0 %v1503, 112
        %v1773 = vpop.permute.xlu0 %1772
        %1775 = vrot.lane.b32.xlu0 %v1505, 112
        %v1776 = vpop.permute.xlu0 %1775
        %v1778 = vsel %vm1508, %v1773, 0
        %v1781 = vsel %vm1508, %v1776, 0
        %1783 = vmatprep.subr.bf16.mxu0 0
        %1784 = vmatpush1.bf16.xpose.msra.mxu0 %v1781
        %1785 = vmatprep.subr.bf16.mxu0 0
        %1786 = vmatpush1.bf16.xpose.msra.mxu0 0
        %1787 = vmatprep.subr.bf16.mxu0 0
        %1788 = vmatpush1.bf16.xpose.msra.mxu0 0
        %1789 = vmatprep.subr.bf16.mxu0 0
        %1790 = vmatpush1.bf16.xpose.msra.mxu0 0
        %1791 = vmatprep.subr.bf16.mxu0 0
        %1792 = vmatpush1.bf16.xpose.msra.mxu0 0
        %1793 = vmatprep.subr.bf16.mxu0 0
        %1794 = vmatpush1.bf16.xpose.msra.mxu0 0
        %1795 = vmatprep.subr.bf16.mxu0 0
        %1796 = vmatpush1.bf16.xpose.msra.mxu0 0
        %1797 = vmatprep.subr.bf16.mxu0 0
        %1798 = vmatpush1.bf16.xpose.msra.mxu0 0
        %1799 = vmatprep.subr.bf16.mxu0 0
        %1800 = vmatpush1.bf16.xpose.msra.mxu0 0
        %1801 = vmatprep.subr.bf16.mxu0 0
        %1802 = vmatpush1.bf16.xpose.msra.mxu0 0
        %1803 = vmatprep.subr.bf16.mxu0 0
        %1804 = vmatpush1.bf16.xpose.msra.mxu0 0
        %1805 = vmatprep.subr.bf16.mxu0 0
        %1806 = vmatpush1.bf16.xpose.msra.mxu0 0
        %1807 = vmatprep.subr.bf16.mxu0 0
        %1808 = vmatpush1.bf16.xpose.msra.mxu0 0
        %1809 = vmatprep.subr.bf16.mxu0 0
        %1810 = vmatpush1.bf16.xpose.msra.mxu0 0
        %1811 = vmatprep.subr.bf16.mxu0 0
        %1812 = vmatpush1.bf16.xpose.msra.mxu0 0
        %1813 = vmatprep.subr.bf16.mxu0 0
        %1814 = vmatpush1.bf16.xpose.msra.mxu0 0
        %1815 = vmatprep.mubr.bf16.mxu0 0
        %1816 = vmatmul.mubr.bf16.gmra.mrb[0].mxu0 %v1778
        %v1817 = vpop.f32.mrb[0].mxu0
        %v1818 = vadd.f32 0.0, %v1817
        %v1819 = vpop.f32.mrb[0].mxu0
        %v1820 = vpop.f32.mrb[0].mxu0
        %v1821 = vpop.f32.mrb[0].mxu0
        %1822 = vdwg.mxu0
        %v1823 = vsel %vm1601, %v1766, -inf
        %1824 = vmax.xlane.f32.xlu0 %v1823
        %v1825 = vpop.xlane.xlu0 %1824
        %v1826 = vsel %vm1601, %v1818, -inf
        %1827 = vmax.xlane.f32.xlu0 %v1826
        %v1828 = vpop.xlane.xlu0 %1827
        %v1829 = vsub.f32 %v1766, %v1825
        %v1830 = vsub.f32 %v1818, %v1828
        %v1831 = vmul.f32 %v1829, 1.442695
        %v1832 = vpow.pop %v1831
        %v1833 = vmul.f32 %v1830, 1.442695
        %v1834 = vpow.pop %v1833
        %v1835 = vsel %vm1601, %v1832, 0.0
        %1836 = vadd.xlane.f32.xlu0 %v1835
        %v1837 = vpop.xlane.xlu0 %1836
        %v1838 = vsel %vm1601, %v1834, 0.0
        %1839 = vadd.xlane.f32.xlu0 %v1838
        %v1840 = vpop.xlane.xlu0 %1839
        %v1841 = vrcp.pop %v1837
        %v1842 = vrcp.pop %v1840
        %v1843 = vmul.f32 %v1832, %v1841
        %v1844 = vmul.f32 %v1834, %v1842
        %v1845 = vpack.c.bf16 %v1843, %v1843
        %v1846 = vpack.c.bf16 %v1844, %v1844
        %1848 = vrot.lane.b32.xlu0 %v1506, 112
        %v1849 = vpop.permute.xlu0 %1848
        %v1851 = vsel %vm1601, %v1845, 0
        %v1854 = vsel %vm1629, %v1849, 0
        %1856 = vmatprep.subr.bf16.mxu0 0
        %1857 = vmatpush1.bf16.msra.mxu0 %v1854
        %1858 = vmatprep.subr.bf16.mxu0 0
        %1859 = vmatpush1.bf16.msra.mxu0 0
        %1860 = vmatprep.subr.bf16.mxu0 0
        %1861 = vmatpush1.bf16.msra.mxu0 0
        %1862 = vmatprep.subr.bf16.mxu0 0
        %1863 = vmatpush1.bf16.msra.mxu0 0
        %1864 = vmatprep.subr.bf16.mxu0 0
        %1865 = vmatpush1.bf16.msra.mxu0 0
        %1866 = vmatprep.subr.bf16.mxu0 0
        %1867 = vmatpush1.bf16.msra.mxu0 0
        %1868 = vmatprep.subr.bf16.mxu0 0
        %1869 = vmatpush1.bf16.msra.mxu0 0
        %1870 = vmatprep.subr.bf16.mxu0 0
        %1871 = vmatpush1.bf16.msra.mxu0 0
        %1872 = vmatprep.subr.bf16.mxu0 0
        %1873 = vmatpush1.bf16.msra.mxu0 0
        %1874 = vmatprep.subr.bf16.mxu0 0
        %1875 = vmatpush1.bf16.msra.mxu0 0
        %1876 = vmatprep.subr.bf16.mxu0 0
        %1877 = vmatpush1.bf16.msra.mxu0 0
        %1878 = vmatprep.subr.bf16.mxu0 0
        %1879 = vmatpush1.bf16.msra.mxu0 0
        %1880 = vmatprep.subr.bf16.mxu0 0
        %1881 = vmatpush1.bf16.msra.mxu0 0
        %1882 = vmatprep.subr.bf16.mxu0 0
        %1883 = vmatpush1.bf16.msra.mxu0 0
        %1884 = vmatprep.subr.bf16.mxu0 0
        %1885 = vmatpush1.bf16.msra.mxu0 0
        %1886 = vmatprep.subr.bf16.mxu0 0
        %1887 = vmatpush1.bf16.msra.mxu0 0
        %1888 = vmatprep.mubr.bf16.mxu0 0
        %1889 = vmatmul.mubr.bf16.gmra.mrb[0].mxu0 %v1851
        %v1890 = vpop.f32.mrb[0].mxu0
        %v1891 = vadd.f32 0.0, %v1890
        %v1892 = vpop.f32.mrb[0].mxu0
        %v1893 = vpop.f32.mrb[0].mxu0
        %v1894 = vpop.f32.mrb[0].mxu0
        %1895 = vdwg.mxu0
        %1897 = vrot.lane.b32.xlu0 %v1507, 112
        %v1898 = vpop.permute.xlu0 %1897
        %v1900 = vsel %vm1601, %v1846, 0
        %v1903 = vsel %vm1629, %v1898, 0
        %1905 = vmatprep.subr.bf16.mxu0 0
        %1906 = vmatpush1.bf16.msra.mxu0 %v1903
        %1907 = vmatprep.subr.bf16.mxu0 0
        %1908 = vmatpush1.bf16.msra.mxu0 0
        %1909 = vmatprep.subr.bf16.mxu0 0
        %1910 = vmatpush1.bf16.msra.mxu0 0
        %1911 = vmatprep.subr.bf16.mxu0 0
        %1912 = vmatpush1.bf16.msra.mxu0 0
        %1913 = vmatprep.subr.bf16.mxu0 0
        %1914 = vmatpush1.bf16.msra.mxu0 0
        %1915 = vmatprep.subr.bf16.mxu0 0
        %1916 = vmatpush1.bf16.msra.mxu0 0
        %1917 = vmatprep.subr.bf16.mxu0 0
        %1918 = vmatpush1.bf16.msra.mxu0 0
        %1919 = vmatprep.subr.bf16.mxu0 0
        %1920 = vmatpush1.bf16.msra.mxu0 0
        %1921 = vmatprep.subr.bf16.mxu0 0
        %1922 = vmatpush1.bf16.msra.mxu0 0
        %1923 = vmatprep.subr.bf16.mxu0 0
        %1924 = vmatpush1.bf16.msra.mxu0 0
        %1925 = vmatprep.subr.bf16.mxu0 0
        %1926 = vmatpush1.bf16.msra.mxu0 0
        %1927 = vmatprep.subr.bf16.mxu0 0
        %1928 = vmatpush1.bf16.msra.mxu0 0
        %1929 = vmatprep.subr.bf16.mxu0 0
        %1930 = vmatpush1.bf16.msra.mxu0 0
        %1931 = vmatprep.subr.bf16.mxu0 0
        %1932 = vmatpush1.bf16.msra.mxu0 0
        %1933 = vmatprep.subr.bf16.mxu0 0
        %1934 = vmatpush1.bf16.msra.mxu0 0
        %1935 = vmatprep.subr.bf16.mxu0 0
        %1936 = vmatpush1.bf16.msra.mxu0 0
        %1937 = vmatprep.mubr.bf16.mxu0 0
        %1938 = vmatmul.mubr.bf16.gmra.mrb[0].mxu0 %v1900
        %v1939 = vpop.f32.mrb[0].mxu0
        %v1940 = vadd.f32 0.0, %v1939
        %v1941 = vpop.f32.mrb[0].mxu0
        %v1942 = vpop.f32.mrb[0].mxu0
        %v1943 = vpop.f32.mrb[0].mxu0
        %1944 = vdwg.mxu0
        %1945 = vrot.lane.b32.xlu0 %v1502, 96
        %v1946 = vpop.permute.xlu0 %1945
        %1947 = vrot.lane.b32.xlu0 %v1504, 96
        %v1948 = vpop.permute.xlu0 %1947
        %v1950 = vsel %vm1508, %v1946, 0
        %v1953 = vsel %vm1508, %v1948, 0
        %1955 = vmatprep.subr.bf16.mxu0 0
        %1956 = vmatpush1.bf16.xpose.msra.mxu0 %v1953
        %1957 = vmatprep.subr.bf16.mxu0 0
        %1958 = vmatpush1.bf16.xpose.msra.mxu0 0
        %1959 = vmatprep.subr.bf16.mxu0 0
        %1960 = vmatpush1.bf16.xpose.msra.mxu0 0
        %1961 = vmatprep.subr.bf16.mxu0 0
        %1962 = vmatpush1.bf16.xpose.msra.mxu0 0
        %1963 = vmatprep.subr.bf16.mxu0 0
        %1964 = vmatpush1.bf16.xpose.msra.mxu0 0
        %1965 = vmatprep.subr.bf16.mxu0 0
        %1966 = vmatpush1.bf16.xpose.msra.mxu0 0
        %1967 = vmatprep.subr.bf16.mxu0 0
        %1968 = vmatpush1.bf16.xpose.msra.mxu0 0
        %1969 = vmatprep.subr.bf16.mxu0 0
        %1970 = vmatpush1.bf16.xpose.msra.mxu0 0
        %1971 = vmatprep.subr.bf16.mxu0 0
        %1972 = vmatpush1.bf16.xpose.msra.mxu0 0
        %1973 = vmatprep.subr.bf16.mxu0 0
        %1974 = vmatpush1.bf16.xpose.msra.mxu0 0
        %1975 = vmatprep.subr.bf16.mxu0 0
        %1976 = vmatpush1.bf16.xpose.msra.mxu0 0
        %1977 = vmatprep.subr.bf16.mxu0 0
        %1978 = vmatpush1.bf16.xpose.msra.mxu0 0
        %1979 = vmatprep.subr.bf16.mxu0 0
        %1980 = vmatpush1.bf16.xpose.msra.mxu0 0
        %1981 = vmatprep.subr.bf16.mxu0 0
        %1982 = vmatpush1.bf16.xpose.msra.mxu0 0
        %1983 = vmatprep.subr.bf16.mxu0 0
        %1984 = vmatpush1.bf16.xpose.msra.mxu0 0
        %1985 = vmatprep.subr.bf16.mxu0 0
        %1986 = vmatpush1.bf16.xpose.msra.mxu0 0
        %1987 = vmatprep.mubr.bf16.mxu0 0
        %1988 = vmatmul.mubr.bf16.gmra.mrb[0].mxu0 %v1950
        %v1989 = vpop.f32.mrb[0].mxu0
        %v1990 = vadd.f32 0.0, %v1989
        %v1991 = vpop.f32.mrb[0].mxu0
        %v1992 = vpop.f32.mrb[0].mxu0
        %v1993 = vpop.f32.mrb[0].mxu0
        %1994 = vdwg.mxu0
        %1995 = vrot.lane.b32.xlu0 %v1503, 96
        %v1996 = vpop.permute.xlu0 %1995
        %1997 = vrot.lane.b32.xlu0 %v1505, 96
        %v1998 = vpop.permute.xlu0 %1997
        %v2000 = vsel %vm1508, %v1996, 0
        %v2003 = vsel %vm1508, %v1998, 0
        %2005 = vmatprep.subr.bf16.mxu0 0
        %2006 = vmatpush1.bf16.xpose.msra.mxu0 %v2003
        %2007 = vmatprep.subr.bf16.mxu0 0
        %2008 = vmatpush1.bf16.xpose.msra.mxu0 0
        %2009 = vmatprep.subr.bf16.mxu0 0
        %2010 = vmatpush1.bf16.xpose.msra.mxu0 0
        %2011 = vmatprep.subr.bf16.mxu0 0
        %2012 = vmatpush1.bf16.xpose.msra.mxu0 0
        %2013 = vmatprep.subr.bf16.mxu0 0
        %2014 = vmatpush1.bf16.xpose.msra.mxu0 0
        %2015 = vmatprep.subr.bf16.mxu0 0
        %2016 = vmatpush1.bf16.xpose.msra.mxu0 0
        %2017 = vmatprep.subr.bf16.mxu0 0
        %2018 = vmatpush1.bf16.xpose.msra.mxu0 0
        %2019 = vmatprep.subr.bf16.mxu0 0
        %2020 = vmatpush1.bf16.xpose.msra.mxu0 0
        %2021 = vmatprep.subr.bf16.mxu0 0
        %2022 = vmatpush1.bf16.xpose.msra.mxu0 0
        %2023 = vmatprep.subr.bf16.mxu0 0
        %2024 = vmatpush1.bf16.xpose.msra.mxu0 0
        %2025 = vmatprep.subr.bf16.mxu0 0
        %2026 = vmatpush1.bf16.xpose.msra.mxu0 0
        %2027 = vmatprep.subr.bf16.mxu0 0
        %2028 = vmatpush1.bf16.xpose.msra.mxu0 0
        %2029 = vmatprep.subr.bf16.mxu0 0
        %2030 = vmatpush1.bf16.xpose.msra.mxu0 0
        %2031 = vmatprep.subr.bf16.mxu0 0
        %2032 = vmatpush1.bf16.xpose.msra.mxu0 0
        %2033 = vmatprep.subr.bf16.mxu0 0
        %2034 = vmatpush1.bf16.xpose.msra.mxu0 0
        %2035 = vmatprep.subr.bf16.mxu0 0
        %2036 = vmatpush1.bf16.xpose.msra.mxu0 0
        %2037 = vmatprep.mubr.bf16.mxu0 0
        %2038 = vmatmul.mubr.bf16.gmra.mrb[0].mxu0 %v2000
        %v2039 = vpop.f32.mrb[0].mxu0
        %v2040 = vadd.f32 0.0, %v2039
        %v2041 = vpop.f32.mrb[0].mxu0
        %v2042 = vpop.f32.mrb[0].mxu0
        %v2043 = vpop.f32.mrb[0].mxu0
        %2044 = vdwg.mxu0
        %v2045 = vsel %vm1601, %v1990, -inf
        %2046 = vmax.xlane.f32.xlu0 %v2045
        %v2047 = vpop.xlane.xlu0 %2046
        %v2048 = vsel %vm1601, %v2040, -inf
        %2049 = vmax.xlane.f32.xlu0 %v2048
        %v2050 = vpop.xlane.xlu0 %2049
        %v2051 = vsub.f32 %v1990, %v2047
        %v2052 = vsub.f32 %v2040, %v2050
        %v2053 = vmul.f32 %v2051, 1.442695
        %v2054 = vpow.pop %v2053
        %v2055 = vmul.f32 %v2052, 1.442695
        %v2056 = vpow.pop %v2055
        %v2057 = vsel %vm1601, %v2054, 0.0
        %2058 = vadd.xlane.f32.xlu0 %v2057
        %v2059 = vpop.xlane.xlu0 %2058
        %v2060 = vsel %vm1601, %v2056, 0.0
        %2061 = vadd.xlane.f32.xlu0 %v2060
        %v2062 = vpop.xlane.xlu0 %2061
        %v2063 = vrcp.pop %v2059
        %v2064 = vrcp.pop %v2062
        %v2065 = vmul.f32 %v2054, %v2063
        %v2066 = vmul.f32 %v2056, %v2064
        %v2067 = vpack.c.bf16 %v2065, %v2065
        %v2068 = vpack.c.bf16 %v2066, %v2066
        %2069 = vrot.lane.b32.xlu0 %v1506, 96
        %v2070 = vpop.permute.xlu0 %2069
        %v2072 = vsel %vm1601, %v2067, 0
        %v2075 = vsel %vm1629, %v2070, 0
        %2077 = vmatprep.subr.bf16.mxu0 0
        %2078 = vmatpush1.bf16.msra.mxu0 %v2075
        %2079 = vmatprep.subr.bf16.mxu0 0
        %2080 = vmatpush1.bf16.msra.mxu0 0
        %2081 = vmatprep.subr.bf16.mxu0 0
        %2082 = vmatpush1.bf16.msra.mxu0 0
        %2083 = vmatprep.subr.bf16.mxu0 0
        %2084 = vmatpush1.bf16.msra.mxu0 0
        %2085 = vmatprep.subr.bf16.mxu0 0
        %2086 = vmatpush1.bf16.msra.mxu0 0
        %2087 = vmatprep.subr.bf16.mxu0 0
        %2088 = vmatpush1.bf16.msra.mxu0 0
        %2089 = vmatprep.subr.bf16.mxu0 0
        %2090 = vmatpush1.bf16.msra.mxu0 0
        %2091 = vmatprep.subr.bf16.mxu0 0
        %2092 = vmatpush1.bf16.msra.mxu0 0
        %2093 = vmatprep.subr.bf16.mxu0 0
        %2094 = vmatpush1.bf16.msra.mxu0 0
        %2095 = vmatprep.subr.bf16.mxu0 0
        %2096 = vmatpush1.bf16.msra.mxu0 0
        %2097 = vmatprep.subr.bf16.mxu0 0
        %2098 = vmatpush1.bf16.msra.mxu0 0
        %2099 = vmatprep.subr.bf16.mxu0 0
        %2100 = vmatpush1.bf16.msra.mxu0 0
        %2101 = vmatprep.subr.bf16.mxu0 0
        %2102 = vmatpush1.bf16.msra.mxu0 0
        %2103 = vmatprep.subr.bf16.mxu0 0
        %2104 = vmatpush1.bf16.msra.mxu0 0
        %2105 = vmatprep.subr.bf16.mxu0 0
        %2106 = vmatpush1.bf16.msra.mxu0 0
        %2107 = vmatprep.subr.bf16.mxu0 0
        %2108 = vmatpush1.bf16.msra.mxu0 0
        %2109 = vmatprep.mubr.bf16.mxu0 0
        %2110 = vmatmul.mubr.bf16.gmra.mrb[0].mxu0 %v2072
        %v2111 = vpop.f32.mrb[0].mxu0
        %v2112 = vadd.f32 0.0, %v2111
        %v2113 = vpop.f32.mrb[0].mxu0
        %v2114 = vpop.f32.mrb[0].mxu0
        %v2115 = vpop.f32.mrb[0].mxu0
        %2116 = vdwg.mxu0
        %2117 = vrot.lane.b32.xlu0 %v1507, 96
        %v2118 = vpop.permute.xlu0 %2117
        %v2120 = vsel %vm1601, %v2068, 0
        %v2123 = vsel %vm1629, %v2118, 0
        %2125 = vmatprep.subr.bf16.mxu0 0
        %2126 = vmatpush1.bf16.msra.mxu0 %v2123
        %2127 = vmatprep.subr.bf16.mxu0 0
        %2128 = vmatpush1.bf16.msra.mxu0 0
        %2129 = vmatprep.subr.bf16.mxu0 0
        %2130 = vmatpush1.bf16.msra.mxu0 0
        %2131 = vmatprep.subr.bf16.mxu0 0
        %2132 = vmatpush1.bf16.msra.mxu0 0
        %2133 = vmatprep.subr.bf16.mxu0 0
        %2134 = vmatpush1.bf16.msra.mxu0 0
        %2135 = vmatprep.subr.bf16.mxu0 0
        %2136 = vmatpush1.bf16.msra.mxu0 0
        %2137 = vmatprep.subr.bf16.mxu0 0
        %2138 = vmatpush1.bf16.msra.mxu0 0
        %2139 = vmatprep.subr.bf16.mxu0 0
        %2140 = vmatpush1.bf16.msra.mxu0 0
        %2141 = vmatprep.subr.bf16.mxu0 0
        %2142 = vmatpush1.bf16.msra.mxu0 0
        %2143 = vmatprep.subr.bf16.mxu0 0
        %2144 = vmatpush1.bf16.msra.mxu0 0
        %2145 = vmatprep.subr.bf16.mxu0 0
        %2146 = vmatpush1.bf16.msra.mxu0 0
        %2147 = vmatprep.subr.bf16.mxu0 0
        %2148 = vmatpush1.bf16.msra.mxu0 0
        %2149 = vmatprep.subr.bf16.mxu0 0
        %2150 = vmatpush1.bf16.msra.mxu0 0
        %2151 = vmatprep.subr.bf16.mxu0 0
        %2152 = vmatpush1.bf16.msra.mxu0 0
        %2153 = vmatprep.subr.bf16.mxu0 0
        %2154 = vmatpush1.bf16.msra.mxu0 0
        %2155 = vmatprep.subr.bf16.mxu0 0
        %2156 = vmatpush1.bf16.msra.mxu0 0
        %2157 = vmatprep.mubr.bf16.mxu0 0
        %2158 = vmatmul.mubr.bf16.gmra.mrb[0].mxu0 %v2120
        %v2159 = vpop.f32.mrb[0].mxu0
        %v2160 = vadd.f32 0.0, %v2159
        %v2161 = vpop.f32.mrb[0].mxu0
        %v2162 = vpop.f32.mrb[0].mxu0
        %v2163 = vpop.f32.mrb[0].mxu0
        %2164 = vdwg.mxu0
        %2165 = vrot.lane.b32.xlu0 %v1502, 80
        %v2166 = vpop.permute.xlu0 %2165
        %2167 = vrot.lane.b32.xlu0 %v1504, 80
        %v2168 = vpop.permute.xlu0 %2167
        %v2170 = vsel %vm1508, %v2166, 0
        %v2173 = vsel %vm1508, %v2168, 0
        %2175 = vmatprep.subr.bf16.mxu0 0
        %2176 = vmatpush1.bf16.xpose.msra.mxu0 %v2173
        %2177 = vmatprep.subr.bf16.mxu0 0
        %2178 = vmatpush1.bf16.xpose.msra.mxu0 0
        %2179 = vmatprep.subr.bf16.mxu0 0
        %2180 = vmatpush1.bf16.xpose.msra.mxu0 0
        %2181 = vmatprep.subr.bf16.mxu0 0
        %2182 = vmatpush1.bf16.xpose.msra.mxu0 0
        %2183 = vmatprep.subr.bf16.mxu0 0
        %2184 = vmatpush1.bf16.xpose.msra.mxu0 0
        %2185 = vmatprep.subr.bf16.mxu0 0
        %2186 = vmatpush1.bf16.xpose.msra.mxu0 0
        %2187 = vmatprep.subr.bf16.mxu0 0
        %2188 = vmatpush1.bf16.xpose.msra.mxu0 0
        %2189 = vmatprep.subr.bf16.mxu0 0
        %2190 = vmatpush1.bf16.xpose.msra.mxu0 0
        %2191 = vmatprep.subr.bf16.mxu0 0
        %2192 = vmatpush1.bf16.xpose.msra.mxu0 0
        %2193 = vmatprep.subr.bf16.mxu0 0
        %2194 = vmatpush1.bf16.xpose.msra.mxu0 0
        %2195 = vmatprep.subr.bf16.mxu0 0
        %2196 = vmatpush1.bf16.xpose.msra.mxu0 0
        %2197 = vmatprep.subr.bf16.mxu0 0
        %2198 = vmatpush1.bf16.xpose.msra.mxu0 0
        %2199 = vmatprep.subr.bf16.mxu0 0
        %2200 = vmatpush1.bf16.xpose.msra.mxu0 0
        %2201 = vmatprep.subr.bf16.mxu0 0
        %2202 = vmatpush1.bf16.xpose.msra.mxu0 0
        %2203 = vmatprep.subr.bf16.mxu0 0
        %2204 = vmatpush1.bf16.xpose.msra.mxu0 0
        %2205 = vmatprep.subr.bf16.mxu0 0
        %2206 = vmatpush1.bf16.xpose.msra.mxu0 0
        %2207 = vmatprep.mubr.bf16.mxu0 0
        %2208 = vmatmul.mubr.bf16.gmra.mrb[0].mxu0 %v2170
        %v2209 = vpop.f32.mrb[0].mxu0
        %v2210 = vadd.f32 0.0, %v2209
        %v2211 = vpop.f32.mrb[0].mxu0
        %v2212 = vpop.f32.mrb[0].mxu0
        %v2213 = vpop.f32.mrb[0].mxu0
        %2214 = vdwg.mxu0
        %2215 = vrot.lane.b32.xlu0 %v1503, 80
        %v2216 = vpop.permute.xlu0 %2215
        %2217 = vrot.lane.b32.xlu0 %v1505, 80
        %v2218 = vpop.permute.xlu0 %2217
        %v2220 = vsel %vm1508, %v2216, 0
        %v2223 = vsel %vm1508, %v2218, 0
        %2225 = vmatprep.subr.bf16.mxu0 0
        %2226 = vmatpush1.bf16.xpose.msra.mxu0 %v2223
        %2227 = vmatprep.subr.bf16.mxu0 0
        %2228 = vmatpush1.bf16.xpose.msra.mxu0 0
        %2229 = vmatprep.subr.bf16.mxu0 0
        %2230 = vmatpush1.bf16.xpose.msra.mxu0 0
        %2231 = vmatprep.subr.bf16.mxu0 0
        %2232 = vmatpush1.bf16.xpose.msra.mxu0 0
        %2233 = vmatprep.subr.bf16.mxu0 0
        %2234 = vmatpush1.bf16.xpose.msra.mxu0 0
        %2235 = vmatprep.subr.bf16.mxu0 0
        %2236 = vmatpush1.bf16.xpose.msra.mxu0 0
        %2237 = vmatprep.subr.bf16.mxu0 0
        %2238 = vmatpush1.bf16.xpose.msra.mxu0 0
        %2239 = vmatprep.subr.bf16.mxu0 0
        %2240 = vmatpush1.bf16.xpose.msra.mxu0 0
        %2241 = vmatprep.subr.bf16.mxu0 0
        %2242 = vmatpush1.bf16.xpose.msra.mxu0 0
        %2243 = vmatprep.subr.bf16.mxu0 0
        %2244 = vmatpush1.bf16.xpose.msra.mxu0 0
        %2245 = vmatprep.subr.bf16.mxu0 0
        %2246 = vmatpush1.bf16.xpose.msra.mxu0 0
        %2247 = vmatprep.subr.bf16.mxu0 0
        %2248 = vmatpush1.bf16.xpose.msra.mxu0 0
        %2249 = vmatprep.subr.bf16.mxu0 0
        %2250 = vmatpush1.bf16.xpose.msra.mxu0 0
        %2251 = vmatprep.subr.bf16.mxu0 0
        %2252 = vmatpush1.bf16.xpose.msra.mxu0 0
        %2253 = vmatprep.subr.bf16.mxu0 0
        %2254 = vmatpush1.bf16.xpose.msra.mxu0 0
        %2255 = vmatprep.subr.bf16.mxu0 0
        %2256 = vmatpush1.bf16.xpose.msra.mxu0 0
        %2257 = vmatprep.mubr.bf16.mxu0 0
        %2258 = vmatmul.mubr.bf16.gmra.mrb[0].mxu0 %v2220
        %v2259 = vpop.f32.mrb[0].mxu0
        %v2260 = vadd.f32 0.0, %v2259
        %v2261 = vpop.f32.mrb[0].mxu0
        %v2262 = vpop.f32.mrb[0].mxu0
        %v2263 = vpop.f32.mrb[0].mxu0
        %2264 = vdwg.mxu0
        %v2265 = vsel %vm1601, %v2210, -inf
        %2266 = vmax.xlane.f32.xlu0 %v2265
        %v2267 = vpop.xlane.xlu0 %2266
        %v2268 = vsel %vm1601, %v2260, -inf
        %2269 = vmax.xlane.f32.xlu0 %v2268
        %v2270 = vpop.xlane.xlu0 %2269
        %v2271 = vsub.f32 %v2210, %v2267
        %v2272 = vsub.f32 %v2260, %v2270
        %v2273 = vmul.f32 %v2271, 1.442695
        %v2274 = vpow.pop %v2273
        %v2275 = vmul.f32 %v2272, 1.442695
        %v2276 = vpow.pop %v2275
        %v2277 = vsel %vm1601, %v2274, 0.0
        %2278 = vadd.xlane.f32.xlu0 %v2277
        %v2279 = vpop.xlane.xlu0 %2278
        %v2280 = vsel %vm1601, %v2276, 0.0
        %2281 = vadd.xlane.f32.xlu0 %v2280
        %v2282 = vpop.xlane.xlu0 %2281
        %v2283 = vrcp.pop %v2279
        %v2284 = vrcp.pop %v2282
        %v2285 = vmul.f32 %v2274, %v2283
        %v2286 = vmul.f32 %v2276, %v2284
        %v2287 = vpack.c.bf16 %v2285, %v2285
        %v2288 = vpack.c.bf16 %v2286, %v2286
        %2289 = vrot.lane.b32.xlu0 %v1506, 80
        %v2290 = vpop.permute.xlu0 %2289
        %v2292 = vsel %vm1601, %v2287, 0
        %v2295 = vsel %vm1629, %v2290, 0
        %2297 = vmatprep.subr.bf16.mxu0 0
        %2298 = vmatpush1.bf16.msra.mxu0 %v2295
        %2299 = vmatprep.subr.bf16.mxu0 0
        %2300 = vmatpush1.bf16.msra.mxu0 0
        %2301 = vmatprep.subr.bf16.mxu0 0
        %2302 = vmatpush1.bf16.msra.mxu0 0
        %2303 = vmatprep.subr.bf16.mxu0 0
        %2304 = vmatpush1.bf16.msra.mxu0 0
        %2305 = vmatprep.subr.bf16.mxu0 0
        %2306 = vmatpush1.bf16.msra.mxu0 0
        %2307 = vmatprep.subr.bf16.mxu0 0
        %2308 = vmatpush1.bf16.msra.mxu0 0
        %2309 = vmatprep.subr.bf16.mxu0 0
        %2310 = vmatpush1.bf16.msra.mxu0 0
        %2311 = vmatprep.subr.bf16.mxu0 0
        %2312 = vmatpush1.bf16.msra.mxu0 0
        %2313 = vmatprep.subr.bf16.mxu0 0
        %2314 = vmatpush1.bf16.msra.mxu0 0
        %2315 = vmatprep.subr.bf16.mxu0 0
        %2316 = vmatpush1.bf16.msra.mxu0 0
        %2317 = vmatprep.subr.bf16.mxu0 0
        %2318 = vmatpush1.bf16.msra.mxu0 0
        %2319 = vmatprep.subr.bf16.mxu0 0
        %2320 = vmatpush1.bf16.msra.mxu0 0
        %2321 = vmatprep.subr.bf16.mxu0 0
        %2322 = vmatpush1.bf16.msra.mxu0 0
        %2323 = vmatprep.subr.bf16.mxu0 0
        %2324 = vmatpush1.bf16.msra.mxu0 0
        %2325 = vmatprep.subr.bf16.mxu0 0
        %2326 = vmatpush1.bf16.msra.mxu0 0
        %2327 = vmatprep.subr.bf16.mxu0 0
        %2328 = vmatpush1.bf16.msra.mxu0 0
        %2329 = vmatprep.mubr.bf16.mxu0 0
        %2330 = vmatmul.mubr.bf16.gmra.mrb[0].mxu0 %v2292
        %v2331 = vpop.f32.mrb[0].mxu0
        %v2332 = vadd.f32 0.0, %v2331
        %v2333 = vpop.f32.mrb[0].mxu0
        %v2334 = vpop.f32.mrb[0].mxu0
        %v2335 = vpop.f32.mrb[0].mxu0
        %2336 = vdwg.mxu0
        %2337 = vrot.lane.b32.xlu0 %v1507, 80
        %v2338 = vpop.permute.xlu0 %2337
        %v2340 = vsel %vm1601, %v2288, 0
        %v2343 = vsel %vm1629, %v2338, 0
        %2345 = vmatprep.subr.bf16.mxu0 0
        %2346 = vmatpush1.bf16.msra.mxu0 %v2343
        %2347 = vmatprep.subr.bf16.mxu0 0
        %2348 = vmatpush1.bf16.msra.mxu0 0
        %2349 = vmatprep.subr.bf16.mxu0 0
        %2350 = vmatpush1.bf16.msra.mxu0 0
        %2351 = vmatprep.subr.bf16.mxu0 0
        %2352 = vmatpush1.bf16.msra.mxu0 0
        %2353 = vmatprep.subr.bf16.mxu0 0
        %2354 = vmatpush1.bf16.msra.mxu0 0
        %2355 = vmatprep.subr.bf16.mxu0 0
        %2356 = vmatpush1.bf16.msra.mxu0 0
        %2357 = vmatprep.subr.bf16.mxu0 0
        %2358 = vmatpush1.bf16.msra.mxu0 0
        %2359 = vmatprep.subr.bf16.mxu0 0
        %2360 = vmatpush1.bf16.msra.mxu0 0
        %2361 = vmatprep.subr.bf16.mxu0 0
        %2362 = vmatpush1.bf16.msra.mxu0 0
        %2363 = vmatprep.subr.bf16.mxu0 0
        %2364 = vmatpush1.bf16.msra.mxu0 0
        %2365 = vmatprep.subr.bf16.mxu0 0
        %2366 = vmatpush1.bf16.msra.mxu0 0
        %2367 = vmatprep.subr.bf16.mxu0 0
        %2368 = vmatpush1.bf16.msra.mxu0 0
        %2369 = vmatprep.subr.bf16.mxu0 0
        %2370 = vmatpush1.bf16.msra.mxu0 0
        %2371 = vmatprep.subr.bf16.mxu0 0
        %2372 = vmatpush1.bf16.msra.mxu0 0
        %2373 = vmatprep.subr.bf16.mxu0 0
        %2374 = vmatpush1.bf16.msra.mxu0 0
        %2375 = vmatprep.subr.bf16.mxu0 0
        %2376 = vmatpush1.bf16.msra.mxu0 0
        %2377 = vmatprep.mubr.bf16.mxu0 0
        %2378 = vmatmul.mubr.bf16.gmra.mrb[0].mxu0 %v2340
        %v2379 = vpop.f32.mrb[0].mxu0
        %v2380 = vadd.f32 0.0, %v2379
        %v2381 = vpop.f32.mrb[0].mxu0
        %v2382 = vpop.f32.mrb[0].mxu0
        %v2383 = vpop.f32.mrb[0].mxu0
        %2384 = vdwg.mxu0
        %2385 = vrot.lane.b32.xlu0 %v1502, 64
        %v2386 = vpop.permute.xlu0 %2385
        %2387 = vrot.lane.b32.xlu0 %v1504, 64
        %v2388 = vpop.permute.xlu0 %2387
        %v2390 = vsel %vm1508, %v2386, 0
        %v2393 = vsel %vm1508, %v2388, 0
        %2395 = vmatprep.subr.bf16.mxu0 0
        %2396 = vmatpush1.bf16.xpose.msra.mxu0 %v2393
        %2397 = vmatprep.subr.bf16.mxu0 0
        %2398 = vmatpush1.bf16.xpose.msra.mxu0 0
        %2399 = vmatprep.subr.bf16.mxu0 0
        %2400 = vmatpush1.bf16.xpose.msra.mxu0 0
        %2401 = vmatprep.subr.bf16.mxu0 0
        %2402 = vmatpush1.bf16.xpose.msra.mxu0 0
        %2403 = vmatprep.subr.bf16.mxu0 0
        %2404 = vmatpush1.bf16.xpose.msra.mxu0 0
        %2405 = vmatprep.subr.bf16.mxu0 0
        %2406 = vmatpush1.bf16.xpose.msra.mxu0 0
        %2407 = vmatprep.subr.bf16.mxu0 0
        %2408 = vmatpush1.bf16.xpose.msra.mxu0 0
        %2409 = vmatprep.subr.bf16.mxu0 0
        %2410 = vmatpush1.bf16.xpose.msra.mxu0 0
        %2411 = vmatprep.subr.bf16.mxu0 0
        %2412 = vmatpush1.bf16.xpose.msra.mxu0 0
        %2413 = vmatprep.subr.bf16.mxu0 0
        %2414 = vmatpush1.bf16.xpose.msra.mxu0 0
        %2415 = vmatprep.subr.bf16.mxu0 0
        %2416 = vmatpush1.bf16.xpose.msra.mxu0 0
        %2417 = vmatprep.subr.bf16.mxu0 0
        %2418 = vmatpush1.bf16.xpose.msra.mxu0 0
        %2419 = vmatprep.subr.bf16.mxu0 0
        %2420 = vmatpush1.bf16.xpose.msra.mxu0 0
        %2421 = vmatprep.subr.bf16.mxu0 0
        %2422 = vmatpush1.bf16.xpose.msra.mxu0 0
        %2423 = vmatprep.subr.bf16.mxu0 0
        %2424 = vmatpush1.bf16.xpose.msra.mxu0 0
        %2425 = vmatprep.subr.bf16.mxu0 0
        %2426 = vmatpush1.bf16.xpose.msra.mxu0 0
        %2427 = vmatprep.mubr.bf16.mxu0 0
        %2428 = vmatmul.mubr.bf16.gmra.mrb[0].mxu0 %v2390
        %v2429 = vpop.f32.mrb[0].mxu0
        %v2430 = vadd.f32 0.0, %v2429
        %v2431 = vpop.f32.mrb[0].mxu0
        %v2432 = vpop.f32.mrb[0].mxu0
        %v2433 = vpop.f32.mrb[0].mxu0
        %2434 = vdwg.mxu0
        %2435 = vrot.lane.b32.xlu0 %v1503, 64
        %v2436 = vpop.permute.xlu0 %2435
        %2437 = vrot.lane.b32.xlu0 %v1505, 64
        %v2438 = vpop.permute.xlu0 %2437
        %v2440 = vsel %vm1508, %v2436, 0
        %v2443 = vsel %vm1508, %v2438, 0
        %2445 = vmatprep.subr.bf16.mxu0 0
        %2446 = vmatpush1.bf16.xpose.msra.mxu0 %v2443
        %2447 = vmatprep.subr.bf16.mxu0 0
        %2448 = vmatpush1.bf16.xpose.msra.mxu0 0
        %2449 = vmatprep.subr.bf16.mxu0 0
        %2450 = vmatpush1.bf16.xpose.msra.mxu0 0
        %2451 = vmatprep.subr.bf16.mxu0 0
        %2452 = vmatpush1.bf16.xpose.msra.mxu0 0
        %2453 = vmatprep.subr.bf16.mxu0 0
        %2454 = vmatpush1.bf16.xpose.msra.mxu0 0
        %2455 = vmatprep.subr.bf16.mxu0 0
        %2456 = vmatpush1.bf16.xpose.msra.mxu0 0
        %2457 = vmatprep.subr.bf16.mxu0 0
        %2458 = vmatpush1.bf16.xpose.msra.mxu0 0
        %2459 = vmatprep.subr.bf16.mxu0 0
        %2460 = vmatpush1.bf16.xpose.msra.mxu0 0
        %2461 = vmatprep.subr.bf16.mxu0 0
        %2462 = vmatpush1.bf16.xpose.msra.mxu0 0
        %2463 = vmatprep.subr.bf16.mxu0 0
        %2464 = vmatpush1.bf16.xpose.msra.mxu0 0
        %2465 = vmatprep.subr.bf16.mxu0 0
        %2466 = vmatpush1.bf16.xpose.msra.mxu0 0
        %2467 = vmatprep.subr.bf16.mxu0 0
        %2468 = vmatpush1.bf16.xpose.msra.mxu0 0
        %2469 = vmatprep.subr.bf16.mxu0 0
        %2470 = vmatpush1.bf16.xpose.msra.mxu0 0
        %2471 = vmatprep.subr.bf16.mxu0 0
        %2472 = vmatpush1.bf16.xpose.msra.mxu0 0
        %2473 = vmatprep.subr.bf16.mxu0 0
        %2474 = vmatpush1.bf16.xpose.msra.mxu0 0
        %2475 = vmatprep.subr.bf16.mxu0 0
        %2476 = vmatpush1.bf16.xpose.msra.mxu0 0
        %2477 = vmatprep.mubr.bf16.mxu0 0
        %2478 = vmatmul.mubr.bf16.gmra.mrb[0].mxu0 %v2440
        %v2479 = vpop.f32.mrb[0].mxu0
        %v2480 = vadd.f32 0.0, %v2479
        %v2481 = vpop.f32.mrb[0].mxu0
        %v2482 = vpop.f32.mrb[0].mxu0
        %v2483 = vpop.f32.mrb[0].mxu0
        %2484 = vdwg.mxu0
        %v2485 = vsel %vm1601, %v2430, -inf
        %2486 = vmax.xlane.f32.xlu0 %v2485
        %v2487 = vpop.xlane.xlu0 %2486
        %v2488 = vsel %vm1601, %v2480, -inf
        %2489 = vmax.xlane.f32.xlu0 %v2488
        %v2490 = vpop.xlane.xlu0 %2489
        %v2491 = vsub.f32 %v2430, %v2487
        %v2492 = vsub.f32 %v2480, %v2490
        %v2493 = vmul.f32 %v2491, 1.442695
        %v2494 = vpow.pop %v2493
        %v2495 = vmul.f32 %v2492, 1.442695
        %v2496 = vpow.pop %v2495
        %v2497 = vsel %vm1601, %v2494, 0.0
        %2498 = vadd.xlane.f32.xlu0 %v2497
        %v2499 = vpop.xlane.xlu0 %2498
        %v2500 = vsel %vm1601, %v2496, 0.0
        %2501 = vadd.xlane.f32.xlu0 %v2500
        %v2502 = vpop.xlane.xlu0 %2501
        %v2503 = vrcp.pop %v2499
        %v2504 = vrcp.pop %v2502
        %v2505 = vmul.f32 %v2494, %v2503
        %v2506 = vmul.f32 %v2496, %v2504
        %v2507 = vpack.c.bf16 %v2505, %v2505
        %v2508 = vpack.c.bf16 %v2506, %v2506
        %2509 = vrot.lane.b32.xlu0 %v1506, 64
        %v2510 = vpop.permute.xlu0 %2509
        %v2512 = vsel %vm1601, %v2507, 0
        %v2515 = vsel %vm1629, %v2510, 0
        %2517 = vmatprep.subr.bf16.mxu0 0
        %2518 = vmatpush1.bf16.msra.mxu0 %v2515
        %2519 = vmatprep.subr.bf16.mxu0 0
        %2520 = vmatpush1.bf16.msra.mxu0 0
        %2521 = vmatprep.subr.bf16.mxu0 0
        %2522 = vmatpush1.bf16.msra.mxu0 0
        %2523 = vmatprep.subr.bf16.mxu0 0
        %2524 = vmatpush1.bf16.msra.mxu0 0
        %2525 = vmatprep.subr.bf16.mxu0 0
        %2526 = vmatpush1.bf16.msra.mxu0 0
        %2527 = vmatprep.subr.bf16.mxu0 0
        %2528 = vmatpush1.bf16.msra.mxu0 0
        %2529 = vmatprep.subr.bf16.mxu0 0
        %2530 = vmatpush1.bf16.msra.mxu0 0
        %2531 = vmatprep.subr.bf16.mxu0 0
        %2532 = vmatpush1.bf16.msra.mxu0 0
        %2533 = vmatprep.subr.bf16.mxu0 0
        %2534 = vmatpush1.bf16.msra.mxu0 0
        %2535 = vmatprep.subr.bf16.mxu0 0
        %2536 = vmatpush1.bf16.msra.mxu0 0
        %2537 = vmatprep.subr.bf16.mxu0 0
        %2538 = vmatpush1.bf16.msra.mxu0 0
        %2539 = vmatprep.subr.bf16.mxu0 0
        %2540 = vmatpush1.bf16.msra.mxu0 0
        %2541 = vmatprep.subr.bf16.mxu0 0
        %2542 = vmatpush1.bf16.msra.mxu0 0
        %2543 = vmatprep.subr.bf16.mxu0 0
        %2544 = vmatpush1.bf16.msra.mxu0 0
        %2545 = vmatprep.subr.bf16.mxu0 0
        %2546 = vmatpush1.bf16.msra.mxu0 0
        %2547 = vmatprep.subr.bf16.mxu0 0
        %2548 = vmatpush1.bf16.msra.mxu0 0
        %2549 = vmatprep.mubr.bf16.mxu0 0
        %2550 = vmatmul.mubr.bf16.gmra.mrb[0].mxu0 %v2512
        %v2551 = vpop.f32.mrb[0].mxu0
        %v2552 = vadd.f32 0.0, %v2551
        %v2553 = vpop.f32.mrb[0].mxu0
        %v2554 = vpop.f32.mrb[0].mxu0
        %v2555 = vpop.f32.mrb[0].mxu0
        %2556 = vdwg.mxu0
        %2557 = vrot.lane.b32.xlu0 %v1507, 64
        %v2558 = vpop.permute.xlu0 %2557
        %v2560 = vsel %vm1601, %v2508, 0
        %v2563 = vsel %vm1629, %v2558, 0
        %2565 = vmatprep.subr.bf16.mxu0 0
        %2566 = vmatpush1.bf16.msra.mxu0 %v2563
        %2567 = vmatprep.subr.bf16.mxu0 0
        %2568 = vmatpush1.bf16.msra.mxu0 0
        %2569 = vmatprep.subr.bf16.mxu0 0
        %2570 = vmatpush1.bf16.msra.mxu0 0
        %2571 = vmatprep.subr.bf16.mxu0 0
        %2572 = vmatpush1.bf16.msra.mxu0 0
        %2573 = vmatprep.subr.bf16.mxu0 0
        %2574 = vmatpush1.bf16.msra.mxu0 0
        %2575 = vmatprep.subr.bf16.mxu0 0
        %2576 = vmatpush1.bf16.msra.mxu0 0
        %2577 = vmatprep.subr.bf16.mxu0 0
        %2578 = vmatpush1.bf16.msra.mxu0 0
        %2579 = vmatprep.subr.bf16.mxu0 0
        %2580 = vmatpush1.bf16.msra.mxu0 0
        %2581 = vmatprep.subr.bf16.mxu0 0
        %2582 = vmatpush1.bf16.msra.mxu0 0
        %2583 = vmatprep.subr.bf16.mxu0 0
        %2584 = vmatpush1.bf16.msra.mxu0 0
        %2585 = vmatprep.subr.bf16.mxu0 0
        %2586 = vmatpush1.bf16.msra.mxu0 0
        %2587 = vmatprep.subr.bf16.mxu0 0
        %2588 = vmatpush1.bf16.msra.mxu0 0
        %2589 = vmatprep.subr.bf16.mxu0 0
        %2590 = vmatpush1.bf16.msra.mxu0 0
        %2591 = vmatprep.subr.bf16.mxu0 0
        %2592 = vmatpush1.bf16.msra.mxu0 0
        %2593 = vmatprep.subr.bf16.mxu0 0
        %2594 = vmatpush1.bf16.msra.mxu0 0
        %2595 = vmatprep.subr.bf16.mxu0 0
        %2596 = vmatpush1.bf16.msra.mxu0 0
        %2597 = vmatprep.mubr.bf16.mxu0 0
        %2598 = vmatmul.mubr.bf16.gmra.mrb[0].mxu0 %v2560
        %v2599 = vpop.f32.mrb[0].mxu0
        %v2600 = vadd.f32 0.0, %v2599
        %v2601 = vpop.f32.mrb[0].mxu0
        %v2602 = vpop.f32.mrb[0].mxu0
        %v2603 = vpop.f32.mrb[0].mxu0
        %2604 = vdwg.mxu0
        %2605 = vrot.lane.b32.xlu0 %v1502, 48
        %v2606 = vpop.permute.xlu0 %2605
        %2607 = vrot.lane.b32.xlu0 %v1504, 48
        %v2608 = vpop.permute.xlu0 %2607
        %v2610 = vsel %vm1508, %v2606, 0
        %v2613 = vsel %vm1508, %v2608, 0
        %2615 = vmatprep.subr.bf16.mxu0 0
        %2616 = vmatpush1.bf16.xpose.msra.mxu0 %v2613
        %2617 = vmatprep.subr.bf16.mxu0 0
        %2618 = vmatpush1.bf16.xpose.msra.mxu0 0
        %2619 = vmatprep.subr.bf16.mxu0 0
        %2620 = vmatpush1.bf16.xpose.msra.mxu0 0
        %2621 = vmatprep.subr.bf16.mxu0 0
        %2622 = vmatpush1.bf16.xpose.msra.mxu0 0
        %2623 = vmatprep.subr.bf16.mxu0 0
        %2624 = vmatpush1.bf16.xpose.msra.mxu0 0
        %2625 = vmatprep.subr.bf16.mxu0 0
        %2626 = vmatpush1.bf16.xpose.msra.mxu0 0
        %2627 = vmatprep.subr.bf16.mxu0 0
        %2628 = vmatpush1.bf16.xpose.msra.mxu0 0
        %2629 = vmatprep.subr.bf16.mxu0 0
        %2630 = vmatpush1.bf16.xpose.msra.mxu0 0
        %2631 = vmatprep.subr.bf16.mxu0 0
        %2632 = vmatpush1.bf16.xpose.msra.mxu0 0
        %2633 = vmatprep.subr.bf16.mxu0 0
        %2634 = vmatpush1.bf16.xpose.msra.mxu0 0
        %2635 = vmatprep.subr.bf16.mxu0 0
        %2636 = vmatpush1.bf16.xpose.msra.mxu0 0
        %2637 = vmatprep.subr.bf16.mxu0 0
        %2638 = vmatpush1.bf16.xpose.msra.mxu0 0
        %2639 = vmatprep.subr.bf16.mxu0 0
        %2640 = vmatpush1.bf16.xpose.msra.mxu0 0
        %2641 = vmatprep.subr.bf16.mxu0 0
        %2642 = vmatpush1.bf16.xpose.msra.mxu0 0
        %2643 = vmatprep.subr.bf16.mxu0 0
        %2644 = vmatpush1.bf16.xpose.msra.mxu0 0
        %2645 = vmatprep.subr.bf16.mxu0 0
        %2646 = vmatpush1.bf16.xpose.msra.mxu0 0
        %2647 = vmatprep.mubr.bf16.mxu0 0
        %2648 = vmatmul.mubr.bf16.gmra.mrb[0].mxu0 %v2610
        %v2649 = vpop.f32.mrb[0].mxu0
        %v2650 = vadd.f32 0.0, %v2649
        %v2651 = vpop.f32.mrb[0].mxu0
        %v2652 = vpop.f32.mrb[0].mxu0
        %v2653 = vpop.f32.mrb[0].mxu0
        %2654 = vdwg.mxu0
        %2655 = vrot.lane.b32.xlu0 %v1503, 48
        %v2656 = vpop.permute.xlu0 %2655
        %2657 = vrot.lane.b32.xlu0 %v1505, 48
        %v2658 = vpop.permute.xlu0 %2657
        %v2660 = vsel %vm1508, %v2656, 0
        %v2663 = vsel %vm1508, %v2658, 0
        %2665 = vmatprep.subr.bf16.mxu0 0
        %2666 = vmatpush1.bf16.xpose.msra.mxu0 %v2663
        %2667 = vmatprep.subr.bf16.mxu0 0
        %2668 = vmatpush1.bf16.xpose.msra.mxu0 0
        %2669 = vmatprep.subr.bf16.mxu0 0
        %2670 = vmatpush1.bf16.xpose.msra.mxu0 0
        %2671 = vmatprep.subr.bf16.mxu0 0
        %2672 = vmatpush1.bf16.xpose.msra.mxu0 0
        %2673 = vmatprep.subr.bf16.mxu0 0
        %2674 = vmatpush1.bf16.xpose.msra.mxu0 0
        %2675 = vmatprep.subr.bf16.mxu0 0
        %2676 = vmatpush1.bf16.xpose.msra.mxu0 0
        %2677 = vmatprep.subr.bf16.mxu0 0
        %2678 = vmatpush1.bf16.xpose.msra.mxu0 0
        %2679 = vmatprep.subr.bf16.mxu0 0
        %2680 = vmatpush1.bf16.xpose.msra.mxu0 0
        %2681 = vmatprep.subr.bf16.mxu0 0
        %2682 = vmatpush1.bf16.xpose.msra.mxu0 0
        %2683 = vmatprep.subr.bf16.mxu0 0
        %2684 = vmatpush1.bf16.xpose.msra.mxu0 0
        %2685 = vmatprep.subr.bf16.mxu0 0
        %2686 = vmatpush1.bf16.xpose.msra.mxu0 0
        %2687 = vmatprep.subr.bf16.mxu0 0
        %2688 = vmatpush1.bf16.xpose.msra.mxu0 0
        %2689 = vmatprep.subr.bf16.mxu0 0
        %2690 = vmatpush1.bf16.xpose.msra.mxu0 0
        %2691 = vmatprep.subr.bf16.mxu0 0
        %2692 = vmatpush1.bf16.xpose.msra.mxu0 0
        %2693 = vmatprep.subr.bf16.mxu0 0
        %2694 = vmatpush1.bf16.xpose.msra.mxu0 0
        %2695 = vmatprep.subr.bf16.mxu0 0
        %2696 = vmatpush1.bf16.xpose.msra.mxu0 0
        %2697 = vmatprep.mubr.bf16.mxu0 0
        %2698 = vmatmul.mubr.bf16.gmra.mrb[0].mxu0 %v2660
        %v2699 = vpop.f32.mrb[0].mxu0
        %v2700 = vadd.f32 0.0, %v2699
        %v2701 = vpop.f32.mrb[0].mxu0
        %v2702 = vpop.f32.mrb[0].mxu0
        %v2703 = vpop.f32.mrb[0].mxu0
        %2704 = vdwg.mxu0
        %v2705 = vsel %vm1601, %v2650, -inf
        %2706 = vmax.xlane.f32.xlu0 %v2705
        %v2707 = vpop.xlane.xlu0 %2706
        %v2708 = vsel %vm1601, %v2700, -inf
        %2709 = vmax.xlane.f32.xlu0 %v2708
        %v2710 = vpop.xlane.xlu0 %2709
        %v2711 = vsub.f32 %v2650, %v2707
        %v2712 = vsub.f32 %v2700, %v2710
        %v2713 = vmul.f32 %v2711, 1.442695
        %v2714 = vpow.pop %v2713
        %v2715 = vmul.f32 %v2712, 1.442695
        %v2716 = vpow.pop %v2715
        %v2717 = vsel %vm1601, %v2714, 0.0
        %2718 = vadd.xlane.f32.xlu0 %v2717
        %v2719 = vpop.xlane.xlu0 %2718
        %v2720 = vsel %vm1601, %v2716, 0.0
        %2721 = vadd.xlane.f32.xlu0 %v2720
        %v2722 = vpop.xlane.xlu0 %2721
        %v2723 = vrcp.pop %v2719
        %v2724 = vrcp.pop %v2722
        %v2725 = vmul.f32 %v2714, %v2723
        %v2726 = vmul.f32 %v2716, %v2724
        %v2727 = vpack.c.bf16 %v2725, %v2725
        %v2728 = vpack.c.bf16 %v2726, %v2726
        %2729 = vrot.lane.b32.xlu0 %v1506, 48
        %v2730 = vpop.permute.xlu0 %2729
        %v2732 = vsel %vm1601, %v2727, 0
        %v2735 = vsel %vm1629, %v2730, 0
        %2737 = vmatprep.subr.bf16.mxu0 0
        %2738 = vmatpush1.bf16.msra.mxu0 %v2735
        %2739 = vmatprep.subr.bf16.mxu0 0
        %2740 = vmatpush1.bf16.msra.mxu0 0
        %2741 = vmatprep.subr.bf16.mxu0 0
        %2742 = vmatpush1.bf16.msra.mxu0 0
        %2743 = vmatprep.subr.bf16.mxu0 0
        %2744 = vmatpush1.bf16.msra.mxu0 0
        %2745 = vmatprep.subr.bf16.mxu0 0
        %2746 = vmatpush1.bf16.msra.mxu0 0
        %2747 = vmatprep.subr.bf16.mxu0 0
        %2748 = vmatpush1.bf16.msra.mxu0 0
        %2749 = vmatprep.subr.bf16.mxu0 0
        %2750 = vmatpush1.bf16.msra.mxu0 0
        %2751 = vmatprep.subr.bf16.mxu0 0
        %2752 = vmatpush1.bf16.msra.mxu0 0
        %2753 = vmatprep.subr.bf16.mxu0 0
        %2754 = vmatpush1.bf16.msra.mxu0 0
        %2755 = vmatprep.subr.bf16.mxu0 0
        %2756 = vmatpush1.bf16.msra.mxu0 0
        %2757 = vmatprep.subr.bf16.mxu0 0
        %2758 = vmatpush1.bf16.msra.mxu0 0
        %2759 = vmatprep.subr.bf16.mxu0 0
        %2760 = vmatpush1.bf16.msra.mxu0 0
        %2761 = vmatprep.subr.bf16.mxu0 0
        %2762 = vmatpush1.bf16.msra.mxu0 0
        %2763 = vmatprep.subr.bf16.mxu0 0
        %2764 = vmatpush1.bf16.msra.mxu0 0
        %2765 = vmatprep.subr.bf16.mxu0 0
        %2766 = vmatpush1.bf16.msra.mxu0 0
        %2767 = vmatprep.subr.bf16.mxu0 0
        %2768 = vmatpush1.bf16.msra.mxu0 0
        %2769 = vmatprep.mubr.bf16.mxu0 0
        %2770 = vmatmul.mubr.bf16.gmra.mrb[0].mxu0 %v2732
        %v2771 = vpop.f32.mrb[0].mxu0
        %v2772 = vadd.f32 0.0, %v2771
        %v2773 = vpop.f32.mrb[0].mxu0
        %v2774 = vpop.f32.mrb[0].mxu0
        %v2775 = vpop.f32.mrb[0].mxu0
        %2776 = vdwg.mxu0
        %2777 = vrot.lane.b32.xlu0 %v1507, 48
        %v2778 = vpop.permute.xlu0 %2777
        %v2780 = vsel %vm1601, %v2728, 0
        %v2783 = vsel %vm1629, %v2778, 0
        %2785 = vmatprep.subr.bf16.mxu0 0
        %2786 = vmatpush1.bf16.msra.mxu0 %v2783
        %2787 = vmatprep.subr.bf16.mxu0 0
        %2788 = vmatpush1.bf16.msra.mxu0 0
        %2789 = vmatprep.subr.bf16.mxu0 0
        %2790 = vmatpush1.bf16.msra.mxu0 0
        %2791 = vmatprep.subr.bf16.mxu0 0
        %2792 = vmatpush1.bf16.msra.mxu0 0
        %2793 = vmatprep.subr.bf16.mxu0 0
        %2794 = vmatpush1.bf16.msra.mxu0 0
        %2795 = vmatprep.subr.bf16.mxu0 0
        %2796 = vmatpush1.bf16.msra.mxu0 0
        %2797 = vmatprep.subr.bf16.mxu0 0
        %2798 = vmatpush1.bf16.msra.mxu0 0
        %2799 = vmatprep.subr.bf16.mxu0 0
        %2800 = vmatpush1.bf16.msra.mxu0 0
        %2801 = vmatprep.subr.bf16.mxu0 0
        %2802 = vmatpush1.bf16.msra.mxu0 0
        %2803 = vmatprep.subr.bf16.mxu0 0
        %2804 = vmatpush1.bf16.msra.mxu0 0
        %2805 = vmatprep.subr.bf16.mxu0 0
        %2806 = vmatpush1.bf16.msra.mxu0 0
        %2807 = vmatprep.subr.bf16.mxu0 0
        %2808 = vmatpush1.bf16.msra.mxu0 0
        %2809 = vmatprep.subr.bf16.mxu0 0
        %2810 = vmatpush1.bf16.msra.mxu0 0
        %2811 = vmatprep.subr.bf16.mxu0 0
        %2812 = vmatpush1.bf16.msra.mxu0 0
        %2813 = vmatprep.subr.bf16.mxu0 0
        %2814 = vmatpush1.bf16.msra.mxu0 0
        %2815 = vmatprep.subr.bf16.mxu0 0
        %2816 = vmatpush1.bf16.msra.mxu0 0
        %2817 = vmatprep.mubr.bf16.mxu0 0
        %2818 = vmatmul.mubr.bf16.gmra.mrb[0].mxu0 %v2780
        %v2819 = vpop.f32.mrb[0].mxu0
        %v2820 = vadd.f32 0.0, %v2819
        %v2821 = vpop.f32.mrb[0].mxu0
        %v2822 = vpop.f32.mrb[0].mxu0
        %v2823 = vpop.f32.mrb[0].mxu0
        %2824 = vdwg.mxu0
        %2825 = vrot.lane.b32.xlu0 %v1502, 32
        %v2826 = vpop.permute.xlu0 %2825
        %2827 = vrot.lane.b32.xlu0 %v1504, 32
        %v2828 = vpop.permute.xlu0 %2827
        %v2830 = vsel %vm1508, %v2826, 0
        %v2833 = vsel %vm1508, %v2828, 0
        %2835 = vmatprep.subr.bf16.mxu0 0
        %2836 = vmatpush1.bf16.xpose.msra.mxu0 %v2833
        %2837 = vmatprep.subr.bf16.mxu0 0
        %2838 = vmatpush1.bf16.xpose.msra.mxu0 0
        %2839 = vmatprep.subr.bf16.mxu0 0
        %2840 = vmatpush1.bf16.xpose.msra.mxu0 0
        %2841 = vmatprep.subr.bf16.mxu0 0
        %2842 = vmatpush1.bf16.xpose.msra.mxu0 0
        %2843 = vmatprep.subr.bf16.mxu0 0
        %2844 = vmatpush1.bf16.xpose.msra.mxu0 0
        %2845 = vmatprep.subr.bf16.mxu0 0
        %2846 = vmatpush1.bf16.xpose.msra.mxu0 0
        %2847 = vmatprep.subr.bf16.mxu0 0
        %2848 = vmatpush1.bf16.xpose.msra.mxu0 0
        %2849 = vmatprep.subr.bf16.mxu0 0
        %2850 = vmatpush1.bf16.xpose.msra.mxu0 0
        %2851 = vmatprep.subr.bf16.mxu0 0
        %2852 = vmatpush1.bf16.xpose.msra.mxu0 0
        %2853 = vmatprep.subr.bf16.mxu0 0
        %2854 = vmatpush1.bf16.xpose.msra.mxu0 0
        %2855 = vmatprep.subr.bf16.mxu0 0
        %2856 = vmatpush1.bf16.xpose.msra.mxu0 0
        %2857 = vmatprep.subr.bf16.mxu0 0
        %2858 = vmatpush1.bf16.xpose.msra.mxu0 0
        %2859 = vmatprep.subr.bf16.mxu0 0
        %2860 = vmatpush1.bf16.xpose.msra.mxu0 0
        %2861 = vmatprep.subr.bf16.mxu0 0
        %2862 = vmatpush1.bf16.xpose.msra.mxu0 0
        %2863 = vmatprep.subr.bf16.mxu0 0
        %2864 = vmatpush1.bf16.xpose.msra.mxu0 0
        %2865 = vmatprep.subr.bf16.mxu0 0
        %2866 = vmatpush1.bf16.xpose.msra.mxu0 0
        %2867 = vmatprep.mubr.bf16.mxu0 0
        %2868 = vmatmul.mubr.bf16.gmra.mrb[0].mxu0 %v2830
        %v2869 = vpop.f32.mrb[0].mxu0
        %v2870 = vadd.f32 0.0, %v2869
        %v2871 = vpop.f32.mrb[0].mxu0
        %v2872 = vpop.f32.mrb[0].mxu0
        %v2873 = vpop.f32.mrb[0].mxu0
        %2874 = vdwg.mxu0
        %2875 = vrot.lane.b32.xlu0 %v1503, 32
        %v2876 = vpop.permute.xlu0 %2875
        %2877 = vrot.lane.b32.xlu0 %v1505, 32
        %v2878 = vpop.permute.xlu0 %2877
        %v2880 = vsel %vm1508, %v2876, 0
        %v2883 = vsel %vm1508, %v2878, 0
        %2885 = vmatprep.subr.bf16.mxu0 0
        %2886 = vmatpush1.bf16.xpose.msra.mxu0 %v2883
        %2887 = vmatprep.subr.bf16.mxu0 0
        %2888 = vmatpush1.bf16.xpose.msra.mxu0 0
        %2889 = vmatprep.subr.bf16.mxu0 0
        %2890 = vmatpush1.bf16.xpose.msra.mxu0 0
        %2891 = vmatprep.subr.bf16.mxu0 0
        %2892 = vmatpush1.bf16.xpose.msra.mxu0 0
        %2893 = vmatprep.subr.bf16.mxu0 0
        %2894 = vmatpush1.bf16.xpose.msra.mxu0 0
        %2895 = vmatprep.subr.bf16.mxu0 0
        %2896 = vmatpush1.bf16.xpose.msra.mxu0 0
        %2897 = vmatprep.subr.bf16.mxu0 0
        %2898 = vmatpush1.bf16.xpose.msra.mxu0 0
        %2899 = vmatprep.subr.bf16.mxu0 0
        %2900 = vmatpush1.bf16.xpose.msra.mxu0 0
        %2901 = vmatprep.subr.bf16.mxu0 0
        %2902 = vmatpush1.bf16.xpose.msra.mxu0 0
        %2903 = vmatprep.subr.bf16.mxu0 0
        %2904 = vmatpush1.bf16.xpose.msra.mxu0 0
        %2905 = vmatprep.subr.bf16.mxu0 0
        %2906 = vmatpush1.bf16.xpose.msra.mxu0 0
        %2907 = vmatprep.subr.bf16.mxu0 0
        %2908 = vmatpush1.bf16.xpose.msra.mxu0 0
        %2909 = vmatprep.subr.bf16.mxu0 0
        %2910 = vmatpush1.bf16.xpose.msra.mxu0 0
        %2911 = vmatprep.subr.bf16.mxu0 0
        %2912 = vmatpush1.bf16.xpose.msra.mxu0 0
        %2913 = vmatprep.subr.bf16.mxu0 0
        %2914 = vmatpush1.bf16.xpose.msra.mxu0 0
        %2915 = vmatprep.subr.bf16.mxu0 0
        %2916 = vmatpush1.bf16.xpose.msra.mxu0 0
        %2917 = vmatprep.mubr.bf16.mxu0 0
        %2918 = vmatmul.mubr.bf16.gmra.mrb[0].mxu0 %v2880
        %v2919 = vpop.f32.mrb[0].mxu0
        %v2920 = vadd.f32 0.0, %v2919
        %v2921 = vpop.f32.mrb[0].mxu0
        %v2922 = vpop.f32.mrb[0].mxu0
        %v2923 = vpop.f32.mrb[0].mxu0
        %2924 = vdwg.mxu0
        %v2925 = vsel %vm1601, %v2870, -inf
        %2926 = vmax.xlane.f32.xlu0 %v2925
        %v2927 = vpop.xlane.xlu0 %2926
        %v2928 = vsel %vm1601, %v2920, -inf
        %2929 = vmax.xlane.f32.xlu0 %v2928
        %v2930 = vpop.xlane.xlu0 %2929
        %v2931 = vsub.f32 %v2870, %v2927
        %v2932 = vsub.f32 %v2920, %v2930
        %v2933 = vmul.f32 %v2931, 1.442695
        %v2934 = vpow.pop %v2933
        %v2935 = vmul.f32 %v2932, 1.442695
        %v2936 = vpow.pop %v2935
        %v2937 = vsel %vm1601, %v2934, 0.0
        %2938 = vadd.xlane.f32.xlu0 %v2937
        %v2939 = vpop.xlane.xlu0 %2938
        %v2940 = vsel %vm1601, %v2936, 0.0
        %2941 = vadd.xlane.f32.xlu0 %v2940
        %v2942 = vpop.xlane.xlu0 %2941
        %v2943 = vrcp.pop %v2939
        %v2944 = vrcp.pop %v2942
        %v2945 = vmul.f32 %v2934, %v2943
        %v2946 = vmul.f32 %v2936, %v2944
        %v2947 = vpack.c.bf16 %v2945, %v2945
        %v2948 = vpack.c.bf16 %v2946, %v2946
        %2949 = vrot.lane.b32.xlu0 %v1506, 32
        %v2950 = vpop.permute.xlu0 %2949
        %v2952 = vsel %vm1601, %v2947, 0
        %v2955 = vsel %vm1629, %v2950, 0
        %2957 = vmatprep.subr.bf16.mxu0 0
        %2958 = vmatpush1.bf16.msra.mxu0 %v2955
        %2959 = vmatprep.subr.bf16.mxu0 0
        %2960 = vmatpush1.bf16.msra.mxu0 0
        %2961 = vmatprep.subr.bf16.mxu0 0
        %2962 = vmatpush1.bf16.msra.mxu0 0
        %2963 = vmatprep.subr.bf16.mxu0 0
        %2964 = vmatpush1.bf16.msra.mxu0 0
        %2965 = vmatprep.subr.bf16.mxu0 0
        %2966 = vmatpush1.bf16.msra.mxu0 0
        %2967 = vmatprep.subr.bf16.mxu0 0
        %2968 = vmatpush1.bf16.msra.mxu0 0
        %2969 = vmatprep.subr.bf16.mxu0 0
        %2970 = vmatpush1.bf16.msra.mxu0 0
        %2971 = vmatprep.subr.bf16.mxu0 0
        %2972 = vmatpush1.bf16.msra.mxu0 0
        %2973 = vmatprep.subr.bf16.mxu0 0
        %2974 = vmatpush1.bf16.msra.mxu0 0
        %2975 = vmatprep.subr.bf16.mxu0 0
        %2976 = vmatpush1.bf16.msra.mxu0 0
        %2977 = vmatprep.subr.bf16.mxu0 0
        %2978 = vmatpush1.bf16.msra.mxu0 0
        %2979 = vmatprep.subr.bf16.mxu0 0
        %2980 = vmatpush1.bf16.msra.mxu0 0
        %2981 = vmatprep.subr.bf16.mxu0 0
        %2982 = vmatpush1.bf16.msra.mxu0 0
        %2983 = vmatprep.subr.bf16.mxu0 0
        %2984 = vmatpush1.bf16.msra.mxu0 0
        %2985 = vmatprep.subr.bf16.mxu0 0
        %2986 = vmatpush1.bf16.msra.mxu0 0
        %2987 = vmatprep.subr.bf16.mxu0 0
        %2988 = vmatpush1.bf16.msra.mxu0 0
        %2989 = vmatprep.mubr.bf16.mxu0 0
        %2990 = vmatmul.mubr.bf16.gmra.mrb[0].mxu0 %v2952
        %v2991 = vpop.f32.mrb[0].mxu0
        %v2992 = vadd.f32 0.0, %v2991
        %v2993 = vpop.f32.mrb[0].mxu0
        %v2994 = vpop.f32.mrb[0].mxu0
        %v2995 = vpop.f32.mrb[0].mxu0
        %2996 = vdwg.mxu0
        %2997 = vrot.lane.b32.xlu0 %v1507, 32
        %v2998 = vpop.permute.xlu0 %2997
        %v3000 = vsel %vm1601, %v2948, 0
        %v3003 = vsel %vm1629, %v2998, 0
        %3005 = vmatprep.subr.bf16.mxu0 0
        %3006 = vmatpush1.bf16.msra.mxu0 %v3003
        %3007 = vmatprep.subr.bf16.mxu0 0
        %3008 = vmatpush1.bf16.msra.mxu0 0
        %3009 = vmatprep.subr.bf16.mxu0 0
        %3010 = vmatpush1.bf16.msra.mxu0 0
        %3011 = vmatprep.subr.bf16.mxu0 0
        %3012 = vmatpush1.bf16.msra.mxu0 0
        %3013 = vmatprep.subr.bf16.mxu0 0
        %3014 = vmatpush1.bf16.msra.mxu0 0
        %3015 = vmatprep.subr.bf16.mxu0 0
        %3016 = vmatpush1.bf16.msra.mxu0 0
        %3017 = vmatprep.subr.bf16.mxu0 0
        %3018 = vmatpush1.bf16.msra.mxu0 0
        %3019 = vmatprep.subr.bf16.mxu0 0
        %3020 = vmatpush1.bf16.msra.mxu0 0
        %3021 = vmatprep.subr.bf16.mxu0 0
        %3022 = vmatpush1.bf16.msra.mxu0 0
        %3023 = vmatprep.subr.bf16.mxu0 0
        %3024 = vmatpush1.bf16.msra.mxu0 0
        %3025 = vmatprep.subr.bf16.mxu0 0
        %3026 = vmatpush1.bf16.msra.mxu0 0
        %3027 = vmatprep.subr.bf16.mxu0 0
        %3028 = vmatpush1.bf16.msra.mxu0 0
        %3029 = vmatprep.subr.bf16.mxu0 0
        %3030 = vmatpush1.bf16.msra.mxu0 0
        %3031 = vmatprep.subr.bf16.mxu0 0
        %3032 = vmatpush1.bf16.msra.mxu0 0
        %3033 = vmatprep.subr.bf16.mxu0 0
        %3034 = vmatpush1.bf16.msra.mxu0 0
        %3035 = vmatprep.subr.bf16.mxu0 0
        %3036 = vmatpush1.bf16.msra.mxu0 0
        %3037 = vmatprep.mubr.bf16.mxu0 0
        %3038 = vmatmul.mubr.bf16.gmra.mrb[0].mxu0 %v3000
        %v3039 = vpop.f32.mrb[0].mxu0
        %v3040 = vadd.f32 0.0, %v3039
        %v3041 = vpop.f32.mrb[0].mxu0
        %v3042 = vpop.f32.mrb[0].mxu0
        %v3043 = vpop.f32.mrb[0].mxu0
        %3044 = vdwg.mxu0
        %3045 = vrot.lane.b32.xlu0 %v1502, 16
        %v3046 = vpop.permute.xlu0 %3045
        %3047 = vrot.lane.b32.xlu0 %v1504, 16
        %v3048 = vpop.permute.xlu0 %3047
        %v3050 = vsel %vm1508, %v3046, 0
        %v3053 = vsel %vm1508, %v3048, 0
        %3055 = vmatprep.subr.bf16.mxu0 0
        %3056 = vmatpush1.bf16.xpose.msra.mxu0 %v3053
        %3057 = vmatprep.subr.bf16.mxu0 0
        %3058 = vmatpush1.bf16.xpose.msra.mxu0 0
        %3059 = vmatprep.subr.bf16.mxu0 0
        %3060 = vmatpush1.bf16.xpose.msra.mxu0 0
        %3061 = vmatprep.subr.bf16.mxu0 0
        %3062 = vmatpush1.bf16.xpose.msra.mxu0 0
        %3063 = vmatprep.subr.bf16.mxu0 0
        %3064 = vmatpush1.bf16.xpose.msra.mxu0 0
        %3065 = vmatprep.subr.bf16.mxu0 0
        %3066 = vmatpush1.bf16.xpose.msra.mxu0 0
        %3067 = vmatprep.subr.bf16.mxu0 0
        %3068 = vmatpush1.bf16.xpose.msra.mxu0 0
        %3069 = vmatprep.subr.bf16.mxu0 0
        %3070 = vmatpush1.bf16.xpose.msra.mxu0 0
        %3071 = vmatprep.subr.bf16.mxu0 0
        %3072 = vmatpush1.bf16.xpose.msra.mxu0 0
        %3073 = vmatprep.subr.bf16.mxu0 0
        %3074 = vmatpush1.bf16.xpose.msra.mxu0 0
        %3075 = vmatprep.subr.bf16.mxu0 0
        %3076 = vmatpush1.bf16.xpose.msra.mxu0 0
        %3077 = vmatprep.subr.bf16.mxu0 0
        %3078 = vmatpush1.bf16.xpose.msra.mxu0 0
        %3079 = vmatprep.subr.bf16.mxu0 0
        %3080 = vmatpush1.bf16.xpose.msra.mxu0 0
        %3081 = vmatprep.subr.bf16.mxu0 0
        %3082 = vmatpush1.bf16.xpose.msra.mxu0 0
        %3083 = vmatprep.subr.bf16.mxu0 0
        %3084 = vmatpush1.bf16.xpose.msra.mxu0 0
        %3085 = vmatprep.subr.bf16.mxu0 0
        %3086 = vmatpush1.bf16.xpose.msra.mxu0 0
        %3087 = vmatprep.mubr.bf16.mxu0 0
        %3088 = vmatmul.mubr.bf16.gmra.mrb[0].mxu0 %v3050
        %v3089 = vpop.f32.mrb[0].mxu0
        %v3090 = vadd.f32 0.0, %v3089
        %v3091 = vpop.f32.mrb[0].mxu0
        %v3092 = vpop.f32.mrb[0].mxu0
        %v3093 = vpop.f32.mrb[0].mxu0
        %3094 = vdwg.mxu0
        %3095 = vrot.lane.b32.xlu0 %v1503, 16
        %v3096 = vpop.permute.xlu0 %3095
        %3097 = vrot.lane.b32.xlu0 %v1505, 16
        %v3098 = vpop.permute.xlu0 %3097
        %v3100 = vsel %vm1508, %v3096, 0
        %v3103 = vsel %vm1508, %v3098, 0
        %3105 = vmatprep.subr.bf16.mxu0 0
        %3106 = vmatpush1.bf16.xpose.msra.mxu0 %v3103
        %3107 = vmatprep.subr.bf16.mxu0 0
        %3108 = vmatpush1.bf16.xpose.msra.mxu0 0
        %3109 = vmatprep.subr.bf16.mxu0 0
        %3110 = vmatpush1.bf16.xpose.msra.mxu0 0
        %3111 = vmatprep.subr.bf16.mxu0 0
        %3112 = vmatpush1.bf16.xpose.msra.mxu0 0
        %3113 = vmatprep.subr.bf16.mxu0 0
        %3114 = vmatpush1.bf16.xpose.msra.mxu0 0
        %3115 = vmatprep.subr.bf16.mxu0 0
        %3116 = vmatpush1.bf16.xpose.msra.mxu0 0
        %3117 = vmatprep.subr.bf16.mxu0 0
        %3118 = vmatpush1.bf16.xpose.msra.mxu0 0
        %3119 = vmatprep.subr.bf16.mxu0 0
        %3120 = vmatpush1.bf16.xpose.msra.mxu0 0
        %3121 = vmatprep.subr.bf16.mxu0 0
        %3122 = vmatpush1.bf16.xpose.msra.mxu0 0
        %3123 = vmatprep.subr.bf16.mxu0 0
        %3124 = vmatpush1.bf16.xpose.msra.mxu0 0
        %3125 = vmatprep.subr.bf16.mxu0 0
        %3126 = vmatpush1.bf16.xpose.msra.mxu0 0
        %3127 = vmatprep.subr.bf16.mxu0 0
        %3128 = vmatpush1.bf16.xpose.msra.mxu0 0
        %3129 = vmatprep.subr.bf16.mxu0 0
        %3130 = vmatpush1.bf16.xpose.msra.mxu0 0
        %3131 = vmatprep.subr.bf16.mxu0 0
        %3132 = vmatpush1.bf16.xpose.msra.mxu0 0
        %3133 = vmatprep.subr.bf16.mxu0 0
        %3134 = vmatpush1.bf16.xpose.msra.mxu0 0
        %3135 = vmatprep.subr.bf16.mxu0 0
        %3136 = vmatpush1.bf16.xpose.msra.mxu0 0
        %3137 = vmatprep.mubr.bf16.mxu0 0
        %3138 = vmatmul.mubr.bf16.gmra.mrb[0].mxu0 %v3100
        %v3139 = vpop.f32.mrb[0].mxu0
        %v3140 = vadd.f32 0.0, %v3139
        %v3141 = vpop.f32.mrb[0].mxu0
        %v3142 = vpop.f32.mrb[0].mxu0
        %v3143 = vpop.f32.mrb[0].mxu0
        %3144 = vdwg.mxu0
        %v3145 = vsel %vm1601, %v3090, -inf
        %3146 = vmax.xlane.f32.xlu0 %v3145
        %v3147 = vpop.xlane.xlu0 %3146
        %v3148 = vsel %vm1601, %v3140, -inf
        %3149 = vmax.xlane.f32.xlu0 %v3148
        %v3150 = vpop.xlane.xlu0 %3149
        %v3151 = vsub.f32 %v3090, %v3147
        %v3152 = vsub.f32 %v3140, %v3150
        %v3153 = vmul.f32 %v3151, 1.442695
        %v3154 = vpow.pop %v3153
        %v3155 = vmul.f32 %v3152, 1.442695
        %v3156 = vpow.pop %v3155
        %v3157 = vsel %vm1601, %v3154, 0.0
        %3158 = vadd.xlane.f32.xlu0 %v3157
        %v3159 = vpop.xlane.xlu0 %3158
        %v3160 = vsel %vm1601, %v3156, 0.0
        %3161 = vadd.xlane.f32.xlu0 %v3160
        %v3162 = vpop.xlane.xlu0 %3161
        %v3163 = vrcp.pop %v3159
        %v3164 = vrcp.pop %v3162
        %v3165 = vmul.f32 %v3154, %v3163
        %v3166 = vmul.f32 %v3156, %v3164
        %v3167 = vpack.c.bf16 %v3165, %v3165
        %v3168 = vpack.c.bf16 %v3166, %v3166
        %3169 = vrot.lane.b32.xlu0 %v1506, 16
        %v3170 = vpop.permute.xlu0 %3169
        %v3172 = vsel %vm1601, %v3167, 0
        %v3175 = vsel %vm1629, %v3170, 0
        %3177 = vmatprep.subr.bf16.mxu0 0
        %3178 = vmatpush1.bf16.msra.mxu0 %v3175
        %3179 = vmatprep.subr.bf16.mxu0 0
        %3180 = vmatpush1.bf16.msra.mxu0 0
        %3181 = vmatprep.subr.bf16.mxu0 0
        %3182 = vmatpush1.bf16.msra.mxu0 0
        %3183 = vmatprep.subr.bf16.mxu0 0
        %3184 = vmatpush1.bf16.msra.mxu0 0
        %3185 = vmatprep.subr.bf16.mxu0 0
        %3186 = vmatpush1.bf16.msra.mxu0 0
        %3187 = vmatprep.subr.bf16.mxu0 0
        %3188 = vmatpush1.bf16.msra.mxu0 0
        %3189 = vmatprep.subr.bf16.mxu0 0
        %3190 = vmatpush1.bf16.msra.mxu0 0
        %3191 = vmatprep.subr.bf16.mxu0 0
        %3192 = vmatpush1.bf16.msra.mxu0 0
        %3193 = vmatprep.subr.bf16.mxu0 0
        %3194 = vmatpush1.bf16.msra.mxu0 0
        %3195 = vmatprep.subr.bf16.mxu0 0
        %3196 = vmatpush1.bf16.msra.mxu0 0
        %3197 = vmatprep.subr.bf16.mxu0 0
        %3198 = vmatpush1.bf16.msra.mxu0 0
        %3199 = vmatprep.subr.bf16.mxu0 0
        %3200 = vmatpush1.bf16.msra.mxu0 0
        %3201 = vmatprep.subr.bf16.mxu0 0
        %3202 = vmatpush1.bf16.msra.mxu0 0
        %3203 = vmatprep.subr.bf16.mxu0 0
        %3204 = vmatpush1.bf16.msra.mxu0 0
        %3205 = vmatprep.subr.bf16.mxu0 0
        %3206 = vmatpush1.bf16.msra.mxu0 0
        %3207 = vmatprep.subr.bf16.mxu0 0
        %3208 = vmatpush1.bf16.msra.mxu0 0
        %3209 = vmatprep.mubr.bf16.mxu0 0
        %3210 = vmatmul.mubr.bf16.gmra.mrb[0].mxu0 %v3172
        %v3211 = vpop.f32.mrb[0].mxu0
        %v3212 = vadd.f32 0.0, %v3211
        %v3213 = vpop.f32.mrb[0].mxu0
        %v3214 = vpop.f32.mrb[0].mxu0
        %v3215 = vpop.f32.mrb[0].mxu0
        %3216 = vdwg.mxu0
        %3217 = vrot.lane.b32.xlu0 %v1507, 16
        %v3218 = vpop.permute.xlu0 %3217
        %v3220 = vsel %vm1601, %v3168, 0
        %v3223 = vsel %vm1629, %v3218, 0
        %3225 = vmatprep.subr.bf16.mxu0 0
        %3226 = vmatpush1.bf16.msra.mxu0 %v3223
        %3227 = vmatprep.subr.bf16.mxu0 0
        %3228 = vmatpush1.bf16.msra.mxu0 0
        %3229 = vmatprep.subr.bf16.mxu0 0
        %3230 = vmatpush1.bf16.msra.mxu0 0
        %3231 = vmatprep.subr.bf16.mxu0 0
        %3232 = vmatpush1.bf16.msra.mxu0 0
        %3233 = vmatprep.subr.bf16.mxu0 0
        %3234 = vmatpush1.bf16.msra.mxu0 0
        %3235 = vmatprep.subr.bf16.mxu0 0
        %3236 = vmatpush1.bf16.msra.mxu0 0
        %3237 = vmatprep.subr.bf16.mxu0 0
        %3238 = vmatpush1.bf16.msra.mxu0 0
        %3239 = vmatprep.subr.bf16.mxu0 0
        %3240 = vmatpush1.bf16.msra.mxu0 0
        %3241 = vmatprep.subr.bf16.mxu0 0
        %3242 = vmatpush1.bf16.msra.mxu0 0
        %3243 = vmatprep.subr.bf16.mxu0 0
        %3244 = vmatpush1.bf16.msra.mxu0 0
        %3245 = vmatprep.subr.bf16.mxu0 0
        %3246 = vmatpush1.bf16.msra.mxu0 0
        %3247 = vmatprep.subr.bf16.mxu0 0
        %3248 = vmatpush1.bf16.msra.mxu0 0
        %3249 = vmatprep.subr.bf16.mxu0 0
        %3250 = vmatpush1.bf16.msra.mxu0 0
        %3251 = vmatprep.subr.bf16.mxu0 0
        %3252 = vmatpush1.bf16.msra.mxu0 0
        %3253 = vmatprep.subr.bf16.mxu0 0
        %3254 = vmatpush1.bf16.msra.mxu0 0
        %3255 = vmatprep.subr.bf16.mxu0 0
        %3256 = vmatpush1.bf16.msra.mxu0 0
        %3257 = vmatprep.mubr.bf16.mxu0 0
        %3258 = vmatmul.mubr.bf16.gmra.mrb[0].mxu0 %v3220
        %v3259 = vpop.f32.mrb[0].mxu0
        %v3260 = vadd.f32 0.0, %v3259
        %v3261 = vpop.f32.mrb[0].mxu0
        %v3262 = vpop.f32.mrb[0].mxu0
        %v3263 = vpop.f32.mrb[0].mxu0
        %3264 = vdwg.mxu0
        %3267 = vrot.lane.b32.xlu0 %v1891, 16
        %v3268 = vpop.permute.xlu0 %3267
        %3269 = vrot.lane.b32.xlu0 %v1940, 16
        %v3270 = vpop.permute.xlu0 %3269
        %3275 = vrot.lane.b32.xlu0 %v2112, 32
        %v3276 = vpop.permute.xlu0 %3275
        %3277 = vrot.lane.b32.xlu0 %v2160, 32
        %v3278 = vpop.permute.xlu0 %3277
        %3283 = vrot.lane.b32.xlu0 %v2332, 48
        %v3284 = vpop.permute.xlu0 %3283
        %3285 = vrot.lane.b32.xlu0 %v2380, 48
        %v3286 = vpop.permute.xlu0 %3285
        %3291 = vrot.lane.b32.xlu0 %v2552, 64
        %v3292 = vpop.permute.xlu0 %3291
        %3293 = vrot.lane.b32.xlu0 %v2600, 64
        %v3294 = vpop.permute.xlu0 %3293
        %3299 = vrot.lane.b32.xlu0 %v2772, 80
        %v3300 = vpop.permute.xlu0 %3299
        %3301 = vrot.lane.b32.xlu0 %v2820, 80
        %v3302 = vpop.permute.xlu0 %3301
        %3307 = vrot.lane.b32.xlu0 %v2992, 96
        %v3308 = vpop.permute.xlu0 %3307
        %3309 = vrot.lane.b32.xlu0 %v3040, 96
        %v3310 = vpop.permute.xlu0 %3309
        %3315 = vrot.lane.b32.xlu0 %v3212, 112
        %v3316 = vpop.permute.xlu0 %3315
        %3317 = vrot.lane.b32.xlu0 %v3260, 112
        %v3318 = vpop.permute.xlu0 %3317
        %v3321 = vsel %vm1508, %v1668, %v3268
        %v3322 = vsel %vm1508, %v1714, %v3270
        %vm3323 = vcmask 261120
        %v3324 = vsel %vm3323, %v3321, %v3276
        %v3325 = vsel %vm3323, %v3322, %v3278
        %vm3326 = vcmask 392192
        %v3327 = vsel %vm3326, %v3324, %v3284
        %v3328 = vsel %vm3326, %v3325, %v3286
        %vm3329 = vcmask 523264
        %v3330 = vsel %vm3329, %v3327, %v3292
        %v3331 = vsel %vm3329, %v3328, %v3294
        %vm3332 = vcmask 654336
        %v3333 = vsel %vm3332, %v3330, %v3300
        %v3334 = vsel %vm3332, %v3331, %v3302
        %vm3335 = vcmask 785408
        %v3336 = vsel %vm3335, %v3333, %v3308
        %v3337 = vsel %vm3335, %v3334, %v3310
        %vm3338 = vcmask 916480
        %v3339 = vsel %vm3338, %v3336, %v3316
        %v3340 = vsel %vm3338, %v3337, %v3318
        %v3341 = vld [vmem:[%s970] sm:$0xf]
        %v3342 = vld [vmem:[%s970 + $0x4] sm:$0xf]
        %v3343 = vld [vmem:[%s970 + $0x8] sm:$0xf]
        %v3344 = vld [vmem:[%s970 + $0xc] sm:$0xf]
        %v3345 = vld [vmem:[%s970 + $0x10] sm:$0xf]
        %v3346 = vld [vmem:[%s970 + $0x14] sm:$0xf]
        %v3347 = vld [vmem:[%s970 + $0x18] sm:$0xf]
        %v3348 = vld [vmem:[%s970 + $0x1c] sm:$0xf]
        %v3349 = vld [vmem:[%s970 + $0x20] sm:$0xf]
        %v3350 = vld [vmem:[%s970 + $0x24] sm:$0xf]
        %v3351 = vld [vmem:[%s970 + $0x28] sm:$0xf]
        %v3352 = vld [vmem:[%s970 + $0x2c] sm:$0xf]
        %v3353 = vld [vmem:[%s970 + $0x30] sm:$0xf]
        %v3354 = vld [vmem:[%s970 + $0x34] sm:$0xf]
        %v3355 = vld [vmem:[%s970 + $0x38] sm:$0xf]
        %v3356 = vld [vmem:[%s970 + $0x3c] sm:$0xf]
        %v3357 = vpack.c.bf16 %v3340, %v3339
        %v3358 = vld [vmem:[%s978] sm:$0x1]
        %v3360 = vlaneseq
        %v3361 = vshrl.u32 %v3360, 7
        %v3362 = vsub.s32 0, %v3361
        %v3363 = vrot.slane %v3358, %v3362
        %v3381 = vunpack.c.l.b16 %v3341
        %v3382 = vunpack.c.l.b16 %v3342
        %v3383 = vunpack.c.l.b16 %v3343
        %v3384 = vunpack.c.l.b16 %v3344
        %v3385 = vunpack.c.l.b16 %v3345
        %v3386 = vunpack.c.l.b16 %v3346
        %v3387 = vunpack.c.l.b16 %v3347
        %v3388 = vunpack.c.l.b16 %v3348
        %v3389 = vunpack.c.l.b16 %v3349
        %v3390 = vunpack.c.l.b16 %v3350
        %v3391 = vunpack.c.l.b16 %v3351
        %v3392 = vunpack.c.l.b16 %v3352
        %v3393 = vunpack.c.l.b16 %v3353
        %v3394 = vunpack.c.l.b16 %v3354
        %v3395 = vunpack.c.l.b16 %v3355
        %v3396 = vunpack.c.l.b16 %v3356
        %v3397 = vpack.c.b16 %v3382, %v3381
        %v3398 = vpack.c.b16 %v3384, %v3383
        %v3399 = vpack.c.b16 %v3386, %v3385
        %v3400 = vpack.c.b16 %v3388, %v3387
        %v3401 = vpack.c.b16 %v3390, %v3389
        %v3402 = vpack.c.b16 %v3392, %v3391
        %v3403 = vpack.c.b16 %v3394, %v3393
        %v3404 = vpack.c.b16 %v3396, %v3395
        %3413 = vmatprep.subr.bf16.mxu0 0
        %3414 = vmatpush1.bf16.msra.mxu0 %v3397
        %3415 = vmatprep.subr.bf16.mxu0 0
        %3416 = vmatpush1.bf16.msra.mxu0 %v3398
        %3417 = vmatprep.subr.bf16.mxu0 0
        %3418 = vmatpush1.bf16.msra.mxu0 %v3399
        %3419 = vmatprep.subr.bf16.mxu0 0
        %3420 = vmatpush1.bf16.msra.mxu0 %v3400
        %3421 = vmatprep.subr.bf16.mxu0 0
        %3422 = vmatpush1.bf16.msra.mxu0 %v3401
        %3423 = vmatprep.subr.bf16.mxu0 0
        %3424 = vmatpush1.bf16.msra.mxu0 %v3402
        %3425 = vmatprep.subr.bf16.mxu0 0
        %3426 = vmatpush1.bf16.msra.mxu0 %v3403
        %3427 = vmatprep.subr.bf16.mxu0 0
        %3428 = vmatpush1.bf16.msra.mxu0 %v3404
        %3429 = vmatprep.subr.bf16.mxu0 0
        %3430 = vmatpush1.bf16.msra.mxu0 0
        %3431 = vmatprep.subr.bf16.mxu0 0
        %3432 = vmatpush1.bf16.msra.mxu0 0
        %3433 = vmatprep.subr.bf16.mxu0 0
        %3434 = vmatpush1.bf16.msra.mxu0 0
        %3435 = vmatprep.subr.bf16.mxu0 0
        %3436 = vmatpush1.bf16.msra.mxu0 0
        %3437 = vmatprep.subr.bf16.mxu0 0
        %3438 = vmatpush1.bf16.msra.mxu0 0
        %3439 = vmatprep.subr.bf16.mxu0 0
        %3440 = vmatpush1.bf16.msra.mxu0 0
        %3441 = vmatprep.subr.bf16.mxu0 0
        %3442 = vmatpush1.bf16.msra.mxu0 0
        %3443 = vmatprep.subr.bf16.mxu0 0
        %3444 = vmatpush1.bf16.msra.mxu0 0
        %3445 = vmatprep.mubr.bf16.mxu0 0
        %3446 = vmatmul.mubr.bf16.gmra.mrb[0].mxu0 %v3357
        %v3447 = vpop.f32.mrb[0].mxu0
        %v3448 = vadd.f32 %v3363, %v3447
        %v3449 = vpop.f32.mrb[0].mxu0
        %v3450 = vpop.f32.mrb[0].mxu0
        %v3451 = vadd.f32 %v3363, %v3450
        %v3452 = vpop.f32.mrb[0].mxu0
        %3453 = vdwg.mxu0
        %v3454 = vld [vmem:[%s986] sm:$0x1]
        %v3455 = vld [vmem:[%s994] sm:$0x1]
        %v3456 = vadd.f32 %v1236, %v3448
        %v3457 = vadd.f32 %v1237, %v3451
        %3458 = vadd.xlane.f32.xlu0 %v3456
        %v3459 = vpop.xlane.xlu0 %3458
        %3460 = vadd.xlane.f32.xlu0 %v3457
        %v3461 = vpop.xlane.xlu0 %3460
        %v3462 = vrcp.pop 128.0
        %v3463 = vmul.f32 %v3459, %v3462
        %v3464 = vmul.f32 %v3461, %v3462
        %v3465 = vsub.f32 %v3456, %v3463
        %v3466 = vsub.f32 %v3457, %v3464
        %v3467 = vmul.f32 %v3465, %v3465
        %v3468 = vmul.f32 %v3466, %v3466
        %3469 = vadd.xlane.f32.xlu0 %v3467
        %v3470 = vpop.xlane.xlu0 %3469
        %3471 = vadd.xlane.f32.xlu0 %v3468
        %v3472 = vpop.xlane.xlu0 %3471
        %v3473 = vmul.f32 %v3470, %v3462
        %v3474 = vmul.f32 %v3472, %v3462
        %v3475 = vadd.f32 %v3473, 1e-05
        %v3476 = vadd.f32 %v3474, 1e-05
        %v3477 = vrsqrt.pop %v3475
        %v3478 = vrsqrt.pop %v3476
        %v3479 = vmul.f32 %v3465, %v3477
        %v3480 = vmul.f32 %v3466, %v3478
        %v3482 = vlaneseq
        %v3483 = vshrl.u32 %v3482, 7
        %v3484 = vsub.s32 0, %v3483
        %v3485 = vrot.slane %v3454, %v3484
        %v3487 = vmul.f32 %v3479, %v3485
        %v3488 = vmul.f32 %v3480, %v3485
        %v3490 = vlaneseq
        %v3491 = vshrl.u32 %v3490, 7
        %v3492 = vsub.s32 0, %v3491
        %v3493 = vrot.slane %v3455, %v3492
        %v3495 = vadd.f32 %v3487, %v3493
        %v3496 = vadd.f32 %v3488, %v3493
        %v3497 = vld [vmem:[%s1003] sm:$0xff]
        %v3498 = vld [vmem:[%s1003 + $0x8] sm:$0xff]
        %v3499 = vld [vmem:[%s1003 + $0x10] sm:$0xff]
        %v3500 = vld [vmem:[%s1003 + $0x18] sm:$0xff]
        %v3501 = vld [vmem:[%s1003 + $0x20] sm:$0xff]
        %v3502 = vld [vmem:[%s1003 + $0x28] sm:$0xff]
        %v3503 = vld [vmem:[%s1003 + $0x30] sm:$0xff]
        %v3504 = vld [vmem:[%s1003 + $0x38] sm:$0xff]
        %v3505 = vld [vmem:[%s1003 + $0x40] sm:$0xff]
        %v3506 = vld [vmem:[%s1003 + $0x48] sm:$0xff]
        %v3507 = vld [vmem:[%s1003 + $0x50] sm:$0xff]
        %v3508 = vld [vmem:[%s1003 + $0x58] sm:$0xff]
        %v3509 = vld [vmem:[%s1003 + $0x60] sm:$0xff]
        %v3510 = vld [vmem:[%s1003 + $0x68] sm:$0xff]
        %v3511 = vld [vmem:[%s1003 + $0x70] sm:$0xff]
        %v3512 = vld [vmem:[%s1003 + $0x78] sm:$0xff]
        %v3513 = vld [vmem:[%s1003 + $0x80] sm:$0xff]
        %v3514 = vld [vmem:[%s1003 + $0x88] sm:$0xff]
        %v3515 = vld [vmem:[%s1003 + $0x90] sm:$0xff]
        %v3516 = vld [vmem:[%s1003 + $0x98] sm:$0xff]
        %v3517 = vld [vmem:[%s1003 + $0xa0] sm:$0xff]
        %v3518 = vld [vmem:[%s1003 + $0xa8] sm:$0xff]
        %v3519 = vld [vmem:[%s1003 + $0xb0] sm:$0xff]
        %v3520 = vld [vmem:[%s1003 + $0xb8] sm:$0xff]
        %v3521 = vld [vmem:[%s1003 + $0xc0] sm:$0xff]
        %v3522 = vld [vmem:[%s1003 + $0xc8] sm:$0xff]
        %v3523 = vld [vmem:[%s1003 + $0xd0] sm:$0xff]
        %v3524 = vld [vmem:[%s1003 + $0xd8] sm:$0xff]
        %v3525 = vld [vmem:[%s1003 + $0xe0] sm:$0xff]
        %v3526 = vld [vmem:[%s1003 + $0xe8] sm:$0xff]
        %v3527 = vld [vmem:[%s1003 + $0xf0] sm:$0xff]
        %v3528 = vld [vmem:[%s1003 + $0xf8] sm:$0xff]
        %v3529 = vld [vmem:[%s1003 + $0x100] sm:$0xff]
        %v3530 = vld [vmem:[%s1003 + $0x108] sm:$0xff]
        %v3531 = vld [vmem:[%s1003 + $0x110] sm:$0xff]
        %v3532 = vld [vmem:[%s1003 + $0x118] sm:$0xff]
        %v3533 = vld [vmem:[%s1003 + $0x120] sm:$0xff]
        %v3534 = vld [vmem:[%s1003 + $0x128] sm:$0xff]
        %v3535 = vld [vmem:[%s1003 + $0x130] sm:$0xff]
        %v3536 = vld [vmem:[%s1003 + $0x138] sm:$0xff]
        %v3537 = vld [vmem:[%s1003 + $0x140] sm:$0xff]
        %v3538 = vld [vmem:[%s1003 + $0x148] sm:$0xff]
        %v3539 = vld [vmem:[%s1003 + $0x150] sm:$0xff]
        %v3540 = vld [vmem:[%s1003 + $0x158] sm:$0xff]
        %v3541 = vld [vmem:[%s1003 + $0x160] sm:$0xff]
        %v3542 = vld [vmem:[%s1003 + $0x168] sm:$0xff]
        %v3543 = vld [vmem:[%s1003 + $0x170] sm:$0xff]
        %v3544 = vld [vmem:[%s1003 + $0x178] sm:$0xff]
        %v3545 = vld [vmem:[%s1003 + $0x180] sm:$0xff]
        %v3546 = vld [vmem:[%s1003 + $0x188] sm:$0xff]
        %v3547 = vld [vmem:[%s1003 + $0x190] sm:$0xff]
        %v3548 = vld [vmem:[%s1003 + $0x198] sm:$0xff]
        %v3549 = vld [vmem:[%s1003 + $0x1a0] sm:$0xff]
        %v3550 = vld [vmem:[%s1003 + $0x1a8] sm:$0xff]
        %v3551 = vld [vmem:[%s1003 + $0x1b0] sm:$0xff]
        %v3552 = vld [vmem:[%s1003 + $0x1b8] sm:$0xff]
        %v3553 = vld [vmem:[%s1003 + $0x1c0] sm:$0xff]
        %v3554 = vld [vmem:[%s1003 + $0x1c8] sm:$0xff]
        %v3555 = vld [vmem:[%s1003 + $0x1d0] sm:$0xff]
        %v3556 = vld [vmem:[%s1003 + $0x1d8] sm:$0xff]
        %v3557 = vld [vmem:[%s1003 + $0x1e0] sm:$0xff]
        %v3558 = vld [vmem:[%s1003 + $0x1e8] sm:$0xff]
        %v3559 = vld [vmem:[%s1003 + $0x1f0] sm:$0xff]
        %v3560 = vld [vmem:[%s1003 + $0x1f8] sm:$0xff]
        %v3561 = vld [vmem:[%s1003 + $0x200] sm:$0xff]
        %v3562 = vld [vmem:[%s1003 + $0x208] sm:$0xff]
        %v3563 = vld [vmem:[%s1003 + $0x210] sm:$0xff]
        %v3564 = vld [vmem:[%s1003 + $0x218] sm:$0xff]
        %v3565 = vld [vmem:[%s1003 + $0x220] sm:$0xff]
        %v3566 = vld [vmem:[%s1003 + $0x228] sm:$0xff]
        %v3567 = vld [vmem:[%s1003 + $0x230] sm:$0xff]
        %v3568 = vld [vmem:[%s1003 + $0x238] sm:$0xff]
        %v3569 = vld [vmem:[%s1003 + $0x240] sm:$0xff]
        %v3570 = vld [vmem:[%s1003 + $0x248] sm:$0xff]
        %v3571 = vld [vmem:[%s1003 + $0x250] sm:$0xff]
        %v3572 = vld [vmem:[%s1003 + $0x258] sm:$0xff]
        %v3573 = vld [vmem:[%s1003 + $0x260] sm:$0xff]
        %v3574 = vld [vmem:[%s1003 + $0x268] sm:$0xff]
        %v3575 = vld [vmem:[%s1003 + $0x270] sm:$0xff]
        %v3576 = vld [vmem:[%s1003 + $0x278] sm:$0xff]
        %v3577 = vld [vmem:[%s1003 + $0x280] sm:$0xff]
        %v3578 = vld [vmem:[%s1003 + $0x288] sm:$0xff]
        %v3579 = vld [vmem:[%s1003 + $0x290] sm:$0xff]
        %v3580 = vld [vmem:[%s1003 + $0x298] sm:$0xff]
        %v3581 = vld [vmem:[%s1003 + $0x2a0] sm:$0xff]
        %v3582 = vld [vmem:[%s1003 + $0x2a8] sm:$0xff]
        %v3583 = vld [vmem:[%s1003 + $0x2b0] sm:$0xff]
        %v3584 = vld [vmem:[%s1003 + $0x2b8] sm:$0xff]
        %v3585 = vld [vmem:[%s1003 + $0x2c0] sm:$0xff]
        %v3586 = vld [vmem:[%s1003 + $0x2c8] sm:$0xff]
        %v3587 = vld [vmem:[%s1003 + $0x2d0] sm:$0xff]
        %v3588 = vld [vmem:[%s1003 + $0x2d8] sm:$0xff]
        %v3589 = vld [vmem:[%s1003 + $0x2e0] sm:$0xff]
        %v3590 = vld [vmem:[%s1003 + $0x2e8] sm:$0xff]
        %v3591 = vld [vmem:[%s1003 + $0x2f0] sm:$0xff]
        %v3592 = vld [vmem:[%s1003 + $0x2f8] sm:$0xff]
        %v3593 = vld [vmem:[%s1003 + $0x300] sm:$0xff]
        %v3594 = vld [vmem:[%s1003 + $0x308] sm:$0xff]
        %v3595 = vld [vmem:[%s1003 + $0x310] sm:$0xff]
        %v3596 = vld [vmem:[%s1003 + $0x318] sm:$0xff]
        %v3597 = vld [vmem:[%s1003 + $0x320] sm:$0xff]
        %v3598 = vld [vmem:[%s1003 + $0x328] sm:$0xff]
        %v3599 = vld [vmem:[%s1003 + $0x330] sm:$0xff]
        %v3600 = vld [vmem:[%s1003 + $0x338] sm:$0xff]
        %v3601 = vld [vmem:[%s1003 + $0x340] sm:$0xff]
        %v3602 = vld [vmem:[%s1003 + $0x348] sm:$0xff]
        %v3603 = vld [vmem:[%s1003 + $0x350] sm:$0xff]
        %v3604 = vld [vmem:[%s1003 + $0x358] sm:$0xff]
        %v3605 = vld [vmem:[%s1003 + $0x360] sm:$0xff]
        %v3606 = vld [vmem:[%s1003 + $0x368] sm:$0xff]
        %v3607 = vld [vmem:[%s1003 + $0x370] sm:$0xff]
        %v3608 = vld [vmem:[%s1003 + $0x378] sm:$0xff]
        %v3609 = vld [vmem:[%s1003 + $0x380] sm:$0xff]
        %v3610 = vld [vmem:[%s1003 + $0x388] sm:$0xff]
        %v3611 = vld [vmem:[%s1003 + $0x390] sm:$0xff]
        %v3612 = vld [vmem:[%s1003 + $0x398] sm:$0xff]
        %v3613 = vld [vmem:[%s1003 + $0x3a0] sm:$0xff]
        %v3614 = vld [vmem:[%s1003 + $0x3a8] sm:$0xff]
        %v3615 = vld [vmem:[%s1003 + $0x3b0] sm:$0xff]
        %v3616 = vld [vmem:[%s1003 + $0x3b8] sm:$0xff]
        %v3617 = vld [vmem:[%s1003 + $0x3c0] sm:$0xff]
        %v3618 = vld [vmem:[%s1003 + $0x3c8] sm:$0xff]
        %v3619 = vld [vmem:[%s1003 + $0x3d0] sm:$0xff]
        %v3620 = vld [vmem:[%s1003 + $0x3d8] sm:$0xff]
        %v3621 = vld [vmem:[%s1003 + $0x3e0] sm:$0xff]
        %v3622 = vld [vmem:[%s1003 + $0x3e8] sm:$0xff]
        %v3623 = vld [vmem:[%s1003 + $0x3f0] sm:$0xff]
        %v3624 = vld [vmem:[%s1003 + $0x3f8] sm:$0xff]
        %v3625 = vpack.c.bf16 %v3496, %v3495
        %v3626 = vld [vmem:[%s1012] sm:$0xff]
        %v3627 = vld [vmem:[%s1012 + $0x8] sm:$0xff]
        %v3630 = vlaneseq
        %v3631 = vshrl.u32 %v3630, 7
        %v3632 = vsub.s32 0, %v3631
        %v3633 = vrot.slane %v3626, %v3632
        %v3634 = vlaneseq
        %v3635 = vshrl.u32 %v3634, 7
        %v3636 = vsub.s32 1, %v3635
        %v3637 = vrot.slane %v3626, %v3636
        %v3638 = vlaneseq
        %v3639 = vshrl.u32 %v3638, 7
        %v3640 = vsub.s32 2, %v3639
        %v3641 = vrot.slane %v3626, %v3640
        %v3642 = vlaneseq
        %v3643 = vshrl.u32 %v3642, 7
        %v3644 = vsub.s32 3, %v3643
        %v3645 = vrot.slane %v3626, %v3644
        %v3646 = vlaneseq
        %v3647 = vshrl.u32 %v3646, 7
        %v3648 = vsub.s32 4, %v3647
        %v3649 = vrot.slane %v3626, %v3648
        %v3650 = vlaneseq
        %v3651 = vshrl.u32 %v3650, 7
        %v3652 = vsub.s32 5, %v3651
        %v3653 = vrot.slane %v3626, %v3652
        %v3654 = vlaneseq
        %v3655 = vshrl.u32 %v3654, 7
        %v3656 = vsub.s32 6, %v3655
        %v3657 = vrot.slane %v3626, %v3656
        %v3658 = vlaneseq
        %v3659 = vshrl.u32 %v3658, 7
        %v3660 = vsub.s32 7, %v3659
        %v3661 = vrot.slane %v3626, %v3660
        %v3662 = vlaneseq
        %v3663 = vshrl.u32 %v3662, 7
        %v3664 = vsub.s32 0, %v3663
        %v3665 = vrot.slane %v3627, %v3664
        %v3666 = vlaneseq
        %v3667 = vshrl.u32 %v3666, 7
        %v3668 = vsub.s32 1, %v3667
        %v3669 = vrot.slane %v3627, %v3668
        %v3670 = vlaneseq
        %v3671 = vshrl.u32 %v3670, 7
        %v3672 = vsub.s32 2, %v3671
        %v3673 = vrot.slane %v3627, %v3672
        %v3674 = vlaneseq
        %v3675 = vshrl.u32 %v3674, 7
        %v3676 = vsub.s32 3, %v3675
        %v3677 = vrot.slane %v3627, %v3676
        %v3678 = vlaneseq
        %v3679 = vshrl.u32 %v3678, 7
        %v3680 = vsub.s32 4, %v3679
        %v3681 = vrot.slane %v3627, %v3680
        %v3682 = vlaneseq
        %v3683 = vshrl.u32 %v3682, 7
        %v3684 = vsub.s32 5, %v3683
        %v3685 = vrot.slane %v3627, %v3684
        %v3686 = vlaneseq
        %v3687 = vshrl.u32 %v3686, 7
        %v3688 = vsub.s32 6, %v3687
        %v3689 = vrot.slane %v3627, %v3688
        %v3690 = vlaneseq
        %v3691 = vshrl.u32 %v3690, 7
        %v3692 = vsub.s32 7, %v3691
        %v3693 = vrot.slane %v3627, %v3692
        %v3838 = vunpack.c.l.b16 %v3497
        %v3839 = vunpack.c.h.b16 %v3497
        %v3840 = vunpack.c.l.b16 %v3498
        %v3841 = vunpack.c.h.b16 %v3498
        %v3842 = vunpack.c.l.b16 %v3499
        %v3843 = vunpack.c.h.b16 %v3499
        %v3844 = vunpack.c.l.b16 %v3500
        %v3845 = vunpack.c.h.b16 %v3500
        %v3846 = vunpack.c.l.b16 %v3501
        %v3847 = vunpack.c.h.b16 %v3501
        %v3848 = vunpack.c.l.b16 %v3502
        %v3849 = vunpack.c.h.b16 %v3502
        %v3850 = vunpack.c.l.b16 %v3503
        %v3851 = vunpack.c.h.b16 %v3503
        %v3852 = vunpack.c.l.b16 %v3504
        %v3853 = vunpack.c.h.b16 %v3504
        %v3854 = vunpack.c.l.b16 %v3505
        %v3855 = vunpack.c.h.b16 %v3505
        %v3856 = vunpack.c.l.b16 %v3506
        %v3857 = vunpack.c.h.b16 %v3506
        %v3858 = vunpack.c.l.b16 %v3507
        %v3859 = vunpack.c.h.b16 %v3507
        %v3860 = vunpack.c.l.b16 %v3508
        %v3861 = vunpack.c.h.b16 %v3508
        %v3862 = vunpack.c.l.b16 %v3509
        %v3863 = vunpack.c.h.b16 %v3509
        %v3864 = vunpack.c.l.b16 %v3510
        %v3865 = vunpack.c.h.b16 %v3510
        %v3866 = vunpack.c.l.b16 %v3511
        %v3867 = vunpack.c.h.b16 %v3511
        %v3868 = vunpack.c.l.b16 %v3512
        %v3869 = vunpack.c.h.b16 %v3512
        %v3870 = vunpack.c.l.b16 %v3513
        %v3871 = vunpack.c.h.b16 %v3513
        %v3872 = vunpack.c.l.b16 %v3514
        %v3873 = vunpack.c.h.b16 %v3514
        %v3874 = vunpack.c.l.b16 %v3515
        %v3875 = vunpack.c.h.b16 %v3515
        %v3876 = vunpack.c.l.b16 %v3516
        %v3877 = vunpack.c.h.b16 %v3516
        %v3878 = vunpack.c.l.b16 %v3517
        %v3879 = vunpack.c.h.b16 %v3517
        %v3880 = vunpack.c.l.b16 %v3518
        %v3881 = vunpack.c.h.b16 %v3518
        %v3882 = vunpack.c.l.b16 %v3519
        %v3883 = vunpack.c.h.b16 %v3519
        %v3884 = vunpack.c.l.b16 %v3520
        %v3885 = vunpack.c.h.b16 %v3520
        %v3886 = vunpack.c.l.b16 %v3521
        %v3887 = vunpack.c.h.b16 %v3521
        %v3888 = vunpack.c.l.b16 %v3522
        %v3889 = vunpack.c.h.b16 %v3522
        %v3890 = vunpack.c.l.b16 %v3523
        %v3891 = vunpack.c.h.b16 %v3523
        %v3892 = vunpack.c.l.b16 %v3524
        %v3893 = vunpack.c.h.b16 %v3524
        %v3894 = vunpack.c.l.b16 %v3525
        %v3895 = vunpack.c.h.b16 %v3525
        %v3896 = vunpack.c.l.b16 %v3526
        %v3897 = vunpack.c.h.b16 %v3526
        %v3898 = vunpack.c.l.b16 %v3527
        %v3899 = vunpack.c.h.b16 %v3527
        %v3900 = vunpack.c.l.b16 %v3528
        %v3901 = vunpack.c.h.b16 %v3528
        %v3902 = vunpack.c.l.b16 %v3529
        %v3903 = vunpack.c.h.b16 %v3529
        %v3904 = vunpack.c.l.b16 %v3530
        %v3905 = vunpack.c.h.b16 %v3530
        %v3906 = vunpack.c.l.b16 %v3531
        %v3907 = vunpack.c.h.b16 %v3531
        %v3908 = vunpack.c.l.b16 %v3532
        %v3909 = vunpack.c.h.b16 %v3532
        %v3910 = vunpack.c.l.b16 %v3533
        %v3911 = vunpack.c.h.b16 %v3533
        %v3912 = vunpack.c.l.b16 %v3534
        %v3913 = vunpack.c.h.b16 %v3534
        %v3914 = vunpack.c.l.b16 %v3535
        %v3915 = vunpack.c.h.b16 %v3535
        %v3916 = vunpack.c.l.b16 %v3536
        %v3917 = vunpack.c.h.b16 %v3536
        %v3918 = vunpack.c.l.b16 %v3537
        %v3919 = vunpack.c.h.b16 %v3537
        %v3920 = vunpack.c.l.b16 %v3538
        %v3921 = vunpack.c.h.b16 %v3538
        %v3922 = vunpack.c.l.b16 %v3539
        %v3923 = vunpack.c.h.b16 %v3539
        %v3924 = vunpack.c.l.b16 %v3540
        %v3925 = vunpack.c.h.b16 %v3540
        %v3926 = vunpack.c.l.b16 %v3541
        %v3927 = vunpack.c.h.b16 %v3541
        %v3928 = vunpack.c.l.b16 %v3542
        %v3929 = vunpack.c.h.b16 %v3542
        %v3930 = vunpack.c.l.b16 %v3543
        %v3931 = vunpack.c.h.b16 %v3543
        %v3932 = vunpack.c.l.b16 %v3544
        %v3933 = vunpack.c.h.b16 %v3544
        %v3934 = vunpack.c.l.b16 %v3545
        %v3935 = vunpack.c.h.b16 %v3545
        %v3936 = vunpack.c.l.b16 %v3546
        %v3937 = vunpack.c.h.b16 %v3546
        %v3938 = vunpack.c.l.b16 %v3547
        %v3939 = vunpack.c.h.b16 %v3547
        %v3940 = vunpack.c.l.b16 %v3548
        %v3941 = vunpack.c.h.b16 %v3548
        %v3942 = vunpack.c.l.b16 %v3549
        %v3943 = vunpack.c.h.b16 %v3549
        %v3944 = vunpack.c.l.b16 %v3550
        %v3945 = vunpack.c.h.b16 %v3550
        %v3946 = vunpack.c.l.b16 %v3551
        %v3947 = vunpack.c.h.b16 %v3551
        %v3948 = vunpack.c.l.b16 %v3552
        %v3949 = vunpack.c.h.b16 %v3552
        %v3950 = vunpack.c.l.b16 %v3553
        %v3951 = vunpack.c.h.b16 %v3553
        %v3952 = vunpack.c.l.b16 %v3554
        %v3953 = vunpack.c.h.b16 %v3554
        %v3954 = vunpack.c.l.b16 %v3555
        %v3955 = vunpack.c.h.b16 %v3555
        %v3956 = vunpack.c.l.b16 %v3556
        %v3957 = vunpack.c.h.b16 %v3556
        %v3958 = vunpack.c.l.b16 %v3557
        %v3959 = vunpack.c.h.b16 %v3557
        %v3960 = vunpack.c.l.b16 %v3558
        %v3961 = vunpack.c.h.b16 %v3558
        %v3962 = vunpack.c.l.b16 %v3559
        %v3963 = vunpack.c.h.b16 %v3559
        %v3964 = vunpack.c.l.b16 %v3560
        %v3965 = vunpack.c.h.b16 %v3560
        %v3966 = vunpack.c.l.b16 %v3561
        %v3967 = vunpack.c.h.b16 %v3561
        %v3968 = vunpack.c.l.b16 %v3562
        %v3969 = vunpack.c.h.b16 %v3562
        %v3970 = vunpack.c.l.b16 %v3563
        %v3971 = vunpack.c.h.b16 %v3563
        %v3972 = vunpack.c.l.b16 %v3564
        %v3973 = vunpack.c.h.b16 %v3564
        %v3974 = vunpack.c.l.b16 %v3565
        %v3975 = vunpack.c.h.b16 %v3565
        %v3976 = vunpack.c.l.b16 %v3566
        %v3977 = vunpack.c.h.b16 %v3566
        %v3978 = vunpack.c.l.b16 %v3567
        %v3979 = vunpack.c.h.b16 %v3567
        %v3980 = vunpack.c.l.b16 %v3568
        %v3981 = vunpack.c.h.b16 %v3568
        %v3982 = vunpack.c.l.b16 %v3569
        %v3983 = vunpack.c.h.b16 %v3569
        %v3984 = vunpack.c.l.b16 %v3570
        %v3985 = vunpack.c.h.b16 %v3570
        %v3986 = vunpack.c.l.b16 %v3571
        %v3987 = vunpack.c.h.b16 %v3571
        %v3988 = vunpack.c.l.b16 %v3572
        %v3989 = vunpack.c.h.b16 %v3572
        %v3990 = vunpack.c.l.b16 %v3573
        %v3991 = vunpack.c.h.b16 %v3573
        %v3992 = vunpack.c.l.b16 %v3574
        %v3993 = vunpack.c.h.b16 %v3574
        %v3994 = vunpack.c.l.b16 %v3575
        %v3995 = vunpack.c.h.b16 %v3575
        %v3996 = vunpack.c.l.b16 %v3576
        %v3997 = vunpack.c.h.b16 %v3576
        %v3998 = vunpack.c.l.b16 %v3577
        %v3999 = vunpack.c.h.b16 %v3577
        %v4000 = vunpack.c.l.b16 %v3578
        %v4001 = vunpack.c.h.b16 %v3578
        %v4002 = vunpack.c.l.b16 %v3579
        %v4003 = vunpack.c.h.b16 %v3579
        %v4004 = vunpack.c.l.b16 %v3580
        %v4005 = vunpack.c.h.b16 %v3580
        %v4006 = vunpack.c.l.b16 %v3581
        %v4007 = vunpack.c.h.b16 %v3581
        %v4008 = vunpack.c.l.b16 %v3582
        %v4009 = vunpack.c.h.b16 %v3582
        %v4010 = vunpack.c.l.b16 %v3583
        %v4011 = vunpack.c.h.b16 %v3583
        %v4012 = vunpack.c.l.b16 %v3584
        %v4013 = vunpack.c.h.b16 %v3584
        %v4014 = vunpack.c.l.b16 %v3585
        %v4015 = vunpack.c.h.b16 %v3585
        %v4016 = vunpack.c.l.b16 %v3586
        %v4017 = vunpack.c.h.b16 %v3586
        %v4018 = vunpack.c.l.b16 %v3587
        %v4019 = vunpack.c.h.b16 %v3587
        %v4020 = vunpack.c.l.b16 %v3588
        %v4021 = vunpack.c.h.b16 %v3588
        %v4022 = vunpack.c.l.b16 %v3589
        %v4023 = vunpack.c.h.b16 %v3589
        %v4024 = vunpack.c.l.b16 %v3590
        %v4025 = vunpack.c.h.b16 %v3590
        %v4026 = vunpack.c.l.b16 %v3591
        %v4027 = vunpack.c.h.b16 %v3591
        %v4028 = vunpack.c.l.b16 %v3592
        %v4029 = vunpack.c.h.b16 %v3592
        %v4030 = vunpack.c.l.b16 %v3593
        %v4031 = vunpack.c.h.b16 %v3593
        %v4032 = vunpack.c.l.b16 %v3594
        %v4033 = vunpack.c.h.b16 %v3594
        %v4034 = vunpack.c.l.b16 %v3595
        %v4035 = vunpack.c.h.b16 %v3595
        %v4036 = vunpack.c.l.b16 %v3596
        %v4037 = vunpack.c.h.b16 %v3596
        %v4038 = vunpack.c.l.b16 %v3597
        %v4039 = vunpack.c.h.b16 %v3597
        %v4040 = vunpack.c.l.b16 %v3598
        %v4041 = vunpack.c.h.b16 %v3598
        %v4042 = vunpack.c.l.b16 %v3599
        %v4043 = vunpack.c.h.b16 %v3599
        %v4044 = vunpack.c.l.b16 %v3600
        %v4045 = vunpack.c.h.b16 %v3600
        %v4046 = vunpack.c.l.b16 %v3601
        %v4047 = vunpack.c.h.b16 %v3601
        %v4048 = vunpack.c.l.b16 %v3602
        %v4049 = vunpack.c.h.b16 %v3602
        %v4050 = vunpack.c.l.b16 %v3603
        %v4051 = vunpack.c.h.b16 %v3603
        %v4052 = vunpack.c.l.b16 %v3604
        %v4053 = vunpack.c.h.b16 %v3604
        %v4054 = vunpack.c.l.b16 %v3605
        %v4055 = vunpack.c.h.b16 %v3605
        %v4056 = vunpack.c.l.b16 %v3606
        %v4057 = vunpack.c.h.b16 %v3606
        %v4058 = vunpack.c.l.b16 %v3607
        %v4059 = vunpack.c.h.b16 %v3607
        %v4060 = vunpack.c.l.b16 %v3608
        %v4061 = vunpack.c.h.b16 %v3608
        %v4062 = vunpack.c.l.b16 %v3609
        %v4063 = vunpack.c.h.b16 %v3609
        %v4064 = vunpack.c.l.b16 %v3610
        %v4065 = vunpack.c.h.b16 %v3610
        %v4066 = vunpack.c.l.b16 %v3611
        %v4067 = vunpack.c.h.b16 %v3611
        %v4068 = vunpack.c.l.b16 %v3612
        %v4069 = vunpack.c.h.b16 %v3612
        %v4070 = vunpack.c.l.b16 %v3613
        %v4071 = vunpack.c.h.b16 %v3613
        %v4072 = vunpack.c.l.b16 %v3614
        %v4073 = vunpack.c.h.b16 %v3614
        %v4074 = vunpack.c.l.b16 %v3615
        %v4075 = vunpack.c.h.b16 %v3615
        %v4076 = vunpack.c.l.b16 %v3616
        %v4077 = vunpack.c.h.b16 %v3616
        %v4078 = vunpack.c.l.b16 %v3617
        %v4079 = vunpack.c.h.b16 %v3617
        %v4080 = vunpack.c.l.b16 %v3618
        %v4081 = vunpack.c.h.b16 %v3618
        %v4082 = vunpack.c.l.b16 %v3619
        %v4083 = vunpack.c.h.b16 %v3619
        %v4084 = vunpack.c.l.b16 %v3620
        %v4085 = vunpack.c.h.b16 %v3620
        %v4086 = vunpack.c.l.b16 %v3621
        %v4087 = vunpack.c.h.b16 %v3621
        %v4088 = vunpack.c.l.b16 %v3622
        %v4089 = vunpack.c.h.b16 %v3622
        %v4090 = vunpack.c.l.b16 %v3623
        %v4091 = vunpack.c.h.b16 %v3623
        %v4092 = vunpack.c.l.b16 %v3624
        %v4093 = vunpack.c.h.b16 %v3624
        %v4094 = vpack.c.b16 %v3854, %v3838
        %v4095 = vpack.c.b16 %v3855, %v3839
        %v4096 = vpack.c.b16 %v3856, %v3840
        %v4097 = vpack.c.b16 %v3857, %v3841
        %v4098 = vpack.c.b16 %v3858, %v3842
        %v4099 = vpack.c.b16 %v3859, %v3843
        %v4100 = vpack.c.b16 %v3860, %v3844
        %v4101 = vpack.c.b16 %v3861, %v3845
        %v4102 = vpack.c.b16 %v3862, %v3846
        %v4103 = vpack.c.b16 %v3863, %v3847
        %v4104 = vpack.c.b16 %v3864, %v3848
        %v4105 = vpack.c.b16 %v3865, %v3849
        %v4106 = vpack.c.b16 %v3866, %v3850
        %v4107 = vpack.c.b16 %v3867, %v3851
        %v4108 = vpack.c.b16 %v3868, %v3852
        %v4109 = vpack.c.b16 %v3869, %v3853
        %v4110 = vpack.c.b16 %v3886, %v3870
        %v4111 = vpack.c.b16 %v3887, %v3871
        %v4112 = vpack.c.b16 %v3888, %v3872
        %v4113 = vpack.c.b16 %v3889, %v3873
        %v4114 = vpack.c.b16 %v3890, %v3874
        %v4115 = vpack.c.b16 %v3891, %v3875
        %v4116 = vpack.c.b16 %v3892, %v3876
        %v4117 = vpack.c.b16 %v3893, %v3877
        %v4118 = vpack.c.b16 %v3894, %v3878
        %v4119 = vpack.c.b16 %v3895, %v3879
        %v4120 = vpack.c.b16 %v3896, %v3880
        %v4121 = vpack.c.b16 %v3897, %v3881
        %v4122 = vpack.c.b16 %v3898, %v3882
        %v4123 = vpack.c.b16 %v3899, %v3883
        %v4124 = vpack.c.b16 %v3900, %v3884
        %v4125 = vpack.c.b16 %v3901, %v3885
        %v4126 = vpack.c.b16 %v3918, %v3902
        %v4127 = vpack.c.b16 %v3919, %v3903
        %v4128 = vpack.c.b16 %v3920, %v3904
        %v4129 = vpack.c.b16 %v3921, %v3905
        %v4130 = vpack.c.b16 %v3922, %v3906
        %v4131 = vpack.c.b16 %v3923, %v3907
        %v4132 = vpack.c.b16 %v3924, %v3908
        %v4133 = vpack.c.b16 %v3925, %v3909
        %v4134 = vpack.c.b16 %v3926, %v3910
        %v4135 = vpack.c.b16 %v3927, %v3911
        %v4136 = vpack.c.b16 %v3928, %v3912
        %v4137 = vpack.c.b16 %v3929, %v3913
        %v4138 = vpack.c.b16 %v3930, %v3914
        %v4139 = vpack.c.b16 %v3931, %v3915
        %v4140 = vpack.c.b16 %v3932, %v3916
        %v4141 = vpack.c.b16 %v3933, %v3917
        %v4142 = vpack.c.b16 %v3950, %v3934
        %v4143 = vpack.c.b16 %v3951, %v3935
        %v4144 = vpack.c.b16 %v3952, %v3936
        %v4145 = vpack.c.b16 %v3953, %v3937
        %v4146 = vpack.c.b16 %v3954, %v3938
        %v4147 = vpack.c.b16 %v3955, %v3939
        %v4148 = vpack.c.b16 %v3956, %v3940
        %v4149 = vpack.c.b16 %v3957, %v3941
        %v4150 = vpack.c.b16 %v3958, %v3942
        %v4151 = vpack.c.b16 %v3959, %v3943
        %v4152 = vpack.c.b16 %v3960, %v3944
        %v4153 = vpack.c.b16 %v3961, %v3945
        %v4154 = vpack.c.b16 %v3962, %v3946
        %v4155 = vpack.c.b16 %v3963, %v3947
        %v4156 = vpack.c.b16 %v3964, %v3948
        %v4157 = vpack.c.b16 %v3965, %v3949
        %v4158 = vpack.c.b16 %v3982, %v3966
        %v4159 = vpack.c.b16 %v3983, %v3967
        %v4160 = vpack.c.b16 %v3984, %v3968
        %v4161 = vpack.c.b16 %v3985, %v3969
        %v4162 = vpack.c.b16 %v3986, %v3970
        %v4163 = vpack.c.b16 %v3987, %v3971
        %v4164 = vpack.c.b16 %v3988, %v3972
        %v4165 = vpack.c.b16 %v3989, %v3973
        %v4166 = vpack.c.b16 %v3990, %v3974
        %v4167 = vpack.c.b16 %v3991, %v3975
        %v4168 = vpack.c.b16 %v3992, %v3976
        %v4169 = vpack.c.b16 %v3993, %v3977
        %v4170 = vpack.c.b16 %v3994, %v3978
        %v4171 = vpack.c.b16 %v3995, %v3979
        %v4172 = vpack.c.b16 %v3996, %v3980
        %v4173 = vpack.c.b16 %v3997, %v3981
        %v4174 = vpack.c.b16 %v4014, %v3998
        %v4175 = vpack.c.b16 %v4015, %v3999
        %v4176 = vpack.c.b16 %v4016, %v4000
        %v4177 = vpack.c.b16 %v4017, %v4001
        %v4178 = vpack.c.b16 %v4018, %v4002
        %v4179 = vpack.c.b16 %v4019, %v4003
        %v4180 = vpack.c.b16 %v4020, %v4004
        %v4181 = vpack.c.b16 %v4021, %v4005
        %v4182 = vpack.c.b16 %v4022, %v4006
        %v4183 = vpack.c.b16 %v4023, %v4007
        %v4184 = vpack.c.b16 %v4024, %v4008
        %v4185 = vpack.c.b16 %v4025, %v4009
        %v4186 = vpack.c.b16 %v4026, %v4010
        %v4187 = vpack.c.b16 %v4027, %v4011
        %v4188 = vpack.c.b16 %v4028, %v4012
        %v4189 = vpack.c.b16 %v4029, %v4013
        %v4190 = vpack.c.b16 %v4046, %v4030
        %v4191 = vpack.c.b16 %v4047, %v4031
        %v4192 = vpack.c.b16 %v4048, %v4032
        %v4193 = vpack.c.b16 %v4049, %v4033
        %v4194 = vpack.c.b16 %v4050, %v4034
        %v4195 = vpack.c.b16 %v4051, %v4035
        %v4196 = vpack.c.b16 %v4052, %v4036
        %v4197 = vpack.c.b16 %v4053, %v4037
        %v4198 = vpack.c.b16 %v4054, %v4038
        %v4199 = vpack.c.b16 %v4055, %v4039
        %v4200 = vpack.c.b16 %v4056, %v4040
        %v4201 = vpack.c.b16 %v4057, %v4041
        %v4202 = vpack.c.b16 %v4058, %v4042
        %v4203 = vpack.c.b16 %v4059, %v4043
        %v4204 = vpack.c.b16 %v4060, %v4044
        %v4205 = vpack.c.b16 %v4061, %v4045
        %v4206 = vpack.c.b16 %v4078, %v4062
        %v4207 = vpack.c.b16 %v4079, %v4063
        %v4208 = vpack.c.b16 %v4080, %v4064
        %v4209 = vpack.c.b16 %v4081, %v4065
        %v4210 = vpack.c.b16 %v4082, %v4066
        %v4211 = vpack.c.b16 %v4083, %v4067
        %v4212 = vpack.c.b16 %v4084, %v4068
        %v4213 = vpack.c.b16 %v4085, %v4069
        %v4214 = vpack.c.b16 %v4086, %v4070
        %v4215 = vpack.c.b16 %v4087, %v4071
        %v4216 = vpack.c.b16 %v4088, %v4072
        %v4217 = vpack.c.b16 %v4089, %v4073
        %v4218 = vpack.c.b16 %v4090, %v4074
        %v4219 = vpack.c.b16 %v4091, %v4075
        %v4220 = vpack.c.b16 %v4092, %v4076
        %v4221 = vpack.c.b16 %v4093, %v4077
        %4350 = vmatprep.subr.bf16.mxu0 %v4095
        %4351 = vmatpush1.bf16.msra.mxu0 %v4094
        %4352 = vmatprep.subr.bf16.mxu0 %v4111
        %4353 = vmatpush1.bf16.msra.mxu0 %v4110
        %4354 = vmatprep.subr.bf16.mxu0 %v4127
        %4355 = vmatpush1.bf16.msra.mxu0 %v4126
        %4356 = vmatprep.subr.bf16.mxu0 %v4143
        %4357 = vmatpush1.bf16.msra.mxu0 %v4142
        %4358 = vmatprep.subr.bf16.mxu0 %v4159
        %4359 = vmatpush1.bf16.msra.mxu0 %v4158
        %4360 = vmatprep.subr.bf16.mxu0 %v4175
        %4361 = vmatpush1.bf16.msra.mxu0 %v4174
        %4362 = vmatprep.subr.bf16.mxu0 %v4191
        %4363 = vmatpush1.bf16.msra.mxu0 %v4190
        %4364 = vmatprep.subr.bf16.mxu0 %v4207
        %4365 = vmatpush1.bf16.msra.mxu0 %v4206
        %4366 = vmatprep.subr.bf16.mxu0 0
        %4367 = vmatpush1.bf16.msra.mxu0 0
        %4368 = vmatprep.subr.bf16.mxu0 0
        %4369 = vmatpush1.bf16.msra.mxu0 0
        %4370 = vmatprep.subr.bf16.mxu0 0
        %4371 = vmatpush1.bf16.msra.mxu0 0
        %4372 = vmatprep.subr.bf16.mxu0 0
        %4373 = vmatpush1.bf16.msra.mxu0 0
        %4374 = vmatprep.subr.bf16.mxu0 0
        %4375 = vmatpush1.bf16.msra.mxu0 0
        %4376 = vmatprep.subr.bf16.mxu0 0
        %4377 = vmatpush1.bf16.msra.mxu0 0
        %4378 = vmatprep.subr.bf16.mxu0 0
        %4379 = vmatpush1.bf16.msra.mxu0 0
        %4380 = vmatprep.subr.bf16.mxu0 0
        %4381 = vmatpush1.bf16.msra.mxu0 0
        %4382 = vmatprep.mubr.bf16.mxu0 0
        %4383 = vmatmul.mubr.bf16.gmra.mrb[0].mxu0 %v3625
        %v4384 = vpop.f32.mrb[0].mxu0
        %v4385 = vadd.f32 %v3633, %v4384
        %v4386 = vpop.f32.mrb[0].mxu0
        %v4387 = vadd.f32 %v3637, %v4386
        %v4388 = vpop.f32.mrb[0].mxu0
        %v4389 = vadd.f32 %v3633, %v4388
        %v4390 = vpop.f32.mrb[0].mxu0
        %v4391 = vadd.f32 %v3637, %v4390
        %4392 = vdwg.mxu0
        %4393 = vmatprep.subr.bf16.mxu0 %v4097
        %4394 = vmatpush1.bf16.msra.mxu0 %v4096
        %4395 = vmatprep.subr.bf16.mxu0 %v4113
        %4396 = vmatpush1.bf16.msra.mxu0 %v4112
        %4397 = vmatprep.subr.bf16.mxu0 %v4129
        %4398 = vmatpush1.bf16.msra.mxu0 %v4128
        %4399 = vmatprep.subr.bf16.mxu0 %v4145
        %4400 = vmatpush1.bf16.msra.mxu0 %v4144
        %4401 = vmatprep.subr.bf16.mxu0 %v4161
        %4402 = vmatpush1.bf16.msra.mxu0 %v4160
        %4403 = vmatprep.subr.bf16.mxu0 %v4177
        %4404 = vmatpush1.bf16.msra.mxu0 %v4176
        %4405 = vmatprep.subr.bf16.mxu0 %v4193
        %4406 = vmatpush1.bf16.msra.mxu0 %v4192
        %4407 = vmatprep.subr.bf16.mxu0 %v4209
        %4408 = vmatpush1.bf16.msra.mxu0 %v4208
        %4409 = vmatprep.subr.bf16.mxu0 0
        %4410 = vmatpush1.bf16.msra.mxu0 0
        %4411 = vmatprep.subr.bf16.mxu0 0
        %4412 = vmatpush1.bf16.msra.mxu0 0
        %4413 = vmatprep.subr.bf16.mxu0 0
        %4414 = vmatpush1.bf16.msra.mxu0 0
        %4415 = vmatprep.subr.bf16.mxu0 0
        %4416 = vmatpush1.bf16.msra.mxu0 0
        %4417 = vmatprep.subr.bf16.mxu0 0
        %4418 = vmatpush1.bf16.msra.mxu0 0
        %4419 = vmatprep.subr.bf16.mxu0 0
        %4420 = vmatpush1.bf16.msra.mxu0 0
        %4421 = vmatprep.subr.bf16.mxu0 0
        %4422 = vmatpush1.bf16.msra.mxu0 0
        %4423 = vmatprep.subr.bf16.mxu0 0
        %4424 = vmatpush1.bf16.msra.mxu0 0
        %4425 = vmatprep.mubr.bf16.mxu0 0
        %4426 = vmatmul.mubr.bf16.gmra.mrb[0].mxu0 %v3625
        %v4427 = vpop.f32.mrb[0].mxu0
        %v4428 = vadd.f32 %v3641, %v4427
        %v4429 = vpop.f32.mrb[0].mxu0
        %v4430 = vadd.f32 %v3645, %v4429
        %v4431 = vpop.f32.mrb[0].mxu0
        %v4432 = vadd.f32 %v3641, %v4431
        %v4433 = vpop.f32.mrb[0].mxu0
        %v4434 = vadd.f32 %v3645, %v4433
        %4435 = vdwg.mxu0
        %4436 = vmatprep.subr.bf16.mxu0 %v4099
        %4437 = vmatpush1.bf16.msra.mxu0 %v4098
        %4438 = vmatprep.subr.bf16.mxu0 %v4115
        %4439 = vmatpush1.bf16.msra.mxu0 %v4114
        %4440 = vmatprep.subr.bf16.mxu0 %v4131
        %4441 = vmatpush1.bf16.msra.mxu0 %v4130
        %4442 = vmatprep.subr.bf16.mxu0 %v4147
        %4443 = vmatpush1.bf16.msra.mxu0 %v4146
        %4444 = vmatprep.subr.bf16.mxu0 %v4163
        %4445 = vmatpush1.bf16.msra.mxu0 %v4162
        %4446 = vmatprep.subr.bf16.mxu0 %v4179
        %4447 = vmatpush1.bf16.msra.mxu0 %v4178
        %4448 = vmatprep.subr.bf16.mxu0 %v4195
        %4449 = vmatpush1.bf16.msra.mxu0 %v4194
        %4450 = vmatprep.subr.bf16.mxu0 %v4211
        %4451 = vmatpush1.bf16.msra.mxu0 %v4210
        %4452 = vmatprep.subr.bf16.mxu0 0
        %4453 = vmatpush1.bf16.msra.mxu0 0
        %4454 = vmatprep.subr.bf16.mxu0 0
        %4455 = vmatpush1.bf16.msra.mxu0 0
        %4456 = vmatprep.subr.bf16.mxu0 0
        %4457 = vmatpush1.bf16.msra.mxu0 0
        %4458 = vmatprep.subr.bf16.mxu0 0
        %4459 = vmatpush1.bf16.msra.mxu0 0
        %4460 = vmatprep.subr.bf16.mxu0 0
        %4461 = vmatpush1.bf16.msra.mxu0 0
        %4462 = vmatprep.subr.bf16.mxu0 0
        %4463 = vmatpush1.bf16.msra.mxu0 0
        %4464 = vmatprep.subr.bf16.mxu0 0
        %4465 = vmatpush1.bf16.msra.mxu0 0
        %4466 = vmatprep.subr.bf16.mxu0 0
        %4467 = vmatpush1.bf16.msra.mxu0 0
        %4468 = vmatprep.mubr.bf16.mxu0 0
        %4469 = vmatmul.mubr.bf16.gmra.mrb[0].mxu0 %v3625
        %v4470 = vpop.f32.mrb[0].mxu0
        %v4471 = vadd.f32 %v3649, %v4470
        %v4472 = vpop.f32.mrb[0].mxu0
        %v4473 = vadd.f32 %v3653, %v4472
        %v4474 = vpop.f32.mrb[0].mxu0
        %v4475 = vadd.f32 %v3649, %v4474
        %v4476 = vpop.f32.mrb[0].mxu0
        %v4477 = vadd.f32 %v3653, %v4476
        %4478 = vdwg.mxu0
        %4479 = vmatprep.subr.bf16.mxu0 %v4101
        %4480 = vmatpush1.bf16.msra.mxu0 %v4100
        %4481 = vmatprep.subr.bf16.mxu0 %v4117
        %4482 = vmatpush1.bf16.msra.mxu0 %v4116
        %4483 = vmatprep.subr.bf16.mxu0 %v4133
        %4484 = vmatpush1.bf16.msra.mxu0 %v4132
        %4485 = vmatprep.subr.bf16.mxu0 %v4149
        %4486 = vmatpush1.bf16.msra.mxu0 %v4148
        %4487 = vmatprep.subr.bf16.mxu0 %v4165
        %4488 = vmatpush1.bf16.msra.mxu0 %v4164
        %4489 = vmatprep.subr.bf16.mxu0 %v4181
        %4490 = vmatpush1.bf16.msra.mxu0 %v4180
        %4491 = vmatprep.subr.bf16.mxu0 %v4197
        %4492 = vmatpush1.bf16.msra.mxu0 %v4196
        %4493 = vmatprep.subr.bf16.mxu0 %v4213
        %4494 = vmatpush1.bf16.msra.mxu0 %v4212
        %4495 = vmatprep.subr.bf16.mxu0 0
        %4496 = vmatpush1.bf16.msra.mxu0 0
        %4497 = vmatprep.subr.bf16.mxu0 0
        %4498 = vmatpush1.bf16.msra.mxu0 0
        %4499 = vmatprep.subr.bf16.mxu0 0
        %4500 = vmatpush1.bf16.msra.mxu0 0
        %4501 = vmatprep.subr.bf16.mxu0 0
        %4502 = vmatpush1.bf16.msra.mxu0 0
        %4503 = vmatprep.subr.bf16.mxu0 0
        %4504 = vmatpush1.bf16.msra.mxu0 0
        %4505 = vmatprep.subr.bf16.mxu0 0
        %4506 = vmatpush1.bf16.msra.mxu0 0
        %4507 = vmatprep.subr.bf16.mxu0 0
        %4508 = vmatpush1.bf16.msra.mxu0 0
        %4509 = vmatprep.subr.bf16.mxu0 0
        %4510 = vmatpush1.bf16.msra.mxu0 0
        %4511 = vmatprep.mubr.bf16.mxu0 0
        %4512 = vmatmul.mubr.bf16.gmra.mrb[0].mxu0 %v3625
        %v4513 = vpop.f32.mrb[0].mxu0
        %v4514 = vadd.f32 %v3657, %v4513
        %v4515 = vpop.f32.mrb[0].mxu0
        %v4516 = vadd.f32 %v3661, %v4515
        %v4517 = vpop.f32.mrb[0].mxu0
        %v4518 = vadd.f32 %v3657, %v4517
        %v4519 = vpop.f32.mrb[0].mxu0
        %v4520 = vadd.f32 %v3661, %v4519
        %4521 = vdwg.mxu0
        %4522 = vmatprep.subr.bf16.mxu0 %v4103
        %4523 = vmatpush1.bf16.msra.mxu0 %v4102
        %4524 = vmatprep.subr.bf16.mxu0 %v4119
        %4525 = vmatpush1.bf16.msra.mxu0 %v4118
        %4526 = vmatprep.subr.bf16.mxu0 %v4135
        %4527 = vmatpush1.bf16.msra.mxu0 %v4134
        %4528 = vmatprep.subr.bf16.mxu0 %v4151
        %4529 = vmatpush1.bf16.msra.mxu0 %v4150
        %4530 = vmatprep.subr.bf16.mxu0 %v4167
        %4531 = vmatpush1.bf16.msra.mxu0 %v4166
        %4532 = vmatprep.subr.bf16.mxu0 %v4183
        %4533 = vmatpush1.bf16.msra.mxu0 %v4182
        %4534 = vmatprep.subr.bf16.mxu0 %v4199
        %4535 = vmatpush1.bf16.msra.mxu0 %v4198
        %4536 = vmatprep.subr.bf16.mxu0 %v4215
        %4537 = vmatpush1.bf16.msra.mxu0 %v4214
        %4538 = vmatprep.subr.bf16.mxu0 0
        %4539 = vmatpush1.bf16.msra.mxu0 0
        %4540 = vmatprep.subr.bf16.mxu0 0
        %4541 = vmatpush1.bf16.msra.mxu0 0
        %4542 = vmatprep.subr.bf16.mxu0 0
        %4543 = vmatpush1.bf16.msra.mxu0 0
        %4544 = vmatprep.subr.bf16.mxu0 0
        %4545 = vmatpush1.bf16.msra.mxu0 0
        %4546 = vmatprep.subr.bf16.mxu0 0
        %4547 = vmatpush1.bf16.msra.mxu0 0
        %4548 = vmatprep.subr.bf16.mxu0 0
        %4549 = vmatpush1.bf16.msra.mxu0 0
        %4550 = vmatprep.subr.bf16.mxu0 0
        %4551 = vmatpush1.bf16.msra.mxu0 0
        %4552 = vmatprep.subr.bf16.mxu0 0
        %4553 = vmatpush1.bf16.msra.mxu0 0
        %4554 = vmatprep.mubr.bf16.mxu0 0
        %4555 = vmatmul.mubr.bf16.gmra.mrb[0].mxu0 %v3625
        %v4556 = vpop.f32.mrb[0].mxu0
        %v4557 = vadd.f32 %v3665, %v4556
        %v4558 = vpop.f32.mrb[0].mxu0
        %v4559 = vadd.f32 %v3669, %v4558
        %v4560 = vpop.f32.mrb[0].mxu0
        %v4561 = vadd.f32 %v3665, %v4560
        %v4562 = vpop.f32.mrb[0].mxu0
        %v4563 = vadd.f32 %v3669, %v4562
        %4564 = vdwg.mxu0
        %4565 = vmatprep.subr.bf16.mxu0 %v4105
        %4566 = vmatpush1.bf16.msra.mxu0 %v4104
        %4567 = vmatprep.subr.bf16.mxu0 %v4121
        %4568 = vmatpush1.bf16.msra.mxu0 %v4120
        %4569 = vmatprep.subr.bf16.mxu0 %v4137
        %4570 = vmatpush1.bf16.msra.mxu0 %v4136
        %4571 = vmatprep.subr.bf16.mxu0 %v4153
        %4572 = vmatpush1.bf16.msra.mxu0 %v4152
        %4573 = vmatprep.subr.bf16.mxu0 %v4169
        %4574 = vmatpush1.bf16.msra.mxu0 %v4168
        %4575 = vmatprep.subr.bf16.mxu0 %v4185
        %4576 = vmatpush1.bf16.msra.mxu0 %v4184
        %4577 = vmatprep.subr.bf16.mxu0 %v4201
        %4578 = vmatpush1.bf16.msra.mxu0 %v4200
        %4579 = vmatprep.subr.bf16.mxu0 %v4217
        %4580 = vmatpush1.bf16.msra.mxu0 %v4216
        %4581 = vmatprep.subr.bf16.mxu0 0
        %4582 = vmatpush1.bf16.msra.mxu0 0
        %4583 = vmatprep.subr.bf16.mxu0 0
        %4584 = vmatpush1.bf16.msra.mxu0 0
        %4585 = vmatprep.subr.bf16.mxu0 0
        %4586 = vmatpush1.bf16.msra.mxu0 0
        %4587 = vmatprep.subr.bf16.mxu0 0
        %4588 = vmatpush1.bf16.msra.mxu0 0
        %4589 = vmatprep.subr.bf16.mxu0 0
        %4590 = vmatpush1.bf16.msra.mxu0 0
        %4591 = vmatprep.subr.bf16.mxu0 0
        %4592 = vmatpush1.bf16.msra.mxu0 0
        %4593 = vmatprep.subr.bf16.mxu0 0
        %4594 = vmatpush1.bf16.msra.mxu0 0
        %4595 = vmatprep.subr.bf16.mxu0 0
        %4596 = vmatpush1.bf16.msra.mxu0 0
        %4597 = vmatprep.mubr.bf16.mxu0 0
        %4598 = vmatmul.mubr.bf16.gmra.mrb[0].mxu0 %v3625
        %v4599 = vpop.f32.mrb[0].mxu0
        %v4600 = vadd.f32 %v3673, %v4599
        %v4601 = vpop.f32.mrb[0].mxu0
        %v4602 = vadd.f32 %v3677, %v4601
        %v4603 = vpop.f32.mrb[0].mxu0
        %v4604 = vadd.f32 %v3673, %v4603
        %v4605 = vpop.f32.mrb[0].mxu0
        %v4606 = vadd.f32 %v3677, %v4605
        %4607 = vdwg.mxu0
        %4608 = vmatprep.subr.bf16.mxu0 %v4107
        %4609 = vmatpush1.bf16.msra.mxu0 %v4106
        %4610 = vmatprep.subr.bf16.mxu0 %v4123
        %4611 = vmatpush1.bf16.msra.mxu0 %v4122
        %4612 = vmatprep.subr.bf16.mxu0 %v4139
        %4613 = vmatpush1.bf16.msra.mxu0 %v4138
        %4614 = vmatprep.subr.bf16.mxu0 %v4155
        %4615 = vmatpush1.bf16.msra.mxu0 %v4154
        %4616 = vmatprep.subr.bf16.mxu0 %v4171
        %4617 = vmatpush1.bf16.msra.mxu0 %v4170
        %4618 = vmatprep.subr.bf16.mxu0 %v4187
        %4619 = vmatpush1.bf16.msra.mxu0 %v4186
        %4620 = vmatprep.subr.bf16.mxu0 %v4203
        %4621 = vmatpush1.bf16.msra.mxu0 %v4202
        %4622 = vmatprep.subr.bf16.mxu0 %v4219
        %4623 = vmatpush1.bf16.msra.mxu0 %v4218
        %4624 = vmatprep.subr.bf16.mxu0 0
        %4625 = vmatpush1.bf16.msra.mxu0 0
        %4626 = vmatprep.subr.bf16.mxu0 0
        %4627 = vmatpush1.bf16.msra.mxu0 0
        %4628 = vmatprep.subr.bf16.mxu0 0
        %4629 = vmatpush1.bf16.msra.mxu0 0
        %4630 = vmatprep.subr.bf16.mxu0 0
        %4631 = vmatpush1.bf16.msra.mxu0 0
        %4632 = vmatprep.subr.bf16.mxu0 0
        %4633 = vmatpush1.bf16.msra.mxu0 0
        %4634 = vmatprep.subr.bf16.mxu0 0
        %4635 = vmatpush1.bf16.msra.mxu0 0
        %4636 = vmatprep.subr.bf16.mxu0 0
        %4637 = vmatpush1.bf16.msra.mxu0 0
        %4638 = vmatprep.subr.bf16.mxu0 0
        %4639 = vmatpush1.bf16.msra.mxu0 0
        %4640 = vmatprep.mubr.bf16.mxu0 0
        %4641 = vmatmul.mubr.bf16.gmra.mrb[0].mxu0 %v3625
        %v4642 = vpop.f32.mrb[0].mxu0
        %v4643 = vadd.f32 %v3681, %v4642
        %v4644 = vpop.f32.mrb[0].mxu0
        %v4645 = vadd.f32 %v3685, %v4644
        %v4646 = vpop.f32.mrb[0].mxu0
        %v4647 = vadd.f32 %v3681, %v4646
        %v4648 = vpop.f32.mrb[0].mxu0
        %v4649 = vadd.f32 %v3685, %v4648
        %4650 = vdwg.mxu0
        %4651 = vmatprep.subr.bf16.mxu0 %v4109
        %4652 = vmatpush1.bf16.msra.mxu0 %v4108
        %4653 = vmatprep.subr.bf16.mxu0 %v4125
        %4654 = vmatpush1.bf16.msra.mxu0 %v4124
        %4655 = vmatprep.subr.bf16.mxu0 %v4141
        %4656 = vmatpush1.bf16.msra.mxu0 %v4140
        %4657 = vmatprep.subr.bf16.mxu0 %v4157
        %4658 = vmatpush1.bf16.msra.mxu0 %v4156
        %4659 = vmatprep.subr.bf16.mxu0 %v4173
        %4660 = vmatpush1.bf16.msra.mxu0 %v4172
        %4661 = vmatprep.subr.bf16.mxu0 %v4189
        %4662 = vmatpush1.bf16.msra.mxu0 %v4188
        %4663 = vmatprep.subr.bf16.mxu0 %v4205
        %4664 = vmatpush1.bf16.msra.mxu0 %v4204
        %4665 = vmatprep.subr.bf16.mxu0 %v4221
        %4666 = vmatpush1.bf16.msra.mxu0 %v4220
        %4667 = vmatprep.subr.bf16.mxu0 0
        %4668 = vmatpush1.bf16.msra.mxu0 0
        %4669 = vmatprep.subr.bf16.mxu0 0
        %4670 = vmatpush1.bf16.msra.mxu0 0
        %4671 = vmatprep.subr.bf16.mxu0 0
        %4672 = vmatpush1.bf16.msra.mxu0 0
        %4673 = vmatprep.subr.bf16.mxu0 0
        %4674 = vmatpush1.bf16.msra.mxu0 0
        %4675 = vmatprep.subr.bf16.mxu0 0
        %4676 = vmatpush1.bf16.msra.mxu0 0
        %4677 = vmatprep.subr.bf16.mxu0 0
        %4678 = vmatpush1.bf16.msra.mxu0 0
        %4679 = vmatprep.subr.bf16.mxu0 0
        %4680 = vmatpush1.bf16.msra.mxu0 0
        %4681 = vmatprep.subr.bf16.mxu0 0
        %4682 = vmatpush1.bf16.msra.mxu0 0
        %4683 = vmatprep.mubr.bf16.mxu0 0
        %4684 = vmatmul.mubr.bf16.gmra.mrb[0].mxu0 %v3625
        %v4685 = vpop.f32.mrb[0].mxu0
        %v4686 = vadd.f32 %v3689, %v4685
        %v4687 = vpop.f32.mrb[0].mxu0
        %v4688 = vadd.f32 %v3693, %v4687
        %v4689 = vpop.f32.mrb[0].mxu0
        %v4690 = vadd.f32 %v3689, %v4689
        %v4691 = vpop.f32.mrb[0].mxu0
        %v4692 = vadd.f32 %v3693, %v4691
        %4693 = vdwg.mxu0
        %v4694 = vmax.f32 %v4385, 0.0
        %v4695 = vmax.f32 %v4387, 0.0
        %v4696 = vmax.f32 %v4428, 0.0
        %v4697 = vmax.f32 %v4430, 0.0
        %v4698 = vmax.f32 %v4471, 0.0
        %v4699 = vmax.f32 %v4473, 0.0
        %v4700 = vmax.f32 %v4514, 0.0
        %v4701 = vmax.f32 %v4516, 0.0
        %v4702 = vmax.f32 %v4557, 0.0
        %v4703 = vmax.f32 %v4559, 0.0
        %v4704 = vmax.f32 %v4600, 0.0
        %v4705 = vmax.f32 %v4602, 0.0
        %v4706 = vmax.f32 %v4643, 0.0
        %v4707 = vmax.f32 %v4645, 0.0
        %v4708 = vmax.f32 %v4686, 0.0
        %v4709 = vmax.f32 %v4688, 0.0
        %v4710 = vmax.f32 %v4389, 0.0
        %v4711 = vmax.f32 %v4391, 0.0
        %v4712 = vmax.f32 %v4432, 0.0
        %v4713 = vmax.f32 %v4434, 0.0
        %v4714 = vmax.f32 %v4475, 0.0
        %v4715 = vmax.f32 %v4477, 0.0
        %v4716 = vmax.f32 %v4518, 0.0
        %v4717 = vmax.f32 %v4520, 0.0
        %v4718 = vmax.f32 %v4561, 0.0
        %v4719 = vmax.f32 %v4563, 0.0
        %v4720 = vmax.f32 %v4604, 0.0
        %v4721 = vmax.f32 %v4606, 0.0
        %v4722 = vmax.f32 %v4647, 0.0
        %v4723 = vmax.f32 %v4649, 0.0
        %v4724 = vmax.f32 %v4690, 0.0
        %v4725 = vmax.f32 %v4692, 0.0
        %v4726 = vld [vmem:[%s1021] sm:$0xf]
        %v4727 = vld [vmem:[%s1021 + $0x4] sm:$0xf]
        %v4728 = vld [vmem:[%s1021 + $0x8] sm:$0xf]
        %v4729 = vld [vmem:[%s1021 + $0xc] sm:$0xf]
        %v4730 = vld [vmem:[%s1021 + $0x10] sm:$0xf]
        %v4731 = vld [vmem:[%s1021 + $0x14] sm:$0xf]
        %v4732 = vld [vmem:[%s1021 + $0x18] sm:$0xf]
        %v4733 = vld [vmem:[%s1021 + $0x1c] sm:$0xf]
        %v4734 = vld [vmem:[%s1021 + $0x20] sm:$0xf]
        %v4735 = vld [vmem:[%s1021 + $0x24] sm:$0xf]
        %v4736 = vld [vmem:[%s1021 + $0x28] sm:$0xf]
        %v4737 = vld [vmem:[%s1021 + $0x2c] sm:$0xf]
        %v4738 = vld [vmem:[%s1021 + $0x30] sm:$0xf]
        %v4739 = vld [vmem:[%s1021 + $0x34] sm:$0xf]
        %v4740 = vld [vmem:[%s1021 + $0x38] sm:$0xf]
        %v4741 = vld [vmem:[%s1021 + $0x3c] sm:$0xf]
        %v4742 = vld [vmem:[%s1021 + $0x40] sm:$0xf]
        %v4743 = vld [vmem:[%s1021 + $0x44] sm:$0xf]
        %v4744 = vld [vmem:[%s1021 + $0x48] sm:$0xf]
        %v4745 = vld [vmem:[%s1021 + $0x4c] sm:$0xf]
        %v4746 = vld [vmem:[%s1021 + $0x50] sm:$0xf]
        %v4747 = vld [vmem:[%s1021 + $0x54] sm:$0xf]
        %v4748 = vld [vmem:[%s1021 + $0x58] sm:$0xf]
        %v4749 = vld [vmem:[%s1021 + $0x5c] sm:$0xf]
        %v4750 = vld [vmem:[%s1021 + $0x60] sm:$0xf]
        %v4751 = vld [vmem:[%s1021 + $0x64] sm:$0xf]
        %v4752 = vld [vmem:[%s1021 + $0x68] sm:$0xf]
        %v4753 = vld [vmem:[%s1021 + $0x6c] sm:$0xf]
        %v4754 = vld [vmem:[%s1021 + $0x70] sm:$0xf]
        %v4755 = vld [vmem:[%s1021 + $0x74] sm:$0xf]
        %v4756 = vld [vmem:[%s1021 + $0x78] sm:$0xf]
        %v4757 = vld [vmem:[%s1021 + $0x7c] sm:$0xf]
        %v4758 = vld [vmem:[%s1021 + $0x80] sm:$0xf]
        %v4759 = vld [vmem:[%s1021 + $0x84] sm:$0xf]
        %v4760 = vld [vmem:[%s1021 + $0x88] sm:$0xf]
        %v4761 = vld [vmem:[%s1021 + $0x8c] sm:$0xf]
        %v4762 = vld [vmem:[%s1021 + $0x90] sm:$0xf]
        %v4763 = vld [vmem:[%s1021 + $0x94] sm:$0xf]
        %v4764 = vld [vmem:[%s1021 + $0x98] sm:$0xf]
        %v4765 = vld [vmem:[%s1021 + $0x9c] sm:$0xf]
        %v4766 = vld [vmem:[%s1021 + $0xa0] sm:$0xf]
        %v4767 = vld [vmem:[%s1021 + $0xa4] sm:$0xf]
        %v4768 = vld [vmem:[%s1021 + $0xa8] sm:$0xf]
        %v4769 = vld [vmem:[%s1021 + $0xac] sm:$0xf]
        %v4770 = vld [vmem:[%s1021 + $0xb0] sm:$0xf]
        %v4771 = vld [vmem:[%s1021 + $0xb4] sm:$0xf]
        %v4772 = vld [vmem:[%s1021 + $0xb8] sm:$0xf]
        %v4773 = vld [vmem:[%s1021 + $0xbc] sm:$0xf]
        %v4774 = vld [vmem:[%s1021 + $0xc0] sm:$0xf]
        %v4775 = vld [vmem:[%s1021 + $0xc4] sm:$0xf]
        %v4776 = vld [vmem:[%s1021 + $0xc8] sm:$0xf]
        %v4777 = vld [vmem:[%s1021 + $0xcc] sm:$0xf]
        %v4778 = vld [vmem:[%s1021 + $0xd0] sm:$0xf]
        %v4779 = vld [vmem:[%s1021 + $0xd4] sm:$0xf]
        %v4780 = vld [vmem:[%s1021 + $0xd8] sm:$0xf]
        %v4781 = vld [vmem:[%s1021 + $0xdc] sm:$0xf]
        %v4782 = vld [vmem:[%s1021 + $0xe0] sm:$0xf]
        %v4783 = vld [vmem:[%s1021 + $0xe4] sm:$0xf]
        %v4784 = vld [vmem:[%s1021 + $0xe8] sm:$0xf]
        %v4785 = vld [vmem:[%s1021 + $0xec] sm:$0xf]
        %v4786 = vld [vmem:[%s1021 + $0xf0] sm:$0xf]
        %v4787 = vld [vmem:[%s1021 + $0xf4] sm:$0xf]
        %v4788 = vld [vmem:[%s1021 + $0xf8] sm:$0xf]
        %v4789 = vld [vmem:[%s1021 + $0xfc] sm:$0xf]
        %v4790 = vld [vmem:[%s1021 + $0x100] sm:$0xf]
        %v4791 = vld [vmem:[%s1021 + $0x104] sm:$0xf]
        %v4792 = vld [vmem:[%s1021 + $0x108] sm:$0xf]
        %v4793 = vld [vmem:[%s1021 + $0x10c] sm:$0xf]
        %v4794 = vld [vmem:[%s1021 + $0x110] sm:$0xf]
        %v4795 = vld [vmem:[%s1021 + $0x114] sm:$0xf]
        %v4796 = vld [vmem:[%s1021 + $0x118] sm:$0xf]
        %v4797 = vld [vmem:[%s1021 + $0x11c] sm:$0xf]
        %v4798 = vld [vmem:[%s1021 + $0x120] sm:$0xf]
        %v4799 = vld [vmem:[%s1021 + $0x124] sm:$0xf]
        %v4800 = vld [vmem:[%s1021 + $0x128] sm:$0xf]
        %v4801 = vld [vmem:[%s1021 + $0x12c] sm:$0xf]
        %v4802 = vld [vmem:[%s1021 + $0x130] sm:$0xf]
        %v4803 = vld [vmem:[%s1021 + $0x134] sm:$0xf]
        %v4804 = vld [vmem:[%s1021 + $0x138] sm:$0xf]
        %v4805 = vld [vmem:[%s1021 + $0x13c] sm:$0xf]
        %v4806 = vld [vmem:[%s1021 + $0x140] sm:$0xf]
        %v4807 = vld [vmem:[%s1021 + $0x144] sm:$0xf]
        %v4808 = vld [vmem:[%s1021 + $0x148] sm:$0xf]
        %v4809 = vld [vmem:[%s1021 + $0x14c] sm:$0xf]
        %v4810 = vld [vmem:[%s1021 + $0x150] sm:$0xf]
        %v4811 = vld [vmem:[%s1021 + $0x154] sm:$0xf]
        %v4812 = vld [vmem:[%s1021 + $0x158] sm:$0xf]
        %v4813 = vld [vmem:[%s1021 + $0x15c] sm:$0xf]
        %v4814 = vld [vmem:[%s1021 + $0x160] sm:$0xf]
        %v4815 = vld [vmem:[%s1021 + $0x164] sm:$0xf]
        %v4816 = vld [vmem:[%s1021 + $0x168] sm:$0xf]
        %v4817 = vld [vmem:[%s1021 + $0x16c] sm:$0xf]
        %v4818 = vld [vmem:[%s1021 + $0x170] sm:$0xf]
        %v4819 = vld [vmem:[%s1021 + $0x174] sm:$0xf]
        %v4820 = vld [vmem:[%s1021 + $0x178] sm:$0xf]
        %v4821 = vld [vmem:[%s1021 + $0x17c] sm:$0xf]
        %v4822 = vld [vmem:[%s1021 + $0x180] sm:$0xf]
        %v4823 = vld [vmem:[%s1021 + $0x184] sm:$0xf]
        %v4824 = vld [vmem:[%s1021 + $0x188] sm:$0xf]
        %v4825 = vld [vmem:[%s1021 + $0x18c] sm:$0xf]
        %v4826 = vld [vmem:[%s1021 + $0x190] sm:$0xf]
        %v4827 = vld [vmem:[%s1021 + $0x194] sm:$0xf]
        %v4828 = vld [vmem:[%s1021 + $0x198] sm:$0xf]
        %v4829 = vld [vmem:[%s1021 + $0x19c] sm:$0xf]
        %v4830 = vld [vmem:[%s1021 + $0x1a0] sm:$0xf]
        %v4831 = vld [vmem:[%s1021 + $0x1a4] sm:$0xf]
        %v4832 = vld [vmem:[%s1021 + $0x1a8] sm:$0xf]
        %v4833 = vld [vmem:[%s1021 + $0x1ac] sm:$0xf]
        %v4834 = vld [vmem:[%s1021 + $0x1b0] sm:$0xf]
        %v4835 = vld [vmem:[%s1021 + $0x1b4] sm:$0xf]
        %v4836 = vld [vmem:[%s1021 + $0x1b8] sm:$0xf]
        %v4837 = vld [vmem:[%s1021 + $0x1bc] sm:$0xf]
        %v4838 = vld [vmem:[%s1021 + $0x1c0] sm:$0xf]
        %v4839 = vld [vmem:[%s1021 + $0x1c4] sm:$0xf]
        %v4840 = vld [vmem:[%s1021 + $0x1c8] sm:$0xf]
        %v4841 = vld [vmem:[%s1021 + $0x1cc] sm:$0xf]
        %v4842 = vld [vmem:[%s1021 + $0x1d0] sm:$0xf]
        %v4843 = vld [vmem:[%s1021 + $0x1d4] sm:$0xf]
        %v4844 = vld [vmem:[%s1021 + $0x1d8] sm:$0xf]
        %v4845 = vld [vmem:[%s1021 + $0x1dc] sm:$0xf]
        %v4846 = vld [vmem:[%s1021 + $0x1e0] sm:$0xf]
        %v4847 = vld [vmem:[%s1021 + $0x1e4] sm:$0xf]
        %v4848 = vld [vmem:[%s1021 + $0x1e8] sm:$0xf]
        %v4849 = vld [vmem:[%s1021 + $0x1ec] sm:$0xf]
        %v4850 = vld [vmem:[%s1021 + $0x1f0] sm:$0xf]
        %v4851 = vld [vmem:[%s1021 + $0x1f4] sm:$0xf]
        %v4852 = vld [vmem:[%s1021 + $0x1f8] sm:$0xf]
        %v4853 = vld [vmem:[%s1021 + $0x1fc] sm:$0xf]
        %v4854 = vld [vmem:[%s1021 + $0x200] sm:$0xf]
        %v4855 = vld [vmem:[%s1021 + $0x204] sm:$0xf]
        %v4856 = vld [vmem:[%s1021 + $0x208] sm:$0xf]
        %v4857 = vld [vmem:[%s1021 + $0x20c] sm:$0xf]
        %v4858 = vld [vmem:[%s1021 + $0x210] sm:$0xf]
        %v4859 = vld [vmem:[%s1021 + $0x214] sm:$0xf]
        %v4860 = vld [vmem:[%s1021 + $0x218] sm:$0xf]
        %v4861 = vld [vmem:[%s1021 + $0x21c] sm:$0xf]
        %v4862 = vld [vmem:[%s1021 + $0x220] sm:$0xf]
        %v4863 = vld [vmem:[%s1021 + $0x224] sm:$0xf]
        %v4864 = vld [vmem:[%s1021 + $0x228] sm:$0xf]
        %v4865 = vld [vmem:[%s1021 + $0x22c] sm:$0xf]
        %v4866 = vld [vmem:[%s1021 + $0x230] sm:$0xf]
        %v4867 = vld [vmem:[%s1021 + $0x234] sm:$0xf]
        %v4868 = vld [vmem:[%s1021 + $0x238] sm:$0xf]
        %v4869 = vld [vmem:[%s1021 + $0x23c] sm:$0xf]
        %v4870 = vld [vmem:[%s1021 + $0x240] sm:$0xf]
        %v4871 = vld [vmem:[%s1021 + $0x244] sm:$0xf]
        %v4872 = vld [vmem:[%s1021 + $0x248] sm:$0xf]
        %v4873 = vld [vmem:[%s1021 + $0x24c] sm:$0xf]
        %v4874 = vld [vmem:[%s1021 + $0x250] sm:$0xf]
        %v4875 = vld [vmem:[%s1021 + $0x254] sm:$0xf]
        %v4876 = vld [vmem:[%s1021 + $0x258] sm:$0xf]
        %v4877 = vld [vmem:[%s1021 + $0x25c] sm:$0xf]
        %v4878 = vld [vmem:[%s1021 + $0x260] sm:$0xf]
        %v4879 = vld [vmem:[%s1021 + $0x264] sm:$0xf]
        %v4880 = vld [vmem:[%s1021 + $0x268] sm:$0xf]
        %v4881 = vld [vmem:[%s1021 + $0x26c] sm:$0xf]
        %v4882 = vld [vmem:[%s1021 + $0x270] sm:$0xf]
        %v4883 = vld [vmem:[%s1021 + $0x274] sm:$0xf]
        %v4884 = vld [vmem:[%s1021 + $0x278] sm:$0xf]
        %v4885 = vld [vmem:[%s1021 + $0x27c] sm:$0xf]
        %v4886 = vld [vmem:[%s1021 + $0x280] sm:$0xf]
        %v4887 = vld [vmem:[%s1021 + $0x284] sm:$0xf]
        %v4888 = vld [vmem:[%s1021 + $0x288] sm:$0xf]
        %v4889 = vld [vmem:[%s1021 + $0x28c] sm:$0xf]
        %v4890 = vld [vmem:[%s1021 + $0x290] sm:$0xf]
        %v4891 = vld [vmem:[%s1021 + $0x294] sm:$0xf]
        %v4892 = vld [vmem:[%s1021 + $0x298] sm:$0xf]
        %v4893 = vld [vmem:[%s1021 + $0x29c] sm:$0xf]
        %v4894 = vld [vmem:[%s1021 + $0x2a0] sm:$0xf]
        %v4895 = vld [vmem:[%s1021 + $0x2a4] sm:$0xf]
        %v4896 = vld [vmem:[%s1021 + $0x2a8] sm:$0xf]
        %v4897 = vld [vmem:[%s1021 + $0x2ac] sm:$0xf]
        %v4898 = vld [vmem:[%s1021 + $0x2b0] sm:$0xf]
        %v4899 = vld [vmem:[%s1021 + $0x2b4] sm:$0xf]
        %v4900 = vld [vmem:[%s1021 + $0x2b8] sm:$0xf]
        %v4901 = vld [vmem:[%s1021 + $0x2bc] sm:$0xf]
        %v4902 = vld [vmem:[%s1021 + $0x2c0] sm:$0xf]
        %v4903 = vld [vmem:[%s1021 + $0x2c4] sm:$0xf]
        %v4904 = vld [vmem:[%s1021 + $0x2c8] sm:$0xf]
        %v4905 = vld [vmem:[%s1021 + $0x2cc] sm:$0xf]
        %v4906 = vld [vmem:[%s1021 + $0x2d0] sm:$0xf]
        %v4907 = vld [vmem:[%s1021 + $0x2d4] sm:$0xf]
        %v4908 = vld [vmem:[%s1021 + $0x2d8] sm:$0xf]
        %v4909 = vld [vmem:[%s1021 + $0x2dc] sm:$0xf]
        %v4910 = vld [vmem:[%s1021 + $0x2e0] sm:$0xf]
        %v4911 = vld [vmem:[%s1021 + $0x2e4] sm:$0xf]
        %v4912 = vld [vmem:[%s1021 + $0x2e8] sm:$0xf]
        %v4913 = vld [vmem:[%s1021 + $0x2ec] sm:$0xf]
        %v4914 = vld [vmem:[%s1021 + $0x2f0] sm:$0xf]
        %v4915 = vld [vmem:[%s1021 + $0x2f4] sm:$0xf]
        %v4916 = vld [vmem:[%s1021 + $0x2f8] sm:$0xf]
        %v4917 = vld [vmem:[%s1021 + $0x2fc] sm:$0xf]
        %v4918 = vld [vmem:[%s1021 + $0x300] sm:$0xf]
        %v4919 = vld [vmem:[%s1021 + $0x304] sm:$0xf]
        %v4920 = vld [vmem:[%s1021 + $0x308] sm:$0xf]
        %v4921 = vld [vmem:[%s1021 + $0x30c] sm:$0xf]
        %v4922 = vld [vmem:[%s1021 + $0x310] sm:$0xf]
        %v4923 = vld [vmem:[%s1021 + $0x314] sm:$0xf]
        %v4924 = vld [vmem:[%s1021 + $0x318] sm:$0xf]
        %v4925 = vld [vmem:[%s1021 + $0x31c] sm:$0xf]
        %v4926 = vld [vmem:[%s1021 + $0x320] sm:$0xf]
        %v4927 = vld [vmem:[%s1021 + $0x324] sm:$0xf]
        %v4928 = vld [vmem:[%s1021 + $0x328] sm:$0xf]
        %v4929 = vld [vmem:[%s1021 + $0x32c] sm:$0xf]
        %v4930 = vld [vmem:[%s1021 + $0x330] sm:$0xf]
        %v4931 = vld [vmem:[%s1021 + $0x334] sm:$0xf]
        %v4932 = vld [vmem:[%s1021 + $0x338] sm:$0xf]
        %v4933 = vld [vmem:[%s1021 + $0x33c] sm:$0xf]
        %v4934 = vld [vmem:[%s1021 + $0x340] sm:$0xf]
        %v4935 = vld [vmem:[%s1021 + $0x344] sm:$0xf]
        %v4936 = vld [vmem:[%s1021 + $0x348] sm:$0xf]
        %v4937 = vld [vmem:[%s1021 + $0x34c] sm:$0xf]
        %v4938 = vld [vmem:[%s1021 + $0x350] sm:$0xf]
        %v4939 = vld [vmem:[%s1021 + $0x354] sm:$0xf]
        %v4940 = vld [vmem:[%s1021 + $0x358] sm:$0xf]
        %v4941 = vld [vmem:[%s1021 + $0x35c] sm:$0xf]
        %v4942 = vld [vmem:[%s1021 + $0x360] sm:$0xf]
        %v4943 = vld [vmem:[%s1021 + $0x364] sm:$0xf]
        %v4944 = vld [vmem:[%s1021 + $0x368] sm:$0xf]
        %v4945 = vld [vmem:[%s1021 + $0x36c] sm:$0xf]
        %v4946 = vld [vmem:[%s1021 + $0x370] sm:$0xf]
        %v4947 = vld [vmem:[%s1021 + $0x374] sm:$0xf]
        %v4948 = vld [vmem:[%s1021 + $0x378] sm:$0xf]
        %v4949 = vld [vmem:[%s1021 + $0x37c] sm:$0xf]
        %v4950 = vld [vmem:[%s1021 + $0x380] sm:$0xf]
        %v4951 = vld [vmem:[%s1021 + $0x384] sm:$0xf]
        %v4952 = vld [vmem:[%s1021 + $0x388] sm:$0xf]
        %v4953 = vld [vmem:[%s1021 + $0x38c] sm:$0xf]
        %v4954 = vld [vmem:[%s1021 + $0x390] sm:$0xf]
        %v4955 = vld [vmem:[%s1021 + $0x394] sm:$0xf]
        %v4956 = vld [vmem:[%s1021 + $0x398] sm:$0xf]
        %v4957 = vld [vmem:[%s1021 + $0x39c] sm:$0xf]
        %v4958 = vld [vmem:[%s1021 + $0x3a0] sm:$0xf]
        %v4959 = vld [vmem:[%s1021 + $0x3a4] sm:$0xf]
        %v4960 = vld [vmem:[%s1021 + $0x3a8] sm:$0xf]
        %v4961 = vld [vmem:[%s1021 + $0x3ac] sm:$0xf]
        %v4962 = vld [vmem:[%s1021 + $0x3b0] sm:$0xf]
        %v4963 = vld [vmem:[%s1021 + $0x3b4] sm:$0xf]
        %v4964 = vld [vmem:[%s1021 + $0x3b8] sm:$0xf]
        %v4965 = vld [vmem:[%s1021 + $0x3bc] sm:$0xf]
        %v4966 = vld [vmem:[%s1021 + $0x3c0] sm:$0xf]
        %v4967 = vld [vmem:[%s1021 + $0x3c4] sm:$0xf]
        %v4968 = vld [vmem:[%s1021 + $0x3c8] sm:$0xf]
        %v4969 = vld [vmem:[%s1021 + $0x3cc] sm:$0xf]
        %v4970 = vld [vmem:[%s1021 + $0x3d0] sm:$0xf]
        %v4971 = vld [vmem:[%s1021 + $0x3d4] sm:$0xf]
        %v4972 = vld [vmem:[%s1021 + $0x3d8] sm:$0xf]
        %v4973 = vld [vmem:[%s1021 + $0x3dc] sm:$0xf]
        %v4974 = vld [vmem:[%s1021 + $0x3e0] sm:$0xf]
        %v4975 = vld [vmem:[%s1021 + $0x3e4] sm:$0xf]
        %v4976 = vld [vmem:[%s1021 + $0x3e8] sm:$0xf]
        %v4977 = vld [vmem:[%s1021 + $0x3ec] sm:$0xf]
        %v4978 = vld [vmem:[%s1021 + $0x3f0] sm:$0xf]
        %v4979 = vld [vmem:[%s1021 + $0x3f4] sm:$0xf]
        %v4980 = vld [vmem:[%s1021 + $0x3f8] sm:$0xf]
        %v4981 = vld [vmem:[%s1021 + $0x3fc] sm:$0xf]
        %v4982 = vpack.c.bf16 %v4710, %v4694
        %v4983 = vpack.c.bf16 %v4711, %v4695
        %v4984 = vpack.c.bf16 %v4712, %v4696
        %v4985 = vpack.c.bf16 %v4713, %v4697
        %v4986 = vpack.c.bf16 %v4714, %v4698
        %v4987 = vpack.c.bf16 %v4715, %v4699
        %v4988 = vpack.c.bf16 %v4716, %v4700
        %v4989 = vpack.c.bf16 %v4717, %v4701
        %v4990 = vpack.c.bf16 %v4718, %v4702
        %v4991 = vpack.c.bf16 %v4719, %v4703
        %v4992 = vpack.c.bf16 %v4720, %v4704
        %v4993 = vpack.c.bf16 %v4721, %v4705
        %v4994 = vpack.c.bf16 %v4722, %v4706
        %v4995 = vpack.c.bf16 %v4723, %v4707
        %v4996 = vpack.c.bf16 %v4724, %v4708
        %v4997 = vpack.c.bf16 %v4725, %v4709
        %v4998 = vld [vmem:[%s1029] sm:$0x1]
        %v5000 = vlaneseq
        %v5001 = vshrl.u32 %v5000, 7
        %v5002 = vsub.s32 0, %v5001
        %v5003 = vrot.slane %v4998, %v5002
        %v5261 = vunpack.c.l.b16 %v4726
        %v5262 = vunpack.c.l.b16 %v4727
        %v5263 = vunpack.c.l.b16 %v4728
        %v5264 = vunpack.c.l.b16 %v4729
        %v5265 = vunpack.c.l.b16 %v4730
        %v5266 = vunpack.c.l.b16 %v4731
        %v5267 = vunpack.c.l.b16 %v4732
        %v5268 = vunpack.c.l.b16 %v4733
        %v5269 = vunpack.c.l.b16 %v4734
        %v5270 = vunpack.c.l.b16 %v4735
        %v5271 = vunpack.c.l.b16 %v4736
        %v5272 = vunpack.c.l.b16 %v4737
        %v5273 = vunpack.c.l.b16 %v4738
        %v5274 = vunpack.c.l.b16 %v4739
        %v5275 = vunpack.c.l.b16 %v4740
        %v5276 = vunpack.c.l.b16 %v4741
        %v5277 = vunpack.c.l.b16 %v4742
        %v5278 = vunpack.c.l.b16 %v4743
        %v5279 = vunpack.c.l.b16 %v4744
        %v5280 = vunpack.c.l.b16 %v4745
        %v5281 = vunpack.c.l.b16 %v4746
        %v5282 = vunpack.c.l.b16 %v4747
        %v5283 = vunpack.c.l.b16 %v4748
        %v5284 = vunpack.c.l.b16 %v4749
        %v5285 = vunpack.c.l.b16 %v4750
        %v5286 = vunpack.c.l.b16 %v4751
        %v5287 = vunpack.c.l.b16 %v4752
        %v5288 = vunpack.c.l.b16 %v4753
        %v5289 = vunpack.c.l.b16 %v4754
        %v5290 = vunpack.c.l.b16 %v4755
        %v5291 = vunpack.c.l.b16 %v4756
        %v5292 = vunpack.c.l.b16 %v4757
        %v5293 = vunpack.c.l.b16 %v4758
        %v5294 = vunpack.c.l.b16 %v4759
        %v5295 = vunpack.c.l.b16 %v4760
        %v5296 = vunpack.c.l.b16 %v4761
        %v5297 = vunpack.c.l.b16 %v4762
        %v5298 = vunpack.c.l.b16 %v4763
        %v5299 = vunpack.c.l.b16 %v4764
        %v5300 = vunpack.c.l.b16 %v4765
        %v5301 = vunpack.c.l.b16 %v4766
        %v5302 = vunpack.c.l.b16 %v4767
        %v5303 = vunpack.c.l.b16 %v4768
        %v5304 = vunpack.c.l.b16 %v4769
        %v5305 = vunpack.c.l.b16 %v4770
        %v5306 = vunpack.c.l.b16 %v4771
        %v5307 = vunpack.c.l.b16 %v4772
        %v5308 = vunpack.c.l.b16 %v4773
        %v5309 = vunpack.c.l.b16 %v4774
        %v5310 = vunpack.c.l.b16 %v4775
        %v5311 = vunpack.c.l.b16 %v4776
        %v5312 = vunpack.c.l.b16 %v4777
        %v5313 = vunpack.c.l.b16 %v4778
        %v5314 = vunpack.c.l.b16 %v4779
        %v5315 = vunpack.c.l.b16 %v4780
        %v5316 = vunpack.c.l.b16 %v4781
        %v5317 = vunpack.c.l.b16 %v4782
        %v5318 = vunpack.c.l.b16 %v4783
        %v5319 = vunpack.c.l.b16 %v4784
        %v5320 = vunpack.c.l.b16 %v4785
        %v5321 = vunpack.c.l.b16 %v4786
        %v5322 = vunpack.c.l.b16 %v4787
        %v5323 = vunpack.c.l.b16 %v4788
        %v5324 = vunpack.c.l.b16 %v4789
        %v5325 = vunpack.c.l.b16 %v4790
        %v5326 = vunpack.c.l.b16 %v4791
        %v5327 = vunpack.c.l.b16 %v4792
        %v5328 = vunpack.c.l.b16 %v4793
        %v5329 = vunpack.c.l.b16 %v4794
        %v5330 = vunpack.c.l.b16 %v4795
        %v5331 = vunpack.c.l.b16 %v4796
        %v5332 = vunpack.c.l.b16 %v4797
        %v5333 = vunpack.c.l.b16 %v4798
        %v5334 = vunpack.c.l.b16 %v4799
        %v5335 = vunpack.c.l.b16 %v4800
        %v5336 = vunpack.c.l.b16 %v4801
        %v5337 = vunpack.c.l.b16 %v4802
        %v5338 = vunpack.c.l.b16 %v4803
        %v5339 = vunpack.c.l.b16 %v4804
        %v5340 = vunpack.c.l.b16 %v4805
        %v5341 = vunpack.c.l.b16 %v4806
        %v5342 = vunpack.c.l.b16 %v4807
        %v5343 = vunpack.c.l.b16 %v4808
        %v5344 = vunpack.c.l.b16 %v4809
        %v5345 = vunpack.c.l.b16 %v4810
        %v5346 = vunpack.c.l.b16 %v4811
        %v5347 = vunpack.c.l.b16 %v4812
        %v5348 = vunpack.c.l.b16 %v4813
        %v5349 = vunpack.c.l.b16 %v4814
        %v5350 = vunpack.c.l.b16 %v4815
        %v5351 = vunpack.c.l.b16 %v4816
        %v5352 = vunpack.c.l.b16 %v4817
        %v5353 = vunpack.c.l.b16 %v4818
        %v5354 = vunpack.c.l.b16 %v4819
        %v5355 = vunpack.c.l.b16 %v4820
        %v5356 = vunpack.c.l.b16 %v4821
        %v5357 = vunpack.c.l.b16 %v4822
        %v5358 = vunpack.c.l.b16 %v4823
        %v5359 = vunpack.c.l.b16 %v4824
        %v5360 = vunpack.c.l.b16 %v4825
        %v5361 = vunpack.c.l.b16 %v4826
        %v5362 = vunpack.c.l.b16 %v4827
        %v5363 = vunpack.c.l.b16 %v4828
        %v5364 = vunpack.c.l.b16 %v4829
        %v5365 = vunpack.c.l.b16 %v4830
        %v5366 = vunpack.c.l.b16 %v4831
        %v5367 = vunpack.c.l.b16 %v4832
        %v5368 = vunpack.c.l.b16 %v4833
        %v5369 = vunpack.c.l.b16 %v4834
        %v5370 = vunpack.c.l.b16 %v4835
        %v5371 = vunpack.c.l.b16 %v4836
        %v5372 = vunpack.c.l.b16 %v4837
        %v5373 = vunpack.c.l.b16 %v4838
        %v5374 = vunpack.c.l.b16 %v4839
        %v5375 = vunpack.c.l.b16 %v4840
        %v5376 = vunpack.c.l.b16 %v4841
        %v5377 = vunpack.c.l.b16 %v4842
        %v5378 = vunpack.c.l.b16 %v4843
        %v5379 = vunpack.c.l.b16 %v4844
        %v5380 = vunpack.c.l.b16 %v4845
        %v5381 = vunpack.c.l.b16 %v4846
        %v5382 = vunpack.c.l.b16 %v4847
        %v5383 = vunpack.c.l.b16 %v4848
        %v5384 = vunpack.c.l.b16 %v4849
        %v5385 = vunpack.c.l.b16 %v4850
        %v5386 = vunpack.c.l.b16 %v4851
        %v5387 = vunpack.c.l.b16 %v4852
        %v5388 = vunpack.c.l.b16 %v4853
        %v5389 = vunpack.c.l.b16 %v4854
        %v5390 = vunpack.c.l.b16 %v4855
        %v5391 = vunpack.c.l.b16 %v4856
        %v5392 = vunpack.c.l.b16 %v4857
        %v5393 = vunpack.c.l.b16 %v4858
        %v5394 = vunpack.c.l.b16 %v4859
        %v5395 = vunpack.c.l.b16 %v4860
        %v5396 = vunpack.c.l.b16 %v4861
        %v5397 = vunpack.c.l.b16 %v4862
        %v5398 = vunpack.c.l.b16 %v4863
        %v5399 = vunpack.c.l.b16 %v4864
        %v5400 = vunpack.c.l.b16 %v4865
        %v5401 = vunpack.c.l.b16 %v4866
        %v5402 = vunpack.c.l.b16 %v4867
        %v5403 = vunpack.c.l.b16 %v4868
        %v5404 = vunpack.c.l.b16 %v4869
        %v5405 = vunpack.c.l.b16 %v4870
        %v5406 = vunpack.c.l.b16 %v4871
        %v5407 = vunpack.c.l.b16 %v4872
        %v5408 = vunpack.c.l.b16 %v4873
        %v5409 = vunpack.c.l.b16 %v4874
        %v5410 = vunpack.c.l.b16 %v4875
        %v5411 = vunpack.c.l.b16 %v4876
        %v5412 = vunpack.c.l.b16 %v4877
        %v5413 = vunpack.c.l.b16 %v4878
        %v5414 = vunpack.c.l.b16 %v4879
        %v5415 = vunpack.c.l.b16 %v4880
        %v5416 = vunpack.c.l.b16 %v4881
        %v5417 = vunpack.c.l.b16 %v4882
        %v5418 = vunpack.c.l.b16 %v4883
        %v5419 = vunpack.c.l.b16 %v4884
        %v5420 = vunpack.c.l.b16 %v4885
        %v5421 = vunpack.c.l.b16 %v4886
        %v5422 = vunpack.c.l.b16 %v4887
        %v5423 = vunpack.c.l.b16 %v4888
        %v5424 = vunpack.c.l.b16 %v4889
        %v5425 = vunpack.c.l.b16 %v4890
        %v5426 = vunpack.c.l.b16 %v4891
        %v5427 = vunpack.c.l.b16 %v4892
        %v5428 = vunpack.c.l.b16 %v4893
        %v5429 = vunpack.c.l.b16 %v4894
        %v5430 = vunpack.c.l.b16 %v4895
        %v5431 = vunpack.c.l.b16 %v4896
        %v5432 = vunpack.c.l.b16 %v4897
        %v5433 = vunpack.c.l.b16 %v4898
        %v5434 = vunpack.c.l.b16 %v4899
        %v5435 = vunpack.c.l.b16 %v4900
        %v5436 = vunpack.c.l.b16 %v4901
        %v5437 = vunpack.c.l.b16 %v4902
        %v5438 = vunpack.c.l.b16 %v4903
        %v5439 = vunpack.c.l.b16 %v4904
        %v5440 = vunpack.c.l.b16 %v4905
        %v5441 = vunpack.c.l.b16 %v4906
        %v5442 = vunpack.c.l.b16 %v4907
        %v5443 = vunpack.c.l.b16 %v4908
        %v5444 = vunpack.c.l.b16 %v4909
        %v5445 = vunpack.c.l.b16 %v4910
        %v5446 = vunpack.c.l.b16 %v4911
        %v5447 = vunpack.c.l.b16 %v4912
        %v5448 = vunpack.c.l.b16 %v4913
        %v5449 = vunpack.c.l.b16 %v4914
        %v5450 = vunpack.c.l.b16 %v4915
        %v5451 = vunpack.c.l.b16 %v4916
        %v5452 = vunpack.c.l.b16 %v4917
        %v5453 = vunpack.c.l.b16 %v4918
        %v5454 = vunpack.c.l.b16 %v4919
        %v5455 = vunpack.c.l.b16 %v4920
        %v5456 = vunpack.c.l.b16 %v4921
        %v5457 = vunpack.c.l.b16 %v4922
        %v5458 = vunpack.c.l.b16 %v4923
        %v5459 = vunpack.c.l.b16 %v4924
        %v5460 = vunpack.c.l.b16 %v4925
        %v5461 = vunpack.c.l.b16 %v4926
        %v5462 = vunpack.c.l.b16 %v4927
        %v5463 = vunpack.c.l.b16 %v4928
        %v5464 = vunpack.c.l.b16 %v4929
        %v5465 = vunpack.c.l.b16 %v4930
        %v5466 = vunpack.c.l.b16 %v4931
        %v5467 = vunpack.c.l.b16 %v4932
        %v5468 = vunpack.c.l.b16 %v4933
        %v5469 = vunpack.c.l.b16 %v4934
        %v5470 = vunpack.c.l.b16 %v4935
        %v5471 = vunpack.c.l.b16 %v4936
        %v5472 = vunpack.c.l.b16 %v4937
        %v5473 = vunpack.c.l.b16 %v4938
        %v5474 = vunpack.c.l.b16 %v4939
        %v5475 = vunpack.c.l.b16 %v4940
        %v5476 = vunpack.c.l.b16 %v4941
        %v5477 = vunpack.c.l.b16 %v4942
        %v5478 = vunpack.c.l.b16 %v4943
        %v5479 = vunpack.c.l.b16 %v4944
        %v5480 = vunpack.c.l.b16 %v4945
        %v5481 = vunpack.c.l.b16 %v4946
        %v5482 = vunpack.c.l.b16 %v4947
        %v5483 = vunpack.c.l.b16 %v4948
        %v5484 = vunpack.c.l.b16 %v4949
        %v5485 = vunpack.c.l.b16 %v4950
        %v5486 = vunpack.c.l.b16 %v4951
        %v5487 = vunpack.c.l.b16 %v4952
        %v5488 = vunpack.c.l.b16 %v4953
        %v5489 = vunpack.c.l.b16 %v4954
        %v5490 = vunpack.c.l.b16 %v4955
        %v5491 = vunpack.c.l.b16 %v4956
        %v5492 = vunpack.c.l.b16 %v4957
        %v5493 = vunpack.c.l.b16 %v4958
        %v5494 = vunpack.c.l.b16 %v4959
        %v5495 = vunpack.c.l.b16 %v4960
        %v5496 = vunpack.c.l.b16 %v4961
        %v5497 = vunpack.c.l.b16 %v4962
        %v5498 = vunpack.c.l.b16 %v4963
        %v5499 = vunpack.c.l.b16 %v4964
        %v5500 = vunpack.c.l.b16 %v4965
        %v5501 = vunpack.c.l.b16 %v4966
        %v5502 = vunpack.c.l.b16 %v4967
        %v5503 = vunpack.c.l.b16 %v4968
        %v5504 = vunpack.c.l.b16 %v4969
        %v5505 = vunpack.c.l.b16 %v4970
        %v5506 = vunpack.c.l.b16 %v4971
        %v5507 = vunpack.c.l.b16 %v4972
        %v5508 = vunpack.c.l.b16 %v4973
        %v5509 = vunpack.c.l.b16 %v4974
        %v5510 = vunpack.c.l.b16 %v4975
        %v5511 = vunpack.c.l.b16 %v4976
        %v5512 = vunpack.c.l.b16 %v4977
        %v5513 = vunpack.c.l.b16 %v4978
        %v5514 = vunpack.c.l.b16 %v4979
        %v5515 = vunpack.c.l.b16 %v4980
        %v5516 = vunpack.c.l.b16 %v4981
        %v5517 = vpack.c.b16 %v5262, %v5261
        %v5518 = vpack.c.b16 %v5264, %v5263
        %v5519 = vpack.c.b16 %v5266, %v5265
        %v5520 = vpack.c.b16 %v5268, %v5267
        %v5521 = vpack.c.b16 %v5270, %v5269
        %v5522 = vpack.c.b16 %v5272, %v5271
        %v5523 = vpack.c.b16 %v5274, %v5273
        %v5524 = vpack.c.b16 %v5276, %v5275
        %v5525 = vpack.c.b16 %v5278, %v5277
        %v5526 = vpack.c.b16 %v5280, %v5279
        %v5527 = vpack.c.b16 %v5282, %v5281
        %v5528 = vpack.c.b16 %v5284, %v5283
        %v5529 = vpack.c.b16 %v5286, %v5285
        %v5530 = vpack.c.b16 %v5288, %v5287
        %v5531 = vpack.c.b16 %v5290, %v5289
        %v5532 = vpack.c.b16 %v5292, %v5291
        %v5533 = vpack.c.b16 %v5294, %v5293
        %v5534 = vpack.c.b16 %v5296, %v5295
        %v5535 = vpack.c.b16 %v5298, %v5297
        %v5536 = vpack.c.b16 %v5300, %v5299
        %v5537 = vpack.c.b16 %v5302, %v5301
        %v5538 = vpack.c.b16 %v5304, %v5303
        %v5539 = vpack.c.b16 %v5306, %v5305
        %v5540 = vpack.c.b16 %v5308, %v5307
        %v5541 = vpack.c.b16 %v5310, %v5309
        %v5542 = vpack.c.b16 %v5312, %v5311
        %v5543 = vpack.c.b16 %v5314, %v5313
        %v5544 = vpack.c.b16 %v5316, %v5315
        %v5545 = vpack.c.b16 %v5318, %v5317
        %v5546 = vpack.c.b16 %v5320, %v5319
        %v5547 = vpack.c.b16 %v5322, %v5321
        %v5548 = vpack.c.b16 %v5324, %v5323
        %v5549 = vpack.c.b16 %v5326, %v5325
        %v5550 = vpack.c.b16 %v5328, %v5327
        %v5551 = vpack.c.b16 %v5330, %v5329
        %v5552 = vpack.c.b16 %v5332, %v5331
        %v5553 = vpack.c.b16 %v5334, %v5333
        %v5554 = vpack.c.b16 %v5336, %v5335
        %v5555 = vpack.c.b16 %v5338, %v5337
        %v5556 = vpack.c.b16 %v5340, %v5339
        %v5557 = vpack.c.b16 %v5342, %v5341
        %v5558 = vpack.c.b16 %v5344, %v5343
        %v5559 = vpack.c.b16 %v5346, %v5345
        %v5560 = vpack.c.b16 %v5348, %v5347
        %v5561 = vpack.c.b16 %v5350, %v5349
        %v5562 = vpack.c.b16 %v5352, %v5351
        %v5563 = vpack.c.b16 %v5354, %v5353
        %v5564 = vpack.c.b16 %v5356, %v5355
        %v5565 = vpack.c.b16 %v5358, %v5357
        %v5566 = vpack.c.b16 %v5360, %v5359
        %v5567 = vpack.c.b16 %v5362, %v5361
        %v5568 = vpack.c.b16 %v5364, %v5363
        %v5569 = vpack.c.b16 %v5366, %v5365
        %v5570 = vpack.c.b16 %v5368, %v5367
        %v5571 = vpack.c.b16 %v5370, %v5369
        %v5572 = vpack.c.b16 %v5372, %v5371
        %v5573 = vpack.c.b16 %v5374, %v5373
        %v5574 = vpack.c.b16 %v5376, %v5375
        %v5575 = vpack.c.b16 %v5378, %v5377
        %v5576 = vpack.c.b16 %v5380, %v5379
        %v5577 = vpack.c.b16 %v5382, %v5381
        %v5578 = vpack.c.b16 %v5384, %v5383
        %v5579 = vpack.c.b16 %v5386, %v5385
        %v5580 = vpack.c.b16 %v5388, %v5387
        %v5581 = vpack.c.b16 %v5390, %v5389
        %v5582 = vpack.c.b16 %v5392, %v5391
        %v5583 = vpack.c.b16 %v5394, %v5393
        %v5584 = vpack.c.b16 %v5396, %v5395
        %v5585 = vpack.c.b16 %v5398, %v5397
        %v5586 = vpack.c.b16 %v5400, %v5399
        %v5587 = vpack.c.b16 %v5402, %v5401
        %v5588 = vpack.c.b16 %v5404, %v5403
        %v5589 = vpack.c.b16 %v5406, %v5405
        %v5590 = vpack.c.b16 %v5408, %v5407
        %v5591 = vpack.c.b16 %v5410, %v5409
        %v5592 = vpack.c.b16 %v5412, %v5411
        %v5593 = vpack.c.b16 %v5414, %v5413
        %v5594 = vpack.c.b16 %v5416, %v5415
        %v5595 = vpack.c.b16 %v5418, %v5417
        %v5596 = vpack.c.b16 %v5420, %v5419
        %v5597 = vpack.c.b16 %v5422, %v5421
        %v5598 = vpack.c.b16 %v5424, %v5423
        %v5599 = vpack.c.b16 %v5426, %v5425
        %v5600 = vpack.c.b16 %v5428, %v5427
        %v5601 = vpack.c.b16 %v5430, %v5429
        %v5602 = vpack.c.b16 %v5432, %v5431
        %v5603 = vpack.c.b16 %v5434, %v5433
        %v5604 = vpack.c.b16 %v5436, %v5435
        %v5605 = vpack.c.b16 %v5438, %v5437
        %v5606 = vpack.c.b16 %v5440, %v5439
        %v5607 = vpack.c.b16 %v5442, %v5441
        %v5608 = vpack.c.b16 %v5444, %v5443
        %v5609 = vpack.c.b16 %v5446, %v5445
        %v5610 = vpack.c.b16 %v5448, %v5447
        %v5611 = vpack.c.b16 %v5450, %v5449
        %v5612 = vpack.c.b16 %v5452, %v5451
        %v5613 = vpack.c.b16 %v5454, %v5453
        %v5614 = vpack.c.b16 %v5456, %v5455
        %v5615 = vpack.c.b16 %v5458, %v5457
        %v5616 = vpack.c.b16 %v5460, %v5459
        %v5617 = vpack.c.b16 %v5462, %v5461
        %v5618 = vpack.c.b16 %v5464, %v5463
        %v5619 = vpack.c.b16 %v5466, %v5465
        %v5620 = vpack.c.b16 %v5468, %v5467
        %v5621 = vpack.c.b16 %v5470, %v5469
        %v5622 = vpack.c.b16 %v5472, %v5471
        %v5623 = vpack.c.b16 %v5474, %v5473
        %v5624 = vpack.c.b16 %v5476, %v5475
        %v5625 = vpack.c.b16 %v5478, %v5477
        %v5626 = vpack.c.b16 %v5480, %v5479
        %v5627 = vpack.c.b16 %v5482, %v5481
        %v5628 = vpack.c.b16 %v5484, %v5483
        %v5629 = vpack.c.b16 %v5486, %v5485
        %v5630 = vpack.c.b16 %v5488, %v5487
        %v5631 = vpack.c.b16 %v5490, %v5489
        %v5632 = vpack.c.b16 %v5492, %v5491
        %v5633 = vpack.c.b16 %v5494, %v5493
        %v5634 = vpack.c.b16 %v5496, %v5495
        %v5635 = vpack.c.b16 %v5498, %v5497
        %v5636 = vpack.c.b16 %v5500, %v5499
        %v5637 = vpack.c.b16 %v5502, %v5501
        %v5638 = vpack.c.b16 %v5504, %v5503
        %v5639 = vpack.c.b16 %v5506, %v5505
        %v5640 = vpack.c.b16 %v5508, %v5507
        %v5641 = vpack.c.b16 %v5510, %v5509
        %v5642 = vpack.c.b16 %v5512, %v5511
        %v5643 = vpack.c.b16 %v5514, %v5513
        %v5644 = vpack.c.b16 %v5516, %v5515
        %5773 = vmatprep.subr.bf16.mxu0 0
        %5774 = vmatpush1.bf16.msra.mxu0 %v5517
        %5775 = vmatprep.subr.bf16.mxu0 0
        %5776 = vmatpush1.bf16.msra.mxu0 %v5518
        %5777 = vmatprep.subr.bf16.mxu0 0
        %5778 = vmatpush1.bf16.msra.mxu0 %v5519
        %5779 = vmatprep.subr.bf16.mxu0 0
        %5780 = vmatpush1.bf16.msra.mxu0 %v5520
        %5781 = vmatprep.subr.bf16.mxu0 0
        %5782 = vmatpush1.bf16.msra.mxu0 %v5521
        %5783 = vmatprep.subr.bf16.mxu0 0
        %5784 = vmatpush1.bf16.msra.mxu0 %v5522
        %5785 = vmatprep.subr.bf16.mxu0 0
        %5786 = vmatpush1.bf16.msra.mxu0 %v5523
        %5787 = vmatprep.subr.bf16.mxu0 0
        %5788 = vmatpush1.bf16.msra.mxu0 %v5524
        %5789 = vmatprep.subr.bf16.mxu0 0
        %5790 = vmatpush1.bf16.msra.mxu0 %v5525
        %5791 = vmatprep.subr.bf16.mxu0 0
        %5792 = vmatpush1.bf16.msra.mxu0 %v5526
        %5793 = vmatprep.subr.bf16.mxu0 0
        %5794 = vmatpush1.bf16.msra.mxu0 %v5527
        %5795 = vmatprep.subr.bf16.mxu0 0
        %5796 = vmatpush1.bf16.msra.mxu0 %v5528
        %5797 = vmatprep.subr.bf16.mxu0 0
        %5798 = vmatpush1.bf16.msra.mxu0 %v5529
        %5799 = vmatprep.subr.bf16.mxu0 0
        %5800 = vmatpush1.bf16.msra.mxu0 %v5530
        %5801 = vmatprep.subr.bf16.mxu0 0
        %5802 = vmatpush1.bf16.msra.mxu0 %v5531
        %5803 = vmatprep.subr.bf16.mxu0 0
        %5804 = vmatpush1.bf16.msra.mxu0 %v5532
        %5805 = vmatprep.mubr.bf16.mxu0 %v4983
        %5806 = vmatmul.mubr.bf16.gmra.mrb[0].mxu0 %v4982
        %v5807 = vpop.f32.mrb[0].mxu0
        %v5808 = vadd.f32 %v5003, %v5807
        %v5809 = vpop.f32.mrb[0].mxu0
        %v5810 = vpop.f32.mrb[0].mxu0
        %v5811 = vadd.f32 %v5003, %v5810
        %v5812 = vpop.f32.mrb[0].mxu0
        %5813 = vdwg.mxu0
        %5814 = vmatprep.subr.bf16.mxu0 0
        %5815 = vmatpush1.bf16.msra.mxu0 %v5533
        %5816 = vmatprep.subr.bf16.mxu0 0
        %5817 = vmatpush1.bf16.msra.mxu0 %v5534
        %5818 = vmatprep.subr.bf16.mxu0 0
        %5819 = vmatpush1.bf16.msra.mxu0 %v5535
        %5820 = vmatprep.subr.bf16.mxu0 0
        %5821 = vmatpush1.bf16.msra.mxu0 %v5536
        %5822 = vmatprep.subr.bf16.mxu0 0
        %5823 = vmatpush1.bf16.msra.mxu0 %v5537
        %5824 = vmatprep.subr.bf16.mxu0 0
        %5825 = vmatpush1.bf16.msra.mxu0 %v5538
        %5826 = vmatprep.subr.bf16.mxu0 0
        %5827 = vmatpush1.bf16.msra.mxu0 %v5539
        %5828 = vmatprep.subr.bf16.mxu0 0
        %5829 = vmatpush1.bf16.msra.mxu0 %v5540
        %5830 = vmatprep.subr.bf16.mxu0 0
        %5831 = vmatpush1.bf16.msra.mxu0 %v5541
        %5832 = vmatprep.subr.bf16.mxu0 0
        %5833 = vmatpush1.bf16.msra.mxu0 %v5542
        %5834 = vmatprep.subr.bf16.mxu0 0
        %5835 = vmatpush1.bf16.msra.mxu0 %v5543
        %5836 = vmatprep.subr.bf16.mxu0 0
        %5837 = vmatpush1.bf16.msra.mxu0 %v5544
        %5838 = vmatprep.subr.bf16.mxu0 0
        %5839 = vmatpush1.bf16.msra.mxu0 %v5545
        %5840 = vmatprep.subr.bf16.mxu0 0
        %5841 = vmatpush1.bf16.msra.mxu0 %v5546
        %5842 = vmatprep.subr.bf16.mxu0 0
        %5843 = vmatpush1.bf16.msra.mxu0 %v5547
        %5844 = vmatprep.subr.bf16.mxu0 0
        %5845 = vmatpush1.bf16.msra.mxu0 %v5548
        %5846 = vmatprep.mubr.bf16.mxu0 %v4985
        %5847 = vmatmul.mubr.bf16.gmra.mrb[0].mxu0 %v4984
        %v5848 = vpop.f32.mrb[0].mxu0
        %v5849 = vadd.f32 %v5808, %v5848
        %v5850 = vpop.f32.mrb[0].mxu0
        %v5851 = vpop.f32.mrb[0].mxu0
        %v5852 = vadd.f32 %v5811, %v5851
        %v5853 = vpop.f32.mrb[0].mxu0
        %5854 = vdwg.mxu0
        %5855 = vmatprep.subr.bf16.mxu0 0
        %5856 = vmatpush1.bf16.msra.mxu0 %v5549
        %5857 = vmatprep.subr.bf16.mxu0 0
        %5858 = vmatpush1.bf16.msra.mxu0 %v5550
        %5859 = vmatprep.subr.bf16.mxu0 0
        %5860 = vmatpush1.bf16.msra.mxu0 %v5551
        %5861 = vmatprep.subr.bf16.mxu0 0
        %5862 = vmatpush1.bf16.msra.mxu0 %v5552
        %5863 = vmatprep.subr.bf16.mxu0 0
        %5864 = vmatpush1.bf16.msra.mxu0 %v5553
        %5865 = vmatprep.subr.bf16.mxu0 0
        %5866 = vmatpush1.bf16.msra.mxu0 %v5554
        %5867 = vmatprep.subr.bf16.mxu0 0
        %5868 = vmatpush1.bf16.msra.mxu0 %v5555
        %5869 = vmatprep.subr.bf16.mxu0 0
        %5870 = vmatpush1.bf16.msra.mxu0 %v5556
        %5871 = vmatprep.subr.bf16.mxu0 0
        %5872 = vmatpush1.bf16.msra.mxu0 %v5557
        %5873 = vmatprep.subr.bf16.mxu0 0
        %5874 = vmatpush1.bf16.msra.mxu0 %v5558
        %5875 = vmatprep.subr.bf16.mxu0 0
        %5876 = vmatpush1.bf16.msra.mxu0 %v5559
        %5877 = vmatprep.subr.bf16.mxu0 0
        %5878 = vmatpush1.bf16.msra.mxu0 %v5560
        %5879 = vmatprep.subr.bf16.mxu0 0
        %5880 = vmatpush1.bf16.msra.mxu0 %v5561
        %5881 = vmatprep.subr.bf16.mxu0 0
        %5882 = vmatpush1.bf16.msra.mxu0 %v5562
        %5883 = vmatprep.subr.bf16.mxu0 0
        %5884 = vmatpush1.bf16.msra.mxu0 %v5563
        %5885 = vmatprep.subr.bf16.mxu0 0
        %5886 = vmatpush1.bf16.msra.mxu0 %v5564
        %5887 = vmatprep.mubr.bf16.mxu0 %v4987
        %5888 = vmatmul.mubr.bf16.gmra.mrb[0].mxu0 %v4986
        %v5889 = vpop.f32.mrb[0].mxu0
        %v5890 = vadd.f32 %v5849, %v5889
        %v5891 = vpop.f32.mrb[0].mxu0
        %v5892 = vpop.f32.mrb[0].mxu0
        %v5893 = vadd.f32 %v5852, %v5892
        %v5894 = vpop.f32.mrb[0].mxu0
        %5895 = vdwg.mxu0
        %5896 = vmatprep.subr.bf16.mxu0 0
        %5897 = vmatpush1.bf16.msra.mxu0 %v5565
        %5898 = vmatprep.subr.bf16.mxu0 0
        %5899 = vmatpush1.bf16.msra.mxu0 %v5566
        %5900 = vmatprep.subr.bf16.mxu0 0
        %5901 = vmatpush1.bf16.msra.mxu0 %v5567
        %5902 = vmatprep.subr.bf16.mxu0 0
        %5903 = vmatpush1.bf16.msra.mxu0 %v5568
        %5904 = vmatprep.subr.bf16.mxu0 0
        %5905 = vmatpush1.bf16.msra.mxu0 %v5569
        %5906 = vmatprep.subr.bf16.mxu0 0
        %5907 = vmatpush1.bf16.msra.mxu0 %v5570
        %5908 = vmatprep.subr.bf16.mxu0 0
        %5909 = vmatpush1.bf16.msra.mxu0 %v5571
        %5910 = vmatprep.subr.bf16.mxu0 0
        %5911 = vmatpush1.bf16.msra.mxu0 %v5572
        %5912 = vmatprep.subr.bf16.mxu0 0
        %5913 = vmatpush1.bf16.msra.mxu0 %v5573
        %5914 = vmatprep.subr.bf16.mxu0 0
        %5915 = vmatpush1.bf16.msra.mxu0 %v5574
        %5916 = vmatprep.subr.bf16.mxu0 0
        %5917 = vmatpush1.bf16.msra.mxu0 %v5575
        %5918 = vmatprep.subr.bf16.mxu0 0
        %5919 = vmatpush1.bf16.msra.mxu0 %v5576
        %5920 = vmatprep.subr.bf16.mxu0 0
        %5921 = vmatpush1.bf16.msra.mxu0 %v5577
        %5922 = vmatprep.subr.bf16.mxu0 0
        %5923 = vmatpush1.bf16.msra.mxu0 %v5578
        %5924 = vmatprep.subr.bf16.mxu0 0
        %5925 = vmatpush1.bf16.msra.mxu0 %v5579
        %5926 = vmatprep.subr.bf16.mxu0 0
        %5927 = vmatpush1.bf16.msra.mxu0 %v5580
        %5928 = vmatprep.mubr.bf16.mxu0 %v4989
        %5929 = vmatmul.mubr.bf16.gmra.mrb[0].mxu0 %v4988
        %v5930 = vpop.f32.mrb[0].mxu0
        %v5931 = vadd.f32 %v5890, %v5930
        %v5932 = vpop.f32.mrb[0].mxu0
        %v5933 = vpop.f32.mrb[0].mxu0
        %v5934 = vadd.f32 %v5893, %v5933
        %v5935 = vpop.f32.mrb[0].mxu0
        %5936 = vdwg.mxu0
        %5937 = vmatprep.subr.bf16.mxu0 0
        %5938 = vmatpush1.bf16.msra.mxu0 %v5581
        %5939 = vmatprep.subr.bf16.mxu0 0
        %5940 = vmatpush1.bf16.msra.mxu0 %v5582
        %5941 = vmatprep.subr.bf16.mxu0 0
        %5942 = vmatpush1.bf16.msra.mxu0 %v5583
        %5943 = vmatprep.subr.bf16.mxu0 0
        %5944 = vmatpush1.bf16.msra.mxu0 %v5584
        %5945 = vmatprep.subr.bf16.mxu0 0
        %5946 = vmatpush1.bf16.msra.mxu0 %v5585
        %5947 = vmatprep.subr.bf16.mxu0 0
        %5948 = vmatpush1.bf16.msra.mxu0 %v5586
        %5949 = vmatprep.subr.bf16.mxu0 0
        %5950 = vmatpush1.bf16.msra.mxu0 %v5587
        %5951 = vmatprep.subr.bf16.mxu0 0
        %5952 = vmatpush1.bf16.msra.mxu0 %v5588
        %5953 = vmatprep.subr.bf16.mxu0 0
        %5954 = vmatpush1.bf16.msra.mxu0 %v5589
        %5955 = vmatprep.subr.bf16.mxu0 0
        %5956 = vmatpush1.bf16.msra.mxu0 %v5590
        %5957 = vmatprep.subr.bf16.mxu0 0
        %5958 = vmatpush1.bf16.msra.mxu0 %v5591
        %5959 = vmatprep.subr.bf16.mxu0 0
        %5960 = vmatpush1.bf16.msra.mxu0 %v5592
        %5961 = vmatprep.subr.bf16.mxu0 0
        %5962 = vmatpush1.bf16.msra.mxu0 %v5593
        %5963 = vmatprep.subr.bf16.mxu0 0
        %5964 = vmatpush1.bf16.msra.mxu0 %v5594
        %5965 = vmatprep.subr.bf16.mxu0 0
        %5966 = vmatpush1.bf16.msra.mxu0 %v5595
        %5967 = vmatprep.subr.bf16.mxu0 0
        %5968 = vmatpush1.bf16.msra.mxu0 %v5596
        %5969 = vmatprep.mubr.bf16.mxu0 %v4991
        %5970 = vmatmul.mubr.bf16.gmra.mrb[0].mxu0 %v4990
        %v5971 = vpop.f32.mrb[0].mxu0
        %v5972 = vadd.f32 %v5931, %v5971
        %v5973 = vpop.f32.mrb[0].mxu0
        %v5974 = vpop.f32.mrb[0].mxu0
        %v5975 = vadd.f32 %v5934, %v5974
        %v5976 = vpop.f32.mrb[0].mxu0
        %5977 = vdwg.mxu0
        %5978 = vmatprep.subr.bf16.mxu0 0
        %5979 = vmatpush1.bf16.msra.mxu0 %v5597
        %5980 = vmatprep.subr.bf16.mxu0 0
        %5981 = vmatpush1.bf16.msra.mxu0 %v5598
        %5982 = vmatprep.subr.bf16.mxu0 0
        %5983 = vmatpush1.bf16.msra.mxu0 %v5599
        %5984 = vmatprep.subr.bf16.mxu0 0
        %5985 = vmatpush1.bf16.msra.mxu0 %v5600
        %5986 = vmatprep.subr.bf16.mxu0 0
        %5987 = vmatpush1.bf16.msra.mxu0 %v5601
        %5988 = vmatprep.subr.bf16.mxu0 0
        %5989 = vmatpush1.bf16.msra.mxu0 %v5602
        %5990 = vmatprep.subr.bf16.mxu0 0
        %5991 = vmatpush1.bf16.msra.mxu0 %v5603
        %5992 = vmatprep.subr.bf16.mxu0 0
        %5993 = vmatpush1.bf16.msra.mxu0 %v5604
        %5994 = vmatprep.subr.bf16.mxu0 0
        %5995 = vmatpush1.bf16.msra.mxu0 %v5605
        %5996 = vmatprep.subr.bf16.mxu0 0
        %5997 = vmatpush1.bf16.msra.mxu0 %v5606
        %5998 = vmatprep.subr.bf16.mxu0 0
        %5999 = vmatpush1.bf16.msra.mxu0 %v5607
        %6000 = vmatprep.subr.bf16.mxu0 0
        %6001 = vmatpush1.bf16.msra.mxu0 %v5608
        %6002 = vmatprep.subr.bf16.mxu0 0
        %6003 = vmatpush1.bf16.msra.mxu0 %v5609
        %6004 = vmatprep.subr.bf16.mxu0 0
        %6005 = vmatpush1.bf16.msra.mxu0 %v5610
        %6006 = vmatprep.subr.bf16.mxu0 0
        %6007 = vmatpush1.bf16.msra.mxu0 %v5611
        %6008 = vmatprep.subr.bf16.mxu0 0
        %6009 = vmatpush1.bf16.msra.mxu0 %v5612
        %6010 = vmatprep.mubr.bf16.mxu0 %v4993
        %6011 = vmatmul.mubr.bf16.gmra.mrb[0].mxu0 %v4992
        %v6012 = vpop.f32.mrb[0].mxu0
        %v6013 = vadd.f32 %v5972, %v6012
        %v6014 = vpop.f32.mrb[0].mxu0
        %v6015 = vpop.f32.mrb[0].mxu0
        %v6016 = vadd.f32 %v5975, %v6015
        %v6017 = vpop.f32.mrb[0].mxu0
        %6018 = vdwg.mxu0
        %6019 = vmatprep.subr.bf16.mxu0 0
        %6020 = vmatpush1.bf16.msra.mxu0 %v5613
        %6021 = vmatprep.subr.bf16.mxu0 0
        %6022 = vmatpush1.bf16.msra.mxu0 %v5614
        %6023 = vmatprep.subr.bf16.mxu0 0
        %6024 = vmatpush1.bf16.msra.mxu0 %v5615
        %6025 = vmatprep.subr.bf16.mxu0 0
        %6026 = vmatpush1.bf16.msra.mxu0 %v5616
        %6027 = vmatprep.subr.bf16.mxu0 0
        %6028 = vmatpush1.bf16.msra.mxu0 %v5617
        %6029 = vmatprep.subr.bf16.mxu0 0
        %6030 = vmatpush1.bf16.msra.mxu0 %v5618
        %6031 = vmatprep.subr.bf16.mxu0 0
        %6032 = vmatpush1.bf16.msra.mxu0 %v5619
        %6033 = vmatprep.subr.bf16.mxu0 0
        %6034 = vmatpush1.bf16.msra.mxu0 %v5620
        %6035 = vmatprep.subr.bf16.mxu0 0
        %6036 = vmatpush1.bf16.msra.mxu0 %v5621
        %6037 = vmatprep.subr.bf16.mxu0 0
        %6038 = vmatpush1.bf16.msra.mxu0 %v5622
        %6039 = vmatprep.subr.bf16.mxu0 0
        %6040 = vmatpush1.bf16.msra.mxu0 %v5623
        %6041 = vmatprep.subr.bf16.mxu0 0
        %6042 = vmatpush1.bf16.msra.mxu0 %v5624
        %6043 = vmatprep.subr.bf16.mxu0 0
        %6044 = vmatpush1.bf16.msra.mxu0 %v5625
        %6045 = vmatprep.subr.bf16.mxu0 0
        %6046 = vmatpush1.bf16.msra.mxu0 %v5626
        %6047 = vmatprep.subr.bf16.mxu0 0
        %6048 = vmatpush1.bf16.msra.mxu0 %v5627
        %6049 = vmatprep.subr.bf16.mxu0 0
        %6050 = vmatpush1.bf16.msra.mxu0 %v5628
        %6051 = vmatprep.mubr.bf16.mxu0 %v4995
        %6052 = vmatmul.mubr.bf16.gmra.mrb[0].mxu0 %v4994
        %v6053 = vpop.f32.mrb[0].mxu0
        %v6054 = vadd.f32 %v6013, %v6053
        %v6055 = vpop.f32.mrb[0].mxu0
        %v6056 = vpop.f32.mrb[0].mxu0
        %v6057 = vadd.f32 %v6016, %v6056
        %v6058 = vpop.f32.mrb[0].mxu0
        %6059 = vdwg.mxu0
        %6060 = vmatprep.subr.bf16.mxu0 0
        %6061 = vmatpush1.bf16.msra.mxu0 %v5629
        %6062 = vmatprep.subr.bf16.mxu0 0
        %6063 = vmatpush1.bf16.msra.mxu0 %v5630
        %6064 = vmatprep.subr.bf16.mxu0 0
        %6065 = vmatpush1.bf16.msra.mxu0 %v5631
        %6066 = vmatprep.subr.bf16.mxu0 0
        %6067 = vmatpush1.bf16.msra.mxu0 %v5632
        %6068 = vmatprep.subr.bf16.mxu0 0
        %6069 = vmatpush1.bf16.msra.mxu0 %v5633
        %6070 = vmatprep.subr.bf16.mxu0 0
        %6071 = vmatpush1.bf16.msra.mxu0 %v5634
        %6072 = vmatprep.subr.bf16.mxu0 0
        %6073 = vmatpush1.bf16.msra.mxu0 %v5635
        %6074 = vmatprep.subr.bf16.mxu0 0
        %6075 = vmatpush1.bf16.msra.mxu0 %v5636
        %6076 = vmatprep.subr.bf16.mxu0 0
        %6077 = vmatpush1.bf16.msra.mxu0 %v5637
        %6078 = vmatprep.subr.bf16.mxu0 0
        %6079 = vmatpush1.bf16.msra.mxu0 %v5638
        %6080 = vmatprep.subr.bf16.mxu0 0
        %6081 = vmatpush1.bf16.msra.mxu0 %v5639
        %6082 = vmatprep.subr.bf16.mxu0 0
        %6083 = vmatpush1.bf16.msra.mxu0 %v5640
        %6084 = vmatprep.subr.bf16.mxu0 0
        %6085 = vmatpush1.bf16.msra.mxu0 %v5641
        %6086 = vmatprep.subr.bf16.mxu0 0
        %6087 = vmatpush1.bf16.msra.mxu0 %v5642
        %6088 = vmatprep.subr.bf16.mxu0 0
        %6089 = vmatpush1.bf16.msra.mxu0 %v5643
        %6090 = vmatprep.subr.bf16.mxu0 0
        %6091 = vmatpush1.bf16.msra.mxu0 %v5644
        %6092 = vmatprep.mubr.bf16.mxu0 %v4997
        %6093 = vmatmul.mubr.bf16.gmra.mrb[0].mxu0 %v4996
        %v6094 = vpop.f32.mrb[0].mxu0
        %v6095 = vadd.f32 %v6054, %v6094
        %v6096 = vpop.f32.mrb[0].mxu0
        %v6097 = vpop.f32.mrb[0].mxu0
        %v6098 = vadd.f32 %v6057, %v6097
        %v6099 = vpop.f32.mrb[0].mxu0
        %6100 = vdwg.mxu0
        %v6101 = vld [vmem:[%s1037] sm:$0x1]
        %v6102 = vld [vmem:[%s1045] sm:$0x1]
        %v6103 = vadd.f32 %v3495, %v6095
        %v6104 = vadd.f32 %v3496, %v6098
        %6105 = vadd.xlane.f32.xlu0 %v6103
        %v6106 = vpop.xlane.xlu0 %6105
        %6107 = vadd.xlane.f32.xlu0 %v6104
        %v6108 = vpop.xlane.xlu0 %6107
        %v6109 = vmul.f32 %v6106, %v3462
        %v6110 = vmul.f32 %v6108, %v3462
        %v6111 = vsub.f32 %v6103, %v6109
        %v6112 = vsub.f32 %v6104, %v6110
        %v6113 = vmul.f32 %v6111, %v6111
        %v6114 = vmul.f32 %v6112, %v6112
        %6115 = vadd.xlane.f32.xlu0 %v6113
        %v6116 = vpop.xlane.xlu0 %6115
        %6117 = vadd.xlane.f32.xlu0 %v6114
        %v6118 = vpop.xlane.xlu0 %6117
        %v6119 = vmul.f32 %v6116, %v3462
        %v6120 = vmul.f32 %v6118, %v3462
        %v6121 = vadd.f32 %v6119, 1e-05
        %v6122 = vadd.f32 %v6120, 1e-05
        %v6123 = vrsqrt.pop %v6121
        %v6124 = vrsqrt.pop %v6122
        %v6125 = vmul.f32 %v6111, %v6123
        %v6126 = vmul.f32 %v6112, %v6124
        %v6128 = vlaneseq
        %v6129 = vshrl.u32 %v6128, 7
        %v6130 = vsub.s32 0, %v6129
        %v6131 = vrot.slane %v6101, %v6130
        %v6133 = vmul.f32 %v6125, %v6131
        %v6134 = vmul.f32 %v6126, %v6131
        %v6136 = vlaneseq
        %v6137 = vshrl.u32 %v6136, 7
        %v6138 = vsub.s32 0, %v6137
        %v6139 = vrot.slane %v6102, %v6138
        %v6141 = vadd.f32 %v6133, %v6139
        %v6142 = vadd.f32 %v6134, %v6139
        %6143 = vst [vmem:[#allocation2] sm:$0xff] %v6141
        %6144 = vst [vmem:[#allocation2 + $0x8] sm:$0xff] %v6142
        %p6145 = scmp.eq.s32.totalorder %s60, 3
        // Predicated region
        $region185: #{tpu_custom_call.1} parent=103 // pred_check
          %p6146 = pneg %p6145
        $region186: #{tpu_custom_call.1} parent=103 // pred_check_branch
          %6148 = sbr.rel (%p6146) target = $region188
        $region187: #{tpu_custom_call.1} parent=103 // pred_region
          %v6149 = vld [vmem:[#allocation27] sm:$0xf]
          %v6150 = vld [vmem:[#allocation27 + $0x4] sm:$0xf]
          %v6151 = vld [vmem:[#allocation27 + $0x8] sm:$0xf]
          %v6152 = vld [vmem:[#allocation27 + $0xc] sm:$0xf]
          %v6153 = vld [vmem:[#allocation27 + $0x10] sm:$0xf]
          %v6154 = vld [vmem:[#allocation27 + $0x14] sm:$0xf]
          %v6155 = vld [vmem:[#allocation27 + $0x18] sm:$0xf]
          %v6156 = vld [vmem:[#allocation27 + $0x1c] sm:$0xf]
          %v6157 = vld [vmem:[#allocation27 + $0x20] sm:$0xf]
          %v6158 = vld [vmem:[#allocation27 + $0x24] sm:$0xf]
          %v6159 = vld [vmem:[#allocation27 + $0x28] sm:$0xf]
          %v6160 = vld [vmem:[#allocation27 + $0x2c] sm:$0xf]
          %v6161 = vld [vmem:[#allocation27 + $0x30] sm:$0xf]
          %v6162 = vld [vmem:[#allocation27 + $0x34] sm:$0xf]
          %v6163 = vld [vmem:[#allocation27 + $0x38] sm:$0xf]
          %v6164 = vld [vmem:[#allocation27 + $0x3c] sm:$0xf]
          %v6165 = vpack.c.bf16 %v6141, %v6141
          %v6166 = vpack.c.bf16 %v6142, %v6142
          %v6167 = vld [vmem:[#allocation29] sm:$0x1]
          %v6169 = vlaneseq
          %v6170 = vshrl.u32 %v6169, 7
          %v6171 = vsub.s32 0, %v6170
          %v6172 = vrot.slane %v6167, %v6171
          %v6176 = vunpack.c.l.b16 %v6165
          %v6177 = vunpack.c.l.b16 %v6166
          %v6178 = vrot.slane %v6176, 7
          %v6179 = vrot.slane %v6177, 6
          %vm6180 = vcmask 1041409
          %v6181 = vsel %vm6180, %v6179, %v6178
          %v6182 = vpack.c.b16 %v6181, %v6181
          %v6200 = vunpack.c.l.b16 %v6149
          %v6201 = vunpack.c.l.b16 %v6150
          %v6202 = vunpack.c.l.b16 %v6151
          %v6203 = vunpack.c.l.b16 %v6152
          %v6204 = vunpack.c.l.b16 %v6153
          %v6205 = vunpack.c.l.b16 %v6154
          %v6206 = vunpack.c.l.b16 %v6155
          %v6207 = vunpack.c.l.b16 %v6156
          %v6208 = vunpack.c.l.b16 %v6157
          %v6209 = vunpack.c.l.b16 %v6158
          %v6210 = vunpack.c.l.b16 %v6159
          %v6211 = vunpack.c.l.b16 %v6160
          %v6212 = vunpack.c.l.b16 %v6161
          %v6213 = vunpack.c.l.b16 %v6162
          %v6214 = vunpack.c.l.b16 %v6163
          %v6215 = vunpack.c.l.b16 %v6164
          %v6216 = vpack.c.b16 %v6201, %v6200
          %v6217 = vpack.c.b16 %v6203, %v6202
          %v6218 = vpack.c.b16 %v6205, %v6204
          %v6219 = vpack.c.b16 %v6207, %v6206
          %v6220 = vpack.c.b16 %v6209, %v6208
          %v6221 = vpack.c.b16 %v6211, %v6210
          %v6222 = vpack.c.b16 %v6213, %v6212
          %v6223 = vpack.c.b16 %v6215, %v6214
          %6232 = vmatprep.subr.bf16.mxu0 0
          %6233 = vmatpush1.bf16.msra.mxu0 %v6216
          %6234 = vmatprep.subr.bf16.mxu0 0
          %6235 = vmatpush1.bf16.msra.mxu0 %v6217
          %6236 = vmatprep.subr.bf16.mxu0 0
          %6237 = vmatpush1.bf16.msra.mxu0 %v6218
          %6238 = vmatprep.subr.bf16.mxu0 0
          %6239 = vmatpush1.bf16.msra.mxu0 %v6219
          %6240 = vmatprep.subr.bf16.mxu0 0
          %6241 = vmatpush1.bf16.msra.mxu0 %v6220
          %6242 = vmatprep.subr.bf16.mxu0 0
          %6243 = vmatpush1.bf16.msra.mxu0 %v6221
          %6244 = vmatprep.subr.bf16.mxu0 0
          %6245 = vmatpush1.bf16.msra.mxu0 %v6222
          %6246 = vmatprep.subr.bf16.mxu0 0
          %6247 = vmatpush1.bf16.msra.mxu0 %v6223
          %6248 = vmatprep.subr.bf16.mxu0 0
          %6249 = vmatpush1.bf16.msra.mxu0 0
          %6250 = vmatprep.subr.bf16.mxu0 0
          %6251 = vmatpush1.bf16.msra.mxu0 0
          %6252 = vmatprep.subr.bf16.mxu0 0
          %6253 = vmatpush1.bf16.msra.mxu0 0
          %6254 = vmatprep.subr.bf16.mxu0 0
          %6255 = vmatpush1.bf16.msra.mxu0 0
          %6256 = vmatprep.subr.bf16.mxu0 0
          %6257 = vmatpush1.bf16.msra.mxu0 0
          %6258 = vmatprep.subr.bf16.mxu0 0
          %6259 = vmatpush1.bf16.msra.mxu0 0
          %6260 = vmatprep.subr.bf16.mxu0 0
          %6261 = vmatpush1.bf16.msra.mxu0 0
          %6262 = vmatprep.subr.bf16.mxu0 0
          %6263 = vmatpush1.bf16.msra.mxu0 0
          %6264 = vmatprep.mubr.bf16.mxu0 0
          %6265 = vmatmul.mubr.bf16.gmra.mrb[0].mxu0 %v6182
          %v6266 = vpop.f32.mrb[0].mxu0
          %v6267 = vadd.f32 %v6172, %v6266
          %v6268 = vpop.f32.mrb[0].mxu0
          %v6269 = vpop.f32.mrb[0].mxu0
          %v6270 = vpop.f32.mrb[0].mxu0
          %6271 = vdwg.mxu0
          %v6272 = vmax.f32 %v6267, 0.0
          %v6273 = vld [vmem:[%s17] sm:$0xf]
          %v6274 = vld [vmem:[%s17 + $0x4] sm:$0xf]
          %v6275 = vld [vmem:[%s17 + $0x8] sm:$0xf]
          %v6276 = vld [vmem:[%s17 + $0xc] sm:$0xf]
          %v6277 = vld [vmem:[%s17 + $0x10] sm:$0xf]
          %v6278 = vld [vmem:[%s17 + $0x14] sm:$0xf]
          %v6279 = vld [vmem:[%s17 + $0x18] sm:$0xf]
          %v6280 = vld [vmem:[%s17 + $0x1c] sm:$0xf]
          %v6281 = vld [vmem:[%s17 + $0x20] sm:$0xf]
          %v6282 = vld [vmem:[%s17 + $0x24] sm:$0xf]
          %v6283 = vld [vmem:[%s17 + $0x28] sm:$0xf]
          %v6284 = vld [vmem:[%s17 + $0x2c] sm:$0xf]
          %v6285 = vld [vmem:[%s17 + $0x30] sm:$0xf]
          %v6286 = vld [vmem:[%s17 + $0x34] sm:$0xf]
          %v6287 = vld [vmem:[%s17 + $0x38] sm:$0xf]
          %v6288 = vld [vmem:[%s17 + $0x3c] sm:$0xf]
          %v6289 = vpack.c.bf16 %v6272, %v6272
          %v6290 = vld [vmem:[#allocation30] sm:$0x1]
          %v6292 = vlaneseq
          %v6293 = vshrl.u32 %v6292, 7
          %v6294 = vsub.s32 0, %v6293
          %v6295 = vrot.slane %v6290, %v6294
          %v6313 = vunpack.c.l.b16 %v6273
          %v6314 = vunpack.c.l.b16 %v6274
          %v6315 = vunpack.c.l.b16 %v6275
          %v6316 = vunpack.c.l.b16 %v6276
          %v6317 = vunpack.c.l.b16 %v6277
          %v6318 = vunpack.c.l.b16 %v6278
          %v6319 = vunpack.c.l.b16 %v6279
          %v6320 = vunpack.c.l.b16 %v6280
          %v6321 = vunpack.c.l.b16 %v6281
          %v6322 = vunpack.c.l.b16 %v6282
          %v6323 = vunpack.c.l.b16 %v6283
          %v6324 = vunpack.c.l.b16 %v6284
          %v6325 = vunpack.c.l.b16 %v6285
          %v6326 = vunpack.c.l.b16 %v6286
          %v6327 = vunpack.c.l.b16 %v6287
          %v6328 = vunpack.c.l.b16 %v6288
          %v6329 = vpack.c.b16 %v6314, %v6313
          %v6330 = vpack.c.b16 %v6316, %v6315
          %v6331 = vpack.c.b16 %v6318, %v6317
          %v6332 = vpack.c.b16 %v6320, %v6319
          %v6333 = vpack.c.b16 %v6322, %v6321
          %v6334 = vpack.c.b16 %v6324, %v6323
          %v6335 = vpack.c.b16 %v6326, %v6325
          %v6336 = vpack.c.b16 %v6328, %v6327
          %6345 = vmatprep.subr.bf16.mxu0 0
          %6346 = vmatpush1.bf16.msra.mxu0 %v6329
          %6347 = vmatprep.subr.bf16.mxu0 0
          %6348 = vmatpush1.bf16.msra.mxu0 %v6330
          %6349 = vmatprep.subr.bf16.mxu0 0
          %6350 = vmatpush1.bf16.msra.mxu0 %v6331
          %6351 = vmatprep.subr.bf16.mxu0 0
          %6352 = vmatpush1.bf16.msra.mxu0 %v6332
          %6353 = vmatprep.subr.bf16.mxu0 0
          %6354 = vmatpush1.bf16.msra.mxu0 %v6333
          %6355 = vmatprep.subr.bf16.mxu0 0
          %6356 = vmatpush1.bf16.msra.mxu0 %v6334
          %6357 = vmatprep.subr.bf16.mxu0 0
          %6358 = vmatpush1.bf16.msra.mxu0 %v6335
          %6359 = vmatprep.subr.bf16.mxu0 0
          %6360 = vmatpush1.bf16.msra.mxu0 %v6336
          %6361 = vmatprep.subr.bf16.mxu0 0
          %6362 = vmatpush1.bf16.msra.mxu0 0
          %6363 = vmatprep.subr.bf16.mxu0 0
          %6364 = vmatpush1.bf16.msra.mxu0 0
          %6365 = vmatprep.subr.bf16.mxu0 0
          %6366 = vmatpush1.bf16.msra.mxu0 0
          %6367 = vmatprep.subr.bf16.mxu0 0
          %6368 = vmatpush1.bf16.msra.mxu0 0
          %6369 = vmatprep.subr.bf16.mxu0 0
          %6370 = vmatpush1.bf16.msra.mxu0 0
          %6371 = vmatprep.subr.bf16.mxu0 0
          %6372 = vmatpush1.bf16.msra.mxu0 0
          %6373 = vmatprep.subr.bf16.mxu0 0
          %6374 = vmatpush1.bf16.msra.mxu0 0
          %6375 = vmatprep.subr.bf16.mxu0 0
          %6376 = vmatpush1.bf16.msra.mxu0 0
          %6377 = vmatprep.mubr.bf16.mxu0 0
          %6378 = vmatmul.mubr.bf16.gmra.mrb[0].mxu0 %v6289
          %v6379 = vpop.f32.mrb[0].mxu0
          %v6380 = vadd.f32 %v6295, %v6379
          %v6381 = vpop.f32.mrb[0].mxu0
          %v6382 = vpop.f32.mrb[0].mxu0
          %v6383 = vpop.f32.mrb[0].mxu0
          %6384 = vdwg.mxu0
          %v6385 = vmax.f32 %v6380, 0.0
          %v6386 = vld [vmem:[%s19] sm:$0xf]
          %v6387 = vld [vmem:[%s19 + $0x4] sm:$0xf]
          %v6388 = vld [vmem:[%s19 + $0x8] sm:$0xf]
          %v6389 = vld [vmem:[%s19 + $0xc] sm:$0xf]
          %v6390 = vld [vmem:[%s19 + $0x10] sm:$0xf]
          %v6391 = vld [vmem:[%s19 + $0x14] sm:$0xf]
          %v6392 = vld [vmem:[%s19 + $0x18] sm:$0xf]
          %v6393 = vld [vmem:[%s19 + $0x1c] sm:$0xf]
          %v6394 = vpack.c.bf16 %v6385, %v6385
          %v6395 = vld [vmem:[#allocation32] sm:$0x1]
          %v6397 = vlaneseq
          %v6398 = vshrl.u32 %v6397, 7
          %v6399 = vsub.s32 0, %v6398
          %v6400 = vrot.slane %v6395, %v6399
          %v6410 = vunpack.c.l.b16 %v6386
          %v6411 = vunpack.c.l.b16 %v6387
          %v6412 = vunpack.c.l.b16 %v6388
          %v6413 = vunpack.c.l.b16 %v6389
          %v6414 = vunpack.c.l.b16 %v6390
          %v6415 = vunpack.c.l.b16 %v6391
          %v6416 = vunpack.c.l.b16 %v6392
          %v6417 = vunpack.c.l.b16 %v6393
          %v6418 = vpack.c.b16 %v6411, %v6410
          %v6419 = vpack.c.b16 %v6413, %v6412
          %v6420 = vpack.c.b16 %v6415, %v6414
          %v6421 = vpack.c.b16 %v6417, %v6416
          %v6427 = vsel %vm3329, %v6394, 0
          %6429 = vmatprep.subr.bf16.mxu0 0
          %6430 = vmatpush1.bf16.msra.mxu0 %v6418
          %6431 = vmatprep.subr.bf16.mxu0 0
          %6432 = vmatpush1.bf16.msra.mxu0 %v6419
          %6433 = vmatprep.subr.bf16.mxu0 0
          %6434 = vmatpush1.bf16.msra.mxu0 %v6420
          %6435 = vmatprep.subr.bf16.mxu0 0
          %6436 = vmatpush1.bf16.msra.mxu0 %v6421
          %6437 = vmatprep.subr.bf16.mxu0 0
          %6438 = vmatpush1.bf16.msra.mxu0 0
          %6439 = vmatprep.subr.bf16.mxu0 0
          %6440 = vmatpush1.bf16.msra.mxu0 0
          %6441 = vmatprep.subr.bf16.mxu0 0
          %6442 = vmatpush1.bf16.msra.mxu0 0
          %6443 = vmatprep.subr.bf16.mxu0 0
          %6444 = vmatpush1.bf16.msra.mxu0 0
          %6445 = vmatprep.subr.bf16.mxu0 0
          %6446 = vmatpush1.bf16.msra.mxu0 0
          %6447 = vmatprep.subr.bf16.mxu0 0
          %6448 = vmatpush1.bf16.msra.mxu0 0
          %6449 = vmatprep.subr.bf16.mxu0 0
          %6450 = vmatpush1.bf16.msra.mxu0 0
          %6451 = vmatprep.subr.bf16.mxu0 0
          %6452 = vmatpush1.bf16.msra.mxu0 0
          %6453 = vmatprep.subr.bf16.mxu0 0
          %6454 = vmatpush1.bf16.msra.mxu0 0
          %6455 = vmatprep.subr.bf16.mxu0 0
          %6456 = vmatpush1.bf16.msra.mxu0 0
          %6457 = vmatprep.subr.bf16.mxu0 0
          %6458 = vmatpush1.bf16.msra.mxu0 0
          %6459 = vmatprep.subr.bf16.mxu0 0
          %6460 = vmatpush1.bf16.msra.mxu0 0
          %6461 = vmatprep.mubr.bf16.mxu0 0
          %6462 = vmatmul.mubr.bf16.gmra.mrb[0].mxu0 %v6427
          %v6463 = vpop.f32.mrb[0].mxu0
          %v6464 = vadd.f32 %v6400, %v6463
          %v6465 = vpop.f32.mrb[0].mxu0
          %v6466 = vpop.f32.mrb[0].mxu0
          %v6467 = vpop.f32.mrb[0].mxu0
          %6468 = vdwg.mxu0
          %v6471 = vunpack.c.l.s4 1966171168
          %v6472 = vunpack.c.0.s8 %v6471
          %v6473 = vlaneseq
          %v6474 = vshrl.u32 %v6473, 7
          %v6475 = vsub.s32 %v6472, %v6474
          %v6476 = vrot.slane %v6464, %v6475
          %v6477 = vcombine.high %v6476, %v6476
          %v6479 = vunpack.c.l.s4 1966171168
          %v6480 = vunpack.c.0.s8 %v6479
          %v6481 = vlaneseq
          %v6482 = vshrl.u32 %v6481, 7
          %v6483 = vsub.s32 %v6480, %v6482
          %v6484 = vrot.slane %v6476, %v6483
          %v6486 = vunpack.c.l.s4 1966171168
          %v6487 = vunpack.c.0.s8 %v6486
          %v6488 = vlaneseq
          %v6489 = vshrl.u32 %v6488, 7
          %v6490 = vsub.s32 %v6487, %v6489
          %v6491 = vrot.slane %v6477, %v6490
          %vm6494 = vcmask 73728
          %6495 = vst.msk [vmem:[#allocation33] sm:$0x1] %vm6494, %v6484
          %6496 = vst.msk [vmem:[#allocation33 + $0x1] sm:$0x1] %vm6494, %v6491
        $region188: #{tpu_custom_call.1} parent=103 // pred_fallthru
          _
        // Predicated region
        $region189: #{tpu_custom_call.1} parent=103 // pred_check
          %p6497 = pneg %p591
        $region190: #{tpu_custom_call.1} parent=103 // pred_check_branch
          %6499 = sbr.rel (%p6497) target = $region192
        $region191: #{tpu_custom_call.1} parent=103 // pred_region
          %s6500 = smul.u32 2, %s59
          %s6502 = ssub.s32 32, 32
          %6503 = vsyncadd [#allocation5], %s6502
          %s6504 = smul.addr %s6500, 16
          %s6505 = scalar_lea.hbm %s21, %s6504
          %s6506 = sshll.u32 [#allocation33], 4
          %s6507 = int_to_ptr.vmem [resolvable:$true] %s6506
          %6512 = dma.vmem_to_hbm [thread:$0]  %s6507, 32, %s6505, [#allocation5], 16, 16, 1
        $region192: #{tpu_custom_call.1} parent=103 // pred_fallthru
          _
        // Predicated region
        $region193: #{tpu_custom_call.1} parent=103 // pred_check
          %p6513 = pneg %p591
        $region194: #{tpu_custom_call.1} parent=103 // pred_check_branch
          %6515 = sbr.rel (%p6513) target = $region196
        $region195: #{tpu_custom_call.1} parent=103 // pred_region
          %6516 = dma.done [#allocation5], 32
        $region196: #{tpu_custom_call.1} parent=103 // pred_fallthru
          _
      $region104: #{tpu_custom_call.1} parent=5 // pred_fallthru
        _
      %p6517 = scmp.le.s32.totalorder 2, %s50
      // Predicated region
      $region197: #{tpu_custom_call.1} parent=5 // pred_check
        %p6518 = pneg %p6517
      $region198: #{tpu_custom_call.1} parent=5 // pred_check_branch
        %6520 = sbr.rel (%p6518) target = $region200
      $region199: #{tpu_custom_call.1} parent=5 // pred_region
        %s6521 = ssub.s32 %s50, 2
      $region200: #{tpu_custom_call.1} parent=5 // pred_fallthru
        _
    $region6: #{tpu_custom_call.1} parent=1 // loop_footer
      %s54 = sadd.s32 1, %s50
    $region7: #{tpu_custom_call.1} parent=1 // loop_footer_branch
      %49 = sbr.rel target = $region3
    $region8: #{tpu_custom_call.1} parent=1 // loop_exit
      _
    %6522 = vsyncpa [#allocation4], 1
    %s6523 = scalar_lea.sflag [#allocation4], 1
    %6524 = vsyncpa %s6523, 1
    %6525 = vsyncpa [#allocation7], 1
    %6526 = vsyncpa [#allocation10], 1
    %s6527 = scalar_lea.sflag [#allocation10], 1
    %6528 = vsyncpa %s6527, 1
    %6529 = vsyncpa [#allocation13], 1
    %s6530 = scalar_lea.sflag [#allocation13], 1
    %6531 = vsyncpa %s6530, 1
    %6532 = vsyncpa [#allocation16], 1
    %s6533 = scalar_lea.sflag [#allocation16], 1
    %6534 = vsyncpa %s6533, 1
    %6535 = vsyncpa [#allocation19], 1
    %s6536 = scalar_lea.sflag [#allocation19], 1
    %6537 = vsyncpa %s6536, 1
    %6538 = vsyncpa [#allocation22], 1
    %s6539 = scalar_lea.sflag [#allocation22], 1
    %6540 = vsyncpa %s6539, 1
    %6541 = vsyncpa [#allocation25], 1
    %s6542 = scalar_lea.sflag [#allocation25], 1
    %6543 = vsyncpa %s6542, 1
    %6544 = vsyncpa [#allocation28], 1
    %6545 = vsyncpa [#allocation31], 1
    %6546 = vsyncpa [#allocation5], 1
    %s6547 = scalar_lea.sflag [#allocation5], 1
    %6548 = vsyncpa %s6547, 1

</llo_original>
